<compile_context>
chip_gen: v7x
topology: tpu7x:2x2x1
jax: 0.10.0
libtpu: 0.0.40
codegen_flags: <defaults>
</compile_context>

<pallas_src>
import functools

import jax
import jax.numpy as jnp
from jax.experimental import pallas as pl
from jax.experimental.pallas import tpu as pltpu

K = 5  # conv kernel size
P = 2  # "same" padding


def residual_kernel(xpad_ref, w1_ref, b1_ref, w2_ref, b2_ref, o_ref,
                    xr_pad, h_pad, *, H, W, C):
    """One batch element per grid step.

    xpad_ref : (1, H+2P, W+2P, C) f32   zero-padded input tile (NHWC)
    w*_ref   : (K, K*C, C)        bf16  conv weights, [ky, kx*C + ci, co]
    b*_ref   : (1, 1, C)          f32   conv biases
    o_ref    : (1, H, W, C)       f32   output tile
    xr_pad   : (H+2P, W+2P, C)    bf16  scratch: padded ReLU(x)
    h_pad    : (H+2P, W+2P, C)    bf16  scratch: padded ReLU(conv1 out)
    """
    HP = H + 2 * P
    WP = W + 2 * P

    # Padded ReLU(x): wrapper already zero-padded x and ReLU(0) == 0, so a
    # single full-store also writes the (zero) halo -- no extra maintenance.
    xr_pad[...] = jnp.maximum(xpad_ref[0], 0.0).astype(jnp.bfloat16)

    # h_pad's interior is rewritten every grid step, but its halo must stay
    # zero. Refresh only the 4 thin border strips (cheap), every step, so the
    # kernel stays correct when the batch axis is split across TensorCores
    # (each core owns its own scratch and may never execute program_id == 0).
    zdt = h_pad.dtype
    h_pad[0:P, :, :] = jnp.zeros((P, WP, C), zdt)
    h_pad[P + H:HP, :, :] = jnp.zeros((P, WP, C), zdt)
    h_pad[:, 0:P, :] = jnp.zeros((HP, P, C), zdt)
    h_pad[:, P + W:WP, :] = jnp.zeros((HP, P, C), zdt)

    def conv(src_pad, w_ref, b_ref):
        # f32 accumulator starts from the broadcast bias (saves a final add).
        acc = jnp.broadcast_to(b_ref[0], (H * W, C))
        for ky in range(K):                       # static unroll, K == 5
            rows = src_pad[ky:ky + H]              # (H, WP, C) bf16
            # Fold the 5 kx taps into one K*C-wide contraction: a single
            # (H*W, K*C) @ (K*C, C) MXU matmul per ky (5 matmuls per conv)
            # instead of 25 C-wide matmuls.
            patch = jnp.concatenate(
                [rows[:, kx:kx + W, :] for kx in range(K)], axis=-1
            ).reshape(H * W, K * C)                 # bf16
            acc = acc + jnp.dot(patch, w_ref[ky],
                                preferred_element_type=jnp.float32)
        return acc.reshape(H, W, C)                 # f32

    # conv1 on padded ReLU(x).
    y1 = conv(xr_pad, w1_ref, b1_ref)

    # ReLU(y1) into the interior of the second padded scratch (halo is zero).
    h_pad[P:P + H, P:P + W, :] = jnp.maximum(y1, 0.0).astype(jnp.bfloat16)

    # conv2 on padded ReLU(conv1 out).
    y2 = conv(h_pad, w2_ref, b2_ref)

    # Residual add against the (un-ReLU'ed) interior of the padded input.
    o_ref[0] = xpad_ref[0, P:P + H, P:P + W, :] + y2


def residual_forward(x_nchw, w1, b1, w2, b2):
    """x_nchw: (B, C, H, W) f32; w*: (K, K, C, C) HWIO; b*: (C,)."""
    B, C, H, W = x_nchw.shape
    # NCHW -> NHWC and zero-pad spatially in the wrapper (fuses with the
    # transpose); the kernel applies ReLU on the padded tile.
    x = jnp.transpose(x_nchw, (0, 2, 3, 1)).astype(jnp.float32)
    xpad = jnp.pad(x, ((0, 0), (P, P), (P, P), (0, 0)))

    # HWIO (K, K, C, C) -> (K, K*C, C): each ky slice is a (K*C, C) matmul rhs.
    w1r = w1.astype(jnp.bfloat16).reshape(K, K * C, C)
    w2r = w2.astype(jnp.bfloat16).reshape(K, K * C, C)
    b1r = b1.reshape(1, 1, C).astype(jnp.float32)
    b2r = b2.reshape(1, 1, C).astype(jnp.float32)

    HP, WP = H + 2 * P, W + 2 * P
    kernel = functools.partial(residual_kernel, H=H, W=W, C=C)

    out_nhwc = pl.pallas_call(
        kernel,
        out_shape=jax.ShapeDtypeStruct((B, H, W, C), jnp.float32),
        grid_spec=pltpu.PrefetchScalarGridSpec(
            num_scalar_prefetch=0,
            grid=(B,),
            in_specs=[
                pl.BlockSpec((1, HP, WP, C), lambda b: (b, 0, 0, 0)),  # x pad
                pl.BlockSpec((K, K * C, C), lambda b: (0, 0, 0)),      # w1
                pl.BlockSpec((1, 1, C), lambda b: (0, 0, 0)),          # b1
                pl.BlockSpec((K, K * C, C), lambda b: (0, 0, 0)),      # w2
                pl.BlockSpec((1, 1, C), lambda b: (0, 0, 0)),          # b2
            ],
            out_specs=pl.BlockSpec((1, H, W, C), lambda b: (b, 0, 0, 0)),
            scratch_shapes=[
                pltpu.VMEM((HP, WP, C), jnp.bfloat16),   # padded ReLU(x)
                pltpu.VMEM((HP, WP, C), jnp.bfloat16),   # padded ReLU(conv1)
            ],
        ),
        compiler_params=pltpu.CompilerParams(
            dimension_semantics=("parallel",)),
    )(xpad, w1r, b1r, w2r, b2r)

    return jnp.transpose(out_nhwc, (0, 3, 1, 2))  # -> NCHW


def residual_ref(x_nchw, w1, b1, w2, b2):
    """Pure-JAX f32 reference (same math as the PyTorch module)."""
    x = jnp.transpose(x_nchw, (0, 2, 3, 1))
    dn = ('NHWC', 'HWIO', 'NHWC')
    h = jax.nn.relu(x)
    h = jax.lax.conv_general_dilated(h, w1, (1, 1), ((P, P), (P, P)),
                                     dimension_numbers=dn) + b1
    h = jax.nn.relu(h)
    h = jax.lax.conv_general_dilated(h, w2, (1, 1), ((P, P), (P, P)),
                                     dimension_numbers=dn) + b2
    out = x + h
    return jnp.transpose(out, (0, 3, 1, 2))


if __name__ == "__main__":
    B, C, H, W = 2, 8, 16, 16
    key = jax.random.PRNGKey(0)
    k1, k2, k3, k4, k5 = jax.random.split(key, 5)

    x = jax.random.normal(k1, (B, C, H, W), jnp.float32)
    # Deterministic "PyTorch-like" uniform init: bound = 1/sqrt(C*K*K)
    bound = 1.0 / (C * K * K) ** 0.5
    w1 = jax.random.uniform(k2, (K, K, C, C), jnp.float32, -bound, bound)
    b1 = jax.random.uniform(k3, (C,), jnp.float32, -bound, bound)
    w2 = jax.random.uniform(k4, (K, K, C, C), jnp.float32, -bound, bound)
    b2 = jax.random.uniform(k5, (C,), jnp.float32, -bound, bound)

    out = jax.block_until_ready(residual_forward(x, w1, b1, w2, b2))
    ref = residual_ref(x, w1, b1, w2, b2)

    assert out.shape == (B, C, H, W), out.shape
    max_err = float(jnp.max(jnp.abs(out - ref)))
    # bf16 MXU inputs (f32 accumulation) -> looser tolerance than pure f32.
    assert jnp.allclose(out, ref, atol=5e-2, rtol=1e-2), max_err
    print("KERNEL_OK")
</pallas_src>

<mosaic_0001>
module attributes {stable_mosaic.version = 11 : i64} {
  func.func @residual_kernel(%arg0: i32, %arg1: memref<1x20x20x8xf32, #tpu.memory_space<vmem>>, %arg2: memref<5x40x8xbf16, #tpu.memory_space<vmem>>, %arg3: memref<1x1x8xf32, #tpu.memory_space<vmem>>, %arg4: memref<5x40x8xbf16, #tpu.memory_space<vmem>>, %arg5: memref<1x1x8xf32, #tpu.memory_space<vmem>>, %arg6: memref<1x16x16x8xf32, #tpu.memory_space<vmem>>, %arg7: memref<20x20x8xbf16, #tpu.memory_space<vmem>>, %arg8: memref<20x20x8xbf16, #tpu.memory_space<vmem>>) attributes {dimension_semantics = [#tpu.dimension_semantics<parallel>], iteration_bounds = array<i64: 2>, scalar_prefetch = 0 : i64, scratch_operands = 2 : i64, tpu.core_type = #tpu.core_type<tc>, window_params = [{transform_indices = @transform_0, window_bounds = array<i64: 1, 20, 20, 8>}, {pipeline_mode = #tpu.pipeline_mode<synchronous>, transform_indices = @transform_1, window_bounds = array<i64: 5, 40, 8>}, {pipeline_mode = #tpu.pipeline_mode<synchronous>, transform_indices = @transform_2, window_bounds = array<i64: 1, 1, 8>}, {pipeline_mode = #tpu.pipeline_mode<synchronous>, transform_indices = @transform_3, window_bounds = array<i64: 5, 40, 8>}, {pipeline_mode = #tpu.pipeline_mode<synchronous>, transform_indices = @transform_4, window_bounds = array<i64: 1, 1, 8>}, {transform_indices = @transform_5, window_bounds = array<i64: 1, 16, 16, 8>}]} {
    %c0 = arith.constant 0 : index
    %c0_0 = arith.constant 0 : index
    %c0_1 = arith.constant 0 : index
    %c0_2 = arith.constant 0 : index
    %0 = vector.load %arg1[%c0, %c0_0, %c0_1, %c0_2] : memref<1x20x20x8xf32, #tpu.memory_space<vmem>>, vector<1x20x20x8xf32>
    %1 = vector.shape_cast %0 : vector<1x20x20x8xf32> to vector<20x20x8xf32>
    %cst = arith.constant 0.000000e+00 : f32
    %2 = vector.broadcast %cst : f32 to vector<20x20x8xf32>
    %3 = arith.maximumf %1, %2 : vector<20x20x8xf32>
    %4 = arith.truncf %3 : vector<20x20x8xf32> to vector<20x20x8xbf16>
    %c0_3 = arith.constant 0 : index
    %c0_4 = arith.constant 0 : index
    %c0_5 = arith.constant 0 : index
    %5 = vector.load %arg7[%c0_3, %c0_4, %c0_5] : memref<20x20x8xbf16, #tpu.memory_space<vmem>>, vector<20x20x8xbf16>
    tpu.vector_store %arg7[%c0_3, %c0_4, %c0_5], %4 {strides = array<i32>} : memref<20x20x8xbf16, #tpu.memory_space<vmem>>, vector<20x20x8xbf16>,
    %cst_6 = arith.constant 0.000000e+00 : bf16
    %6 = vector.broadcast %cst_6 : bf16 to vector<2x20x8xbf16>
    %c0_7 = arith.constant 0 : index
    %c0_8 = arith.constant 0 : index
    %c0_9 = arith.constant 0 : index
    %7 = vector.load %arg8[%c0_7, %c0_8, %c0_9] : memref<20x20x8xbf16, #tpu.memory_space<vmem>>, vector<2x20x8xbf16>
    tpu.vector_store %arg8[%c0_7, %c0_8, %c0_9], %6 {strides = array<i32>} : memref<20x20x8xbf16, #tpu.memory_space<vmem>>, vector<2x20x8xbf16>,
    %cst_10 = arith.constant 0.000000e+00 : bf16
    %8 = vector.broadcast %cst_10 : bf16 to vector<2x20x8xbf16>
    %c18 = arith.constant 18 : index
    %c0_11 = arith.constant 0 : index
    %c0_12 = arith.constant 0 : index
    %9 = vector.load %arg8[%c18, %c0_11, %c0_12] : memref<20x20x8xbf16, #tpu.memory_space<vmem>>, vector<2x20x8xbf16>
    tpu.vector_store %arg8[%c18, %c0_11, %c0_12], %8 {strides = array<i32>} : memref<20x20x8xbf16, #tpu.memory_space<vmem>>, vector<2x20x8xbf16>,
    %cst_13 = arith.constant 0.000000e+00 : bf16
    %10 = vector.broadcast %cst_13 : bf16 to vector<20x2x8xbf16>
    %c0_14 = arith.constant 0 : index
    %c0_15 = arith.constant 0 : index
    %c0_16 = arith.constant 0 : index
    %11 = vector.load %arg8[%c0_14, %c0_15, %c0_16] : memref<20x20x8xbf16, #tpu.memory_space<vmem>>, vector<20x2x8xbf16>
    tpu.vector_store %arg8[%c0_14, %c0_15, %c0_16], %10 {strides = array<i32>} : memref<20x20x8xbf16, #tpu.memory_space<vmem>>, vector<20x2x8xbf16>,
    %cst_17 = arith.constant 0.000000e+00 : bf16
    %12 = vector.broadcast %cst_17 : bf16 to vector<20x2x8xbf16>
    %c0_18 = arith.constant 0 : index
    %c18_19 = arith.constant 18 : index
    %c0_20 = arith.constant 0 : index
    %13 = vector.load %arg8[%c0_18, %c18_19, %c0_20] : memref<20x20x8xbf16, #tpu.memory_space<vmem>>, vector<20x2x8xbf16>
    tpu.vector_store %arg8[%c0_18, %c18_19, %c0_20], %12 {strides = array<i32>} : memref<20x20x8xbf16, #tpu.memory_space<vmem>>, vector<20x2x8xbf16>,
    %c0_21 = arith.constant 0 : index
    %c0_22 = arith.constant 0 : index
    %c0_23 = arith.constant 0 : index
    %14 = vector.load %arg3[%c0_21, %c0_22, %c0_23] : memref<1x1x8xf32, #tpu.memory_space<vmem>>, vector<1x1x8xf32>
    %15 = vector.shape_cast %14 : vector<1x1x8xf32> to vector<1x8xf32>
    %16 = vector.shape_cast %15 : vector<1x8xf32> to vector<1x8xf32>
    %17 = vector.broadcast %16 : vector<1x8xf32> to vector<256x8xf32>
    %c0_24 = arith.constant 0 : index
    %c0_25 = arith.constant 0 : index
    %c0_26 = arith.constant 0 : index
    %18 = vector.load %arg7[%c0_24, %c0_25, %c0_26] : memref<20x20x8xbf16, #tpu.memory_space<vmem>>, vector<16x20x8xbf16>
    %19 = vector.extract_strided_slice %18 {offsets = [0, 0, 0], sizes = [16, 16, 8], strides = [1, 1, 1]} : vector<16x20x8xbf16> to vector<16x16x8xbf16>
    %20 = vector.extract_strided_slice %18 {offsets = [0, 1, 0], sizes = [16, 16, 8], strides = [1, 1, 1]} : vector<16x20x8xbf16> to vector<16x16x8xbf16>
    %21 = vector.extract_strided_slice %18 {offsets = [0, 2, 0], sizes = [16, 16, 8], strides = [1, 1, 1]} : vector<16x20x8xbf16> to vector<16x16x8xbf16>
    %22 = vector.extract_strided_slice %18 {offsets = [0, 3, 0], sizes = [16, 16, 8], strides = [1, 1, 1]} : vector<16x20x8xbf16> to vector<16x16x8xbf16>
    %23 = vector.extract_strided_slice %18 {offsets = [0, 4, 0], sizes = [16, 16, 8], strides = [1, 1, 1]} : vector<16x20x8xbf16> to vector<16x16x8xbf16>
    %24 = tpu.concatenate %19, %20, %21, %22, %23 in 2 : vector<16x16x8xbf16>, vector<16x16x8xbf16>, vector<16x16x8xbf16>, vector<16x16x8xbf16>, vector<16x16x8xbf16> -> vector<16x16x40xbf16>
    %25 = vector.shape_cast %24 : vector<16x16x40xbf16> to vector<256x40xbf16>
    %c0_27 = arith.constant 0 : index
    %c0_28 = arith.constant 0 : index
    %c0_29 = arith.constant 0 : index
    %26 = vector.load %arg2[%c0_27, %c0_28, %c0_29] : memref<5x40x8xbf16, #tpu.memory_space<vmem>>, vector<1x40x8xbf16>
    %27 = vector.shape_cast %26 : vector<1x40x8xbf16> to vector<40x8xbf16>
    %cst_30 = arith.constant dense<0.000000e+00> : vector<256x8xf32>
    %28 = tpu.matmul %25, %27, %cst_30 {dimension_numbers = #tpu.dot_dimension_numbers<[1], [0], [0], [1], [0, 0, 1, 1], [], []>} : vector<256x40xbf16>, vector<40x8xbf16>, vector<256x8xf32> -> vector<256x8xf32>
    %29 = arith.addf %17, %28 : vector<256x8xf32>
    %c1 = arith.constant 1 : index
    %c0_31 = arith.constant 0 : index
    %c0_32 = arith.constant 0 : index
    %30 = vector.load %arg7[%c1, %c0_31, %c0_32] : memref<20x20x8xbf16, #tpu.memory_space<vmem>>, vector<16x20x8xbf16>
    %31 = vector.extract_strided_slice %30 {offsets = [0, 0, 0], sizes = [16, 16, 8], strides = [1, 1, 1]} : vector<16x20x8xbf16> to vector<16x16x8xbf16>
    %32 = vector.extract_strided_slice %30 {offsets = [0, 1, 0], sizes = [16, 16, 8], strides = [1, 1, 1]} : vector<16x20x8xbf16> to vector<16x16x8xbf16>
    %33 = vector.extract_strided_slice %30 {offsets = [0, 2, 0], sizes = [16, 16, 8], strides = [1, 1, 1]} : vector<16x20x8xbf16> to vector<16x16x8xbf16>
    %34 = vector.extract_strided_slice %30 {offsets = [0, 3, 0], sizes = [16, 16, 8], strides = [1, 1, 1]} : vector<16x20x8xbf16> to vector<16x16x8xbf16>
    %35 = vector.extract_strided_slice %30 {offsets = [0, 4, 0], sizes = [16, 16, 8], strides = [1, 1, 1]} : vector<16x20x8xbf16> to vector<16x16x8xbf16>
    %36 = tpu.concatenate %31, %32, %33, %34, %35 in 2 : vector<16x16x8xbf16>, vector<16x16x8xbf16>, vector<16x16x8xbf16>, vector<16x16x8xbf16>, vector<16x16x8xbf16> -> vector<16x16x40xbf16>
    %37 = vector.shape_cast %36 : vector<16x16x40xbf16> to vector<256x40xbf16>
    %c1_33 = arith.constant 1 : index
    %c0_34 = arith.constant 0 : index
    %c0_35 = arith.constant 0 : index
    %38 = vector.load %arg2[%c1_33, %c0_34, %c0_35] : memref<5x40x8xbf16, #tpu.memory_space<vmem>>, vector<1x40x8xbf16>
    %39 = vector.shape_cast %38 : vector<1x40x8xbf16> to vector<40x8xbf16>
    %cst_36 = arith.constant dense<0.000000e+00> : vector<256x8xf32>
    %40 = tpu.matmul %37, %39, %cst_36 {dimension_numbers = #tpu.dot_dimension_numbers<[1], [0], [0], [1], [0, 0, 1, 1], [], []>} : vector<256x40xbf16>, vector<40x8xbf16>, vector<256x8xf32> -> vector<256x8xf32>
    %41 = arith.addf %29, %40 : vector<256x8xf32>
    %c2 = arith.constant 2 : index
    %c0_37 = arith.constant 0 : index
    %c0_38 = arith.constant 0 : index
    %42 = vector.load %arg7[%c2, %c0_37, %c0_38] : memref<20x20x8xbf16, #tpu.memory_space<vmem>>, vector<16x20x8xbf16>
    %43 = vector.extract_strided_slice %42 {offsets = [0, 0, 0], sizes = [16, 16, 8], strides = [1, 1, 1]} : vector<16x20x8xbf16> to vector<16x16x8xbf16>
    %44 = vector.extract_strided_slice %42 {offsets = [0, 1, 0], sizes = [16, 16, 8], strides = [1, 1, 1]} : vector<16x20x8xbf16> to vector<16x16x8xbf16>
    %45 = vector.extract_strided_slice %42 {offsets = [0, 2, 0], sizes = [16, 16, 8], strides = [1, 1, 1]} : vector<16x20x8xbf16> to vector<16x16x8xbf16>
    %46 = vector.extract_strided_slice %42 {offsets = [0, 3, 0], sizes = [16, 16, 8], strides = [1, 1, 1]} : vector<16x20x8xbf16> to vector<16x16x8xbf16>
    %47 = vector.extract_strided_slice %42 {offsets = [0, 4, 0], sizes = [16, 16, 8], strides = [1, 1, 1]} : vector<16x20x8xbf16> to vector<16x16x8xbf16>
    %48 = tpu.concatenate %43, %44, %45, %46, %47 in 2 : vector<16x16x8xbf16>, vector<16x16x8xbf16>, vector<16x16x8xbf16>, vector<16x16x8xbf16>, vector<16x16x8xbf16> -> vector<16x16x40xbf16>
    %49 = vector.shape_cast %48 : vector<16x16x40xbf16> to vector<256x40xbf16>
    %c2_39 = arith.constant 2 : index
    %c0_40 = arith.constant 0 : index
    %c0_41 = arith.constant 0 : index
    %50 = vector.load %arg2[%c2_39, %c0_40, %c0_41] : memref<5x40x8xbf16, #tpu.memory_space<vmem>>, vector<1x40x8xbf16>
    %51 = vector.shape_cast %50 : vector<1x40x8xbf16> to vector<40x8xbf16>
    %cst_42 = arith.constant dense<0.000000e+00> : vector<256x8xf32>
    %52 = tpu.matmul %49, %51, %cst_42 {dimension_numbers = #tpu.dot_dimension_numbers<[1], [0], [0], [1], [0, 0, 1, 1], [], []>} : vector<256x40xbf16>, vector<40x8xbf16>, vector<256x8xf32> -> vector<256x8xf32>
    %53 = arith.addf %41, %52 : vector<256x8xf32>
    %c3 = arith.constant 3 : index
    %c0_43 = arith.constant 0 : index
    %c0_44 = arith.constant 0 : index
    %54 = vector.load %arg7[%c3, %c0_43, %c0_44] : memref<20x20x8xbf16, #tpu.memory_space<vmem>>, vector<16x20x8xbf16>
    %55 = vector.extract_strided_slice %54 {offsets = [0, 0, 0], sizes = [16, 16, 8], strides = [1, 1, 1]} : vector<16x20x8xbf16> to vector<16x16x8xbf16>
    %56 = vector.extract_strided_slice %54 {offsets = [0, 1, 0], sizes = [16, 16, 8], strides = [1, 1, 1]} : vector<16x20x8xbf16> to vector<16x16x8xbf16>
    %57 = vector.extract_strided_slice %54 {offsets = [0, 2, 0], sizes = [16, 16, 8], strides = [1, 1, 1]} : vector<16x20x8xbf16> to vector<16x16x8xbf16>
    %58 = vector.extract_strided_slice %54 {offsets = [0, 3, 0], sizes = [16, 16, 8], strides = [1, 1, 1]} : vector<16x20x8xbf16> to vector<16x16x8xbf16>
    %59 = vector.extract_strided_slice %54 {offsets = [0, 4, 0], sizes = [16, 16, 8], strides = [1, 1, 1]} : vector<16x20x8xbf16> to vector<16x16x8xbf16>
    %60 = tpu.concatenate %55, %56, %57, %58, %59 in 2 : vector<16x16x8xbf16>, vector<16x16x8xbf16>, vector<16x16x8xbf16>, vector<16x16x8xbf16>, vector<16x16x8xbf16> -> vector<16x16x40xbf16>
    %61 = vector.shape_cast %60 : vector<16x16x40xbf16> to vector<256x40xbf16>
    %c3_45 = arith.constant 3 : index
    %c0_46 = arith.constant 0 : index
    %c0_47 = arith.constant 0 : index
    %62 = vector.load %arg2[%c3_45, %c0_46, %c0_47] : memref<5x40x8xbf16, #tpu.memory_space<vmem>>, vector<1x40x8xbf16>
    %63 = vector.shape_cast %62 : vector<1x40x8xbf16> to vector<40x8xbf16>
    %cst_48 = arith.constant dense<0.000000e+00> : vector<256x8xf32>
    %64 = tpu.matmul %61, %63, %cst_48 {dimension_numbers = #tpu.dot_dimension_numbers<[1], [0], [0], [1], [0, 0, 1, 1], [], []>} : vector<256x40xbf16>, vector<40x8xbf16>, vector<256x8xf32> -> vector<256x8xf32>
    %65 = arith.addf %53, %64 : vector<256x8xf32>
    %c4 = arith.constant 4 : index
    %c0_49 = arith.constant 0 : index
    %c0_50 = arith.constant 0 : index
    %66 = vector.load %arg7[%c4, %c0_49, %c0_50] : memref<20x20x8xbf16, #tpu.memory_space<vmem>>, vector<16x20x8xbf16>
    %67 = vector.extract_strided_slice %66 {offsets = [0, 0, 0], sizes = [16, 16, 8], strides = [1, 1, 1]} : vector<16x20x8xbf16> to vector<16x16x8xbf16>
    %68 = vector.extract_strided_slice %66 {offsets = [0, 1, 0], sizes = [16, 16, 8], strides = [1, 1, 1]} : vector<16x20x8xbf16> to vector<16x16x8xbf16>
    %69 = vector.extract_strided_slice %66 {offsets = [0, 2, 0], sizes = [16, 16, 8], strides = [1, 1, 1]} : vector<16x20x8xbf16> to vector<16x16x8xbf16>
    %70 = vector.extract_strided_slice %66 {offsets = [0, 3, 0], sizes = [16, 16, 8], strides = [1, 1, 1]} : vector<16x20x8xbf16> to vector<16x16x8xbf16>
    %71 = vector.extract_strided_slice %66 {offsets = [0, 4, 0], sizes = [16, 16, 8], strides = [1, 1, 1]} : vector<16x20x8xbf16> to vector<16x16x8xbf16>
    %72 = tpu.concatenate %67, %68, %69, %70, %71 in 2 : vector<16x16x8xbf16>, vector<16x16x8xbf16>, vector<16x16x8xbf16>, vector<16x16x8xbf16>, vector<16x16x8xbf16> -> vector<16x16x40xbf16>
    %73 = vector.shape_cast %72 : vector<16x16x40xbf16> to vector<256x40xbf16>
    %c4_51 = arith.constant 4 : index
    %c0_52 = arith.constant 0 : index
    %c0_53 = arith.constant 0 : index
    %74 = vector.load %arg2[%c4_51, %c0_52, %c0_53] : memref<5x40x8xbf16, #tpu.memory_space<vmem>>, vector<1x40x8xbf16>
    %75 = vector.shape_cast %74 : vector<1x40x8xbf16> to vector<40x8xbf16>
    %cst_54 = arith.constant dense<0.000000e+00> : vector<256x8xf32>
    %76 = tpu.matmul %73, %75, %cst_54 {dimension_numbers = #tpu.dot_dimension_numbers<[1], [0], [0], [1], [0, 0, 1, 1], [], []>} : vector<256x40xbf16>, vector<40x8xbf16>, vector<256x8xf32> -> vector<256x8xf32>
    %77 = arith.addf %65, %76 : vector<256x8xf32>
    %78 = vector.shape_cast %77 : vector<256x8xf32> to vector<16x16x8xf32>
    %cst_55 = arith.constant 0.000000e+00 : f32
    %79 = vector.broadcast %cst_55 : f32 to vector<16x16x8xf32>
    %80 = arith.maximumf %78, %79 : vector<16x16x8xf32>
    %81 = arith.truncf %80 : vector<16x16x8xf32> to vector<16x16x8xbf16>
    %c2_56 = arith.constant 2 : index
    %c2_57 = arith.constant 2 : index
    %c0_58 = arith.constant 0 : index
    %82 = vector.load %arg8[%c2_56, %c2_57, %c0_58] : memref<20x20x8xbf16, #tpu.memory_space<vmem>>, vector<16x16x8xbf16>
    tpu.vector_store %arg8[%c2_56, %c2_57, %c0_58], %81 {strides = array<i32>} : memref<20x20x8xbf16, #tpu.memory_space<vmem>>, vector<16x16x8xbf16>,
    %c0_59 = arith.constant 0 : index
    %c0_60 = arith.constant 0 : index
    %c0_61 = arith.constant 0 : index
    %83 = vector.load %arg5[%c0_59, %c0_60, %c0_61] : memref<1x1x8xf32, #tpu.memory_space<vmem>>, vector<1x1x8xf32>
    %84 = vector.shape_cast %83 : vector<1x1x8xf32> to vector<1x8xf32>
    %85 = vector.shape_cast %84 : vector<1x8xf32> to vector<1x8xf32>
    %86 = vector.broadcast %85 : vector<1x8xf32> to vector<256x8xf32>
    %c0_62 = arith.constant 0 : index
    %c0_63 = arith.constant 0 : index
    %c0_64 = arith.constant 0 : index
    %87 = vector.load %arg8[%c0_62, %c0_63, %c0_64] : memref<20x20x8xbf16, #tpu.memory_space<vmem>>, vector<16x20x8xbf16>
    %88 = vector.extract_strided_slice %87 {offsets = [0, 0, 0], sizes = [16, 16, 8], strides = [1, 1, 1]} : vector<16x20x8xbf16> to vector<16x16x8xbf16>
    %89 = vector.extract_strided_slice %87 {offsets = [0, 1, 0], sizes = [16, 16, 8], strides = [1, 1, 1]} : vector<16x20x8xbf16> to vector<16x16x8xbf16>
    %90 = vector.extract_strided_slice %87 {offsets = [0, 2, 0], sizes = [16, 16, 8], strides = [1, 1, 1]} : vector<16x20x8xbf16> to vector<16x16x8xbf16>
    %91 = vector.extract_strided_slice %87 {offsets = [0, 3, 0], sizes = [16, 16, 8], strides = [1, 1, 1]} : vector<16x20x8xbf16> to vector<16x16x8xbf16>
    %92 = vector.extract_strided_slice %87 {offsets = [0, 4, 0], sizes = [16, 16, 8], strides = [1, 1, 1]} : vector<16x20x8xbf16> to vector<16x16x8xbf16>
    %93 = tpu.concatenate %88, %89, %90, %91, %92 in 2 : vector<16x16x8xbf16>, vector<16x16x8xbf16>, vector<16x16x8xbf16>, vector<16x16x8xbf16>, vector<16x16x8xbf16> -> vector<16x16x40xbf16>
    %94 = vector.shape_cast %93 : vector<16x16x40xbf16> to vector<256x40xbf16>
    %c0_65 = arith.constant 0 : index
    %c0_66 = arith.constant 0 : index
    %c0_67 = arith.constant 0 : index
    %95 = vector.load %arg4[%c0_65, %c0_66, %c0_67] : memref<5x40x8xbf16, #tpu.memory_space<vmem>>, vector<1x40x8xbf16>
    %96 = vector.shape_cast %95 : vector<1x40x8xbf16> to vector<40x8xbf16>
    %cst_68 = arith.constant dense<0.000000e+00> : vector<256x8xf32>
    %97 = tpu.matmul %94, %96, %cst_68 {dimension_numbers = #tpu.dot_dimension_numbers<[1], [0], [0], [1], [0, 0, 1, 1], [], []>} : vector<256x40xbf16>, vector<40x8xbf16>, vector<256x8xf32> -> vector<256x8xf32>
    %98 = arith.addf %86, %97 : vector<256x8xf32>
    %c1_69 = arith.constant 1 : index
    %c0_70 = arith.constant 0 : index
    %c0_71 = arith.constant 0 : index
    %99 = vector.load %arg8[%c1_69, %c0_70, %c0_71] : memref<20x20x8xbf16, #tpu.memory_space<vmem>>, vector<16x20x8xbf16>
    %100 = vector.extract_strided_slice %99 {offsets = [0, 0, 0], sizes = [16, 16, 8], strides = [1, 1, 1]} : vector<16x20x8xbf16> to vector<16x16x8xbf16>
    %101 = vector.extract_strided_slice %99 {offsets = [0, 1, 0], sizes = [16, 16, 8], strides = [1, 1, 1]} : vector<16x20x8xbf16> to vector<16x16x8xbf16>
    %102 = vector.extract_strided_slice %99 {offsets = [0, 2, 0], sizes = [16, 16, 8], strides = [1, 1, 1]} : vector<16x20x8xbf16> to vector<16x16x8xbf16>
    %103 = vector.extract_strided_slice %99 {offsets = [0, 3, 0], sizes = [16, 16, 8], strides = [1, 1, 1]} : vector<16x20x8xbf16> to vector<16x16x8xbf16>
    %104 = vector.extract_strided_slice %99 {offsets = [0, 4, 0], sizes = [16, 16, 8], strides = [1, 1, 1]} : vector<16x20x8xbf16> to vector<16x16x8xbf16>
    %105 = tpu.concatenate %100, %101, %102, %103, %104 in 2 : vector<16x16x8xbf16>, vector<16x16x8xbf16>, vector<16x16x8xbf16>, vector<16x16x8xbf16>, vector<16x16x8xbf16> -> vector<16x16x40xbf16>
    %106 = vector.shape_cast %105 : vector<16x16x40xbf16> to vector<256x40xbf16>
    %c1_72 = arith.constant 1 : index
    %c0_73 = arith.constant 0 : index
    %c0_74 = arith.constant 0 : index
    %107 = vector.load %arg4[%c1_72, %c0_73, %c0_74] : memref<5x40x8xbf16, #tpu.memory_space<vmem>>, vector<1x40x8xbf16>
    %108 = vector.shape_cast %107 : vector<1x40x8xbf16> to vector<40x8xbf16>
    %cst_75 = arith.constant dense<0.000000e+00> : vector<256x8xf32>
    %109 = tpu.matmul %106, %108, %cst_75 {dimension_numbers = #tpu.dot_dimension_numbers<[1], [0], [0], [1], [0, 0, 1, 1], [], []>} : vector<256x40xbf16>, vector<40x8xbf16>, vector<256x8xf32> -> vector<256x8xf32>
    %110 = arith.addf %98, %109 : vector<256x8xf32>
    %c2_76 = arith.constant 2 : index
    %c0_77 = arith.constant 0 : index
    %c0_78 = arith.constant 0 : index
    %111 = vector.load %arg8[%c2_76, %c0_77, %c0_78] : memref<20x20x8xbf16, #tpu.memory_space<vmem>>, vector<16x20x8xbf16>
    %112 = vector.extract_strided_slice %111 {offsets = [0, 0, 0], sizes = [16, 16, 8], strides = [1, 1, 1]} : vector<16x20x8xbf16> to vector<16x16x8xbf16>
    %113 = vector.extract_strided_slice %111 {offsets = [0, 1, 0], sizes = [16, 16, 8], strides = [1, 1, 1]} : vector<16x20x8xbf16> to vector<16x16x8xbf16>
    %114 = vector.extract_strided_slice %111 {offsets = [0, 2, 0], sizes = [16, 16, 8], strides = [1, 1, 1]} : vector<16x20x8xbf16> to vector<16x16x8xbf16>
    %115 = vector.extract_strided_slice %111 {offsets = [0, 3, 0], sizes = [16, 16, 8], strides = [1, 1, 1]} : vector<16x20x8xbf16> to vector<16x16x8xbf16>
    %116 = vector.extract_strided_slice %111 {offsets = [0, 4, 0], sizes = [16, 16, 8], strides = [1, 1, 1]} : vector<16x20x8xbf16> to vector<16x16x8xbf16>
    %117 = tpu.concatenate %112, %113, %114, %115, %116 in 2 : vector<16x16x8xbf16>, vector<16x16x8xbf16>, vector<16x16x8xbf16>, vector<16x16x8xbf16>, vector<16x16x8xbf16> -> vector<16x16x40xbf16>
    %118 = vector.shape_cast %117 : vector<16x16x40xbf16> to vector<256x40xbf16>
    %c2_79 = arith.constant 2 : index
    %c0_80 = arith.constant 0 : index
    %c0_81 = arith.constant 0 : index
    %119 = vector.load %arg4[%c2_79, %c0_80, %c0_81] : memref<5x40x8xbf16, #tpu.memory_space<vmem>>, vector<1x40x8xbf16>
    %120 = vector.shape_cast %119 : vector<1x40x8xbf16> to vector<40x8xbf16>
    %cst_82 = arith.constant dense<0.000000e+00> : vector<256x8xf32>
    %121 = tpu.matmul %118, %120, %cst_82 {dimension_numbers = #tpu.dot_dimension_numbers<[1], [0], [0], [1], [0, 0, 1, 1], [], []>} : vector<256x40xbf16>, vector<40x8xbf16>, vector<256x8xf32> -> vector<256x8xf32>
    %122 = arith.addf %110, %121 : vector<256x8xf32>
    %c3_83 = arith.constant 3 : index
    %c0_84 = arith.constant 0 : index
    %c0_85 = arith.constant 0 : index
    %123 = vector.load %arg8[%c3_83, %c0_84, %c0_85] : memref<20x20x8xbf16, #tpu.memory_space<vmem>>, vector<16x20x8xbf16>
    %124 = vector.extract_strided_slice %123 {offsets = [0, 0, 0], sizes = [16, 16, 8], strides = [1, 1, 1]} : vector<16x20x8xbf16> to vector<16x16x8xbf16>
    %125 = vector.extract_strided_slice %123 {offsets = [0, 1, 0], sizes = [16, 16, 8], strides = [1, 1, 1]} : vector<16x20x8xbf16> to vector<16x16x8xbf16>
    %126 = vector.extract_strided_slice %123 {offsets = [0, 2, 0], sizes = [16, 16, 8], strides = [1, 1, 1]} : vector<16x20x8xbf16> to vector<16x16x8xbf16>
    %127 = vector.extract_strided_slice %123 {offsets = [0, 3, 0], sizes = [16, 16, 8], strides = [1, 1, 1]} : vector<16x20x8xbf16> to vector<16x16x8xbf16>
    %128 = vector.extract_strided_slice %123 {offsets = [0, 4, 0], sizes = [16, 16, 8], strides = [1, 1, 1]} : vector<16x20x8xbf16> to vector<16x16x8xbf16>
    %129 = tpu.concatenate %124, %125, %126, %127, %128 in 2 : vector<16x16x8xbf16>, vector<16x16x8xbf16>, vector<16x16x8xbf16>, vector<16x16x8xbf16>, vector<16x16x8xbf16> -> vector<16x16x40xbf16>
    %130 = vector.shape_cast %129 : vector<16x16x40xbf16> to vector<256x40xbf16>
    %c3_86 = arith.constant 3 : index
    %c0_87 = arith.constant 0 : index
    %c0_88 = arith.constant 0 : index
    %131 = vector.load %arg4[%c3_86, %c0_87, %c0_88] : memref<5x40x8xbf16, #tpu.memory_space<vmem>>, vector<1x40x8xbf16>
    %132 = vector.shape_cast %131 : vector<1x40x8xbf16> to vector<40x8xbf16>
    %cst_89 = arith.constant dense<0.000000e+00> : vector<256x8xf32>
    %133 = tpu.matmul %130, %132, %cst_89 {dimension_numbers = #tpu.dot_dimension_numbers<[1], [0], [0], [1], [0, 0, 1, 1], [], []>} : vector<256x40xbf16>, vector<40x8xbf16>, vector<256x8xf32> -> vector<256x8xf32>
    %134 = arith.addf %122, %133 : vector<256x8xf32>
    %c4_90 = arith.constant 4 : index
    %c0_91 = arith.constant 0 : index
    %c0_92 = arith.constant 0 : index
    %135 = vector.load %arg8[%c4_90, %c0_91, %c0_92] : memref<20x20x8xbf16, #tpu.memory_space<vmem>>, vector<16x20x8xbf16>
    %136 = vector.extract_strided_slice %135 {offsets = [0, 0, 0], sizes = [16, 16, 8], strides = [1, 1, 1]} : vector<16x20x8xbf16> to vector<16x16x8xbf16>
    %137 = vector.extract_strided_slice %135 {offsets = [0, 1, 0], sizes = [16, 16, 8], strides = [1, 1, 1]} : vector<16x20x8xbf16> to vector<16x16x8xbf16>
    %138 = vector.extract_strided_slice %135 {offsets = [0, 2, 0], sizes = [16, 16, 8], strides = [1, 1, 1]} : vector<16x20x8xbf16> to vector<16x16x8xbf16>
    %139 = vector.extract_strided_slice %135 {offsets = [0, 3, 0], sizes = [16, 16, 8], strides = [1, 1, 1]} : vector<16x20x8xbf16> to vector<16x16x8xbf16>
    %140 = vector.extract_strided_slice %135 {offsets = [0, 4, 0], sizes = [16, 16, 8], strides = [1, 1, 1]} : vector<16x20x8xbf16> to vector<16x16x8xbf16>
    %141 = tpu.concatenate %136, %137, %138, %139, %140 in 2 : vector<16x16x8xbf16>, vector<16x16x8xbf16>, vector<16x16x8xbf16>, vector<16x16x8xbf16>, vector<16x16x8xbf16> -> vector<16x16x40xbf16>
    %142 = vector.shape_cast %141 : vector<16x16x40xbf16> to vector<256x40xbf16>
    %c4_93 = arith.constant 4 : index
    %c0_94 = arith.constant 0 : index
    %c0_95 = arith.constant 0 : index
    %143 = vector.load %arg4[%c4_93, %c0_94, %c0_95] : memref<5x40x8xbf16, #tpu.memory_space<vmem>>, vector<1x40x8xbf16>
    %144 = vector.shape_cast %143 : vector<1x40x8xbf16> to vector<40x8xbf16>
    %cst_96 = arith.constant dense<0.000000e+00> : vector<256x8xf32>
    %145 = tpu.matmul %142, %144, %cst_96 {dimension_numbers = #tpu.dot_dimension_numbers<[1], [0], [0], [1], [0, 0, 1, 1], [], []>} : vector<256x40xbf16>, vector<40x8xbf16>, vector<256x8xf32> -> vector<256x8xf32>
    %146 = arith.addf %134, %145 : vector<256x8xf32>
    %147 = vector.shape_cast %146 : vector<256x8xf32> to vector<16x16x8xf32>
    %c0_97 = arith.constant 0 : index
    %c2_98 = arith.constant 2 : index
    %c2_99 = arith.constant 2 : index
    %c0_100 = arith.constant 0 : index
    %148 = vector.load %arg1[%c0_97, %c2_98, %c2_99, %c0_100] : memref<1x20x20x8xf32, #tpu.memory_space<vmem>>, vector<1x16x16x8xf32>
    %149 = vector.shape_cast %148 : vector<1x16x16x8xf32> to vector<16x16x8xf32>
    %150 = arith.addf %149, %147 : vector<16x16x8xf32>
    %c0_101 = arith.constant 0 : index
    %c0_102 = arith.constant 0 : index
    %c0_103 = arith.constant 0 : index
    %c0_104 = arith.constant 0 : index
    %151 = vector.load %arg6[%c0_101, %c0_102, %c0_103, %c0_104] : memref<1x16x16x8xf32, #tpu.memory_space<vmem>>, vector<1x16x16x8xf32>
    %152 = vector.shape_cast %151 : vector<1x16x16x8xf32> to vector<16x16x8xf32>
    %153 = vector.shape_cast %150 : vector<16x16x8xf32> to vector<1x16x16x8xf32>
    tpu.vector_store %arg6[%c0_101, %c0_102, %c0_103, %c0_104], %153 {strides = array<i32>} : memref<1x16x16x8xf32, #tpu.memory_space<vmem>>, vector<1x16x16x8xf32>,
    return
  }
  func.func @transform_0(%arg0: i32) -> (i32, i32, i32, i32) {
    %c0_i32 = arith.constant 0 : i32
    %c0_i32_0 = arith.constant 0 : i32
    %c0_i32_1 = arith.constant 0 : i32
    %c0_i32_2 = arith.constant 0 : i32
    return %arg0, %c0_i32, %c0_i32_0, %c0_i32_1 : i32, i32, i32, i32
  }
  func.func @transform_1(%arg0: i32) -> (i32, i32, i32) {
    %c0_i32 = arith.constant 0 : i32
    %c0_i32_0 = arith.constant 0 : i32
    %c0_i32_1 = arith.constant 0 : i32
    %c0_i32_2 = arith.constant 0 : i32
    return %c0_i32, %c0_i32_0, %c0_i32_1 : i32, i32, i32
  }
  func.func @transform_2(%arg0: i32) -> (i32, i32, i32) {
    %c0_i32 = arith.constant 0 : i32
    %c0_i32_0 = arith.constant 0 : i32
    %c0_i32_1 = arith.constant 0 : i32
    %c0_i32_2 = arith.constant 0 : i32
    return %c0_i32, %c0_i32_0, %c0_i32_1 : i32, i32, i32
  }
  func.func @transform_3(%arg0: i32) -> (i32, i32, i32) {
    %c0_i32 = arith.constant 0 : i32
    %c0_i32_0 = arith.constant 0 : i32
    %c0_i32_1 = arith.constant 0 : i32
    %c0_i32_2 = arith.constant 0 : i32
    return %c0_i32, %c0_i32_0, %c0_i32_1 : i32, i32, i32
  }
  func.func @transform_4(%arg0: i32) -> (i32, i32, i32) {
    %c0_i32 = arith.constant 0 : i32
    %c0_i32_0 = arith.constant 0 : i32
    %c0_i32_1 = arith.constant 0 : i32
    %c0_i32_2 = arith.constant 0 : i32
    return %c0_i32, %c0_i32_0, %c0_i32_1 : i32, i32, i32
  }
  func.func @transform_5(%arg0: i32) -> (i32, i32, i32, i32) {
    %c0_i32 = arith.constant 0 : i32
    %c0_i32_0 = arith.constant 0 : i32
    %c0_i32_1 = arith.constant 0 : i32
    %c0_i32_2 = arith.constant 0 : i32
    return %arg0, %c0_i32, %c0_i32_0, %c0_i32_1 : i32, i32, i32, i32
  }
}

</mosaic_0001>

<llo_original>
// kernel: tpu_custom_call.1
$region0: #{tpu_custom_call.1}
  #allocation0 [shape = 'u32[]', space=smem, size = 0x4, offset = 0x4, fixed_abs, tag = 'smem constant byte address 0x4 - core index']
  #allocation1 [shape = 'u32[144,128]{1,0:T(1,128)}', space=vmem, size = 0x12000, scoped, tag = 'internal scratch']
  #allocation2 [shape = 'bf16[20,20,8]{2,1,0:T(8,128)(2,1)}', space=vmem, size = 0x1e000, scoped, tag = 'scratch operand']
  #allocation3 [shape = 'bf16[20,20,8]{2,1,0:T(8,128)(2,1)}', space=vmem, size = 0x1e000, scoped, tag = 'scratch operand']
  %s0 = inlined_call_operand.vmem [shape: f32[2,20,20,8], index: 0, kind: input, shape index: {}]
  %s1 = inlined_call_operand.vmem [shape: bf16[5,40,8], index: 1, kind: input, shape index: {}]
  %s2 = inlined_call_operand.vmem [shape: f32[1,1,8], index: 2, kind: input, shape index: {}]
  %s3 = inlined_call_operand.vmem [shape: bf16[5,40,8], index: 3, kind: input, shape index: {}]
  %s4 = inlined_call_operand.vmem [shape: f32[1,1,8], index: 4, kind: input, shape index: {}]
  %s5 = inlined_call_operand.vmem [shape: f32[2,16,16,8], index: 5, kind: output, shape index: {}]
  %s6 = sld [smem:[#allocation0]]
  $region53: #{tpu_custom_call.1} parent=0
    _
  %s8 = ssub.s32 1, %s6
  %s9 = scalar_select 0, %s8, %s6
  loop: start=0, step=1, limit=4
  $region2: #{tpu_custom_call.1} parent=0 // loop_pre_header
    _
  $region3: #{tpu_custom_call.1} parent=0 // loop_header
    %s11 = sphi 0, %s15
    %p12 = scmp.ge.s32.totalorder %s11, 4
    %s21 = sphi 0, %s23
    %s24 = sphi 0, %s21
    %s25 = sphi 0, %s24
    %s41 = sphi 0, %s25
    %s45 = sphi 0, %s45
    %s47 = sphi 0, %s45
    %s48 = sphi 0, %s47
    %s62 = sphi 0, %s48
    %s66 = sphi 0, %s66
    %s68 = sphi 0, %s66
    %s69 = sphi 0, %s68
    %s83 = sphi 0, %s69
    %s87 = sphi 0, %s87
    %s89 = sphi 0, %s87
    %s90 = sphi 0, %s89
    %s104 = sphi 0, %s90
    %s108 = sphi 0, %s108
    %s110 = sphi 0, %s108
    %s111 = sphi 0, %s110
    %s125 = sphi 0, %s111
    %s131 = sphi 0, %s133
    %s134 = sphi 0, %s131
    %s135 = sphi 0, %s134
    %s151 = sphi 0, %s135
  $region4: #{tpu_custom_call.1} parent=0 // loop_header_branch
    %14 = sbr.rel (%p12) target = $region8
  $region5: #{tpu_custom_call.1} parent=0 // loop_body
    %s16 = ssub.s32 %s11, 1
    %s17 = ssub.s32 %s11, 2
    %s18 = sadd.s32 %s11, 1
    %s19 = ssub.s32 %s11, %s18
    %p20 = scmp.eq.s32.totalorder %s19, 0
    %s22 = sadd.s32 %s21, 1
    %s23 = scalar_select %p20, %s21, %s22
    %p26 = pneg %p20
    %p27 = scmp.eq.s32.totalorder %s11, 1
    %p28 = por %p26, %p27
    %p29 = scmp.ne.s32.totalorder %s21, %s24
    %p30 = scmp.eq.s32.totalorder %s11, 0
    %p31 = por %p29, %p30
    %p32 = scmp.ne.s32.totalorder %s21, %s24
    %p33 = scmp.eq.s32.totalorder %s16, 1
    %p34 = por %p32, %p33
    %p35 = scmp.ne.s32.totalorder %s24, %s25
    %p36 = scmp.eq.s32.totalorder %s16, 0
    %p37 = por %p35, %p36
    %p38 = scmp.ne.s32.totalorder %s24, %s25
    %p39 = scmp.eq.s32.totalorder %s17, 1
    %p40 = por %p38, %p39
    %p42 = scmp.ne.s32.totalorder %s25, %s41
    %p43 = scmp.eq.s32.totalorder %s17, 0
    %p44 = por %p42, %p43
    %s46 = sadd.s32 %s45, 1
    %p49 = scmp.eq.s32.totalorder %s11, 1
    %p50 = scmp.ne.s32.totalorder %s45, %s47
    %p51 = scmp.eq.s32.totalorder %s11, 0
    %p52 = por %p50, %p51
    %p53 = scmp.ne.s32.totalorder %s45, %s47
    %p54 = scmp.eq.s32.totalorder %s16, 1
    %p55 = por %p53, %p54
    %p56 = scmp.ne.s32.totalorder %s47, %s48
    %p57 = scmp.eq.s32.totalorder %s16, 0
    %p58 = por %p56, %p57
    %p59 = scmp.ne.s32.totalorder %s47, %s48
    %p60 = scmp.eq.s32.totalorder %s17, 1
    %p61 = por %p59, %p60
    %p63 = scmp.ne.s32.totalorder %s48, %s62
    %p64 = scmp.eq.s32.totalorder %s17, 0
    %p65 = por %p63, %p64
    %s67 = sadd.s32 %s66, 1
    %p70 = scmp.eq.s32.totalorder %s11, 1
    %p71 = scmp.ne.s32.totalorder %s66, %s68
    %p72 = scmp.eq.s32.totalorder %s11, 0
    %p73 = por %p71, %p72
    %p74 = scmp.ne.s32.totalorder %s66, %s68
    %p75 = scmp.eq.s32.totalorder %s16, 1
    %p76 = por %p74, %p75
    %p77 = scmp.ne.s32.totalorder %s68, %s69
    %p78 = scmp.eq.s32.totalorder %s16, 0
    %p79 = por %p77, %p78
    %p80 = scmp.ne.s32.totalorder %s68, %s69
    %p81 = scmp.eq.s32.totalorder %s17, 1
    %p82 = por %p80, %p81
    %p84 = scmp.ne.s32.totalorder %s69, %s83
    %p85 = scmp.eq.s32.totalorder %s17, 0
    %p86 = por %p84, %p85
    %s88 = sadd.s32 %s87, 1
    %p91 = scmp.eq.s32.totalorder %s11, 1
    %p92 = scmp.ne.s32.totalorder %s87, %s89
    %p93 = scmp.eq.s32.totalorder %s11, 0
    %p94 = por %p92, %p93
    %p95 = scmp.ne.s32.totalorder %s87, %s89
    %p96 = scmp.eq.s32.totalorder %s16, 1
    %p97 = por %p95, %p96
    %p98 = scmp.ne.s32.totalorder %s89, %s90
    %p99 = scmp.eq.s32.totalorder %s16, 0
    %p100 = por %p98, %p99
    %p101 = scmp.ne.s32.totalorder %s89, %s90
    %p102 = scmp.eq.s32.totalorder %s17, 1
    %p103 = por %p101, %p102
    %p105 = scmp.ne.s32.totalorder %s90, %s104
    %p106 = scmp.eq.s32.totalorder %s17, 0
    %p107 = por %p105, %p106
    %s109 = sadd.s32 %s108, 1
    %p112 = scmp.eq.s32.totalorder %s11, 1
    %p113 = scmp.ne.s32.totalorder %s108, %s110
    %p114 = scmp.eq.s32.totalorder %s11, 0
    %p115 = por %p113, %p114
    %p116 = scmp.ne.s32.totalorder %s108, %s110
    %p117 = scmp.eq.s32.totalorder %s16, 1
    %p118 = por %p116, %p117
    %p119 = scmp.ne.s32.totalorder %s110, %s111
    %p120 = scmp.eq.s32.totalorder %s16, 0
    %p121 = por %p119, %p120
    %p122 = scmp.ne.s32.totalorder %s110, %s111
    %p123 = scmp.eq.s32.totalorder %s17, 1
    %p124 = por %p122, %p123
    %p126 = scmp.ne.s32.totalorder %s111, %s125
    %p127 = scmp.eq.s32.totalorder %s17, 0
    %p128 = por %p126, %p127
    %s129 = ssub.s32 %s11, %s18
    %p130 = scmp.eq.s32.totalorder %s129, 0
    %s132 = sadd.s32 %s131, 1
    %s133 = scalar_select %p130, %s131, %s132
    %p136 = pneg %p130
    %p137 = scmp.eq.s32.totalorder %s11, 1
    %p138 = por %p136, %p137
    %p139 = scmp.ne.s32.totalorder %s131, %s134
    %p140 = scmp.eq.s32.totalorder %s11, 0
    %p141 = por %p139, %p140
    %p142 = scmp.ne.s32.totalorder %s131, %s134
    %p143 = scmp.eq.s32.totalorder %s16, 1
    %p144 = por %p142, %p143
    %p145 = scmp.ne.s32.totalorder %s134, %s135
    %p146 = scmp.eq.s32.totalorder %s16, 0
    %p147 = por %p145, %p146
    %p148 = scmp.ne.s32.totalorder %s134, %s135
    %p149 = scmp.eq.s32.totalorder %s17, 1
    %p150 = por %p148, %p149
    %p152 = scmp.ne.s32.totalorder %s135, %s151
    %p153 = scmp.eq.s32.totalorder %s17, 0
    %p154 = por %p152, %p153
    %p155 = scmp.le.s32.totalorder 1, %s11
    %p156 = scmp.lt.s32.totalorder %s11, 3
    %p157 = pnand %p155, %p156
    %p158 = pneg %p157
    // Predicated region
    $region9: #{tpu_custom_call.1} parent=5 // pred_check
      _
    $region10: #{tpu_custom_call.1} parent=5 // pred_check_branch
      %160 = sbr.rel (%p157) target = $region12
    $region11: #{tpu_custom_call.1} parent=5 // pred_region
      %s161 = ssub.s32 %s11, 1
      // Predicated region
      $region13: #{tpu_custom_call.1} parent=11 // pred_check
        %p162 = pneg %p58
      $region14: #{tpu_custom_call.1} parent=11 // pred_check_branch
        %164 = sbr.rel (%p162) target = $region16
      $region15: #{tpu_custom_call.1} parent=11 // pred_region
        _
      $region16: #{tpu_custom_call.1} parent=11 // pred_fallthru
        _
      // Predicated region
      $region17: #{tpu_custom_call.1} parent=11 // pred_check
        %p165 = pneg %p79
      $region18: #{tpu_custom_call.1} parent=11 // pred_check_branch
        %167 = sbr.rel (%p165) target = $region20
      $region19: #{tpu_custom_call.1} parent=11 // pred_region
        _
      $region20: #{tpu_custom_call.1} parent=11 // pred_fallthru
        _
      // Predicated region
      $region21: #{tpu_custom_call.1} parent=11 // pred_check
        %p168 = pneg %p100
      $region22: #{tpu_custom_call.1} parent=11 // pred_check_branch
        %170 = sbr.rel (%p168) target = $region24
      $region23: #{tpu_custom_call.1} parent=11 // pred_region
        _
      $region24: #{tpu_custom_call.1} parent=11 // pred_fallthru
        _
      // Predicated region
      $region25: #{tpu_custom_call.1} parent=11 // pred_check
        %p171 = pneg %p121
      $region26: #{tpu_custom_call.1} parent=11 // pred_check_branch
        %173 = sbr.rel (%p171) target = $region28
      $region27: #{tpu_custom_call.1} parent=11 // pred_region
        _
      $region28: #{tpu_custom_call.1} parent=11 // pred_fallthru
        _
    $region12: #{tpu_custom_call.1} parent=5 // pred_fallthru
      _
    %p174 = scmp.lt.s32.totalorder %s11, 2
    // Predicated region
    $region29: #{tpu_custom_call.1} parent=5 // pred_check
      %p175 = pneg %p174
    $region30: #{tpu_custom_call.1} parent=5 // pred_check_branch
      %177 = sbr.rel (%p175) target = $region32
    $region31: #{tpu_custom_call.1} parent=5 // pred_region
      // Predicated region
      $region33: #{tpu_custom_call.1} parent=31 // pred_check
        %p178 = pneg %p31
      $region34: #{tpu_custom_call.1} parent=31 // pred_check_branch
        %180 = sbr.rel (%p178) target = $region36
      $region35: #{tpu_custom_call.1} parent=31 // pred_region
        %p181 = scmp.lt.s32.totalorder %s11, 1
        %s182 = scalar_select %p181, %s11, 1
        %s183 = smul.addr %s182, 60
        %s184 = smul.addr %s183, 8
        %s185 = scalar_lea.vmem %s0, %s184
      $region36: #{tpu_custom_call.1} parent=31 // pred_fallthru
        _
    $region32: #{tpu_custom_call.1} parent=5 // pred_fallthru
      _
    %p186 = scmp.le.s32.totalorder 1, %s11
    %p187 = scmp.lt.s32.totalorder %s11, 3
    %p188 = pnand %p186, %p187
    %p189 = pneg %p188
    // Predicated region
    $region37: #{tpu_custom_call.1} parent=5 // pred_check
      _
    $region38: #{tpu_custom_call.1} parent=5 // pred_check_branch
      %191 = sbr.rel (%p188) target = $region40
    $region39: #{tpu_custom_call.1} parent=5 // pred_region
      %s192 = ssub.s32 %s11, 1
      %p193 = scmp.lt.s32.totalorder %s16, 1
      %s194 = scalar_select %p193, %s16, 1
      %s195 = smul.addr %s194, 60
      %s196 = smul.addr %s195, 8
      %s197 = scalar_lea.vmem %s0, %s196
      %p198 = pneg %p37
      %p199 = pneg %p34
      %p200 = pneg %p58
      %p201 = pneg %p55
      %p202 = pneg %p79
      %p203 = pneg %p76
      %p204 = pneg %p100
      %p205 = pneg %p97
      %p206 = pneg %p121
      %p207 = pneg %p118
      %p208 = pneg %p147
      %p209 = pneg %p144
      %p210 = scmp.lt.s32.totalorder %s16, 1
      %s211 = scalar_select %p210, %s16, 1
      %s212 = smul.addr %s211, 32
      %s213 = smul.addr %s212, 8
      %s214 = scalar_lea.vmem %s5, %s213
      %p215 = scmp.lt.s32.totalorder %s16, 1
      %s216 = scalar_select %p215, %s16, 1
      %s217 = smul.addr %s216, 60
      %s218 = smul.addr %s217, 8
      %s219 = scalar_lea.vmem %s0, %s218
      %p220 = scmp.lt.s32.totalorder %s16, 1
      %s221 = scalar_select %p220, %s16, 1
      %s222 = smul.addr %s221, 32
      %s223 = smul.addr %s222, 8
      %s224 = scalar_lea.vmem %s5, %s223
      %v226 = vld [vmem:[%s219] sm:$0xff]
      %v227 = vld [vmem:[%s219 + $0x8] sm:$0xff]
      %v228 = vld [vmem:[%s219 + $0x10] sm:$0xf]
      %v229 = vld [vmem:[%s219 + $0x18] sm:$0xff]
      %v230 = vld [vmem:[%s219 + $0x20] sm:$0xff]
      %v231 = vld [vmem:[%s219 + $0x28] sm:$0xf]
      %v232 = vld [vmem:[%s219 + $0x30] sm:$0xff]
      %v233 = vld [vmem:[%s219 + $0x38] sm:$0xff]
      %v234 = vld [vmem:[%s219 + $0x40] sm:$0xf]
      %v235 = vld [vmem:[%s219 + $0x48] sm:$0xff]
      %v236 = vld [vmem:[%s219 + $0x50] sm:$0xff]
      %v237 = vld [vmem:[%s219 + $0x58] sm:$0xf]
      %v238 = vld [vmem:[%s219 + $0x60] sm:$0xff]
      %v239 = vld [vmem:[%s219 + $0x68] sm:$0xff]
      %v240 = vld [vmem:[%s219 + $0x70] sm:$0xf]
      %v241 = vld [vmem:[%s219 + $0x78] sm:$0xff]
      %v242 = vld [vmem:[%s219 + $0x80] sm:$0xff]
      %v243 = vld [vmem:[%s219 + $0x88] sm:$0xf]
      %v244 = vld [vmem:[%s219 + $0x90] sm:$0xff]
      %v245 = vld [vmem:[%s219 + $0x98] sm:$0xff]
      %v246 = vld [vmem:[%s219 + $0xa0] sm:$0xf]
      %v247 = vld [vmem:[%s219 + $0xa8] sm:$0xff]
      %v248 = vld [vmem:[%s219 + $0xb0] sm:$0xff]
      %v249 = vld [vmem:[%s219 + $0xb8] sm:$0xf]
      %v250 = vld [vmem:[%s219 + $0xc0] sm:$0xff]
      %v251 = vld [vmem:[%s219 + $0xc8] sm:$0xff]
      %v252 = vld [vmem:[%s219 + $0xd0] sm:$0xf]
      %v253 = vld [vmem:[%s219 + $0xd8] sm:$0xff]
      %v254 = vld [vmem:[%s219 + $0xe0] sm:$0xff]
      %v255 = vld [vmem:[%s219 + $0xe8] sm:$0xf]
      %v256 = vld [vmem:[%s219 + $0xf0] sm:$0xff]
      %v257 = vld [vmem:[%s219 + $0xf8] sm:$0xff]
      %v258 = vld [vmem:[%s219 + $0x100] sm:$0xf]
      %v259 = vld [vmem:[%s219 + $0x108] sm:$0xff]
      %v260 = vld [vmem:[%s219 + $0x110] sm:$0xff]
      %v261 = vld [vmem:[%s219 + $0x118] sm:$0xf]
      %v262 = vld [vmem:[%s219 + $0x120] sm:$0xff]
      %v263 = vld [vmem:[%s219 + $0x128] sm:$0xff]
      %v264 = vld [vmem:[%s219 + $0x130] sm:$0xf]
      %v265 = vld [vmem:[%s219 + $0x138] sm:$0xff]
      %v266 = vld [vmem:[%s219 + $0x140] sm:$0xff]
      %v267 = vld [vmem:[%s219 + $0x148] sm:$0xf]
      %v268 = vld [vmem:[%s219 + $0x150] sm:$0xff]
      %v269 = vld [vmem:[%s219 + $0x158] sm:$0xff]
      %v270 = vld [vmem:[%s219 + $0x160] sm:$0xf]
      %v271 = vld [vmem:[%s219 + $0x168] sm:$0xff]
      %v272 = vld [vmem:[%s219 + $0x170] sm:$0xff]
      %v273 = vld [vmem:[%s219 + $0x178] sm:$0xf]
      %v274 = vld [vmem:[%s219 + $0x180] sm:$0xff]
      %v275 = vld [vmem:[%s219 + $0x188] sm:$0xff]
      %v276 = vld [vmem:[%s219 + $0x190] sm:$0xf]
      %v277 = vld [vmem:[%s219 + $0x198] sm:$0xff]
      %v278 = vld [vmem:[%s219 + $0x1a0] sm:$0xff]
      %v279 = vld [vmem:[%s219 + $0x1a8] sm:$0xf]
      %v280 = vld [vmem:[%s219 + $0x1b0] sm:$0xff]
      %v281 = vld [vmem:[%s219 + $0x1b8] sm:$0xff]
      %v282 = vld [vmem:[%s219 + $0x1c0] sm:$0xf]
      %v283 = vld [vmem:[%s219 + $0x1c8] sm:$0xff]
      %v284 = vld [vmem:[%s219 + $0x1d0] sm:$0xff]
      %v285 = vld [vmem:[%s219 + $0x1d8] sm:$0xf]
      %v286 = vmax.f32 %v226, 0.0
      %v287 = vmax.f32 %v227, 0.0
      %v288 = vmax.f32 %v228, 0.0
      %v289 = vmax.f32 %v229, 0.0
      %v290 = vmax.f32 %v230, 0.0
      %v291 = vmax.f32 %v231, 0.0
      %v292 = vmax.f32 %v232, 0.0
      %v293 = vmax.f32 %v233, 0.0
      %v294 = vmax.f32 %v234, 0.0
      %v295 = vmax.f32 %v235, 0.0
      %v296 = vmax.f32 %v236, 0.0
      %v297 = vmax.f32 %v237, 0.0
      %v298 = vmax.f32 %v238, 0.0
      %v299 = vmax.f32 %v239, 0.0
      %v300 = vmax.f32 %v240, 0.0
      %v301 = vmax.f32 %v241, 0.0
      %v302 = vmax.f32 %v242, 0.0
      %v303 = vmax.f32 %v243, 0.0
      %v304 = vmax.f32 %v244, 0.0
      %v305 = vmax.f32 %v245, 0.0
      %v306 = vmax.f32 %v246, 0.0
      %v307 = vmax.f32 %v247, 0.0
      %v308 = vmax.f32 %v248, 0.0
      %v309 = vmax.f32 %v249, 0.0
      %v310 = vmax.f32 %v250, 0.0
      %v311 = vmax.f32 %v251, 0.0
      %v312 = vmax.f32 %v252, 0.0
      %v313 = vmax.f32 %v253, 0.0
      %v314 = vmax.f32 %v254, 0.0
      %v315 = vmax.f32 %v255, 0.0
      %v316 = vmax.f32 %v256, 0.0
      %v317 = vmax.f32 %v257, 0.0
      %v318 = vmax.f32 %v258, 0.0
      %v319 = vmax.f32 %v259, 0.0
      %v320 = vmax.f32 %v260, 0.0
      %v321 = vmax.f32 %v261, 0.0
      %v322 = vmax.f32 %v262, 0.0
      %v323 = vmax.f32 %v263, 0.0
      %v324 = vmax.f32 %v264, 0.0
      %v325 = vmax.f32 %v265, 0.0
      %v326 = vmax.f32 %v266, 0.0
      %v327 = vmax.f32 %v267, 0.0
      %v328 = vmax.f32 %v268, 0.0
      %v329 = vmax.f32 %v269, 0.0
      %v330 = vmax.f32 %v270, 0.0
      %v331 = vmax.f32 %v271, 0.0
      %v332 = vmax.f32 %v272, 0.0
      %v333 = vmax.f32 %v273, 0.0
      %v334 = vmax.f32 %v274, 0.0
      %v335 = vmax.f32 %v275, 0.0
      %v336 = vmax.f32 %v276, 0.0
      %v337 = vmax.f32 %v277, 0.0
      %v338 = vmax.f32 %v278, 0.0
      %v339 = vmax.f32 %v279, 0.0
      %v340 = vmax.f32 %v280, 0.0
      %v341 = vmax.f32 %v281, 0.0
      %v342 = vmax.f32 %v282, 0.0
      %v343 = vmax.f32 %v283, 0.0
      %v344 = vmax.f32 %v284, 0.0
      %v345 = vmax.f32 %v285, 0.0
      %v346 = vpack.c.bf16 %v287, %v286
      %v347 = vpack.c.bf16 %v288, %v288
      %v348 = vpack.c.bf16 %v290, %v289
      %v349 = vpack.c.bf16 %v291, %v291
      %v350 = vpack.c.bf16 %v293, %v292
      %v351 = vpack.c.bf16 %v294, %v294
      %v352 = vpack.c.bf16 %v296, %v295
      %v353 = vpack.c.bf16 %v297, %v297
      %v354 = vpack.c.bf16 %v299, %v298
      %v355 = vpack.c.bf16 %v300, %v300
      %v356 = vpack.c.bf16 %v302, %v301
      %v357 = vpack.c.bf16 %v303, %v303
      %v358 = vpack.c.bf16 %v305, %v304
      %v359 = vpack.c.bf16 %v306, %v306
      %v360 = vpack.c.bf16 %v308, %v307
      %v361 = vpack.c.bf16 %v309, %v309
      %v362 = vpack.c.bf16 %v311, %v310
      %v363 = vpack.c.bf16 %v312, %v312
      %v364 = vpack.c.bf16 %v314, %v313
      %v365 = vpack.c.bf16 %v315, %v315
      %v366 = vpack.c.bf16 %v317, %v316
      %v367 = vpack.c.bf16 %v318, %v318
      %v368 = vpack.c.bf16 %v320, %v319
      %v369 = vpack.c.bf16 %v321, %v321
      %v370 = vpack.c.bf16 %v323, %v322
      %v371 = vpack.c.bf16 %v324, %v324
      %v372 = vpack.c.bf16 %v326, %v325
      %v373 = vpack.c.bf16 %v327, %v327
      %v374 = vpack.c.bf16 %v329, %v328
      %v375 = vpack.c.bf16 %v330, %v330
      %v376 = vpack.c.bf16 %v332, %v331
      %v377 = vpack.c.bf16 %v333, %v333
      %v378 = vpack.c.bf16 %v335, %v334
      %v379 = vpack.c.bf16 %v336, %v336
      %v380 = vpack.c.bf16 %v338, %v337
      %v381 = vpack.c.bf16 %v339, %v339
      %v382 = vpack.c.bf16 %v341, %v340
      %v383 = vpack.c.bf16 %v342, %v342
      %v384 = vpack.c.bf16 %v344, %v343
      %v385 = vpack.c.bf16 %v345, %v345
      %v426 = vunpack.c.l.b16 %v346
      %v427 = vunpack.c.h.b16 %v346
      %v428 = vunpack.c.l.b16 %v347
      %v429 = vunpack.c.l.b16 %v348
      %v430 = vunpack.c.h.b16 %v348
      %v431 = vunpack.c.l.b16 %v349
      %v432 = vunpack.c.l.b16 %v350
      %v433 = vunpack.c.h.b16 %v350
      %v434 = vunpack.c.l.b16 %v351
      %v435 = vunpack.c.l.b16 %v352
      %v436 = vunpack.c.h.b16 %v352
      %v437 = vunpack.c.l.b16 %v353
      %v438 = vunpack.c.l.b16 %v354
      %v439 = vunpack.c.h.b16 %v354
      %v440 = vunpack.c.l.b16 %v355
      %v441 = vunpack.c.l.b16 %v356
      %v442 = vunpack.c.h.b16 %v356
      %v443 = vunpack.c.l.b16 %v357
      %v444 = vunpack.c.l.b16 %v358
      %v445 = vunpack.c.h.b16 %v358
      %v446 = vunpack.c.l.b16 %v359
      %v447 = vunpack.c.l.b16 %v360
      %v448 = vunpack.c.h.b16 %v360
      %v449 = vunpack.c.l.b16 %v361
      %v450 = vunpack.c.l.b16 %v362
      %v451 = vunpack.c.h.b16 %v362
      %v452 = vunpack.c.l.b16 %v363
      %v453 = vunpack.c.l.b16 %v364
      %v454 = vunpack.c.h.b16 %v364
      %v455 = vunpack.c.l.b16 %v365
      %v456 = vunpack.c.l.b16 %v366
      %v457 = vunpack.c.h.b16 %v366
      %v458 = vunpack.c.l.b16 %v367
      %v459 = vunpack.c.l.b16 %v368
      %v460 = vunpack.c.h.b16 %v368
      %v461 = vunpack.c.l.b16 %v369
      %v462 = vunpack.c.l.b16 %v370
      %v463 = vunpack.c.h.b16 %v370
      %v464 = vunpack.c.l.b16 %v371
      %v465 = vunpack.c.l.b16 %v372
      %v466 = vunpack.c.h.b16 %v372
      %v467 = vunpack.c.l.b16 %v373
      %v468 = vunpack.c.l.b16 %v374
      %v469 = vunpack.c.h.b16 %v374
      %v470 = vunpack.c.l.b16 %v375
      %v471 = vunpack.c.l.b16 %v376
      %v472 = vunpack.c.h.b16 %v376
      %v473 = vunpack.c.l.b16 %v377
      %v474 = vunpack.c.l.b16 %v378
      %v475 = vunpack.c.h.b16 %v378
      %v476 = vunpack.c.l.b16 %v379
      %v477 = vunpack.c.l.b16 %v380
      %v478 = vunpack.c.h.b16 %v380
      %v479 = vunpack.c.l.b16 %v381
      %v480 = vunpack.c.l.b16 %v382
      %v481 = vunpack.c.h.b16 %v382
      %v482 = vunpack.c.l.b16 %v383
      %v483 = vunpack.c.l.b16 %v384
      %v484 = vunpack.c.h.b16 %v384
      %v485 = vunpack.c.l.b16 %v385
      %v486 = vpack.c.b16 %v426, %v426
      %v487 = vpack.c.b16 %v427, %v427
      %v488 = vpack.c.b16 %v428, %v428
      %v489 = vpack.c.b16 %v429, %v429
      %v490 = vpack.c.b16 %v430, %v430
      %v491 = vpack.c.b16 %v431, %v431
      %v492 = vpack.c.b16 %v432, %v432
      %v493 = vpack.c.b16 %v433, %v433
      %v494 = vpack.c.b16 %v434, %v434
      %v495 = vpack.c.b16 %v435, %v435
      %v496 = vpack.c.b16 %v436, %v436
      %v497 = vpack.c.b16 %v437, %v437
      %v498 = vpack.c.b16 %v438, %v438
      %v499 = vpack.c.b16 %v439, %v439
      %v500 = vpack.c.b16 %v440, %v440
      %v501 = vpack.c.b16 %v441, %v441
      %v502 = vpack.c.b16 %v442, %v442
      %v503 = vpack.c.b16 %v443, %v443
      %v504 = vpack.c.b16 %v444, %v444
      %v505 = vpack.c.b16 %v445, %v445
      %v506 = vpack.c.b16 %v446, %v446
      %v507 = vpack.c.b16 %v447, %v447
      %v508 = vpack.c.b16 %v448, %v448
      %v509 = vpack.c.b16 %v449, %v449
      %v510 = vpack.c.b16 %v450, %v450
      %v511 = vpack.c.b16 %v451, %v451
      %v512 = vpack.c.b16 %v452, %v452
      %v513 = vpack.c.b16 %v453, %v453
      %v514 = vpack.c.b16 %v454, %v454
      %v515 = vpack.c.b16 %v455, %v455
      %v516 = vpack.c.b16 %v456, %v456
      %v517 = vpack.c.b16 %v457, %v457
      %v518 = vpack.c.b16 %v458, %v458
      %v519 = vpack.c.b16 %v459, %v459
      %v520 = vpack.c.b16 %v460, %v460
      %v521 = vpack.c.b16 %v461, %v461
      %v522 = vpack.c.b16 %v462, %v462
      %v523 = vpack.c.b16 %v463, %v463
      %v524 = vpack.c.b16 %v464, %v464
      %v525 = vpack.c.b16 %v465, %v465
      %v526 = vpack.c.b16 %v466, %v466
      %v527 = vpack.c.b16 %v467, %v467
      %v528 = vpack.c.b16 %v468, %v468
      %v529 = vpack.c.b16 %v469, %v469
      %v530 = vpack.c.b16 %v470, %v470
      %v531 = vpack.c.b16 %v471, %v471
      %v532 = vpack.c.b16 %v472, %v472
      %v533 = vpack.c.b16 %v473, %v473
      %v534 = vpack.c.b16 %v474, %v474
      %v535 = vpack.c.b16 %v475, %v475
      %v536 = vpack.c.b16 %v476, %v476
      %v537 = vpack.c.b16 %v477, %v477
      %v538 = vpack.c.b16 %v478, %v478
      %v539 = vpack.c.b16 %v479, %v479
      %v540 = vpack.c.b16 %v480, %v480
      %v541 = vpack.c.b16 %v481, %v481
      %v542 = vpack.c.b16 %v482, %v482
      %v543 = vpack.c.b16 %v483, %v483
      %v544 = vpack.c.b16 %v484, %v484
      %v545 = vpack.c.b16 %v485, %v485
      %vm606 = vcmask 60416
      %607 = vst.msk [vmem:[#allocation2] sm:$0xf] %vm606, %v486
      %608 = vst.msk [vmem:[#allocation2 + $0x4] sm:$0xf] %vm606, %v487
      %vm609 = vcmask 58368
      %610 = vst.msk [vmem:[#allocation2 + $0x8] sm:$0x3] %vm609, %v488
      %611 = vst.msk [vmem:[#allocation2 + $0xc] sm:$0xf] %vm606, %v489
      %612 = vst.msk [vmem:[#allocation2 + $0x10] sm:$0xf] %vm606, %v490
      %613 = vst.msk [vmem:[#allocation2 + $0x14] sm:$0x3] %vm609, %v491
      %614 = vst.msk [vmem:[#allocation2 + $0x18] sm:$0xf] %vm606, %v492
      %615 = vst.msk [vmem:[#allocation2 + $0x1c] sm:$0xf] %vm606, %v493
      %616 = vst.msk [vmem:[#allocation2 + $0x20] sm:$0x3] %vm609, %v494
      %617 = vst.msk [vmem:[#allocation2 + $0x24] sm:$0xf] %vm606, %v495
      %618 = vst.msk [vmem:[#allocation2 + $0x28] sm:$0xf] %vm606, %v496
      %619 = vst.msk [vmem:[#allocation2 + $0x2c] sm:$0x3] %vm609, %v497
      %620 = vst.msk [vmem:[#allocation2 + $0x30] sm:$0xf] %vm606, %v498
      %621 = vst.msk [vmem:[#allocation2 + $0x34] sm:$0xf] %vm606, %v499
      %622 = vst.msk [vmem:[#allocation2 + $0x38] sm:$0x3] %vm609, %v500
      %623 = vst.msk [vmem:[#allocation2 + $0x3c] sm:$0xf] %vm606, %v501
      %624 = vst.msk [vmem:[#allocation2 + $0x40] sm:$0xf] %vm606, %v502
      %625 = vst.msk [vmem:[#allocation2 + $0x44] sm:$0x3] %vm609, %v503
      %626 = vst.msk [vmem:[#allocation2 + $0x48] sm:$0xf] %vm606, %v504
      %627 = vst.msk [vmem:[#allocation2 + $0x4c] sm:$0xf] %vm606, %v505
      %628 = vst.msk [vmem:[#allocation2 + $0x50] sm:$0x3] %vm609, %v506
      %629 = vst.msk [vmem:[#allocation2 + $0x54] sm:$0xf] %vm606, %v507
      %630 = vst.msk [vmem:[#allocation2 + $0x58] sm:$0xf] %vm606, %v508
      %631 = vst.msk [vmem:[#allocation2 + $0x5c] sm:$0x3] %vm609, %v509
      %632 = vst.msk [vmem:[#allocation2 + $0x60] sm:$0xf] %vm606, %v510
      %633 = vst.msk [vmem:[#allocation2 + $0x64] sm:$0xf] %vm606, %v511
      %634 = vst.msk [vmem:[#allocation2 + $0x68] sm:$0x3] %vm609, %v512
      %635 = vst.msk [vmem:[#allocation2 + $0x6c] sm:$0xf] %vm606, %v513
      %636 = vst.msk [vmem:[#allocation2 + $0x70] sm:$0xf] %vm606, %v514
      %637 = vst.msk [vmem:[#allocation2 + $0x74] sm:$0x3] %vm609, %v515
      %638 = vst.msk [vmem:[#allocation2 + $0x78] sm:$0xf] %vm606, %v516
      %639 = vst.msk [vmem:[#allocation2 + $0x7c] sm:$0xf] %vm606, %v517
      %640 = vst.msk [vmem:[#allocation2 + $0x80] sm:$0x3] %vm609, %v518
      %641 = vst.msk [vmem:[#allocation2 + $0x84] sm:$0xf] %vm606, %v519
      %642 = vst.msk [vmem:[#allocation2 + $0x88] sm:$0xf] %vm606, %v520
      %643 = vst.msk [vmem:[#allocation2 + $0x8c] sm:$0x3] %vm609, %v521
      %644 = vst.msk [vmem:[#allocation2 + $0x90] sm:$0xf] %vm606, %v522
      %645 = vst.msk [vmem:[#allocation2 + $0x94] sm:$0xf] %vm606, %v523
      %646 = vst.msk [vmem:[#allocation2 + $0x98] sm:$0x3] %vm609, %v524
      %647 = vst.msk [vmem:[#allocation2 + $0x9c] sm:$0xf] %vm606, %v525
      %648 = vst.msk [vmem:[#allocation2 + $0xa0] sm:$0xf] %vm606, %v526
      %649 = vst.msk [vmem:[#allocation2 + $0xa4] sm:$0x3] %vm609, %v527
      %650 = vst.msk [vmem:[#allocation2 + $0xa8] sm:$0xf] %vm606, %v528
      %651 = vst.msk [vmem:[#allocation2 + $0xac] sm:$0xf] %vm606, %v529
      %652 = vst.msk [vmem:[#allocation2 + $0xb0] sm:$0x3] %vm609, %v530
      %653 = vst.msk [vmem:[#allocation2 + $0xb4] sm:$0xf] %vm606, %v531
      %654 = vst.msk [vmem:[#allocation2 + $0xb8] sm:$0xf] %vm606, %v532
      %655 = vst.msk [vmem:[#allocation2 + $0xbc] sm:$0x3] %vm609, %v533
      %656 = vst.msk [vmem:[#allocation2 + $0xc0] sm:$0xf] %vm606, %v534
      %657 = vst.msk [vmem:[#allocation2 + $0xc4] sm:$0xf] %vm606, %v535
      %658 = vst.msk [vmem:[#allocation2 + $0xc8] sm:$0x3] %vm609, %v536
      %659 = vst.msk [vmem:[#allocation2 + $0xcc] sm:$0xf] %vm606, %v537
      %660 = vst.msk [vmem:[#allocation2 + $0xd0] sm:$0xf] %vm606, %v538
      %661 = vst.msk [vmem:[#allocation2 + $0xd4] sm:$0x3] %vm609, %v539
      %662 = vst.msk [vmem:[#allocation2 + $0xd8] sm:$0xf] %vm606, %v540
      %663 = vst.msk [vmem:[#allocation2 + $0xdc] sm:$0xf] %vm606, %v541
      %664 = vst.msk [vmem:[#allocation2 + $0xe0] sm:$0x3] %vm609, %v542
      %665 = vst.msk [vmem:[#allocation2 + $0xe4] sm:$0xf] %vm606, %v543
      %666 = vst.msk [vmem:[#allocation2 + $0xe8] sm:$0xf] %vm606, %v544
      %667 = vst.msk [vmem:[#allocation2 + $0xec] sm:$0x3] %vm609, %v545
      %668 = vst.msk [vmem:[#allocation3] sm:$0xf] %vm606, 0
      %669 = vst.msk [vmem:[#allocation3 + $0x4] sm:$0xf] %vm606, 0
      %670 = vst.msk [vmem:[#allocation3 + $0x8] sm:$0x3] %vm609, 0
      %671 = vst.msk [vmem:[#allocation3 + $0xc] sm:$0xf] %vm606, 0
      %672 = vst.msk [vmem:[#allocation3 + $0x10] sm:$0xf] %vm606, 0
      %673 = vst.msk [vmem:[#allocation3 + $0x14] sm:$0x3] %vm609, 0
      %s674 = scalar_lea.vmem [#allocation3], 216
      %675 = vst.msk [vmem:[%s674] sm:$0xf] %vm606, 0
      %676 = vst.msk [vmem:[%s674 + $0x4] sm:$0xf] %vm606, 0
      %677 = vst.msk [vmem:[%s674 + $0x8] sm:$0x3] %vm609, 0
      %678 = vst.msk [vmem:[%s674 + $0xc] sm:$0xf] %vm606, 0
      %679 = vst.msk [vmem:[%s674 + $0x10] sm:$0xf] %vm606, 0
      %680 = vst.msk [vmem:[%s674 + $0x14] sm:$0x3] %vm609, 0
      %vm681 = vcmask 57344
      %682 = vst.msk [vmem:[#allocation3] sm:$0x1] %vm681, 0
      %683 = vst.msk [vmem:[#allocation3 + $0xc] sm:$0x1] %vm681, 0
      %684 = vst.msk [vmem:[#allocation3 + $0x18] sm:$0x1] %vm681, 0
      %685 = vst.msk [vmem:[#allocation3 + $0x24] sm:$0x1] %vm681, 0
      %686 = vst.msk [vmem:[#allocation3 + $0x30] sm:$0x1] %vm681, 0
      %687 = vst.msk [vmem:[#allocation3 + $0x3c] sm:$0x1] %vm681, 0
      %688 = vst.msk [vmem:[#allocation3 + $0x48] sm:$0x1] %vm681, 0
      %689 = vst.msk [vmem:[#allocation3 + $0x54] sm:$0x1] %vm681, 0
      %690 = vst.msk [vmem:[#allocation3 + $0x60] sm:$0x1] %vm681, 0
      %691 = vst.msk [vmem:[#allocation3 + $0x6c] sm:$0x1] %vm681, 0
      %692 = vst.msk [vmem:[#allocation3 + $0x78] sm:$0x1] %vm681, 0
      %693 = vst.msk [vmem:[#allocation3 + $0x84] sm:$0x1] %vm681, 0
      %694 = vst.msk [vmem:[#allocation3 + $0x90] sm:$0x1] %vm681, 0
      %695 = vst.msk [vmem:[#allocation3 + $0x9c] sm:$0x1] %vm681, 0
      %696 = vst.msk [vmem:[#allocation3 + $0xa8] sm:$0x1] %vm681, 0
      %697 = vst.msk [vmem:[#allocation3 + $0xb4] sm:$0x1] %vm681, 0
      %698 = vst.msk [vmem:[#allocation3 + $0xc0] sm:$0x1] %vm681, 0
      %699 = vst.msk [vmem:[#allocation3 + $0xcc] sm:$0x1] %vm681, 0
      %700 = vst.msk [vmem:[#allocation3 + $0xd8] sm:$0x1] %vm681, 0
      %701 = vst.msk [vmem:[#allocation3 + $0xe4] sm:$0x1] %vm681, 0
      %vm702 = vcmask 58369
      %703 = vst.msk [vmem:[#allocation3 + $0x8] sm:$0x2] %vm702, 0
      %704 = vst.msk [vmem:[#allocation3 + $0x14] sm:$0x2] %vm702, 0
      %705 = vst.msk [vmem:[#allocation3 + $0x20] sm:$0x2] %vm702, 0
      %706 = vst.msk [vmem:[#allocation3 + $0x2c] sm:$0x2] %vm702, 0
      %707 = vst.msk [vmem:[#allocation3 + $0x38] sm:$0x2] %vm702, 0
      %708 = vst.msk [vmem:[#allocation3 + $0x44] sm:$0x2] %vm702, 0
      %709 = vst.msk [vmem:[#allocation3 + $0x50] sm:$0x2] %vm702, 0
      %710 = vst.msk [vmem:[#allocation3 + $0x5c] sm:$0x2] %vm702, 0
      %711 = vst.msk [vmem:[#allocation3 + $0x68] sm:$0x2] %vm702, 0
      %712 = vst.msk [vmem:[#allocation3 + $0x74] sm:$0x2] %vm702, 0
      %713 = vst.msk [vmem:[#allocation3 + $0x80] sm:$0x2] %vm702, 0
      %714 = vst.msk [vmem:[#allocation3 + $0x8c] sm:$0x2] %vm702, 0
      %715 = vst.msk [vmem:[#allocation3 + $0x98] sm:$0x2] %vm702, 0
      %716 = vst.msk [vmem:[#allocation3 + $0xa4] sm:$0x2] %vm702, 0
      %717 = vst.msk [vmem:[#allocation3 + $0xb0] sm:$0x2] %vm702, 0
      %718 = vst.msk [vmem:[#allocation3 + $0xbc] sm:$0x2] %vm702, 0
      %719 = vst.msk [vmem:[#allocation3 + $0xc8] sm:$0x2] %vm702, 0
      %720 = vst.msk [vmem:[#allocation3 + $0xd4] sm:$0x2] %vm702, 0
      %721 = vst.msk [vmem:[#allocation3 + $0xe0] sm:$0x2] %vm702, 0
      %722 = vst.msk [vmem:[#allocation3 + $0xec] sm:$0x2] %vm702, 0
      %v723 = vld [vmem:[%s2] sm:$0x1]
      %v725 = vlaneseq
      %v726 = vshrl.u32 %v725, 7
      %v727 = vsub.s32 0, %v726
      %v728 = vrot.slane %v723, %v727
      %v730 = vld [vmem:[#allocation2] sm:$0xf]
      %v731 = vld [vmem:[#allocation2 + $0x4] sm:$0xf]
      %v732 = vld [vmem:[#allocation2 + $0x8] sm:$0x3]
      %v733 = vld [vmem:[#allocation2 + $0xc] sm:$0xf]
      %v734 = vld [vmem:[#allocation2 + $0x10] sm:$0xf]
      %v735 = vld [vmem:[#allocation2 + $0x14] sm:$0x3]
      %v736 = vld [vmem:[#allocation2 + $0x18] sm:$0xf]
      %v737 = vld [vmem:[#allocation2 + $0x1c] sm:$0xf]
      %v738 = vld [vmem:[#allocation2 + $0x20] sm:$0x3]
      %v739 = vld [vmem:[#allocation2 + $0x24] sm:$0xf]
      %v740 = vld [vmem:[#allocation2 + $0x28] sm:$0xf]
      %v741 = vld [vmem:[#allocation2 + $0x2c] sm:$0x3]
      %v742 = vld [vmem:[#allocation2 + $0x30] sm:$0xf]
      %v743 = vld [vmem:[#allocation2 + $0x34] sm:$0xf]
      %v744 = vld [vmem:[#allocation2 + $0x38] sm:$0x3]
      %v745 = vld [vmem:[#allocation2 + $0x3c] sm:$0xf]
      %v746 = vld [vmem:[#allocation2 + $0x40] sm:$0xf]
      %v747 = vld [vmem:[#allocation2 + $0x44] sm:$0x3]
      %v748 = vld [vmem:[#allocation2 + $0x48] sm:$0xf]
      %v749 = vld [vmem:[#allocation2 + $0x4c] sm:$0xf]
      %v750 = vld [vmem:[#allocation2 + $0x50] sm:$0x3]
      %v751 = vld [vmem:[#allocation2 + $0x54] sm:$0xf]
      %v752 = vld [vmem:[#allocation2 + $0x58] sm:$0xf]
      %v753 = vld [vmem:[#allocation2 + $0x5c] sm:$0x3]
      %v754 = vld [vmem:[#allocation2 + $0x60] sm:$0xf]
      %v755 = vld [vmem:[#allocation2 + $0x64] sm:$0xf]
      %v756 = vld [vmem:[#allocation2 + $0x68] sm:$0x3]
      %v757 = vld [vmem:[#allocation2 + $0x6c] sm:$0xf]
      %v758 = vld [vmem:[#allocation2 + $0x70] sm:$0xf]
      %v759 = vld [vmem:[#allocation2 + $0x74] sm:$0x3]
      %v760 = vld [vmem:[#allocation2 + $0x78] sm:$0xf]
      %v761 = vld [vmem:[#allocation2 + $0x7c] sm:$0xf]
      %v762 = vld [vmem:[#allocation2 + $0x80] sm:$0x3]
      %v763 = vld [vmem:[#allocation2 + $0x84] sm:$0xf]
      %v764 = vld [vmem:[#allocation2 + $0x88] sm:$0xf]
      %v765 = vld [vmem:[#allocation2 + $0x8c] sm:$0x3]
      %v766 = vld [vmem:[#allocation2 + $0x90] sm:$0xf]
      %v767 = vld [vmem:[#allocation2 + $0x94] sm:$0xf]
      %v768 = vld [vmem:[#allocation2 + $0x98] sm:$0x3]
      %v769 = vld [vmem:[#allocation2 + $0x9c] sm:$0xf]
      %v770 = vld [vmem:[#allocation2 + $0xa0] sm:$0xf]
      %v771 = vld [vmem:[#allocation2 + $0xa4] sm:$0x3]
      %v772 = vld [vmem:[#allocation2 + $0xa8] sm:$0xf]
      %v773 = vld [vmem:[#allocation2 + $0xac] sm:$0xf]
      %v774 = vld [vmem:[#allocation2 + $0xb0] sm:$0x3]
      %v775 = vld [vmem:[#allocation2 + $0xb4] sm:$0xf]
      %v776 = vld [vmem:[#allocation2 + $0xb8] sm:$0xf]
      %v777 = vld [vmem:[#allocation2 + $0xbc] sm:$0x3]
      %v810 = vunpack.c.l.b16 %v730
      %v811 = vunpack.c.l.b16 %v731
      %v812 = vunpack.c.l.b16 %v733
      %v813 = vunpack.c.l.b16 %v734
      %v814 = vunpack.c.l.b16 %v736
      %v815 = vunpack.c.l.b16 %v737
      %v816 = vunpack.c.l.b16 %v739
      %v817 = vunpack.c.l.b16 %v740
      %v818 = vunpack.c.l.b16 %v742
      %v819 = vunpack.c.l.b16 %v743
      %v820 = vunpack.c.l.b16 %v745
      %v821 = vunpack.c.l.b16 %v746
      %v822 = vunpack.c.l.b16 %v748
      %v823 = vunpack.c.l.b16 %v749
      %v824 = vunpack.c.l.b16 %v751
      %v825 = vunpack.c.l.b16 %v752
      %v826 = vunpack.c.l.b16 %v754
      %v827 = vunpack.c.l.b16 %v755
      %v828 = vunpack.c.l.b16 %v757
      %v829 = vunpack.c.l.b16 %v758
      %v830 = vunpack.c.l.b16 %v760
      %v831 = vunpack.c.l.b16 %v761
      %v832 = vunpack.c.l.b16 %v763
      %v833 = vunpack.c.l.b16 %v764
      %v834 = vunpack.c.l.b16 %v766
      %v835 = vunpack.c.l.b16 %v767
      %v836 = vunpack.c.l.b16 %v769
      %v837 = vunpack.c.l.b16 %v770
      %v838 = vunpack.c.l.b16 %v772
      %v839 = vunpack.c.l.b16 %v773
      %v840 = vunpack.c.l.b16 %v775
      %v841 = vunpack.c.l.b16 %v776
      %v842 = vpack.c.b16 %v811, %v810
      %v843 = vpack.c.b16 %v813, %v812
      %v844 = vpack.c.b16 %v815, %v814
      %v845 = vpack.c.b16 %v817, %v816
      %v846 = vpack.c.b16 %v819, %v818
      %v847 = vpack.c.b16 %v821, %v820
      %v848 = vpack.c.b16 %v823, %v822
      %v849 = vpack.c.b16 %v825, %v824
      %v850 = vpack.c.b16 %v827, %v826
      %v851 = vpack.c.b16 %v829, %v828
      %v852 = vpack.c.b16 %v831, %v830
      %v853 = vpack.c.b16 %v833, %v832
      %v854 = vpack.c.b16 %v835, %v834
      %v855 = vpack.c.b16 %v837, %v836
      %v856 = vpack.c.b16 %v839, %v838
      %v857 = vpack.c.b16 %v841, %v840
      %v874 = vunpack.c.l.b16 %v732
      %v875 = vunpack.c.l.b16 %v735
      %v876 = vunpack.c.l.b16 %v738
      %v877 = vunpack.c.l.b16 %v741
      %v878 = vunpack.c.l.b16 %v744
      %v879 = vunpack.c.l.b16 %v747
      %v880 = vunpack.c.l.b16 %v750
      %v881 = vunpack.c.l.b16 %v753
      %v882 = vunpack.c.l.b16 %v756
      %v883 = vunpack.c.l.b16 %v759
      %v884 = vunpack.c.l.b16 %v762
      %v885 = vunpack.c.l.b16 %v765
      %v886 = vunpack.c.l.b16 %v768
      %v887 = vunpack.c.l.b16 %v771
      %v888 = vunpack.c.l.b16 %v774
      %v889 = vunpack.c.l.b16 %v777
      %v890 = vpack.c.b16 %v874, %v874
      %v891 = vpack.c.b16 %v875, %v875
      %v892 = vpack.c.b16 %v876, %v876
      %v893 = vpack.c.b16 %v877, %v877
      %v894 = vpack.c.b16 %v878, %v878
      %v895 = vpack.c.b16 %v879, %v879
      %v896 = vpack.c.b16 %v880, %v880
      %v897 = vpack.c.b16 %v881, %v881
      %v898 = vpack.c.b16 %v882, %v882
      %v899 = vpack.c.b16 %v883, %v883
      %v900 = vpack.c.b16 %v884, %v884
      %v901 = vpack.c.b16 %v885, %v885
      %v902 = vpack.c.b16 %v886, %v886
      %v903 = vpack.c.b16 %v887, %v887
      %v904 = vpack.c.b16 %v888, %v888
      %v905 = vpack.c.b16 %v889, %v889
      %vm906 = vsmask.f32 7424
      %v908 = vshrl.u32 %v842, 16
      %v910 = vshll.u32 %v842, 16
      %v912 = vrot.slane %v910, 1
      %v913 = vor.u32 %v908, %v912
      %v915 = vshll.u32 %v890, 16
      %v917 = vrot.slane %v915, 1
      %v918 = vsel %vm906, %v913, %v917
      %v920 = vshrl.u32 %v843, 16
      %v922 = vshll.u32 %v843, 16
      %v924 = vrot.slane %v922, 1
      %v925 = vor.u32 %v920, %v924
      %v927 = vshll.u32 %v891, 16
      %v929 = vrot.slane %v927, 1
      %v930 = vsel %vm906, %v925, %v929
      %v932 = vshrl.u32 %v844, 16
      %v934 = vshll.u32 %v844, 16
      %v936 = vrot.slane %v934, 1
      %v937 = vor.u32 %v932, %v936
      %v939 = vshll.u32 %v892, 16
      %v941 = vrot.slane %v939, 1
      %v942 = vsel %vm906, %v937, %v941
      %v944 = vshrl.u32 %v845, 16
      %v946 = vshll.u32 %v845, 16
      %v948 = vrot.slane %v946, 1
      %v949 = vor.u32 %v944, %v948
      %v951 = vshll.u32 %v893, 16
      %v953 = vrot.slane %v951, 1
      %v954 = vsel %vm906, %v949, %v953
      %v956 = vshrl.u32 %v846, 16
      %v958 = vshll.u32 %v846, 16
      %v960 = vrot.slane %v958, 1
      %v961 = vor.u32 %v956, %v960
      %v963 = vshll.u32 %v894, 16
      %v965 = vrot.slane %v963, 1
      %v966 = vsel %vm906, %v961, %v965
      %v968 = vshrl.u32 %v847, 16
      %v970 = vshll.u32 %v847, 16
      %v972 = vrot.slane %v970, 1
      %v973 = vor.u32 %v968, %v972
      %v975 = vshll.u32 %v895, 16
      %v977 = vrot.slane %v975, 1
      %v978 = vsel %vm906, %v973, %v977
      %v980 = vshrl.u32 %v848, 16
      %v982 = vshll.u32 %v848, 16
      %v984 = vrot.slane %v982, 1
      %v985 = vor.u32 %v980, %v984
      %v987 = vshll.u32 %v896, 16
      %v989 = vrot.slane %v987, 1
      %v990 = vsel %vm906, %v985, %v989
      %v992 = vshrl.u32 %v849, 16
      %v994 = vshll.u32 %v849, 16
      %v996 = vrot.slane %v994, 1
      %v997 = vor.u32 %v992, %v996
      %v999 = vshll.u32 %v897, 16
      %v1001 = vrot.slane %v999, 1
      %v1002 = vsel %vm906, %v997, %v1001
      %v1004 = vshrl.u32 %v850, 16
      %v1006 = vshll.u32 %v850, 16
      %v1008 = vrot.slane %v1006, 1
      %v1009 = vor.u32 %v1004, %v1008
      %v1011 = vshll.u32 %v898, 16
      %v1013 = vrot.slane %v1011, 1
      %v1014 = vsel %vm906, %v1009, %v1013
      %v1016 = vshrl.u32 %v851, 16
      %v1018 = vshll.u32 %v851, 16
      %v1020 = vrot.slane %v1018, 1
      %v1021 = vor.u32 %v1016, %v1020
      %v1023 = vshll.u32 %v899, 16
      %v1025 = vrot.slane %v1023, 1
      %v1026 = vsel %vm906, %v1021, %v1025
      %v1028 = vshrl.u32 %v852, 16
      %v1030 = vshll.u32 %v852, 16
      %v1032 = vrot.slane %v1030, 1
      %v1033 = vor.u32 %v1028, %v1032
      %v1035 = vshll.u32 %v900, 16
      %v1037 = vrot.slane %v1035, 1
      %v1038 = vsel %vm906, %v1033, %v1037
      %v1040 = vshrl.u32 %v853, 16
      %v1042 = vshll.u32 %v853, 16
      %v1044 = vrot.slane %v1042, 1
      %v1045 = vor.u32 %v1040, %v1044
      %v1047 = vshll.u32 %v901, 16
      %v1049 = vrot.slane %v1047, 1
      %v1050 = vsel %vm906, %v1045, %v1049
      %v1052 = vshrl.u32 %v854, 16
      %v1054 = vshll.u32 %v854, 16
      %v1056 = vrot.slane %v1054, 1
      %v1057 = vor.u32 %v1052, %v1056
      %v1059 = vshll.u32 %v902, 16
      %v1061 = vrot.slane %v1059, 1
      %v1062 = vsel %vm906, %v1057, %v1061
      %v1064 = vshrl.u32 %v855, 16
      %v1066 = vshll.u32 %v855, 16
      %v1068 = vrot.slane %v1066, 1
      %v1069 = vor.u32 %v1064, %v1068
      %v1071 = vshll.u32 %v903, 16
      %v1073 = vrot.slane %v1071, 1
      %v1074 = vsel %vm906, %v1069, %v1073
      %v1076 = vshrl.u32 %v856, 16
      %v1078 = vshll.u32 %v856, 16
      %v1080 = vrot.slane %v1078, 1
      %v1081 = vor.u32 %v1076, %v1080
      %v1083 = vshll.u32 %v904, 16
      %v1085 = vrot.slane %v1083, 1
      %v1086 = vsel %vm906, %v1081, %v1085
      %v1088 = vshrl.u32 %v857, 16
      %v1090 = vshll.u32 %v857, 16
      %v1092 = vrot.slane %v1090, 1
      %v1093 = vor.u32 %v1088, %v1092
      %v1095 = vshll.u32 %v905, 16
      %v1097 = vrot.slane %v1095, 1
      %v1098 = vsel %vm906, %v1093, %v1097
      %1099 = vrot.lane.b32.xlu0 %v918, 8
      %v1100 = vpop.permute.xlu0 %1099
      %1101 = vrot.lane.b32.xlu0 %v930, 8
      %v1102 = vpop.permute.xlu0 %1101
      %1103 = vrot.lane.b32.xlu0 %v942, 8
      %v1104 = vpop.permute.xlu0 %1103
      %1105 = vrot.lane.b32.xlu0 %v954, 8
      %v1106 = vpop.permute.xlu0 %1105
      %1107 = vrot.lane.b32.xlu0 %v966, 8
      %v1108 = vpop.permute.xlu0 %1107
      %1109 = vrot.lane.b32.xlu0 %v978, 8
      %v1110 = vpop.permute.xlu0 %1109
      %1111 = vrot.lane.b32.xlu0 %v990, 8
      %v1112 = vpop.permute.xlu0 %1111
      %1113 = vrot.lane.b32.xlu0 %v1002, 8
      %v1114 = vpop.permute.xlu0 %1113
      %1115 = vrot.lane.b32.xlu0 %v1014, 8
      %v1116 = vpop.permute.xlu0 %1115
      %1117 = vrot.lane.b32.xlu0 %v1026, 8
      %v1118 = vpop.permute.xlu0 %1117
      %1119 = vrot.lane.b32.xlu0 %v1038, 8
      %v1120 = vpop.permute.xlu0 %1119
      %1121 = vrot.lane.b32.xlu0 %v1050, 8
      %v1122 = vpop.permute.xlu0 %1121
      %1123 = vrot.lane.b32.xlu0 %v1062, 8
      %v1124 = vpop.permute.xlu0 %1123
      %1125 = vrot.lane.b32.xlu0 %v1074, 8
      %v1126 = vpop.permute.xlu0 %1125
      %1127 = vrot.lane.b32.xlu0 %v1086, 8
      %v1128 = vpop.permute.xlu0 %1127
      %1129 = vrot.lane.b32.xlu0 %v1098, 8
      %v1130 = vpop.permute.xlu0 %1129
      %vm1131 = vcmask 1046528
      %v1132 = vrot.slane %v842, 1
      %v1133 = vrot.slane %v890, 1
      %v1134 = vsel %vm1131, %v1132, %v1133
      %v1135 = vrot.slane %v843, 1
      %v1136 = vrot.slane %v891, 1
      %v1137 = vsel %vm1131, %v1135, %v1136
      %v1138 = vrot.slane %v844, 1
      %v1139 = vrot.slane %v892, 1
      %v1140 = vsel %vm1131, %v1138, %v1139
      %v1141 = vrot.slane %v845, 1
      %v1142 = vrot.slane %v893, 1
      %v1143 = vsel %vm1131, %v1141, %v1142
      %v1144 = vrot.slane %v846, 1
      %v1145 = vrot.slane %v894, 1
      %v1146 = vsel %vm1131, %v1144, %v1145
      %v1147 = vrot.slane %v847, 1
      %v1148 = vrot.slane %v895, 1
      %v1149 = vsel %vm1131, %v1147, %v1148
      %v1150 = vrot.slane %v848, 1
      %v1151 = vrot.slane %v896, 1
      %v1152 = vsel %vm1131, %v1150, %v1151
      %v1153 = vrot.slane %v849, 1
      %v1154 = vrot.slane %v897, 1
      %v1155 = vsel %vm1131, %v1153, %v1154
      %v1156 = vrot.slane %v850, 1
      %v1157 = vrot.slane %v898, 1
      %v1158 = vsel %vm1131, %v1156, %v1157
      %v1159 = vrot.slane %v851, 1
      %v1160 = vrot.slane %v899, 1
      %v1161 = vsel %vm1131, %v1159, %v1160
      %v1162 = vrot.slane %v852, 1
      %v1163 = vrot.slane %v900, 1
      %v1164 = vsel %vm1131, %v1162, %v1163
      %v1165 = vrot.slane %v853, 1
      %v1166 = vrot.slane %v901, 1
      %v1167 = vsel %vm1131, %v1165, %v1166
      %v1168 = vrot.slane %v854, 1
      %v1169 = vrot.slane %v902, 1
      %v1170 = vsel %vm1131, %v1168, %v1169
      %v1171 = vrot.slane %v855, 1
      %v1172 = vrot.slane %v903, 1
      %v1173 = vsel %vm1131, %v1171, %v1172
      %v1174 = vrot.slane %v856, 1
      %v1175 = vrot.slane %v904, 1
      %v1176 = vsel %vm1131, %v1174, %v1175
      %v1177 = vrot.slane %v857, 1
      %v1178 = vrot.slane %v905, 1
      %v1179 = vsel %vm1131, %v1177, %v1178
      %1180 = vrot.lane.b32.xlu0 %v1134, 16
      %v1181 = vpop.permute.xlu0 %1180
      %1182 = vrot.lane.b32.xlu0 %v1137, 16
      %v1183 = vpop.permute.xlu0 %1182
      %1184 = vrot.lane.b32.xlu0 %v1140, 16
      %v1185 = vpop.permute.xlu0 %1184
      %1186 = vrot.lane.b32.xlu0 %v1143, 16
      %v1187 = vpop.permute.xlu0 %1186
      %1188 = vrot.lane.b32.xlu0 %v1146, 16
      %v1189 = vpop.permute.xlu0 %1188
      %1190 = vrot.lane.b32.xlu0 %v1149, 16
      %v1191 = vpop.permute.xlu0 %1190
      %1192 = vrot.lane.b32.xlu0 %v1152, 16
      %v1193 = vpop.permute.xlu0 %1192
      %1194 = vrot.lane.b32.xlu0 %v1155, 16
      %v1195 = vpop.permute.xlu0 %1194
      %1196 = vrot.lane.b32.xlu0 %v1158, 16
      %v1197 = vpop.permute.xlu0 %1196
      %1198 = vrot.lane.b32.xlu0 %v1161, 16
      %v1199 = vpop.permute.xlu0 %1198
      %1200 = vrot.lane.b32.xlu0 %v1164, 16
      %v1201 = vpop.permute.xlu0 %1200
      %1202 = vrot.lane.b32.xlu0 %v1167, 16
      %v1203 = vpop.permute.xlu0 %1202
      %1204 = vrot.lane.b32.xlu0 %v1170, 16
      %v1205 = vpop.permute.xlu0 %1204
      %1206 = vrot.lane.b32.xlu0 %v1173, 16
      %v1207 = vpop.permute.xlu0 %1206
      %1208 = vrot.lane.b32.xlu0 %v1176, 16
      %v1209 = vpop.permute.xlu0 %1208
      %1210 = vrot.lane.b32.xlu0 %v1179, 16
      %v1211 = vpop.permute.xlu0 %1210
      %vm1212 = vsmask.f32 6400
      %v1213 = vrot.slane %v908, 1
      %v1214 = vrot.slane %v910, 2
      %v1215 = vor.u32 %v1213, %v1214
      %v1216 = vshrl.u32 %v890, 16
      %v1218 = vrot.slane %v1216, 1
      %v1219 = vrot.slane %v915, 2
      %v1220 = vor.u32 %v1218, %v1219
      %v1221 = vsel %vm1212, %v1215, %v1220
      %v1222 = vrot.slane %v920, 1
      %v1223 = vrot.slane %v922, 2
      %v1224 = vor.u32 %v1222, %v1223
      %v1225 = vshrl.u32 %v891, 16
      %v1227 = vrot.slane %v1225, 1
      %v1228 = vrot.slane %v927, 2
      %v1229 = vor.u32 %v1227, %v1228
      %v1230 = vsel %vm1212, %v1224, %v1229
      %v1231 = vrot.slane %v932, 1
      %v1232 = vrot.slane %v934, 2
      %v1233 = vor.u32 %v1231, %v1232
      %v1234 = vshrl.u32 %v892, 16
      %v1236 = vrot.slane %v1234, 1
      %v1237 = vrot.slane %v939, 2
      %v1238 = vor.u32 %v1236, %v1237
      %v1239 = vsel %vm1212, %v1233, %v1238
      %v1240 = vrot.slane %v944, 1
      %v1241 = vrot.slane %v946, 2
      %v1242 = vor.u32 %v1240, %v1241
      %v1243 = vshrl.u32 %v893, 16
      %v1245 = vrot.slane %v1243, 1
      %v1246 = vrot.slane %v951, 2
      %v1247 = vor.u32 %v1245, %v1246
      %v1248 = vsel %vm1212, %v1242, %v1247
      %v1249 = vrot.slane %v956, 1
      %v1250 = vrot.slane %v958, 2
      %v1251 = vor.u32 %v1249, %v1250
      %v1252 = vshrl.u32 %v894, 16
      %v1254 = vrot.slane %v1252, 1
      %v1255 = vrot.slane %v963, 2
      %v1256 = vor.u32 %v1254, %v1255
      %v1257 = vsel %vm1212, %v1251, %v1256
      %v1258 = vrot.slane %v968, 1
      %v1259 = vrot.slane %v970, 2
      %v1260 = vor.u32 %v1258, %v1259
      %v1261 = vshrl.u32 %v895, 16
      %v1263 = vrot.slane %v1261, 1
      %v1264 = vrot.slane %v975, 2
      %v1265 = vor.u32 %v1263, %v1264
      %v1266 = vsel %vm1212, %v1260, %v1265
      %v1267 = vrot.slane %v980, 1
      %v1268 = vrot.slane %v982, 2
      %v1269 = vor.u32 %v1267, %v1268
      %v1270 = vshrl.u32 %v896, 16
      %v1272 = vrot.slane %v1270, 1
      %v1273 = vrot.slane %v987, 2
      %v1274 = vor.u32 %v1272, %v1273
      %v1275 = vsel %vm1212, %v1269, %v1274
      %v1276 = vrot.slane %v992, 1
      %v1277 = vrot.slane %v994, 2
      %v1278 = vor.u32 %v1276, %v1277
      %v1279 = vshrl.u32 %v897, 16
      %v1281 = vrot.slane %v1279, 1
      %v1282 = vrot.slane %v999, 2
      %v1283 = vor.u32 %v1281, %v1282
      %v1284 = vsel %vm1212, %v1278, %v1283
      %v1285 = vrot.slane %v1004, 1
      %v1286 = vrot.slane %v1006, 2
      %v1287 = vor.u32 %v1285, %v1286
      %v1288 = vshrl.u32 %v898, 16
      %v1290 = vrot.slane %v1288, 1
      %v1291 = vrot.slane %v1011, 2
      %v1292 = vor.u32 %v1290, %v1291
      %v1293 = vsel %vm1212, %v1287, %v1292
      %v1294 = vrot.slane %v1016, 1
      %v1295 = vrot.slane %v1018, 2
      %v1296 = vor.u32 %v1294, %v1295
      %v1297 = vshrl.u32 %v899, 16
      %v1299 = vrot.slane %v1297, 1
      %v1300 = vrot.slane %v1023, 2
      %v1301 = vor.u32 %v1299, %v1300
      %v1302 = vsel %vm1212, %v1296, %v1301
      %v1303 = vrot.slane %v1028, 1
      %v1304 = vrot.slane %v1030, 2
      %v1305 = vor.u32 %v1303, %v1304
      %v1306 = vshrl.u32 %v900, 16
      %v1308 = vrot.slane %v1306, 1
      %v1309 = vrot.slane %v1035, 2
      %v1310 = vor.u32 %v1308, %v1309
      %v1311 = vsel %vm1212, %v1305, %v1310
      %v1312 = vrot.slane %v1040, 1
      %v1313 = vrot.slane %v1042, 2
      %v1314 = vor.u32 %v1312, %v1313
      %v1315 = vshrl.u32 %v901, 16
      %v1317 = vrot.slane %v1315, 1
      %v1318 = vrot.slane %v1047, 2
      %v1319 = vor.u32 %v1317, %v1318
      %v1320 = vsel %vm1212, %v1314, %v1319
      %v1321 = vrot.slane %v1052, 1
      %v1322 = vrot.slane %v1054, 2
      %v1323 = vor.u32 %v1321, %v1322
      %v1324 = vshrl.u32 %v902, 16
      %v1326 = vrot.slane %v1324, 1
      %v1327 = vrot.slane %v1059, 2
      %v1328 = vor.u32 %v1326, %v1327
      %v1329 = vsel %vm1212, %v1323, %v1328
      %v1330 = vrot.slane %v1064, 1
      %v1331 = vrot.slane %v1066, 2
      %v1332 = vor.u32 %v1330, %v1331
      %v1333 = vshrl.u32 %v903, 16
      %v1335 = vrot.slane %v1333, 1
      %v1336 = vrot.slane %v1071, 2
      %v1337 = vor.u32 %v1335, %v1336
      %v1338 = vsel %vm1212, %v1332, %v1337
      %v1339 = vrot.slane %v1076, 1
      %v1340 = vrot.slane %v1078, 2
      %v1341 = vor.u32 %v1339, %v1340
      %v1342 = vshrl.u32 %v904, 16
      %v1344 = vrot.slane %v1342, 1
      %v1345 = vrot.slane %v1083, 2
      %v1346 = vor.u32 %v1344, %v1345
      %v1347 = vsel %vm1212, %v1341, %v1346
      %v1348 = vrot.slane %v1088, 1
      %v1349 = vrot.slane %v1090, 2
      %v1350 = vor.u32 %v1348, %v1349
      %v1351 = vshrl.u32 %v905, 16
      %v1353 = vrot.slane %v1351, 1
      %v1354 = vrot.slane %v1095, 2
      %v1355 = vor.u32 %v1353, %v1354
      %v1356 = vsel %vm1212, %v1350, %v1355
      %1357 = vrot.lane.b32.xlu0 %v1221, 24
      %v1358 = vpop.permute.xlu0 %1357
      %1359 = vrot.lane.b32.xlu0 %v1230, 24
      %v1360 = vpop.permute.xlu0 %1359
      %1361 = vrot.lane.b32.xlu0 %v1239, 24
      %v1362 = vpop.permute.xlu0 %1361
      %1363 = vrot.lane.b32.xlu0 %v1248, 24
      %v1364 = vpop.permute.xlu0 %1363
      %1365 = vrot.lane.b32.xlu0 %v1257, 24
      %v1366 = vpop.permute.xlu0 %1365
      %1367 = vrot.lane.b32.xlu0 %v1266, 24
      %v1368 = vpop.permute.xlu0 %1367
      %1369 = vrot.lane.b32.xlu0 %v1275, 24
      %v1370 = vpop.permute.xlu0 %1369
      %1371 = vrot.lane.b32.xlu0 %v1284, 24
      %v1372 = vpop.permute.xlu0 %1371
      %1373 = vrot.lane.b32.xlu0 %v1293, 24
      %v1374 = vpop.permute.xlu0 %1373
      %1375 = vrot.lane.b32.xlu0 %v1302, 24
      %v1376 = vpop.permute.xlu0 %1375
      %1377 = vrot.lane.b32.xlu0 %v1311, 24
      %v1378 = vpop.permute.xlu0 %1377
      %1379 = vrot.lane.b32.xlu0 %v1320, 24
      %v1380 = vpop.permute.xlu0 %1379
      %1381 = vrot.lane.b32.xlu0 %v1329, 24
      %v1382 = vpop.permute.xlu0 %1381
      %1383 = vrot.lane.b32.xlu0 %v1338, 24
      %v1384 = vpop.permute.xlu0 %1383
      %1385 = vrot.lane.b32.xlu0 %v1347, 24
      %v1386 = vpop.permute.xlu0 %1385
      %1387 = vrot.lane.b32.xlu0 %v1356, 24
      %v1388 = vpop.permute.xlu0 %1387
      %vm1389 = vcmask 1045504
      %v1390 = vrot.slane %v842, 2
      %v1391 = vrot.slane %v890, 2
      %v1392 = vsel %vm1389, %v1390, %v1391
      %v1393 = vrot.slane %v843, 2
      %v1394 = vrot.slane %v891, 2
      %v1395 = vsel %vm1389, %v1393, %v1394
      %v1396 = vrot.slane %v844, 2
      %v1397 = vrot.slane %v892, 2
      %v1398 = vsel %vm1389, %v1396, %v1397
      %v1399 = vrot.slane %v845, 2
      %v1400 = vrot.slane %v893, 2
      %v1401 = vsel %vm1389, %v1399, %v1400
      %v1402 = vrot.slane %v846, 2
      %v1403 = vrot.slane %v894, 2
      %v1404 = vsel %vm1389, %v1402, %v1403
      %v1405 = vrot.slane %v847, 2
      %v1406 = vrot.slane %v895, 2
      %v1407 = vsel %vm1389, %v1405, %v1406
      %v1408 = vrot.slane %v848, 2
      %v1409 = vrot.slane %v896, 2
      %v1410 = vsel %vm1389, %v1408, %v1409
      %v1411 = vrot.slane %v849, 2
      %v1412 = vrot.slane %v897, 2
      %v1413 = vsel %vm1389, %v1411, %v1412
      %v1414 = vrot.slane %v850, 2
      %v1415 = vrot.slane %v898, 2
      %v1416 = vsel %vm1389, %v1414, %v1415
      %v1417 = vrot.slane %v851, 2
      %v1418 = vrot.slane %v899, 2
      %v1419 = vsel %vm1389, %v1417, %v1418
      %v1420 = vrot.slane %v852, 2
      %v1421 = vrot.slane %v900, 2
      %v1422 = vsel %vm1389, %v1420, %v1421
      %v1423 = vrot.slane %v853, 2
      %v1424 = vrot.slane %v901, 2
      %v1425 = vsel %vm1389, %v1423, %v1424
      %v1426 = vrot.slane %v854, 2
      %v1427 = vrot.slane %v902, 2
      %v1428 = vsel %vm1389, %v1426, %v1427
      %v1429 = vrot.slane %v855, 2
      %v1430 = vrot.slane %v903, 2
      %v1431 = vsel %vm1389, %v1429, %v1430
      %v1432 = vrot.slane %v856, 2
      %v1433 = vrot.slane %v904, 2
      %v1434 = vsel %vm1389, %v1432, %v1433
      %v1435 = vrot.slane %v857, 2
      %v1436 = vrot.slane %v905, 2
      %v1437 = vsel %vm1389, %v1435, %v1436
      %1438 = vrot.lane.b32.xlu0 %v1392, 32
      %v1439 = vpop.permute.xlu0 %1438
      %1440 = vrot.lane.b32.xlu0 %v1395, 32
      %v1441 = vpop.permute.xlu0 %1440
      %1442 = vrot.lane.b32.xlu0 %v1398, 32
      %v1443 = vpop.permute.xlu0 %1442
      %1444 = vrot.lane.b32.xlu0 %v1401, 32
      %v1445 = vpop.permute.xlu0 %1444
      %1446 = vrot.lane.b32.xlu0 %v1404, 32
      %v1447 = vpop.permute.xlu0 %1446
      %1448 = vrot.lane.b32.xlu0 %v1407, 32
      %v1449 = vpop.permute.xlu0 %1448
      %1450 = vrot.lane.b32.xlu0 %v1410, 32
      %v1451 = vpop.permute.xlu0 %1450
      %1452 = vrot.lane.b32.xlu0 %v1413, 32
      %v1453 = vpop.permute.xlu0 %1452
      %1454 = vrot.lane.b32.xlu0 %v1416, 32
      %v1455 = vpop.permute.xlu0 %1454
      %1456 = vrot.lane.b32.xlu0 %v1419, 32
      %v1457 = vpop.permute.xlu0 %1456
      %1458 = vrot.lane.b32.xlu0 %v1422, 32
      %v1459 = vpop.permute.xlu0 %1458
      %1460 = vrot.lane.b32.xlu0 %v1425, 32
      %v1461 = vpop.permute.xlu0 %1460
      %1462 = vrot.lane.b32.xlu0 %v1428, 32
      %v1463 = vpop.permute.xlu0 %1462
      %1464 = vrot.lane.b32.xlu0 %v1431, 32
      %v1465 = vpop.permute.xlu0 %1464
      %1466 = vrot.lane.b32.xlu0 %v1434, 32
      %v1467 = vpop.permute.xlu0 %1466
      %1468 = vrot.lane.b32.xlu0 %v1437, 32
      %v1469 = vpop.permute.xlu0 %1468
      %vm1470 = vcmask 64512
      %v1472 = vsel %vm1470, %v842, %v1100
      %v1474 = vsel %vm1470, %v843, %v1102
      %v1476 = vsel %vm1470, %v844, %v1104
      %v1478 = vsel %vm1470, %v845, %v1106
      %v1480 = vsel %vm1470, %v846, %v1108
      %v1482 = vsel %vm1470, %v847, %v1110
      %v1484 = vsel %vm1470, %v848, %v1112
      %v1486 = vsel %vm1470, %v849, %v1114
      %v1488 = vsel %vm1470, %v850, %v1116
      %v1490 = vsel %vm1470, %v851, %v1118
      %v1492 = vsel %vm1470, %v852, %v1120
      %v1494 = vsel %vm1470, %v853, %v1122
      %v1496 = vsel %vm1470, %v854, %v1124
      %v1498 = vsel %vm1470, %v855, %v1126
      %v1500 = vsel %vm1470, %v856, %v1128
      %v1502 = vsel %vm1470, %v857, %v1130
      %vm1503 = vcmask 130048
      %v1505 = vsel %vm1503, %v1472, %v1181
      %v1507 = vsel %vm1503, %v1474, %v1183
      %v1509 = vsel %vm1503, %v1476, %v1185
      %v1511 = vsel %vm1503, %v1478, %v1187
      %v1513 = vsel %vm1503, %v1480, %v1189
      %v1515 = vsel %vm1503, %v1482, %v1191
      %v1517 = vsel %vm1503, %v1484, %v1193
      %v1519 = vsel %vm1503, %v1486, %v1195
      %v1521 = vsel %vm1503, %v1488, %v1197
      %v1523 = vsel %vm1503, %v1490, %v1199
      %v1525 = vsel %vm1503, %v1492, %v1201
      %v1527 = vsel %vm1503, %v1494, %v1203
      %v1529 = vsel %vm1503, %v1496, %v1205
      %v1531 = vsel %vm1503, %v1498, %v1207
      %v1533 = vsel %vm1503, %v1500, %v1209
      %v1535 = vsel %vm1503, %v1502, %v1211
      %vm1536 = vcmask 195584
      %v1538 = vsel %vm1536, %v1505, %v1358
      %v1540 = vsel %vm1536, %v1507, %v1360
      %v1542 = vsel %vm1536, %v1509, %v1362
      %v1544 = vsel %vm1536, %v1511, %v1364
      %v1546 = vsel %vm1536, %v1513, %v1366
      %v1548 = vsel %vm1536, %v1515, %v1368
      %v1550 = vsel %vm1536, %v1517, %v1370
      %v1552 = vsel %vm1536, %v1519, %v1372
      %v1554 = vsel %vm1536, %v1521, %v1374
      %v1556 = vsel %vm1536, %v1523, %v1376
      %v1558 = vsel %vm1536, %v1525, %v1378
      %v1560 = vsel %vm1536, %v1527, %v1380
      %v1562 = vsel %vm1536, %v1529, %v1382
      %v1564 = vsel %vm1536, %v1531, %v1384
      %v1566 = vsel %vm1536, %v1533, %v1386
      %v1568 = vsel %vm1536, %v1535, %v1388
      %vm1569 = vcmask 261120
      %v1571 = vsel %vm1569, %v1538, %v1439
      %v1573 = vsel %vm1569, %v1540, %v1441
      %v1575 = vsel %vm1569, %v1542, %v1443
      %v1577 = vsel %vm1569, %v1544, %v1445
      %v1579 = vsel %vm1569, %v1546, %v1447
      %v1581 = vsel %vm1569, %v1548, %v1449
      %v1583 = vsel %vm1569, %v1550, %v1451
      %v1585 = vsel %vm1569, %v1552, %v1453
      %v1587 = vsel %vm1569, %v1554, %v1455
      %v1589 = vsel %vm1569, %v1556, %v1457
      %v1591 = vsel %vm1569, %v1558, %v1459
      %v1593 = vsel %vm1569, %v1560, %v1461
      %v1595 = vsel %vm1569, %v1562, %v1463
      %v1597 = vsel %vm1569, %v1564, %v1465
      %v1599 = vsel %vm1569, %v1566, %v1467
      %v1601 = vsel %vm1569, %v1568, %v1469
      %v1602 = vld [vmem:[%s1] sm:$0xf]
      %v1603 = vld [vmem:[%s1 + $0x4] sm:$0xf]
      %v1604 = vld [vmem:[%s1 + $0x8] sm:$0xf]
      %v1605 = vld [vmem:[%s1 + $0xc] sm:$0xf]
      %v1606 = vld [vmem:[%s1 + $0x10] sm:$0xf]
      %v1612 = vunpack.c.l.b16 %v1602
      %v1613 = vunpack.c.l.b16 %v1603
      %v1614 = vunpack.c.l.b16 %v1604
      %v1615 = vunpack.c.l.b16 %v1605
      %v1616 = vunpack.c.l.b16 %v1606
      %v1617 = vpack.c.b16 %v1613, %v1612
      %v1618 = vpack.c.b16 %v1615, %v1614
      %v1619 = vpack.c.b16 %v1616, %v1616
      %vm1622 = vcmask 326656
      %v1623 = vsel %vm1622, %v1571, 0
      %v1625 = vsel %vm1622, %v1573, 0
      %v1627 = vsel %vm1622, %v1575, 0
      %v1629 = vsel %vm1622, %v1577, 0
      %v1631 = vsel %vm1622, %v1579, 0
      %v1633 = vsel %vm1622, %v1581, 0
      %v1635 = vsel %vm1622, %v1583, 0
      %v1637 = vsel %vm1622, %v1585, 0
      %v1639 = vsel %vm1622, %v1587, 0
      %v1641 = vsel %vm1622, %v1589, 0
      %v1643 = vsel %vm1622, %v1591, 0
      %v1645 = vsel %vm1622, %v1593, 0
      %v1647 = vsel %vm1622, %v1595, 0
      %v1649 = vsel %vm1622, %v1597, 0
      %v1651 = vsel %vm1622, %v1599, 0
      %v1653 = vsel %vm1622, %v1601, 0
      %vm1655 = vcmask 1043456
      %v1657 = vsel %vm1655, %v1619, 0
      %1659 = vmatprep.subr.bf16.mxu0 0
      %1660 = vmatpush1.bf16.msra.mxu0 %v1617
      %1661 = vmatprep.subr.bf16.mxu0 0
      %1662 = vmatpush1.bf16.msra.mxu0 %v1618
      %1663 = vmatprep.subr.bf16.mxu0 0
      %1664 = vmatpush1.bf16.msra.mxu0 %v1657
      %1665 = vmatprep.subr.bf16.mxu0 0
      %1666 = vmatpush1.bf16.msra.mxu0 0
      %1667 = vmatprep.subr.bf16.mxu0 0
      %1668 = vmatpush1.bf16.msra.mxu0 0
      %1669 = vmatprep.subr.bf16.mxu0 0
      %1670 = vmatpush1.bf16.msra.mxu0 0
      %1671 = vmatprep.subr.bf16.mxu0 0
      %1672 = vmatpush1.bf16.msra.mxu0 0
      %1673 = vmatprep.subr.bf16.mxu0 0
      %1674 = vmatpush1.bf16.msra.mxu0 0
      %1675 = vmatprep.subr.bf16.mxu0 0
      %1676 = vmatpush1.bf16.msra.mxu0 0
      %1677 = vmatprep.subr.bf16.mxu0 0
      %1678 = vmatpush1.bf16.msra.mxu0 0
      %1679 = vmatprep.subr.bf16.mxu0 0
      %1680 = vmatpush1.bf16.msra.mxu0 0
      %1681 = vmatprep.subr.bf16.mxu0 0
      %1682 = vmatpush1.bf16.msra.mxu0 0
      %1683 = vmatprep.subr.bf16.mxu0 0
      %1684 = vmatpush1.bf16.msra.mxu0 0
      %1685 = vmatprep.subr.bf16.mxu0 0
      %1686 = vmatpush1.bf16.msra.mxu0 0
      %1687 = vmatprep.subr.bf16.mxu0 0
      %1688 = vmatpush1.bf16.msra.mxu0 0
      %1689 = vmatprep.subr.bf16.mxu0 0
      %1690 = vmatpush1.bf16.msra.mxu0 0
      %1691 = vmatprep.mubr.bf16.mxu0 0
      %1692 = vmatmul.mubr.bf16.gmra.mrb[0].mxu0 %v1623
      %v1693 = vpop.f32.mrb[0].mxu0
      %v1694 = vadd.f32 0.0, %v1693
      %v1695 = vpop.f32.mrb[0].mxu0
      %v1696 = vpop.f32.mrb[0].mxu0
      %v1697 = vadd.f32 0.0, %v1696
      %v1698 = vpop.f32.mrb[0].mxu0
      %1699 = vmatprep.mubr.bf16.mxu0 0
      %1700 = vmatmul.mubr.bf16.gmra.mrb[0].mxu0 %v1625
      %v1701 = vpop.f32.mrb[0].mxu0
      %v1702 = vadd.f32 0.0, %v1701
      %v1703 = vpop.f32.mrb[0].mxu0
      %v1704 = vpop.f32.mrb[0].mxu0
      %v1705 = vadd.f32 0.0, %v1704
      %v1706 = vpop.f32.mrb[0].mxu0
      %1707 = vmatprep.mubr.bf16.mxu0 0
      %1708 = vmatmul.mubr.bf16.gmra.mrb[0].mxu0 %v1627
      %v1709 = vpop.f32.mrb[0].mxu0
      %v1710 = vadd.f32 0.0, %v1709
      %v1711 = vpop.f32.mrb[0].mxu0
      %v1712 = vpop.f32.mrb[0].mxu0
      %v1713 = vadd.f32 0.0, %v1712
      %v1714 = vpop.f32.mrb[0].mxu0
      %1715 = vmatprep.mubr.bf16.mxu0 0
      %1716 = vmatmul.mubr.bf16.gmra.mrb[0].mxu0 %v1629
      %v1717 = vpop.f32.mrb[0].mxu0
      %v1718 = vadd.f32 0.0, %v1717
      %v1719 = vpop.f32.mrb[0].mxu0
      %v1720 = vpop.f32.mrb[0].mxu0
      %v1721 = vadd.f32 0.0, %v1720
      %v1722 = vpop.f32.mrb[0].mxu0
      %1723 = vmatprep.mubr.bf16.mxu0 0
      %1724 = vmatmul.mubr.bf16.gmra.mrb[0].mxu0 %v1631
      %v1725 = vpop.f32.mrb[0].mxu0
      %v1726 = vadd.f32 0.0, %v1725
      %v1727 = vpop.f32.mrb[0].mxu0
      %v1728 = vpop.f32.mrb[0].mxu0
      %v1729 = vadd.f32 0.0, %v1728
      %v1730 = vpop.f32.mrb[0].mxu0
      %1731 = vmatprep.mubr.bf16.mxu0 0
      %1732 = vmatmul.mubr.bf16.gmra.mrb[0].mxu0 %v1633
      %v1733 = vpop.f32.mrb[0].mxu0
      %v1734 = vadd.f32 0.0, %v1733
      %v1735 = vpop.f32.mrb[0].mxu0
      %v1736 = vpop.f32.mrb[0].mxu0
      %v1737 = vadd.f32 0.0, %v1736
      %v1738 = vpop.f32.mrb[0].mxu0
      %1739 = vmatprep.mubr.bf16.mxu0 0
      %1740 = vmatmul.mubr.bf16.gmra.mrb[0].mxu0 %v1635
      %v1741 = vpop.f32.mrb[0].mxu0
      %v1742 = vadd.f32 0.0, %v1741
      %v1743 = vpop.f32.mrb[0].mxu0
      %v1744 = vpop.f32.mrb[0].mxu0
      %v1745 = vadd.f32 0.0, %v1744
      %v1746 = vpop.f32.mrb[0].mxu0
      %1747 = vmatprep.mubr.bf16.mxu0 0
      %1748 = vmatmul.mubr.bf16.gmra.mrb[0].mxu0 %v1637
      %v1749 = vpop.f32.mrb[0].mxu0
      %v1750 = vadd.f32 0.0, %v1749
      %v1751 = vpop.f32.mrb[0].mxu0
      %v1752 = vpop.f32.mrb[0].mxu0
      %v1753 = vadd.f32 0.0, %v1752
      %v1754 = vpop.f32.mrb[0].mxu0
      %1755 = vmatprep.mubr.bf16.mxu0 0
      %1756 = vmatmul.mubr.bf16.gmra.mrb[0].mxu0 %v1639
      %v1757 = vpop.f32.mrb[0].mxu0
      %v1758 = vadd.f32 0.0, %v1757
      %v1759 = vpop.f32.mrb[0].mxu0
      %v1760 = vpop.f32.mrb[0].mxu0
      %v1761 = vadd.f32 0.0, %v1760
      %v1762 = vpop.f32.mrb[0].mxu0
      %1763 = vmatprep.mubr.bf16.mxu0 0
      %1764 = vmatmul.mubr.bf16.gmra.mrb[0].mxu0 %v1641
      %v1765 = vpop.f32.mrb[0].mxu0
      %v1766 = vadd.f32 0.0, %v1765
      %v1767 = vpop.f32.mrb[0].mxu0
      %v1768 = vpop.f32.mrb[0].mxu0
      %v1769 = vadd.f32 0.0, %v1768
      %v1770 = vpop.f32.mrb[0].mxu0
      %1771 = vmatprep.mubr.bf16.mxu0 0
      %1772 = vmatmul.mubr.bf16.gmra.mrb[0].mxu0 %v1643
      %v1773 = vpop.f32.mrb[0].mxu0
      %v1774 = vadd.f32 0.0, %v1773
      %v1775 = vpop.f32.mrb[0].mxu0
      %v1776 = vpop.f32.mrb[0].mxu0
      %v1777 = vadd.f32 0.0, %v1776
      %v1778 = vpop.f32.mrb[0].mxu0
      %1779 = vmatprep.mubr.bf16.mxu0 0
      %1780 = vmatmul.mubr.bf16.gmra.mrb[0].mxu0 %v1645
      %v1781 = vpop.f32.mrb[0].mxu0
      %v1782 = vadd.f32 0.0, %v1781
      %v1783 = vpop.f32.mrb[0].mxu0
      %v1784 = vpop.f32.mrb[0].mxu0
      %v1785 = vadd.f32 0.0, %v1784
      %v1786 = vpop.f32.mrb[0].mxu0
      %1787 = vmatprep.mubr.bf16.mxu0 0
      %1788 = vmatmul.mubr.bf16.gmra.mrb[0].mxu0 %v1647
      %v1789 = vpop.f32.mrb[0].mxu0
      %v1790 = vadd.f32 0.0, %v1789
      %v1791 = vpop.f32.mrb[0].mxu0
      %v1792 = vpop.f32.mrb[0].mxu0
      %v1793 = vadd.f32 0.0, %v1792
      %v1794 = vpop.f32.mrb[0].mxu0
      %1795 = vmatprep.mubr.bf16.mxu0 0
      %1796 = vmatmul.mubr.bf16.gmra.mrb[0].mxu0 %v1649
      %v1797 = vpop.f32.mrb[0].mxu0
      %v1798 = vadd.f32 0.0, %v1797
      %v1799 = vpop.f32.mrb[0].mxu0
      %v1800 = vpop.f32.mrb[0].mxu0
      %v1801 = vadd.f32 0.0, %v1800
      %v1802 = vpop.f32.mrb[0].mxu0
      %1803 = vmatprep.mubr.bf16.mxu0 0
      %1804 = vmatmul.mubr.bf16.gmra.mrb[0].mxu0 %v1651
      %v1805 = vpop.f32.mrb[0].mxu0
      %v1806 = vadd.f32 0.0, %v1805
      %v1807 = vpop.f32.mrb[0].mxu0
      %v1808 = vpop.f32.mrb[0].mxu0
      %v1809 = vadd.f32 0.0, %v1808
      %v1810 = vpop.f32.mrb[0].mxu0
      %1811 = vmatprep.mubr.bf16.mxu0 0
      %1812 = vmatmul.mubr.bf16.gmra.mrb[0].mxu0 %v1653
      %v1813 = vpop.f32.mrb[0].mxu0
      %v1814 = vadd.f32 0.0, %v1813
      %v1815 = vpop.f32.mrb[0].mxu0
      %v1816 = vpop.f32.mrb[0].mxu0
      %v1817 = vadd.f32 0.0, %v1816
      %v1818 = vpop.f32.mrb[0].mxu0
      %1819 = vdwg.mxu0
      %v1820 = vadd.f32 %v728, %v1694
      %v1821 = vadd.f32 %v728, %v1697
      %v1822 = vadd.f32 %v728, %v1702
      %v1823 = vadd.f32 %v728, %v1705
      %v1824 = vadd.f32 %v728, %v1710
      %v1825 = vadd.f32 %v728, %v1713
      %v1826 = vadd.f32 %v728, %v1718
      %v1827 = vadd.f32 %v728, %v1721
      %v1828 = vadd.f32 %v728, %v1726
      %v1829 = vadd.f32 %v728, %v1729
      %v1830 = vadd.f32 %v728, %v1734
      %v1831 = vadd.f32 %v728, %v1737
      %v1832 = vadd.f32 %v728, %v1742
      %v1833 = vadd.f32 %v728, %v1745
      %v1834 = vadd.f32 %v728, %v1750
      %v1835 = vadd.f32 %v728, %v1753
      %v1836 = vadd.f32 %v728, %v1758
      %v1837 = vadd.f32 %v728, %v1761
      %v1838 = vadd.f32 %v728, %v1766
      %v1839 = vadd.f32 %v728, %v1769
      %v1840 = vadd.f32 %v728, %v1774
      %v1841 = vadd.f32 %v728, %v1777
      %v1842 = vadd.f32 %v728, %v1782
      %v1843 = vadd.f32 %v728, %v1785
      %v1844 = vadd.f32 %v728, %v1790
      %v1845 = vadd.f32 %v728, %v1793
      %v1846 = vadd.f32 %v728, %v1798
      %v1847 = vadd.f32 %v728, %v1801
      %v1848 = vadd.f32 %v728, %v1806
      %v1849 = vadd.f32 %v728, %v1809
      %v1850 = vadd.f32 %v728, %v1814
      %v1851 = vadd.f32 %v728, %v1817
      %s1852 = scalar_lea.vmem [#allocation2], 12
      %v1853 = vld [vmem:[%s1852] sm:$0xf]
      %v1854 = vld [vmem:[%s1852 + $0x4] sm:$0xf]
      %v1855 = vld [vmem:[%s1852 + $0x8] sm:$0x3]
      %v1856 = vld [vmem:[%s1852 + $0xc] sm:$0xf]
      %v1857 = vld [vmem:[%s1852 + $0x10] sm:$0xf]
      %v1858 = vld [vmem:[%s1852 + $0x14] sm:$0x3]
      %v1859 = vld [vmem:[%s1852 + $0x18] sm:$0xf]
      %v1860 = vld [vmem:[%s1852 + $0x1c] sm:$0xf]
      %v1861 = vld [vmem:[%s1852 + $0x20] sm:$0x3]
      %v1862 = vld [vmem:[%s1852 + $0x24] sm:$0xf]
      %v1863 = vld [vmem:[%s1852 + $0x28] sm:$0xf]
      %v1864 = vld [vmem:[%s1852 + $0x2c] sm:$0x3]
      %v1865 = vld [vmem:[%s1852 + $0x30] sm:$0xf]
      %v1866 = vld [vmem:[%s1852 + $0x34] sm:$0xf]
      %v1867 = vld [vmem:[%s1852 + $0x38] sm:$0x3]
      %v1868 = vld [vmem:[%s1852 + $0x3c] sm:$0xf]
      %v1869 = vld [vmem:[%s1852 + $0x40] sm:$0xf]
      %v1870 = vld [vmem:[%s1852 + $0x44] sm:$0x3]
      %v1871 = vld [vmem:[%s1852 + $0x48] sm:$0xf]
      %v1872 = vld [vmem:[%s1852 + $0x4c] sm:$0xf]
      %v1873 = vld [vmem:[%s1852 + $0x50] sm:$0x3]
      %v1874 = vld [vmem:[%s1852 + $0x54] sm:$0xf]
      %v1875 = vld [vmem:[%s1852 + $0x58] sm:$0xf]
      %v1876 = vld [vmem:[%s1852 + $0x5c] sm:$0x3]
      %v1877 = vld [vmem:[%s1852 + $0x60] sm:$0xf]
      %v1878 = vld [vmem:[%s1852 + $0x64] sm:$0xf]
      %v1879 = vld [vmem:[%s1852 + $0x68] sm:$0x3]
      %v1880 = vld [vmem:[%s1852 + $0x6c] sm:$0xf]
      %v1881 = vld [vmem:[%s1852 + $0x70] sm:$0xf]
      %v1882 = vld [vmem:[%s1852 + $0x74] sm:$0x3]
      %v1883 = vld [vmem:[%s1852 + $0x78] sm:$0xf]
      %v1884 = vld [vmem:[%s1852 + $0x7c] sm:$0xf]
      %v1885 = vld [vmem:[%s1852 + $0x80] sm:$0x3]
      %v1886 = vld [vmem:[%s1852 + $0x84] sm:$0xf]
      %v1887 = vld [vmem:[%s1852 + $0x88] sm:$0xf]
      %v1888 = vld [vmem:[%s1852 + $0x8c] sm:$0x3]
      %v1889 = vld [vmem:[%s1852 + $0x90] sm:$0xf]
      %v1890 = vld [vmem:[%s1852 + $0x94] sm:$0xf]
      %v1891 = vld [vmem:[%s1852 + $0x98] sm:$0x3]
      %v1892 = vld [vmem:[%s1852 + $0x9c] sm:$0xf]
      %v1893 = vld [vmem:[%s1852 + $0xa0] sm:$0xf]
      %v1894 = vld [vmem:[%s1852 + $0xa4] sm:$0x3]
      %v1895 = vld [vmem:[%s1852 + $0xa8] sm:$0xf]
      %v1896 = vld [vmem:[%s1852 + $0xac] sm:$0xf]
      %v1897 = vld [vmem:[%s1852 + $0xb0] sm:$0x3]
      %v1898 = vld [vmem:[%s1852 + $0xb4] sm:$0xf]
      %v1899 = vld [vmem:[%s1852 + $0xb8] sm:$0xf]
      %v1900 = vld [vmem:[%s1852 + $0xbc] sm:$0x3]
      %v1933 = vunpack.c.l.b16 %v1853
      %v1934 = vunpack.c.l.b16 %v1854
      %v1935 = vunpack.c.l.b16 %v1856
      %v1936 = vunpack.c.l.b16 %v1857
      %v1937 = vunpack.c.l.b16 %v1859
      %v1938 = vunpack.c.l.b16 %v1860
      %v1939 = vunpack.c.l.b16 %v1862
      %v1940 = vunpack.c.l.b16 %v1863
      %v1941 = vunpack.c.l.b16 %v1865
      %v1942 = vunpack.c.l.b16 %v1866
      %v1943 = vunpack.c.l.b16 %v1868
      %v1944 = vunpack.c.l.b16 %v1869
      %v1945 = vunpack.c.l.b16 %v1871
      %v1946 = vunpack.c.l.b16 %v1872
      %v1947 = vunpack.c.l.b16 %v1874
      %v1948 = vunpack.c.l.b16 %v1875
      %v1949 = vunpack.c.l.b16 %v1877
      %v1950 = vunpack.c.l.b16 %v1878
      %v1951 = vunpack.c.l.b16 %v1880
      %v1952 = vunpack.c.l.b16 %v1881
      %v1953 = vunpack.c.l.b16 %v1883
      %v1954 = vunpack.c.l.b16 %v1884
      %v1955 = vunpack.c.l.b16 %v1886
      %v1956 = vunpack.c.l.b16 %v1887
      %v1957 = vunpack.c.l.b16 %v1889
      %v1958 = vunpack.c.l.b16 %v1890
      %v1959 = vunpack.c.l.b16 %v1892
      %v1960 = vunpack.c.l.b16 %v1893
      %v1961 = vunpack.c.l.b16 %v1895
      %v1962 = vunpack.c.l.b16 %v1896
      %v1963 = vunpack.c.l.b16 %v1898
      %v1964 = vunpack.c.l.b16 %v1899
      %v1965 = vpack.c.b16 %v1934, %v1933
      %v1966 = vpack.c.b16 %v1936, %v1935
      %v1967 = vpack.c.b16 %v1938, %v1937
      %v1968 = vpack.c.b16 %v1940, %v1939
      %v1969 = vpack.c.b16 %v1942, %v1941
      %v1970 = vpack.c.b16 %v1944, %v1943
      %v1971 = vpack.c.b16 %v1946, %v1945
      %v1972 = vpack.c.b16 %v1948, %v1947
      %v1973 = vpack.c.b16 %v1950, %v1949
      %v1974 = vpack.c.b16 %v1952, %v1951
      %v1975 = vpack.c.b16 %v1954, %v1953
      %v1976 = vpack.c.b16 %v1956, %v1955
      %v1977 = vpack.c.b16 %v1958, %v1957
      %v1978 = vpack.c.b16 %v1960, %v1959
      %v1979 = vpack.c.b16 %v1962, %v1961
      %v1980 = vpack.c.b16 %v1964, %v1963
      %v1997 = vunpack.c.l.b16 %v1855
      %v1998 = vunpack.c.l.b16 %v1858
      %v1999 = vunpack.c.l.b16 %v1861
      %v2000 = vunpack.c.l.b16 %v1864
      %v2001 = vunpack.c.l.b16 %v1867
      %v2002 = vunpack.c.l.b16 %v1870
      %v2003 = vunpack.c.l.b16 %v1873
      %v2004 = vunpack.c.l.b16 %v1876
      %v2005 = vunpack.c.l.b16 %v1879
      %v2006 = vunpack.c.l.b16 %v1882
      %v2007 = vunpack.c.l.b16 %v1885
      %v2008 = vunpack.c.l.b16 %v1888
      %v2009 = vunpack.c.l.b16 %v1891
      %v2010 = vunpack.c.l.b16 %v1894
      %v2011 = vunpack.c.l.b16 %v1897
      %v2012 = vunpack.c.l.b16 %v1900
      %v2013 = vpack.c.b16 %v1997, %v1997
      %v2014 = vpack.c.b16 %v1998, %v1998
      %v2015 = vpack.c.b16 %v1999, %v1999
      %v2016 = vpack.c.b16 %v2000, %v2000
      %v2017 = vpack.c.b16 %v2001, %v2001
      %v2018 = vpack.c.b16 %v2002, %v2002
      %v2019 = vpack.c.b16 %v2003, %v2003
      %v2020 = vpack.c.b16 %v2004, %v2004
      %v2021 = vpack.c.b16 %v2005, %v2005
      %v2022 = vpack.c.b16 %v2006, %v2006
      %v2023 = vpack.c.b16 %v2007, %v2007
      %v2024 = vpack.c.b16 %v2008, %v2008
      %v2025 = vpack.c.b16 %v2009, %v2009
      %v2026 = vpack.c.b16 %v2010, %v2010
      %v2027 = vpack.c.b16 %v2011, %v2011
      %v2028 = vpack.c.b16 %v2012, %v2012
      %v2030 = vshrl.u32 %v1965, 16
      %v2032 = vshll.u32 %v1965, 16
      %v2034 = vrot.slane %v2032, 1
      %v2035 = vor.u32 %v2030, %v2034
      %v2037 = vshll.u32 %v2013, 16
      %v2039 = vrot.slane %v2037, 1
      %v2040 = vsel %vm906, %v2035, %v2039
      %v2042 = vshrl.u32 %v1966, 16
      %v2044 = vshll.u32 %v1966, 16
      %v2046 = vrot.slane %v2044, 1
      %v2047 = vor.u32 %v2042, %v2046
      %v2049 = vshll.u32 %v2014, 16
      %v2051 = vrot.slane %v2049, 1
      %v2052 = vsel %vm906, %v2047, %v2051
      %v2054 = vshrl.u32 %v1967, 16
      %v2056 = vshll.u32 %v1967, 16
      %v2058 = vrot.slane %v2056, 1
      %v2059 = vor.u32 %v2054, %v2058
      %v2061 = vshll.u32 %v2015, 16
      %v2063 = vrot.slane %v2061, 1
      %v2064 = vsel %vm906, %v2059, %v2063
      %v2066 = vshrl.u32 %v1968, 16
      %v2068 = vshll.u32 %v1968, 16
      %v2070 = vrot.slane %v2068, 1
      %v2071 = vor.u32 %v2066, %v2070
      %v2073 = vshll.u32 %v2016, 16
      %v2075 = vrot.slane %v2073, 1
      %v2076 = vsel %vm906, %v2071, %v2075
      %v2078 = vshrl.u32 %v1969, 16
      %v2080 = vshll.u32 %v1969, 16
      %v2082 = vrot.slane %v2080, 1
      %v2083 = vor.u32 %v2078, %v2082
      %v2085 = vshll.u32 %v2017, 16
      %v2087 = vrot.slane %v2085, 1
      %v2088 = vsel %vm906, %v2083, %v2087
      %v2090 = vshrl.u32 %v1970, 16
      %v2092 = vshll.u32 %v1970, 16
      %v2094 = vrot.slane %v2092, 1
      %v2095 = vor.u32 %v2090, %v2094
      %v2097 = vshll.u32 %v2018, 16
      %v2099 = vrot.slane %v2097, 1
      %v2100 = vsel %vm906, %v2095, %v2099
      %v2102 = vshrl.u32 %v1971, 16
      %v2104 = vshll.u32 %v1971, 16
      %v2106 = vrot.slane %v2104, 1
      %v2107 = vor.u32 %v2102, %v2106
      %v2109 = vshll.u32 %v2019, 16
      %v2111 = vrot.slane %v2109, 1
      %v2112 = vsel %vm906, %v2107, %v2111
      %v2114 = vshrl.u32 %v1972, 16
      %v2116 = vshll.u32 %v1972, 16
      %v2118 = vrot.slane %v2116, 1
      %v2119 = vor.u32 %v2114, %v2118
      %v2121 = vshll.u32 %v2020, 16
      %v2123 = vrot.slane %v2121, 1
      %v2124 = vsel %vm906, %v2119, %v2123
      %v2126 = vshrl.u32 %v1973, 16
      %v2128 = vshll.u32 %v1973, 16
      %v2130 = vrot.slane %v2128, 1
      %v2131 = vor.u32 %v2126, %v2130
      %v2133 = vshll.u32 %v2021, 16
      %v2135 = vrot.slane %v2133, 1
      %v2136 = vsel %vm906, %v2131, %v2135
      %v2138 = vshrl.u32 %v1974, 16
      %v2140 = vshll.u32 %v1974, 16
      %v2142 = vrot.slane %v2140, 1
      %v2143 = vor.u32 %v2138, %v2142
      %v2145 = vshll.u32 %v2022, 16
      %v2147 = vrot.slane %v2145, 1
      %v2148 = vsel %vm906, %v2143, %v2147
      %v2150 = vshrl.u32 %v1975, 16
      %v2152 = vshll.u32 %v1975, 16
      %v2154 = vrot.slane %v2152, 1
      %v2155 = vor.u32 %v2150, %v2154
      %v2157 = vshll.u32 %v2023, 16
      %v2159 = vrot.slane %v2157, 1
      %v2160 = vsel %vm906, %v2155, %v2159
      %v2162 = vshrl.u32 %v1976, 16
      %v2164 = vshll.u32 %v1976, 16
      %v2166 = vrot.slane %v2164, 1
      %v2167 = vor.u32 %v2162, %v2166
      %v2169 = vshll.u32 %v2024, 16
      %v2171 = vrot.slane %v2169, 1
      %v2172 = vsel %vm906, %v2167, %v2171
      %v2174 = vshrl.u32 %v1977, 16
      %v2176 = vshll.u32 %v1977, 16
      %v2178 = vrot.slane %v2176, 1
      %v2179 = vor.u32 %v2174, %v2178
      %v2181 = vshll.u32 %v2025, 16
      %v2183 = vrot.slane %v2181, 1
      %v2184 = vsel %vm906, %v2179, %v2183
      %v2186 = vshrl.u32 %v1978, 16
      %v2188 = vshll.u32 %v1978, 16
      %v2190 = vrot.slane %v2188, 1
      %v2191 = vor.u32 %v2186, %v2190
      %v2193 = vshll.u32 %v2026, 16
      %v2195 = vrot.slane %v2193, 1
      %v2196 = vsel %vm906, %v2191, %v2195
      %v2198 = vshrl.u32 %v1979, 16
      %v2200 = vshll.u32 %v1979, 16
      %v2202 = vrot.slane %v2200, 1
      %v2203 = vor.u32 %v2198, %v2202
      %v2205 = vshll.u32 %v2027, 16
      %v2207 = vrot.slane %v2205, 1
      %v2208 = vsel %vm906, %v2203, %v2207
      %v2210 = vshrl.u32 %v1980, 16
      %v2212 = vshll.u32 %v1980, 16
      %v2214 = vrot.slane %v2212, 1
      %v2215 = vor.u32 %v2210, %v2214
      %v2217 = vshll.u32 %v2028, 16
      %v2219 = vrot.slane %v2217, 1
      %v2220 = vsel %vm906, %v2215, %v2219
      %2221 = vrot.lane.b32.xlu0 %v2040, 8
      %v2222 = vpop.permute.xlu0 %2221
      %2223 = vrot.lane.b32.xlu0 %v2052, 8
      %v2224 = vpop.permute.xlu0 %2223
      %2225 = vrot.lane.b32.xlu0 %v2064, 8
      %v2226 = vpop.permute.xlu0 %2225
      %2227 = vrot.lane.b32.xlu0 %v2076, 8
      %v2228 = vpop.permute.xlu0 %2227
      %2229 = vrot.lane.b32.xlu0 %v2088, 8
      %v2230 = vpop.permute.xlu0 %2229
      %2231 = vrot.lane.b32.xlu0 %v2100, 8
      %v2232 = vpop.permute.xlu0 %2231
      %2233 = vrot.lane.b32.xlu0 %v2112, 8
      %v2234 = vpop.permute.xlu0 %2233
      %2235 = vrot.lane.b32.xlu0 %v2124, 8
      %v2236 = vpop.permute.xlu0 %2235
      %2237 = vrot.lane.b32.xlu0 %v2136, 8
      %v2238 = vpop.permute.xlu0 %2237
      %2239 = vrot.lane.b32.xlu0 %v2148, 8
      %v2240 = vpop.permute.xlu0 %2239
      %2241 = vrot.lane.b32.xlu0 %v2160, 8
      %v2242 = vpop.permute.xlu0 %2241
      %2243 = vrot.lane.b32.xlu0 %v2172, 8
      %v2244 = vpop.permute.xlu0 %2243
      %2245 = vrot.lane.b32.xlu0 %v2184, 8
      %v2246 = vpop.permute.xlu0 %2245
      %2247 = vrot.lane.b32.xlu0 %v2196, 8
      %v2248 = vpop.permute.xlu0 %2247
      %2249 = vrot.lane.b32.xlu0 %v2208, 8
      %v2250 = vpop.permute.xlu0 %2249
      %2251 = vrot.lane.b32.xlu0 %v2220, 8
      %v2252 = vpop.permute.xlu0 %2251
      %v2253 = vrot.slane %v1965, 1
      %v2254 = vrot.slane %v2013, 1
      %v2255 = vsel %vm1131, %v2253, %v2254
      %v2256 = vrot.slane %v1966, 1
      %v2257 = vrot.slane %v2014, 1
      %v2258 = vsel %vm1131, %v2256, %v2257
      %v2259 = vrot.slane %v1967, 1
      %v2260 = vrot.slane %v2015, 1
      %v2261 = vsel %vm1131, %v2259, %v2260
      %v2262 = vrot.slane %v1968, 1
      %v2263 = vrot.slane %v2016, 1
      %v2264 = vsel %vm1131, %v2262, %v2263
      %v2265 = vrot.slane %v1969, 1
      %v2266 = vrot.slane %v2017, 1
      %v2267 = vsel %vm1131, %v2265, %v2266
      %v2268 = vrot.slane %v1970, 1
      %v2269 = vrot.slane %v2018, 1
      %v2270 = vsel %vm1131, %v2268, %v2269
      %v2271 = vrot.slane %v1971, 1
      %v2272 = vrot.slane %v2019, 1
      %v2273 = vsel %vm1131, %v2271, %v2272
      %v2274 = vrot.slane %v1972, 1
      %v2275 = vrot.slane %v2020, 1
      %v2276 = vsel %vm1131, %v2274, %v2275
      %v2277 = vrot.slane %v1973, 1
      %v2278 = vrot.slane %v2021, 1
      %v2279 = vsel %vm1131, %v2277, %v2278
      %v2280 = vrot.slane %v1974, 1
      %v2281 = vrot.slane %v2022, 1
      %v2282 = vsel %vm1131, %v2280, %v2281
      %v2283 = vrot.slane %v1975, 1
      %v2284 = vrot.slane %v2023, 1
      %v2285 = vsel %vm1131, %v2283, %v2284
      %v2286 = vrot.slane %v1976, 1
      %v2287 = vrot.slane %v2024, 1
      %v2288 = vsel %vm1131, %v2286, %v2287
      %v2289 = vrot.slane %v1977, 1
      %v2290 = vrot.slane %v2025, 1
      %v2291 = vsel %vm1131, %v2289, %v2290
      %v2292 = vrot.slane %v1978, 1
      %v2293 = vrot.slane %v2026, 1
      %v2294 = vsel %vm1131, %v2292, %v2293
      %v2295 = vrot.slane %v1979, 1
      %v2296 = vrot.slane %v2027, 1
      %v2297 = vsel %vm1131, %v2295, %v2296
      %v2298 = vrot.slane %v1980, 1
      %v2299 = vrot.slane %v2028, 1
      %v2300 = vsel %vm1131, %v2298, %v2299
      %2301 = vrot.lane.b32.xlu0 %v2255, 16
      %v2302 = vpop.permute.xlu0 %2301
      %2303 = vrot.lane.b32.xlu0 %v2258, 16
      %v2304 = vpop.permute.xlu0 %2303
      %2305 = vrot.lane.b32.xlu0 %v2261, 16
      %v2306 = vpop.permute.xlu0 %2305
      %2307 = vrot.lane.b32.xlu0 %v2264, 16
      %v2308 = vpop.permute.xlu0 %2307
      %2309 = vrot.lane.b32.xlu0 %v2267, 16
      %v2310 = vpop.permute.xlu0 %2309
      %2311 = vrot.lane.b32.xlu0 %v2270, 16
      %v2312 = vpop.permute.xlu0 %2311
      %2313 = vrot.lane.b32.xlu0 %v2273, 16
      %v2314 = vpop.permute.xlu0 %2313
      %2315 = vrot.lane.b32.xlu0 %v2276, 16
      %v2316 = vpop.permute.xlu0 %2315
      %2317 = vrot.lane.b32.xlu0 %v2279, 16
      %v2318 = vpop.permute.xlu0 %2317
      %2319 = vrot.lane.b32.xlu0 %v2282, 16
      %v2320 = vpop.permute.xlu0 %2319
      %2321 = vrot.lane.b32.xlu0 %v2285, 16
      %v2322 = vpop.permute.xlu0 %2321
      %2323 = vrot.lane.b32.xlu0 %v2288, 16
      %v2324 = vpop.permute.xlu0 %2323
      %2325 = vrot.lane.b32.xlu0 %v2291, 16
      %v2326 = vpop.permute.xlu0 %2325
      %2327 = vrot.lane.b32.xlu0 %v2294, 16
      %v2328 = vpop.permute.xlu0 %2327
      %2329 = vrot.lane.b32.xlu0 %v2297, 16
      %v2330 = vpop.permute.xlu0 %2329
      %2331 = vrot.lane.b32.xlu0 %v2300, 16
      %v2332 = vpop.permute.xlu0 %2331
      %v2333 = vrot.slane %v2030, 1
      %v2334 = vrot.slane %v2032, 2
      %v2335 = vor.u32 %v2333, %v2334
      %v2336 = vshrl.u32 %v2013, 16
      %v2338 = vrot.slane %v2336, 1
      %v2339 = vrot.slane %v2037, 2
      %v2340 = vor.u32 %v2338, %v2339
      %v2341 = vsel %vm1212, %v2335, %v2340
      %v2342 = vrot.slane %v2042, 1
      %v2343 = vrot.slane %v2044, 2
      %v2344 = vor.u32 %v2342, %v2343
      %v2345 = vshrl.u32 %v2014, 16
      %v2347 = vrot.slane %v2345, 1
      %v2348 = vrot.slane %v2049, 2
      %v2349 = vor.u32 %v2347, %v2348
      %v2350 = vsel %vm1212, %v2344, %v2349
      %v2351 = vrot.slane %v2054, 1
      %v2352 = vrot.slane %v2056, 2
      %v2353 = vor.u32 %v2351, %v2352
      %v2354 = vshrl.u32 %v2015, 16
      %v2356 = vrot.slane %v2354, 1
      %v2357 = vrot.slane %v2061, 2
      %v2358 = vor.u32 %v2356, %v2357
      %v2359 = vsel %vm1212, %v2353, %v2358
      %v2360 = vrot.slane %v2066, 1
      %v2361 = vrot.slane %v2068, 2
      %v2362 = vor.u32 %v2360, %v2361
      %v2363 = vshrl.u32 %v2016, 16
      %v2365 = vrot.slane %v2363, 1
      %v2366 = vrot.slane %v2073, 2
      %v2367 = vor.u32 %v2365, %v2366
      %v2368 = vsel %vm1212, %v2362, %v2367
      %v2369 = vrot.slane %v2078, 1
      %v2370 = vrot.slane %v2080, 2
      %v2371 = vor.u32 %v2369, %v2370
      %v2372 = vshrl.u32 %v2017, 16
      %v2374 = vrot.slane %v2372, 1
      %v2375 = vrot.slane %v2085, 2
      %v2376 = vor.u32 %v2374, %v2375
      %v2377 = vsel %vm1212, %v2371, %v2376
      %v2378 = vrot.slane %v2090, 1
      %v2379 = vrot.slane %v2092, 2
      %v2380 = vor.u32 %v2378, %v2379
      %v2381 = vshrl.u32 %v2018, 16
      %v2383 = vrot.slane %v2381, 1
      %v2384 = vrot.slane %v2097, 2
      %v2385 = vor.u32 %v2383, %v2384
      %v2386 = vsel %vm1212, %v2380, %v2385
      %v2387 = vrot.slane %v2102, 1
      %v2388 = vrot.slane %v2104, 2
      %v2389 = vor.u32 %v2387, %v2388
      %v2390 = vshrl.u32 %v2019, 16
      %v2392 = vrot.slane %v2390, 1
      %v2393 = vrot.slane %v2109, 2
      %v2394 = vor.u32 %v2392, %v2393
      %v2395 = vsel %vm1212, %v2389, %v2394
      %v2396 = vrot.slane %v2114, 1
      %v2397 = vrot.slane %v2116, 2
      %v2398 = vor.u32 %v2396, %v2397
      %v2399 = vshrl.u32 %v2020, 16
      %v2401 = vrot.slane %v2399, 1
      %v2402 = vrot.slane %v2121, 2
      %v2403 = vor.u32 %v2401, %v2402
      %v2404 = vsel %vm1212, %v2398, %v2403
      %v2405 = vrot.slane %v2126, 1
      %v2406 = vrot.slane %v2128, 2
      %v2407 = vor.u32 %v2405, %v2406
      %v2408 = vshrl.u32 %v2021, 16
      %v2410 = vrot.slane %v2408, 1
      %v2411 = vrot.slane %v2133, 2
      %v2412 = vor.u32 %v2410, %v2411
      %v2413 = vsel %vm1212, %v2407, %v2412
      %v2414 = vrot.slane %v2138, 1
      %v2415 = vrot.slane %v2140, 2
      %v2416 = vor.u32 %v2414, %v2415
      %v2417 = vshrl.u32 %v2022, 16
      %v2419 = vrot.slane %v2417, 1
      %v2420 = vrot.slane %v2145, 2
      %v2421 = vor.u32 %v2419, %v2420
      %v2422 = vsel %vm1212, %v2416, %v2421
      %v2423 = vrot.slane %v2150, 1
      %v2424 = vrot.slane %v2152, 2
      %v2425 = vor.u32 %v2423, %v2424
      %v2426 = vshrl.u32 %v2023, 16
      %v2428 = vrot.slane %v2426, 1
      %v2429 = vrot.slane %v2157, 2
      %v2430 = vor.u32 %v2428, %v2429
      %v2431 = vsel %vm1212, %v2425, %v2430
      %v2432 = vrot.slane %v2162, 1
      %v2433 = vrot.slane %v2164, 2
      %v2434 = vor.u32 %v2432, %v2433
      %v2435 = vshrl.u32 %v2024, 16
      %v2437 = vrot.slane %v2435, 1
      %v2438 = vrot.slane %v2169, 2
      %v2439 = vor.u32 %v2437, %v2438
      %v2440 = vsel %vm1212, %v2434, %v2439
      %v2441 = vrot.slane %v2174, 1
      %v2442 = vrot.slane %v2176, 2
      %v2443 = vor.u32 %v2441, %v2442
      %v2444 = vshrl.u32 %v2025, 16
      %v2446 = vrot.slane %v2444, 1
      %v2447 = vrot.slane %v2181, 2
      %v2448 = vor.u32 %v2446, %v2447
      %v2449 = vsel %vm1212, %v2443, %v2448
      %v2450 = vrot.slane %v2186, 1
      %v2451 = vrot.slane %v2188, 2
      %v2452 = vor.u32 %v2450, %v2451
      %v2453 = vshrl.u32 %v2026, 16
      %v2455 = vrot.slane %v2453, 1
      %v2456 = vrot.slane %v2193, 2
      %v2457 = vor.u32 %v2455, %v2456
      %v2458 = vsel %vm1212, %v2452, %v2457
      %v2459 = vrot.slane %v2198, 1
      %v2460 = vrot.slane %v2200, 2
      %v2461 = vor.u32 %v2459, %v2460
      %v2462 = vshrl.u32 %v2027, 16
      %v2464 = vrot.slane %v2462, 1
      %v2465 = vrot.slane %v2205, 2
      %v2466 = vor.u32 %v2464, %v2465
      %v2467 = vsel %vm1212, %v2461, %v2466
      %v2468 = vrot.slane %v2210, 1
      %v2469 = vrot.slane %v2212, 2
      %v2470 = vor.u32 %v2468, %v2469
      %v2471 = vshrl.u32 %v2028, 16
      %v2473 = vrot.slane %v2471, 1
      %v2474 = vrot.slane %v2217, 2
      %v2475 = vor.u32 %v2473, %v2474
      %v2476 = vsel %vm1212, %v2470, %v2475
      %2477 = vrot.lane.b32.xlu0 %v2341, 24
      %v2478 = vpop.permute.xlu0 %2477
      %2479 = vrot.lane.b32.xlu0 %v2350, 24
      %v2480 = vpop.permute.xlu0 %2479
      %2481 = vrot.lane.b32.xlu0 %v2359, 24
      %v2482 = vpop.permute.xlu0 %2481
      %2483 = vrot.lane.b32.xlu0 %v2368, 24
      %v2484 = vpop.permute.xlu0 %2483
      %2485 = vrot.lane.b32.xlu0 %v2377, 24
      %v2486 = vpop.permute.xlu0 %2485
      %2487 = vrot.lane.b32.xlu0 %v2386, 24
      %v2488 = vpop.permute.xlu0 %2487
      %2489 = vrot.lane.b32.xlu0 %v2395, 24
      %v2490 = vpop.permute.xlu0 %2489
      %2491 = vrot.lane.b32.xlu0 %v2404, 24
      %v2492 = vpop.permute.xlu0 %2491
      %2493 = vrot.lane.b32.xlu0 %v2413, 24
      %v2494 = vpop.permute.xlu0 %2493
      %2495 = vrot.lane.b32.xlu0 %v2422, 24
      %v2496 = vpop.permute.xlu0 %2495
      %2497 = vrot.lane.b32.xlu0 %v2431, 24
      %v2498 = vpop.permute.xlu0 %2497
      %2499 = vrot.lane.b32.xlu0 %v2440, 24
      %v2500 = vpop.permute.xlu0 %2499
      %2501 = vrot.lane.b32.xlu0 %v2449, 24
      %v2502 = vpop.permute.xlu0 %2501
      %2503 = vrot.lane.b32.xlu0 %v2458, 24
      %v2504 = vpop.permute.xlu0 %2503
      %2505 = vrot.lane.b32.xlu0 %v2467, 24
      %v2506 = vpop.permute.xlu0 %2505
      %2507 = vrot.lane.b32.xlu0 %v2476, 24
      %v2508 = vpop.permute.xlu0 %2507
      %v2509 = vrot.slane %v1965, 2
      %v2510 = vrot.slane %v2013, 2
      %v2511 = vsel %vm1389, %v2509, %v2510
      %v2512 = vrot.slane %v1966, 2
      %v2513 = vrot.slane %v2014, 2
      %v2514 = vsel %vm1389, %v2512, %v2513
      %v2515 = vrot.slane %v1967, 2
      %v2516 = vrot.slane %v2015, 2
      %v2517 = vsel %vm1389, %v2515, %v2516
      %v2518 = vrot.slane %v1968, 2
      %v2519 = vrot.slane %v2016, 2
      %v2520 = vsel %vm1389, %v2518, %v2519
      %v2521 = vrot.slane %v1969, 2
      %v2522 = vrot.slane %v2017, 2
      %v2523 = vsel %vm1389, %v2521, %v2522
      %v2524 = vrot.slane %v1970, 2
      %v2525 = vrot.slane %v2018, 2
      %v2526 = vsel %vm1389, %v2524, %v2525
      %v2527 = vrot.slane %v1971, 2
      %v2528 = vrot.slane %v2019, 2
      %v2529 = vsel %vm1389, %v2527, %v2528
      %v2530 = vrot.slane %v1972, 2
      %v2531 = vrot.slane %v2020, 2
      %v2532 = vsel %vm1389, %v2530, %v2531
      %v2533 = vrot.slane %v1973, 2
      %v2534 = vrot.slane %v2021, 2
      %v2535 = vsel %vm1389, %v2533, %v2534
      %v2536 = vrot.slane %v1974, 2
      %v2537 = vrot.slane %v2022, 2
      %v2538 = vsel %vm1389, %v2536, %v2537
      %v2539 = vrot.slane %v1975, 2
      %v2540 = vrot.slane %v2023, 2
      %v2541 = vsel %vm1389, %v2539, %v2540
      %v2542 = vrot.slane %v1976, 2
      %v2543 = vrot.slane %v2024, 2
      %v2544 = vsel %vm1389, %v2542, %v2543
      %v2545 = vrot.slane %v1977, 2
      %v2546 = vrot.slane %v2025, 2
      %v2547 = vsel %vm1389, %v2545, %v2546
      %v2548 = vrot.slane %v1978, 2
      %v2549 = vrot.slane %v2026, 2
      %v2550 = vsel %vm1389, %v2548, %v2549
      %v2551 = vrot.slane %v1979, 2
      %v2552 = vrot.slane %v2027, 2
      %v2553 = vsel %vm1389, %v2551, %v2552
      %v2554 = vrot.slane %v1980, 2
      %v2555 = vrot.slane %v2028, 2
      %v2556 = vsel %vm1389, %v2554, %v2555
      %2557 = vrot.lane.b32.xlu0 %v2511, 32
      %v2558 = vpop.permute.xlu0 %2557
      %2559 = vrot.lane.b32.xlu0 %v2514, 32
      %v2560 = vpop.permute.xlu0 %2559
      %2561 = vrot.lane.b32.xlu0 %v2517, 32
      %v2562 = vpop.permute.xlu0 %2561
      %2563 = vrot.lane.b32.xlu0 %v2520, 32
      %v2564 = vpop.permute.xlu0 %2563
      %2565 = vrot.lane.b32.xlu0 %v2523, 32
      %v2566 = vpop.permute.xlu0 %2565
      %2567 = vrot.lane.b32.xlu0 %v2526, 32
      %v2568 = vpop.permute.xlu0 %2567
      %2569 = vrot.lane.b32.xlu0 %v2529, 32
      %v2570 = vpop.permute.xlu0 %2569
      %2571 = vrot.lane.b32.xlu0 %v2532, 32
      %v2572 = vpop.permute.xlu0 %2571
      %2573 = vrot.lane.b32.xlu0 %v2535, 32
      %v2574 = vpop.permute.xlu0 %2573
      %2575 = vrot.lane.b32.xlu0 %v2538, 32
      %v2576 = vpop.permute.xlu0 %2575
      %2577 = vrot.lane.b32.xlu0 %v2541, 32
      %v2578 = vpop.permute.xlu0 %2577
      %2579 = vrot.lane.b32.xlu0 %v2544, 32
      %v2580 = vpop.permute.xlu0 %2579
      %2581 = vrot.lane.b32.xlu0 %v2547, 32
      %v2582 = vpop.permute.xlu0 %2581
      %2583 = vrot.lane.b32.xlu0 %v2550, 32
      %v2584 = vpop.permute.xlu0 %2583
      %2585 = vrot.lane.b32.xlu0 %v2553, 32
      %v2586 = vpop.permute.xlu0 %2585
      %2587 = vrot.lane.b32.xlu0 %v2556, 32
      %v2588 = vpop.permute.xlu0 %2587
      %v2590 = vsel %vm1470, %v1965, %v2222
      %v2592 = vsel %vm1470, %v1966, %v2224
      %v2594 = vsel %vm1470, %v1967, %v2226
      %v2596 = vsel %vm1470, %v1968, %v2228
      %v2598 = vsel %vm1470, %v1969, %v2230
      %v2600 = vsel %vm1470, %v1970, %v2232
      %v2602 = vsel %vm1470, %v1971, %v2234
      %v2604 = vsel %vm1470, %v1972, %v2236
      %v2606 = vsel %vm1470, %v1973, %v2238
      %v2608 = vsel %vm1470, %v1974, %v2240
      %v2610 = vsel %vm1470, %v1975, %v2242
      %v2612 = vsel %vm1470, %v1976, %v2244
      %v2614 = vsel %vm1470, %v1977, %v2246
      %v2616 = vsel %vm1470, %v1978, %v2248
      %v2618 = vsel %vm1470, %v1979, %v2250
      %v2620 = vsel %vm1470, %v1980, %v2252
      %v2622 = vsel %vm1503, %v2590, %v2302
      %v2624 = vsel %vm1503, %v2592, %v2304
      %v2626 = vsel %vm1503, %v2594, %v2306
      %v2628 = vsel %vm1503, %v2596, %v2308
      %v2630 = vsel %vm1503, %v2598, %v2310
      %v2632 = vsel %vm1503, %v2600, %v2312
      %v2634 = vsel %vm1503, %v2602, %v2314
      %v2636 = vsel %vm1503, %v2604, %v2316
      %v2638 = vsel %vm1503, %v2606, %v2318
      %v2640 = vsel %vm1503, %v2608, %v2320
      %v2642 = vsel %vm1503, %v2610, %v2322
      %v2644 = vsel %vm1503, %v2612, %v2324
      %v2646 = vsel %vm1503, %v2614, %v2326
      %v2648 = vsel %vm1503, %v2616, %v2328
      %v2650 = vsel %vm1503, %v2618, %v2330
      %v2652 = vsel %vm1503, %v2620, %v2332
      %v2654 = vsel %vm1536, %v2622, %v2478
      %v2656 = vsel %vm1536, %v2624, %v2480
      %v2658 = vsel %vm1536, %v2626, %v2482
      %v2660 = vsel %vm1536, %v2628, %v2484
      %v2662 = vsel %vm1536, %v2630, %v2486
      %v2664 = vsel %vm1536, %v2632, %v2488
      %v2666 = vsel %vm1536, %v2634, %v2490
      %v2668 = vsel %vm1536, %v2636, %v2492
      %v2670 = vsel %vm1536, %v2638, %v2494
      %v2672 = vsel %vm1536, %v2640, %v2496
      %v2674 = vsel %vm1536, %v2642, %v2498
      %v2676 = vsel %vm1536, %v2644, %v2500
      %v2678 = vsel %vm1536, %v2646, %v2502
      %v2680 = vsel %vm1536, %v2648, %v2504
      %v2682 = vsel %vm1536, %v2650, %v2506
      %v2684 = vsel %vm1536, %v2652, %v2508
      %v2686 = vsel %vm1569, %v2654, %v2558
      %v2688 = vsel %vm1569, %v2656, %v2560
      %v2690 = vsel %vm1569, %v2658, %v2562
      %v2692 = vsel %vm1569, %v2660, %v2564
      %v2694 = vsel %vm1569, %v2662, %v2566
      %v2696 = vsel %vm1569, %v2664, %v2568
      %v2698 = vsel %vm1569, %v2666, %v2570
      %v2700 = vsel %vm1569, %v2668, %v2572
      %v2702 = vsel %vm1569, %v2670, %v2574
      %v2704 = vsel %vm1569, %v2672, %v2576
      %v2706 = vsel %vm1569, %v2674, %v2578
      %v2708 = vsel %vm1569, %v2676, %v2580
      %v2710 = vsel %vm1569, %v2678, %v2582
      %v2712 = vsel %vm1569, %v2680, %v2584
      %v2714 = vsel %vm1569, %v2682, %v2586
      %v2716 = vsel %vm1569, %v2684, %v2588
      %s2717 = scalar_lea.vmem %s1, 20
      %v2718 = vld [vmem:[%s2717] sm:$0xf]
      %v2719 = vld [vmem:[%s2717 + $0x4] sm:$0xf]
      %v2720 = vld [vmem:[%s2717 + $0x8] sm:$0xf]
      %v2721 = vld [vmem:[%s2717 + $0xc] sm:$0xf]
      %v2722 = vld [vmem:[%s2717 + $0x10] sm:$0xf]
      %v2728 = vunpack.c.l.b16 %v2718
      %v2729 = vunpack.c.l.b16 %v2719
      %v2730 = vunpack.c.l.b16 %v2720
      %v2731 = vunpack.c.l.b16 %v2721
      %v2732 = vunpack.c.l.b16 %v2722
      %v2733 = vpack.c.b16 %v2729, %v2728
      %v2734 = vpack.c.b16 %v2731, %v2730
      %v2735 = vpack.c.b16 %v2732, %v2732
      %v2738 = vsel %vm1622, %v2686, 0
      %v2740 = vsel %vm1622, %v2688, 0
      %v2742 = vsel %vm1622, %v2690, 0
      %v2744 = vsel %vm1622, %v2692, 0
      %v2746 = vsel %vm1622, %v2694, 0
      %v2748 = vsel %vm1622, %v2696, 0
      %v2750 = vsel %vm1622, %v2698, 0
      %v2752 = vsel %vm1622, %v2700, 0
      %v2754 = vsel %vm1622, %v2702, 0
      %v2756 = vsel %vm1622, %v2704, 0
      %v2758 = vsel %vm1622, %v2706, 0
      %v2760 = vsel %vm1622, %v2708, 0
      %v2762 = vsel %vm1622, %v2710, 0
      %v2764 = vsel %vm1622, %v2712, 0
      %v2766 = vsel %vm1622, %v2714, 0
      %v2768 = vsel %vm1622, %v2716, 0
      %v2771 = vsel %vm1655, %v2735, 0
      %2773 = vmatprep.subr.bf16.mxu0 0
      %2774 = vmatpush1.bf16.msra.mxu0 %v2733
      %2775 = vmatprep.subr.bf16.mxu0 0
      %2776 = vmatpush1.bf16.msra.mxu0 %v2734
      %2777 = vmatprep.subr.bf16.mxu0 0
      %2778 = vmatpush1.bf16.msra.mxu0 %v2771
      %2779 = vmatprep.subr.bf16.mxu0 0
      %2780 = vmatpush1.bf16.msra.mxu0 0
      %2781 = vmatprep.subr.bf16.mxu0 0
      %2782 = vmatpush1.bf16.msra.mxu0 0
      %2783 = vmatprep.subr.bf16.mxu0 0
      %2784 = vmatpush1.bf16.msra.mxu0 0
      %2785 = vmatprep.subr.bf16.mxu0 0
      %2786 = vmatpush1.bf16.msra.mxu0 0
      %2787 = vmatprep.subr.bf16.mxu0 0
      %2788 = vmatpush1.bf16.msra.mxu0 0
      %2789 = vmatprep.subr.bf16.mxu0 0
      %2790 = vmatpush1.bf16.msra.mxu0 0
      %2791 = vmatprep.subr.bf16.mxu0 0
      %2792 = vmatpush1.bf16.msra.mxu0 0
      %2793 = vmatprep.subr.bf16.mxu0 0
      %2794 = vmatpush1.bf16.msra.mxu0 0
      %2795 = vmatprep.subr.bf16.mxu0 0
      %2796 = vmatpush1.bf16.msra.mxu0 0
      %2797 = vmatprep.subr.bf16.mxu0 0
      %2798 = vmatpush1.bf16.msra.mxu0 0
      %2799 = vmatprep.subr.bf16.mxu0 0
      %2800 = vmatpush1.bf16.msra.mxu0 0
      %2801 = vmatprep.subr.bf16.mxu0 0
      %2802 = vmatpush1.bf16.msra.mxu0 0
      %2803 = vmatprep.subr.bf16.mxu0 0
      %2804 = vmatpush1.bf16.msra.mxu0 0
      %2805 = vmatprep.mubr.bf16.mxu0 0
      %2806 = vmatmul.mubr.bf16.gmra.mrb[0].mxu0 %v2738
      %v2807 = vpop.f32.mrb[0].mxu0
      %v2808 = vadd.f32 0.0, %v2807
      %v2809 = vpop.f32.mrb[0].mxu0
      %v2810 = vpop.f32.mrb[0].mxu0
      %v2811 = vadd.f32 0.0, %v2810
      %v2812 = vpop.f32.mrb[0].mxu0
      %2813 = vmatprep.mubr.bf16.mxu0 0
      %2814 = vmatmul.mubr.bf16.gmra.mrb[0].mxu0 %v2740
      %v2815 = vpop.f32.mrb[0].mxu0
      %v2816 = vadd.f32 0.0, %v2815
      %v2817 = vpop.f32.mrb[0].mxu0
      %v2818 = vpop.f32.mrb[0].mxu0
      %v2819 = vadd.f32 0.0, %v2818
      %v2820 = vpop.f32.mrb[0].mxu0
      %2821 = vmatprep.mubr.bf16.mxu0 0
      %2822 = vmatmul.mubr.bf16.gmra.mrb[0].mxu0 %v2742
      %v2823 = vpop.f32.mrb[0].mxu0
      %v2824 = vadd.f32 0.0, %v2823
      %v2825 = vpop.f32.mrb[0].mxu0
      %v2826 = vpop.f32.mrb[0].mxu0
      %v2827 = vadd.f32 0.0, %v2826
      %v2828 = vpop.f32.mrb[0].mxu0
      %2829 = vmatprep.mubr.bf16.mxu0 0
      %2830 = vmatmul.mubr.bf16.gmra.mrb[0].mxu0 %v2744
      %v2831 = vpop.f32.mrb[0].mxu0
      %v2832 = vadd.f32 0.0, %v2831
      %v2833 = vpop.f32.mrb[0].mxu0
      %v2834 = vpop.f32.mrb[0].mxu0
      %v2835 = vadd.f32 0.0, %v2834
      %v2836 = vpop.f32.mrb[0].mxu0
      %2837 = vmatprep.mubr.bf16.mxu0 0
      %2838 = vmatmul.mubr.bf16.gmra.mrb[0].mxu0 %v2746
      %v2839 = vpop.f32.mrb[0].mxu0
      %v2840 = vadd.f32 0.0, %v2839
      %v2841 = vpop.f32.mrb[0].mxu0
      %v2842 = vpop.f32.mrb[0].mxu0
      %v2843 = vadd.f32 0.0, %v2842
      %v2844 = vpop.f32.mrb[0].mxu0
      %2845 = vmatprep.mubr.bf16.mxu0 0
      %2846 = vmatmul.mubr.bf16.gmra.mrb[0].mxu0 %v2748
      %v2847 = vpop.f32.mrb[0].mxu0
      %v2848 = vadd.f32 0.0, %v2847
      %v2849 = vpop.f32.mrb[0].mxu0
      %v2850 = vpop.f32.mrb[0].mxu0
      %v2851 = vadd.f32 0.0, %v2850
      %v2852 = vpop.f32.mrb[0].mxu0
      %2853 = vmatprep.mubr.bf16.mxu0 0
      %2854 = vmatmul.mubr.bf16.gmra.mrb[0].mxu0 %v2750
      %v2855 = vpop.f32.mrb[0].mxu0
      %v2856 = vadd.f32 0.0, %v2855
      %v2857 = vpop.f32.mrb[0].mxu0
      %v2858 = vpop.f32.mrb[0].mxu0
      %v2859 = vadd.f32 0.0, %v2858
      %v2860 = vpop.f32.mrb[0].mxu0
      %2861 = vmatprep.mubr.bf16.mxu0 0
      %2862 = vmatmul.mubr.bf16.gmra.mrb[0].mxu0 %v2752
      %v2863 = vpop.f32.mrb[0].mxu0
      %v2864 = vadd.f32 0.0, %v2863
      %v2865 = vpop.f32.mrb[0].mxu0
      %v2866 = vpop.f32.mrb[0].mxu0
      %v2867 = vadd.f32 0.0, %v2866
      %v2868 = vpop.f32.mrb[0].mxu0
      %2869 = vmatprep.mubr.bf16.mxu0 0
      %2870 = vmatmul.mubr.bf16.gmra.mrb[0].mxu0 %v2754
      %v2871 = vpop.f32.mrb[0].mxu0
      %v2872 = vadd.f32 0.0, %v2871
      %v2873 = vpop.f32.mrb[0].mxu0
      %v2874 = vpop.f32.mrb[0].mxu0
      %v2875 = vadd.f32 0.0, %v2874
      %v2876 = vpop.f32.mrb[0].mxu0
      %2877 = vmatprep.mubr.bf16.mxu0 0
      %2878 = vmatmul.mubr.bf16.gmra.mrb[0].mxu0 %v2756
      %v2879 = vpop.f32.mrb[0].mxu0
      %v2880 = vadd.f32 0.0, %v2879
      %v2881 = vpop.f32.mrb[0].mxu0
      %v2882 = vpop.f32.mrb[0].mxu0
      %v2883 = vadd.f32 0.0, %v2882
      %v2884 = vpop.f32.mrb[0].mxu0
      %2885 = vmatprep.mubr.bf16.mxu0 0
      %2886 = vmatmul.mubr.bf16.gmra.mrb[0].mxu0 %v2758
      %v2887 = vpop.f32.mrb[0].mxu0
      %v2888 = vadd.f32 0.0, %v2887
      %v2889 = vpop.f32.mrb[0].mxu0
      %v2890 = vpop.f32.mrb[0].mxu0
      %v2891 = vadd.f32 0.0, %v2890
      %v2892 = vpop.f32.mrb[0].mxu0
      %2893 = vmatprep.mubr.bf16.mxu0 0
      %2894 = vmatmul.mubr.bf16.gmra.mrb[0].mxu0 %v2760
      %v2895 = vpop.f32.mrb[0].mxu0
      %v2896 = vadd.f32 0.0, %v2895
      %v2897 = vpop.f32.mrb[0].mxu0
      %v2898 = vpop.f32.mrb[0].mxu0
      %v2899 = vadd.f32 0.0, %v2898
      %v2900 = vpop.f32.mrb[0].mxu0
      %2901 = vmatprep.mubr.bf16.mxu0 0
      %2902 = vmatmul.mubr.bf16.gmra.mrb[0].mxu0 %v2762
      %v2903 = vpop.f32.mrb[0].mxu0
      %v2904 = vadd.f32 0.0, %v2903
      %v2905 = vpop.f32.mrb[0].mxu0
      %v2906 = vpop.f32.mrb[0].mxu0
      %v2907 = vadd.f32 0.0, %v2906
      %v2908 = vpop.f32.mrb[0].mxu0
      %2909 = vmatprep.mubr.bf16.mxu0 0
      %2910 = vmatmul.mubr.bf16.gmra.mrb[0].mxu0 %v2764
      %v2911 = vpop.f32.mrb[0].mxu0
      %v2912 = vadd.f32 0.0, %v2911
      %v2913 = vpop.f32.mrb[0].mxu0
      %v2914 = vpop.f32.mrb[0].mxu0
      %v2915 = vadd.f32 0.0, %v2914
      %v2916 = vpop.f32.mrb[0].mxu0
      %2917 = vmatprep.mubr.bf16.mxu0 0
      %2918 = vmatmul.mubr.bf16.gmra.mrb[0].mxu0 %v2766
      %v2919 = vpop.f32.mrb[0].mxu0
      %v2920 = vadd.f32 0.0, %v2919
      %v2921 = vpop.f32.mrb[0].mxu0
      %v2922 = vpop.f32.mrb[0].mxu0
      %v2923 = vadd.f32 0.0, %v2922
      %v2924 = vpop.f32.mrb[0].mxu0
      %2925 = vmatprep.mubr.bf16.mxu0 0
      %2926 = vmatmul.mubr.bf16.gmra.mrb[0].mxu0 %v2768
      %v2927 = vpop.f32.mrb[0].mxu0
      %v2928 = vadd.f32 0.0, %v2927
      %v2929 = vpop.f32.mrb[0].mxu0
      %v2930 = vpop.f32.mrb[0].mxu0
      %v2931 = vadd.f32 0.0, %v2930
      %v2932 = vpop.f32.mrb[0].mxu0
      %2933 = vdwg.mxu0
      %v2934 = vadd.f32 %v1820, %v2808
      %v2935 = vadd.f32 %v1821, %v2811
      %v2936 = vadd.f32 %v1822, %v2816
      %v2937 = vadd.f32 %v1823, %v2819
      %v2938 = vadd.f32 %v1824, %v2824
      %v2939 = vadd.f32 %v1825, %v2827
      %v2940 = vadd.f32 %v1826, %v2832
      %v2941 = vadd.f32 %v1827, %v2835
      %v2942 = vadd.f32 %v1828, %v2840
      %v2943 = vadd.f32 %v1829, %v2843
      %v2944 = vadd.f32 %v1830, %v2848
      %v2945 = vadd.f32 %v1831, %v2851
      %v2946 = vadd.f32 %v1832, %v2856
      %v2947 = vadd.f32 %v1833, %v2859
      %v2948 = vadd.f32 %v1834, %v2864
      %v2949 = vadd.f32 %v1835, %v2867
      %v2950 = vadd.f32 %v1836, %v2872
      %v2951 = vadd.f32 %v1837, %v2875
      %v2952 = vadd.f32 %v1838, %v2880
      %v2953 = vadd.f32 %v1839, %v2883
      %v2954 = vadd.f32 %v1840, %v2888
      %v2955 = vadd.f32 %v1841, %v2891
      %v2956 = vadd.f32 %v1842, %v2896
      %v2957 = vadd.f32 %v1843, %v2899
      %v2958 = vadd.f32 %v1844, %v2904
      %v2959 = vadd.f32 %v1845, %v2907
      %v2960 = vadd.f32 %v1846, %v2912
      %v2961 = vadd.f32 %v1847, %v2915
      %v2962 = vadd.f32 %v1848, %v2920
      %v2963 = vadd.f32 %v1849, %v2923
      %v2964 = vadd.f32 %v1850, %v2928
      %v2965 = vadd.f32 %v1851, %v2931
      %s2966 = scalar_lea.vmem [#allocation2], 24
      %v2967 = vld [vmem:[%s2966] sm:$0xf]
      %v2968 = vld [vmem:[%s2966 + $0x4] sm:$0xf]
      %v2969 = vld [vmem:[%s2966 + $0x8] sm:$0x3]
      %v2970 = vld [vmem:[%s2966 + $0xc] sm:$0xf]
      %v2971 = vld [vmem:[%s2966 + $0x10] sm:$0xf]
      %v2972 = vld [vmem:[%s2966 + $0x14] sm:$0x3]
      %v2973 = vld [vmem:[%s2966 + $0x18] sm:$0xf]
      %v2974 = vld [vmem:[%s2966 + $0x1c] sm:$0xf]
      %v2975 = vld [vmem:[%s2966 + $0x20] sm:$0x3]
      %v2976 = vld [vmem:[%s2966 + $0x24] sm:$0xf]
      %v2977 = vld [vmem:[%s2966 + $0x28] sm:$0xf]
      %v2978 = vld [vmem:[%s2966 + $0x2c] sm:$0x3]
      %v2979 = vld [vmem:[%s2966 + $0x30] sm:$0xf]
      %v2980 = vld [vmem:[%s2966 + $0x34] sm:$0xf]
      %v2981 = vld [vmem:[%s2966 + $0x38] sm:$0x3]
      %v2982 = vld [vmem:[%s2966 + $0x3c] sm:$0xf]
      %v2983 = vld [vmem:[%s2966 + $0x40] sm:$0xf]
      %v2984 = vld [vmem:[%s2966 + $0x44] sm:$0x3]
      %v2985 = vld [vmem:[%s2966 + $0x48] sm:$0xf]
      %v2986 = vld [vmem:[%s2966 + $0x4c] sm:$0xf]
      %v2987 = vld [vmem:[%s2966 + $0x50] sm:$0x3]
      %v2988 = vld [vmem:[%s2966 + $0x54] sm:$0xf]
      %v2989 = vld [vmem:[%s2966 + $0x58] sm:$0xf]
      %v2990 = vld [vmem:[%s2966 + $0x5c] sm:$0x3]
      %v2991 = vld [vmem:[%s2966 + $0x60] sm:$0xf]
      %v2992 = vld [vmem:[%s2966 + $0x64] sm:$0xf]
      %v2993 = vld [vmem:[%s2966 + $0x68] sm:$0x3]
      %v2994 = vld [vmem:[%s2966 + $0x6c] sm:$0xf]
      %v2995 = vld [vmem:[%s2966 + $0x70] sm:$0xf]
      %v2996 = vld [vmem:[%s2966 + $0x74] sm:$0x3]
      %v2997 = vld [vmem:[%s2966 + $0x78] sm:$0xf]
      %v2998 = vld [vmem:[%s2966 + $0x7c] sm:$0xf]
      %v2999 = vld [vmem:[%s2966 + $0x80] sm:$0x3]
      %v3000 = vld [vmem:[%s2966 + $0x84] sm:$0xf]
      %v3001 = vld [vmem:[%s2966 + $0x88] sm:$0xf]
      %v3002 = vld [vmem:[%s2966 + $0x8c] sm:$0x3]
      %v3003 = vld [vmem:[%s2966 + $0x90] sm:$0xf]
      %v3004 = vld [vmem:[%s2966 + $0x94] sm:$0xf]
      %v3005 = vld [vmem:[%s2966 + $0x98] sm:$0x3]
      %v3006 = vld [vmem:[%s2966 + $0x9c] sm:$0xf]
      %v3007 = vld [vmem:[%s2966 + $0xa0] sm:$0xf]
      %v3008 = vld [vmem:[%s2966 + $0xa4] sm:$0x3]
      %v3009 = vld [vmem:[%s2966 + $0xa8] sm:$0xf]
      %v3010 = vld [vmem:[%s2966 + $0xac] sm:$0xf]
      %v3011 = vld [vmem:[%s2966 + $0xb0] sm:$0x3]
      %v3012 = vld [vmem:[%s2966 + $0xb4] sm:$0xf]
      %v3013 = vld [vmem:[%s2966 + $0xb8] sm:$0xf]
      %v3014 = vld [vmem:[%s2966 + $0xbc] sm:$0x3]
      %v3047 = vunpack.c.l.b16 %v2967
      %v3048 = vunpack.c.l.b16 %v2968
      %v3049 = vunpack.c.l.b16 %v2970
      %v3050 = vunpack.c.l.b16 %v2971
      %v3051 = vunpack.c.l.b16 %v2973
      %v3052 = vunpack.c.l.b16 %v2974
      %v3053 = vunpack.c.l.b16 %v2976
      %v3054 = vunpack.c.l.b16 %v2977
      %v3055 = vunpack.c.l.b16 %v2979
      %v3056 = vunpack.c.l.b16 %v2980
      %v3057 = vunpack.c.l.b16 %v2982
      %v3058 = vunpack.c.l.b16 %v2983
      %v3059 = vunpack.c.l.b16 %v2985
      %v3060 = vunpack.c.l.b16 %v2986
      %v3061 = vunpack.c.l.b16 %v2988
      %v3062 = vunpack.c.l.b16 %v2989
      %v3063 = vunpack.c.l.b16 %v2991
      %v3064 = vunpack.c.l.b16 %v2992
      %v3065 = vunpack.c.l.b16 %v2994
      %v3066 = vunpack.c.l.b16 %v2995
      %v3067 = vunpack.c.l.b16 %v2997
      %v3068 = vunpack.c.l.b16 %v2998
      %v3069 = vunpack.c.l.b16 %v3000
      %v3070 = vunpack.c.l.b16 %v3001
      %v3071 = vunpack.c.l.b16 %v3003
      %v3072 = vunpack.c.l.b16 %v3004
      %v3073 = vunpack.c.l.b16 %v3006
      %v3074 = vunpack.c.l.b16 %v3007
      %v3075 = vunpack.c.l.b16 %v3009
      %v3076 = vunpack.c.l.b16 %v3010
      %v3077 = vunpack.c.l.b16 %v3012
      %v3078 = vunpack.c.l.b16 %v3013
      %v3079 = vpack.c.b16 %v3048, %v3047
      %v3080 = vpack.c.b16 %v3050, %v3049
      %v3081 = vpack.c.b16 %v3052, %v3051
      %v3082 = vpack.c.b16 %v3054, %v3053
      %v3083 = vpack.c.b16 %v3056, %v3055
      %v3084 = vpack.c.b16 %v3058, %v3057
      %v3085 = vpack.c.b16 %v3060, %v3059
      %v3086 = vpack.c.b16 %v3062, %v3061
      %v3087 = vpack.c.b16 %v3064, %v3063
      %v3088 = vpack.c.b16 %v3066, %v3065
      %v3089 = vpack.c.b16 %v3068, %v3067
      %v3090 = vpack.c.b16 %v3070, %v3069
      %v3091 = vpack.c.b16 %v3072, %v3071
      %v3092 = vpack.c.b16 %v3074, %v3073
      %v3093 = vpack.c.b16 %v3076, %v3075
      %v3094 = vpack.c.b16 %v3078, %v3077
      %v3111 = vunpack.c.l.b16 %v2969
      %v3112 = vunpack.c.l.b16 %v2972
      %v3113 = vunpack.c.l.b16 %v2975
      %v3114 = vunpack.c.l.b16 %v2978
      %v3115 = vunpack.c.l.b16 %v2981
      %v3116 = vunpack.c.l.b16 %v2984
      %v3117 = vunpack.c.l.b16 %v2987
      %v3118 = vunpack.c.l.b16 %v2990
      %v3119 = vunpack.c.l.b16 %v2993
      %v3120 = vunpack.c.l.b16 %v2996
      %v3121 = vunpack.c.l.b16 %v2999
      %v3122 = vunpack.c.l.b16 %v3002
      %v3123 = vunpack.c.l.b16 %v3005
      %v3124 = vunpack.c.l.b16 %v3008
      %v3125 = vunpack.c.l.b16 %v3011
      %v3126 = vunpack.c.l.b16 %v3014
      %v3127 = vpack.c.b16 %v3111, %v3111
      %v3128 = vpack.c.b16 %v3112, %v3112
      %v3129 = vpack.c.b16 %v3113, %v3113
      %v3130 = vpack.c.b16 %v3114, %v3114
      %v3131 = vpack.c.b16 %v3115, %v3115
      %v3132 = vpack.c.b16 %v3116, %v3116
      %v3133 = vpack.c.b16 %v3117, %v3117
      %v3134 = vpack.c.b16 %v3118, %v3118
      %v3135 = vpack.c.b16 %v3119, %v3119
      %v3136 = vpack.c.b16 %v3120, %v3120
      %v3137 = vpack.c.b16 %v3121, %v3121
      %v3138 = vpack.c.b16 %v3122, %v3122
      %v3139 = vpack.c.b16 %v3123, %v3123
      %v3140 = vpack.c.b16 %v3124, %v3124
      %v3141 = vpack.c.b16 %v3125, %v3125
      %v3142 = vpack.c.b16 %v3126, %v3126
      %v3144 = vshrl.u32 %v3079, 16
      %v3146 = vshll.u32 %v3079, 16
      %v3148 = vrot.slane %v3146, 1
      %v3149 = vor.u32 %v3144, %v3148
      %v3151 = vshll.u32 %v3127, 16
      %v3153 = vrot.slane %v3151, 1
      %v3154 = vsel %vm906, %v3149, %v3153
      %v3156 = vshrl.u32 %v3080, 16
      %v3158 = vshll.u32 %v3080, 16
      %v3160 = vrot.slane %v3158, 1
      %v3161 = vor.u32 %v3156, %v3160
      %v3163 = vshll.u32 %v3128, 16
      %v3165 = vrot.slane %v3163, 1
      %v3166 = vsel %vm906, %v3161, %v3165
      %v3168 = vshrl.u32 %v3081, 16
      %v3170 = vshll.u32 %v3081, 16
      %v3172 = vrot.slane %v3170, 1
      %v3173 = vor.u32 %v3168, %v3172
      %v3175 = vshll.u32 %v3129, 16
      %v3177 = vrot.slane %v3175, 1
      %v3178 = vsel %vm906, %v3173, %v3177
      %v3180 = vshrl.u32 %v3082, 16
      %v3182 = vshll.u32 %v3082, 16
      %v3184 = vrot.slane %v3182, 1
      %v3185 = vor.u32 %v3180, %v3184
      %v3187 = vshll.u32 %v3130, 16
      %v3189 = vrot.slane %v3187, 1
      %v3190 = vsel %vm906, %v3185, %v3189
      %v3192 = vshrl.u32 %v3083, 16
      %v3194 = vshll.u32 %v3083, 16
      %v3196 = vrot.slane %v3194, 1
      %v3197 = vor.u32 %v3192, %v3196
      %v3199 = vshll.u32 %v3131, 16
      %v3201 = vrot.slane %v3199, 1
      %v3202 = vsel %vm906, %v3197, %v3201
      %v3204 = vshrl.u32 %v3084, 16
      %v3206 = vshll.u32 %v3084, 16
      %v3208 = vrot.slane %v3206, 1
      %v3209 = vor.u32 %v3204, %v3208
      %v3211 = vshll.u32 %v3132, 16
      %v3213 = vrot.slane %v3211, 1
      %v3214 = vsel %vm906, %v3209, %v3213
      %v3216 = vshrl.u32 %v3085, 16
      %v3218 = vshll.u32 %v3085, 16
      %v3220 = vrot.slane %v3218, 1
      %v3221 = vor.u32 %v3216, %v3220
      %v3223 = vshll.u32 %v3133, 16
      %v3225 = vrot.slane %v3223, 1
      %v3226 = vsel %vm906, %v3221, %v3225
      %v3228 = vshrl.u32 %v3086, 16
      %v3230 = vshll.u32 %v3086, 16
      %v3232 = vrot.slane %v3230, 1
      %v3233 = vor.u32 %v3228, %v3232
      %v3235 = vshll.u32 %v3134, 16
      %v3237 = vrot.slane %v3235, 1
      %v3238 = vsel %vm906, %v3233, %v3237
      %v3240 = vshrl.u32 %v3087, 16
      %v3242 = vshll.u32 %v3087, 16
      %v3244 = vrot.slane %v3242, 1
      %v3245 = vor.u32 %v3240, %v3244
      %v3247 = vshll.u32 %v3135, 16
      %v3249 = vrot.slane %v3247, 1
      %v3250 = vsel %vm906, %v3245, %v3249
      %v3252 = vshrl.u32 %v3088, 16
      %v3254 = vshll.u32 %v3088, 16
      %v3256 = vrot.slane %v3254, 1
      %v3257 = vor.u32 %v3252, %v3256
      %v3259 = vshll.u32 %v3136, 16
      %v3261 = vrot.slane %v3259, 1
      %v3262 = vsel %vm906, %v3257, %v3261
      %v3264 = vshrl.u32 %v3089, 16
      %v3266 = vshll.u32 %v3089, 16
      %v3268 = vrot.slane %v3266, 1
      %v3269 = vor.u32 %v3264, %v3268
      %v3271 = vshll.u32 %v3137, 16
      %v3273 = vrot.slane %v3271, 1
      %v3274 = vsel %vm906, %v3269, %v3273
      %v3276 = vshrl.u32 %v3090, 16
      %v3278 = vshll.u32 %v3090, 16
      %v3280 = vrot.slane %v3278, 1
      %v3281 = vor.u32 %v3276, %v3280
      %v3283 = vshll.u32 %v3138, 16
      %v3285 = vrot.slane %v3283, 1
      %v3286 = vsel %vm906, %v3281, %v3285
      %v3288 = vshrl.u32 %v3091, 16
      %v3290 = vshll.u32 %v3091, 16
      %v3292 = vrot.slane %v3290, 1
      %v3293 = vor.u32 %v3288, %v3292
      %v3295 = vshll.u32 %v3139, 16
      %v3297 = vrot.slane %v3295, 1
      %v3298 = vsel %vm906, %v3293, %v3297
      %v3300 = vshrl.u32 %v3092, 16
      %v3302 = vshll.u32 %v3092, 16
      %v3304 = vrot.slane %v3302, 1
      %v3305 = vor.u32 %v3300, %v3304
      %v3307 = vshll.u32 %v3140, 16
      %v3309 = vrot.slane %v3307, 1
      %v3310 = vsel %vm906, %v3305, %v3309
      %v3312 = vshrl.u32 %v3093, 16
      %v3314 = vshll.u32 %v3093, 16
      %v3316 = vrot.slane %v3314, 1
      %v3317 = vor.u32 %v3312, %v3316
      %v3319 = vshll.u32 %v3141, 16
      %v3321 = vrot.slane %v3319, 1
      %v3322 = vsel %vm906, %v3317, %v3321
      %v3324 = vshrl.u32 %v3094, 16
      %v3326 = vshll.u32 %v3094, 16
      %v3328 = vrot.slane %v3326, 1
      %v3329 = vor.u32 %v3324, %v3328
      %v3331 = vshll.u32 %v3142, 16
      %v3333 = vrot.slane %v3331, 1
      %v3334 = vsel %vm906, %v3329, %v3333
      %3335 = vrot.lane.b32.xlu0 %v3154, 8
      %v3336 = vpop.permute.xlu0 %3335
      %3337 = vrot.lane.b32.xlu0 %v3166, 8
      %v3338 = vpop.permute.xlu0 %3337
      %3339 = vrot.lane.b32.xlu0 %v3178, 8
      %v3340 = vpop.permute.xlu0 %3339
      %3341 = vrot.lane.b32.xlu0 %v3190, 8
      %v3342 = vpop.permute.xlu0 %3341
      %3343 = vrot.lane.b32.xlu0 %v3202, 8
      %v3344 = vpop.permute.xlu0 %3343
      %3345 = vrot.lane.b32.xlu0 %v3214, 8
      %v3346 = vpop.permute.xlu0 %3345
      %3347 = vrot.lane.b32.xlu0 %v3226, 8
      %v3348 = vpop.permute.xlu0 %3347
      %3349 = vrot.lane.b32.xlu0 %v3238, 8
      %v3350 = vpop.permute.xlu0 %3349
      %3351 = vrot.lane.b32.xlu0 %v3250, 8
      %v3352 = vpop.permute.xlu0 %3351
      %3353 = vrot.lane.b32.xlu0 %v3262, 8
      %v3354 = vpop.permute.xlu0 %3353
      %3355 = vrot.lane.b32.xlu0 %v3274, 8
      %v3356 = vpop.permute.xlu0 %3355
      %3357 = vrot.lane.b32.xlu0 %v3286, 8
      %v3358 = vpop.permute.xlu0 %3357
      %3359 = vrot.lane.b32.xlu0 %v3298, 8
      %v3360 = vpop.permute.xlu0 %3359
      %3361 = vrot.lane.b32.xlu0 %v3310, 8
      %v3362 = vpop.permute.xlu0 %3361
      %3363 = vrot.lane.b32.xlu0 %v3322, 8
      %v3364 = vpop.permute.xlu0 %3363
      %3365 = vrot.lane.b32.xlu0 %v3334, 8
      %v3366 = vpop.permute.xlu0 %3365
      %v3367 = vrot.slane %v3079, 1
      %v3368 = vrot.slane %v3127, 1
      %v3369 = vsel %vm1131, %v3367, %v3368
      %v3370 = vrot.slane %v3080, 1
      %v3371 = vrot.slane %v3128, 1
      %v3372 = vsel %vm1131, %v3370, %v3371
      %v3373 = vrot.slane %v3081, 1
      %v3374 = vrot.slane %v3129, 1
      %v3375 = vsel %vm1131, %v3373, %v3374
      %v3376 = vrot.slane %v3082, 1
      %v3377 = vrot.slane %v3130, 1
      %v3378 = vsel %vm1131, %v3376, %v3377
      %v3379 = vrot.slane %v3083, 1
      %v3380 = vrot.slane %v3131, 1
      %v3381 = vsel %vm1131, %v3379, %v3380
      %v3382 = vrot.slane %v3084, 1
      %v3383 = vrot.slane %v3132, 1
      %v3384 = vsel %vm1131, %v3382, %v3383
      %v3385 = vrot.slane %v3085, 1
      %v3386 = vrot.slane %v3133, 1
      %v3387 = vsel %vm1131, %v3385, %v3386
      %v3388 = vrot.slane %v3086, 1
      %v3389 = vrot.slane %v3134, 1
      %v3390 = vsel %vm1131, %v3388, %v3389
      %v3391 = vrot.slane %v3087, 1
      %v3392 = vrot.slane %v3135, 1
      %v3393 = vsel %vm1131, %v3391, %v3392
      %v3394 = vrot.slane %v3088, 1
      %v3395 = vrot.slane %v3136, 1
      %v3396 = vsel %vm1131, %v3394, %v3395
      %v3397 = vrot.slane %v3089, 1
      %v3398 = vrot.slane %v3137, 1
      %v3399 = vsel %vm1131, %v3397, %v3398
      %v3400 = vrot.slane %v3090, 1
      %v3401 = vrot.slane %v3138, 1
      %v3402 = vsel %vm1131, %v3400, %v3401
      %v3403 = vrot.slane %v3091, 1
      %v3404 = vrot.slane %v3139, 1
      %v3405 = vsel %vm1131, %v3403, %v3404
      %v3406 = vrot.slane %v3092, 1
      %v3407 = vrot.slane %v3140, 1
      %v3408 = vsel %vm1131, %v3406, %v3407
      %v3409 = vrot.slane %v3093, 1
      %v3410 = vrot.slane %v3141, 1
      %v3411 = vsel %vm1131, %v3409, %v3410
      %v3412 = vrot.slane %v3094, 1
      %v3413 = vrot.slane %v3142, 1
      %v3414 = vsel %vm1131, %v3412, %v3413
      %3415 = vrot.lane.b32.xlu0 %v3369, 16
      %v3416 = vpop.permute.xlu0 %3415
      %3417 = vrot.lane.b32.xlu0 %v3372, 16
      %v3418 = vpop.permute.xlu0 %3417
      %3419 = vrot.lane.b32.xlu0 %v3375, 16
      %v3420 = vpop.permute.xlu0 %3419
      %3421 = vrot.lane.b32.xlu0 %v3378, 16
      %v3422 = vpop.permute.xlu0 %3421
      %3423 = vrot.lane.b32.xlu0 %v3381, 16
      %v3424 = vpop.permute.xlu0 %3423
      %3425 = vrot.lane.b32.xlu0 %v3384, 16
      %v3426 = vpop.permute.xlu0 %3425
      %3427 = vrot.lane.b32.xlu0 %v3387, 16
      %v3428 = vpop.permute.xlu0 %3427
      %3429 = vrot.lane.b32.xlu0 %v3390, 16
      %v3430 = vpop.permute.xlu0 %3429
      %3431 = vrot.lane.b32.xlu0 %v3393, 16
      %v3432 = vpop.permute.xlu0 %3431
      %3433 = vrot.lane.b32.xlu0 %v3396, 16
      %v3434 = vpop.permute.xlu0 %3433
      %3435 = vrot.lane.b32.xlu0 %v3399, 16
      %v3436 = vpop.permute.xlu0 %3435
      %3437 = vrot.lane.b32.xlu0 %v3402, 16
      %v3438 = vpop.permute.xlu0 %3437
      %3439 = vrot.lane.b32.xlu0 %v3405, 16
      %v3440 = vpop.permute.xlu0 %3439
      %3441 = vrot.lane.b32.xlu0 %v3408, 16
      %v3442 = vpop.permute.xlu0 %3441
      %3443 = vrot.lane.b32.xlu0 %v3411, 16
      %v3444 = vpop.permute.xlu0 %3443
      %3445 = vrot.lane.b32.xlu0 %v3414, 16
      %v3446 = vpop.permute.xlu0 %3445
      %v3447 = vrot.slane %v3144, 1
      %v3448 = vrot.slane %v3146, 2
      %v3449 = vor.u32 %v3447, %v3448
      %v3450 = vshrl.u32 %v3127, 16
      %v3452 = vrot.slane %v3450, 1
      %v3453 = vrot.slane %v3151, 2
      %v3454 = vor.u32 %v3452, %v3453
      %v3455 = vsel %vm1212, %v3449, %v3454
      %v3456 = vrot.slane %v3156, 1
      %v3457 = vrot.slane %v3158, 2
      %v3458 = vor.u32 %v3456, %v3457
      %v3459 = vshrl.u32 %v3128, 16
      %v3461 = vrot.slane %v3459, 1
      %v3462 = vrot.slane %v3163, 2
      %v3463 = vor.u32 %v3461, %v3462
      %v3464 = vsel %vm1212, %v3458, %v3463
      %v3465 = vrot.slane %v3168, 1
      %v3466 = vrot.slane %v3170, 2
      %v3467 = vor.u32 %v3465, %v3466
      %v3468 = vshrl.u32 %v3129, 16
      %v3470 = vrot.slane %v3468, 1
      %v3471 = vrot.slane %v3175, 2
      %v3472 = vor.u32 %v3470, %v3471
      %v3473 = vsel %vm1212, %v3467, %v3472
      %v3474 = vrot.slane %v3180, 1
      %v3475 = vrot.slane %v3182, 2
      %v3476 = vor.u32 %v3474, %v3475
      %v3477 = vshrl.u32 %v3130, 16
      %v3479 = vrot.slane %v3477, 1
      %v3480 = vrot.slane %v3187, 2
      %v3481 = vor.u32 %v3479, %v3480
      %v3482 = vsel %vm1212, %v3476, %v3481
      %v3483 = vrot.slane %v3192, 1
      %v3484 = vrot.slane %v3194, 2
      %v3485 = vor.u32 %v3483, %v3484
      %v3486 = vshrl.u32 %v3131, 16
      %v3488 = vrot.slane %v3486, 1
      %v3489 = vrot.slane %v3199, 2
      %v3490 = vor.u32 %v3488, %v3489
      %v3491 = vsel %vm1212, %v3485, %v3490
      %v3492 = vrot.slane %v3204, 1
      %v3493 = vrot.slane %v3206, 2
      %v3494 = vor.u32 %v3492, %v3493
      %v3495 = vshrl.u32 %v3132, 16
      %v3497 = vrot.slane %v3495, 1
      %v3498 = vrot.slane %v3211, 2
      %v3499 = vor.u32 %v3497, %v3498
      %v3500 = vsel %vm1212, %v3494, %v3499
      %v3501 = vrot.slane %v3216, 1
      %v3502 = vrot.slane %v3218, 2
      %v3503 = vor.u32 %v3501, %v3502
      %v3504 = vshrl.u32 %v3133, 16
      %v3506 = vrot.slane %v3504, 1
      %v3507 = vrot.slane %v3223, 2
      %v3508 = vor.u32 %v3506, %v3507
      %v3509 = vsel %vm1212, %v3503, %v3508
      %v3510 = vrot.slane %v3228, 1
      %v3511 = vrot.slane %v3230, 2
      %v3512 = vor.u32 %v3510, %v3511
      %v3513 = vshrl.u32 %v3134, 16
      %v3515 = vrot.slane %v3513, 1
      %v3516 = vrot.slane %v3235, 2
      %v3517 = vor.u32 %v3515, %v3516
      %v3518 = vsel %vm1212, %v3512, %v3517
      %v3519 = vrot.slane %v3240, 1
      %v3520 = vrot.slane %v3242, 2
      %v3521 = vor.u32 %v3519, %v3520
      %v3522 = vshrl.u32 %v3135, 16
      %v3524 = vrot.slane %v3522, 1
      %v3525 = vrot.slane %v3247, 2
      %v3526 = vor.u32 %v3524, %v3525
      %v3527 = vsel %vm1212, %v3521, %v3526
      %v3528 = vrot.slane %v3252, 1
      %v3529 = vrot.slane %v3254, 2
      %v3530 = vor.u32 %v3528, %v3529
      %v3531 = vshrl.u32 %v3136, 16
      %v3533 = vrot.slane %v3531, 1
      %v3534 = vrot.slane %v3259, 2
      %v3535 = vor.u32 %v3533, %v3534
      %v3536 = vsel %vm1212, %v3530, %v3535
      %v3537 = vrot.slane %v3264, 1
      %v3538 = vrot.slane %v3266, 2
      %v3539 = vor.u32 %v3537, %v3538
      %v3540 = vshrl.u32 %v3137, 16
      %v3542 = vrot.slane %v3540, 1
      %v3543 = vrot.slane %v3271, 2
      %v3544 = vor.u32 %v3542, %v3543
      %v3545 = vsel %vm1212, %v3539, %v3544
      %v3546 = vrot.slane %v3276, 1
      %v3547 = vrot.slane %v3278, 2
      %v3548 = vor.u32 %v3546, %v3547
      %v3549 = vshrl.u32 %v3138, 16
      %v3551 = vrot.slane %v3549, 1
      %v3552 = vrot.slane %v3283, 2
      %v3553 = vor.u32 %v3551, %v3552
      %v3554 = vsel %vm1212, %v3548, %v3553
      %v3555 = vrot.slane %v3288, 1
      %v3556 = vrot.slane %v3290, 2
      %v3557 = vor.u32 %v3555, %v3556
      %v3558 = vshrl.u32 %v3139, 16
      %v3560 = vrot.slane %v3558, 1
      %v3561 = vrot.slane %v3295, 2
      %v3562 = vor.u32 %v3560, %v3561
      %v3563 = vsel %vm1212, %v3557, %v3562
      %v3564 = vrot.slane %v3300, 1
      %v3565 = vrot.slane %v3302, 2
      %v3566 = vor.u32 %v3564, %v3565
      %v3567 = vshrl.u32 %v3140, 16
      %v3569 = vrot.slane %v3567, 1
      %v3570 = vrot.slane %v3307, 2
      %v3571 = vor.u32 %v3569, %v3570
      %v3572 = vsel %vm1212, %v3566, %v3571
      %v3573 = vrot.slane %v3312, 1
      %v3574 = vrot.slane %v3314, 2
      %v3575 = vor.u32 %v3573, %v3574
      %v3576 = vshrl.u32 %v3141, 16
      %v3578 = vrot.slane %v3576, 1
      %v3579 = vrot.slane %v3319, 2
      %v3580 = vor.u32 %v3578, %v3579
      %v3581 = vsel %vm1212, %v3575, %v3580
      %v3582 = vrot.slane %v3324, 1
      %v3583 = vrot.slane %v3326, 2
      %v3584 = vor.u32 %v3582, %v3583
      %v3585 = vshrl.u32 %v3142, 16
      %v3587 = vrot.slane %v3585, 1
      %v3588 = vrot.slane %v3331, 2
      %v3589 = vor.u32 %v3587, %v3588
      %v3590 = vsel %vm1212, %v3584, %v3589
      %3591 = vrot.lane.b32.xlu0 %v3455, 24
      %v3592 = vpop.permute.xlu0 %3591
      %3593 = vrot.lane.b32.xlu0 %v3464, 24
      %v3594 = vpop.permute.xlu0 %3593
      %3595 = vrot.lane.b32.xlu0 %v3473, 24
      %v3596 = vpop.permute.xlu0 %3595
      %3597 = vrot.lane.b32.xlu0 %v3482, 24
      %v3598 = vpop.permute.xlu0 %3597
      %3599 = vrot.lane.b32.xlu0 %v3491, 24
      %v3600 = vpop.permute.xlu0 %3599
      %3601 = vrot.lane.b32.xlu0 %v3500, 24
      %v3602 = vpop.permute.xlu0 %3601
      %3603 = vrot.lane.b32.xlu0 %v3509, 24
      %v3604 = vpop.permute.xlu0 %3603
      %3605 = vrot.lane.b32.xlu0 %v3518, 24
      %v3606 = vpop.permute.xlu0 %3605
      %3607 = vrot.lane.b32.xlu0 %v3527, 24
      %v3608 = vpop.permute.xlu0 %3607
      %3609 = vrot.lane.b32.xlu0 %v3536, 24
      %v3610 = vpop.permute.xlu0 %3609
      %3611 = vrot.lane.b32.xlu0 %v3545, 24
      %v3612 = vpop.permute.xlu0 %3611
      %3613 = vrot.lane.b32.xlu0 %v3554, 24
      %v3614 = vpop.permute.xlu0 %3613
      %3615 = vrot.lane.b32.xlu0 %v3563, 24
      %v3616 = vpop.permute.xlu0 %3615
      %3617 = vrot.lane.b32.xlu0 %v3572, 24
      %v3618 = vpop.permute.xlu0 %3617
      %3619 = vrot.lane.b32.xlu0 %v3581, 24
      %v3620 = vpop.permute.xlu0 %3619
      %3621 = vrot.lane.b32.xlu0 %v3590, 24
      %v3622 = vpop.permute.xlu0 %3621
      %v3623 = vrot.slane %v3079, 2
      %v3624 = vrot.slane %v3127, 2
      %v3625 = vsel %vm1389, %v3623, %v3624
      %v3626 = vrot.slane %v3080, 2
      %v3627 = vrot.slane %v3128, 2
      %v3628 = vsel %vm1389, %v3626, %v3627
      %v3629 = vrot.slane %v3081, 2
      %v3630 = vrot.slane %v3129, 2
      %v3631 = vsel %vm1389, %v3629, %v3630
      %v3632 = vrot.slane %v3082, 2
      %v3633 = vrot.slane %v3130, 2
      %v3634 = vsel %vm1389, %v3632, %v3633
      %v3635 = vrot.slane %v3083, 2
      %v3636 = vrot.slane %v3131, 2
      %v3637 = vsel %vm1389, %v3635, %v3636
      %v3638 = vrot.slane %v3084, 2
      %v3639 = vrot.slane %v3132, 2
      %v3640 = vsel %vm1389, %v3638, %v3639
      %v3641 = vrot.slane %v3085, 2
      %v3642 = vrot.slane %v3133, 2
      %v3643 = vsel %vm1389, %v3641, %v3642
      %v3644 = vrot.slane %v3086, 2
      %v3645 = vrot.slane %v3134, 2
      %v3646 = vsel %vm1389, %v3644, %v3645
      %v3647 = vrot.slane %v3087, 2
      %v3648 = vrot.slane %v3135, 2
      %v3649 = vsel %vm1389, %v3647, %v3648
      %v3650 = vrot.slane %v3088, 2
      %v3651 = vrot.slane %v3136, 2
      %v3652 = vsel %vm1389, %v3650, %v3651
      %v3653 = vrot.slane %v3089, 2
      %v3654 = vrot.slane %v3137, 2
      %v3655 = vsel %vm1389, %v3653, %v3654
      %v3656 = vrot.slane %v3090, 2
      %v3657 = vrot.slane %v3138, 2
      %v3658 = vsel %vm1389, %v3656, %v3657
      %v3659 = vrot.slane %v3091, 2
      %v3660 = vrot.slane %v3139, 2
      %v3661 = vsel %vm1389, %v3659, %v3660
      %v3662 = vrot.slane %v3092, 2
      %v3663 = vrot.slane %v3140, 2
      %v3664 = vsel %vm1389, %v3662, %v3663
      %v3665 = vrot.slane %v3093, 2
      %v3666 = vrot.slane %v3141, 2
      %v3667 = vsel %vm1389, %v3665, %v3666
      %v3668 = vrot.slane %v3094, 2
      %v3669 = vrot.slane %v3142, 2
      %v3670 = vsel %vm1389, %v3668, %v3669
      %3671 = vrot.lane.b32.xlu0 %v3625, 32
      %v3672 = vpop.permute.xlu0 %3671
      %3673 = vrot.lane.b32.xlu0 %v3628, 32
      %v3674 = vpop.permute.xlu0 %3673
      %3675 = vrot.lane.b32.xlu0 %v3631, 32
      %v3676 = vpop.permute.xlu0 %3675
      %3677 = vrot.lane.b32.xlu0 %v3634, 32
      %v3678 = vpop.permute.xlu0 %3677
      %3679 = vrot.lane.b32.xlu0 %v3637, 32
      %v3680 = vpop.permute.xlu0 %3679
      %3681 = vrot.lane.b32.xlu0 %v3640, 32
      %v3682 = vpop.permute.xlu0 %3681
      %3683 = vrot.lane.b32.xlu0 %v3643, 32
      %v3684 = vpop.permute.xlu0 %3683
      %3685 = vrot.lane.b32.xlu0 %v3646, 32
      %v3686 = vpop.permute.xlu0 %3685
      %3687 = vrot.lane.b32.xlu0 %v3649, 32
      %v3688 = vpop.permute.xlu0 %3687
      %3689 = vrot.lane.b32.xlu0 %v3652, 32
      %v3690 = vpop.permute.xlu0 %3689
      %3691 = vrot.lane.b32.xlu0 %v3655, 32
      %v3692 = vpop.permute.xlu0 %3691
      %3693 = vrot.lane.b32.xlu0 %v3658, 32
      %v3694 = vpop.permute.xlu0 %3693
      %3695 = vrot.lane.b32.xlu0 %v3661, 32
      %v3696 = vpop.permute.xlu0 %3695
      %3697 = vrot.lane.b32.xlu0 %v3664, 32
      %v3698 = vpop.permute.xlu0 %3697
      %3699 = vrot.lane.b32.xlu0 %v3667, 32
      %v3700 = vpop.permute.xlu0 %3699
      %3701 = vrot.lane.b32.xlu0 %v3670, 32
      %v3702 = vpop.permute.xlu0 %3701
      %v3704 = vsel %vm1470, %v3079, %v3336
      %v3706 = vsel %vm1470, %v3080, %v3338
      %v3708 = vsel %vm1470, %v3081, %v3340
      %v3710 = vsel %vm1470, %v3082, %v3342
      %v3712 = vsel %vm1470, %v3083, %v3344
      %v3714 = vsel %vm1470, %v3084, %v3346
      %v3716 = vsel %vm1470, %v3085, %v3348
      %v3718 = vsel %vm1470, %v3086, %v3350
      %v3720 = vsel %vm1470, %v3087, %v3352
      %v3722 = vsel %vm1470, %v3088, %v3354
      %v3724 = vsel %vm1470, %v3089, %v3356
      %v3726 = vsel %vm1470, %v3090, %v3358
      %v3728 = vsel %vm1470, %v3091, %v3360
      %v3730 = vsel %vm1470, %v3092, %v3362
      %v3732 = vsel %vm1470, %v3093, %v3364
      %v3734 = vsel %vm1470, %v3094, %v3366
      %v3736 = vsel %vm1503, %v3704, %v3416
      %v3738 = vsel %vm1503, %v3706, %v3418
      %v3740 = vsel %vm1503, %v3708, %v3420
      %v3742 = vsel %vm1503, %v3710, %v3422
      %v3744 = vsel %vm1503, %v3712, %v3424
      %v3746 = vsel %vm1503, %v3714, %v3426
      %v3748 = vsel %vm1503, %v3716, %v3428
      %v3750 = vsel %vm1503, %v3718, %v3430
      %v3752 = vsel %vm1503, %v3720, %v3432
      %v3754 = vsel %vm1503, %v3722, %v3434
      %v3756 = vsel %vm1503, %v3724, %v3436
      %v3758 = vsel %vm1503, %v3726, %v3438
      %v3760 = vsel %vm1503, %v3728, %v3440
      %v3762 = vsel %vm1503, %v3730, %v3442
      %v3764 = vsel %vm1503, %v3732, %v3444
      %v3766 = vsel %vm1503, %v3734, %v3446
      %v3768 = vsel %vm1536, %v3736, %v3592
      %v3770 = vsel %vm1536, %v3738, %v3594
      %v3772 = vsel %vm1536, %v3740, %v3596
      %v3774 = vsel %vm1536, %v3742, %v3598
      %v3776 = vsel %vm1536, %v3744, %v3600
      %v3778 = vsel %vm1536, %v3746, %v3602
      %v3780 = vsel %vm1536, %v3748, %v3604
      %v3782 = vsel %vm1536, %v3750, %v3606
      %v3784 = vsel %vm1536, %v3752, %v3608
      %v3786 = vsel %vm1536, %v3754, %v3610
      %v3788 = vsel %vm1536, %v3756, %v3612
      %v3790 = vsel %vm1536, %v3758, %v3614
      %v3792 = vsel %vm1536, %v3760, %v3616
      %v3794 = vsel %vm1536, %v3762, %v3618
      %v3796 = vsel %vm1536, %v3764, %v3620
      %v3798 = vsel %vm1536, %v3766, %v3622
      %v3800 = vsel %vm1569, %v3768, %v3672
      %v3802 = vsel %vm1569, %v3770, %v3674
      %v3804 = vsel %vm1569, %v3772, %v3676
      %v3806 = vsel %vm1569, %v3774, %v3678
      %v3808 = vsel %vm1569, %v3776, %v3680
      %v3810 = vsel %vm1569, %v3778, %v3682
      %v3812 = vsel %vm1569, %v3780, %v3684
      %v3814 = vsel %vm1569, %v3782, %v3686
      %v3816 = vsel %vm1569, %v3784, %v3688
      %v3818 = vsel %vm1569, %v3786, %v3690
      %v3820 = vsel %vm1569, %v3788, %v3692
      %v3822 = vsel %vm1569, %v3790, %v3694
      %v3824 = vsel %vm1569, %v3792, %v3696
      %v3826 = vsel %vm1569, %v3794, %v3698
      %v3828 = vsel %vm1569, %v3796, %v3700
      %v3830 = vsel %vm1569, %v3798, %v3702
      %s3831 = scalar_lea.vmem %s1, 40
      %v3832 = vld [vmem:[%s3831] sm:$0xf]
      %v3833 = vld [vmem:[%s3831 + $0x4] sm:$0xf]
      %v3834 = vld [vmem:[%s3831 + $0x8] sm:$0xf]
      %v3835 = vld [vmem:[%s3831 + $0xc] sm:$0xf]
      %v3836 = vld [vmem:[%s3831 + $0x10] sm:$0xf]
      %v3842 = vunpack.c.l.b16 %v3832
      %v3843 = vunpack.c.l.b16 %v3833
      %v3844 = vunpack.c.l.b16 %v3834
      %v3845 = vunpack.c.l.b16 %v3835
      %v3846 = vunpack.c.l.b16 %v3836
      %v3847 = vpack.c.b16 %v3843, %v3842
      %v3848 = vpack.c.b16 %v3845, %v3844
      %v3849 = vpack.c.b16 %v3846, %v3846
      %v3852 = vsel %vm1622, %v3800, 0
      %v3854 = vsel %vm1622, %v3802, 0
      %v3856 = vsel %vm1622, %v3804, 0
      %v3858 = vsel %vm1622, %v3806, 0
      %v3860 = vsel %vm1622, %v3808, 0
      %v3862 = vsel %vm1622, %v3810, 0
      %v3864 = vsel %vm1622, %v3812, 0
      %v3866 = vsel %vm1622, %v3814, 0
      %v3868 = vsel %vm1622, %v3816, 0
      %v3870 = vsel %vm1622, %v3818, 0
      %v3872 = vsel %vm1622, %v3820, 0
      %v3874 = vsel %vm1622, %v3822, 0
      %v3876 = vsel %vm1622, %v3824, 0
      %v3878 = vsel %vm1622, %v3826, 0
      %v3880 = vsel %vm1622, %v3828, 0
      %v3882 = vsel %vm1622, %v3830, 0
      %v3885 = vsel %vm1655, %v3849, 0
      %3887 = vmatprep.subr.bf16.mxu0 0
      %3888 = vmatpush1.bf16.msra.mxu0 %v3847
      %3889 = vmatprep.subr.bf16.mxu0 0
      %3890 = vmatpush1.bf16.msra.mxu0 %v3848
      %3891 = vmatprep.subr.bf16.mxu0 0
      %3892 = vmatpush1.bf16.msra.mxu0 %v3885
      %3893 = vmatprep.subr.bf16.mxu0 0
      %3894 = vmatpush1.bf16.msra.mxu0 0
      %3895 = vmatprep.subr.bf16.mxu0 0
      %3896 = vmatpush1.bf16.msra.mxu0 0
      %3897 = vmatprep.subr.bf16.mxu0 0
      %3898 = vmatpush1.bf16.msra.mxu0 0
      %3899 = vmatprep.subr.bf16.mxu0 0
      %3900 = vmatpush1.bf16.msra.mxu0 0
      %3901 = vmatprep.subr.bf16.mxu0 0
      %3902 = vmatpush1.bf16.msra.mxu0 0
      %3903 = vmatprep.subr.bf16.mxu0 0
      %3904 = vmatpush1.bf16.msra.mxu0 0
      %3905 = vmatprep.subr.bf16.mxu0 0
      %3906 = vmatpush1.bf16.msra.mxu0 0
      %3907 = vmatprep.subr.bf16.mxu0 0
      %3908 = vmatpush1.bf16.msra.mxu0 0
      %3909 = vmatprep.subr.bf16.mxu0 0
      %3910 = vmatpush1.bf16.msra.mxu0 0
      %3911 = vmatprep.subr.bf16.mxu0 0
      %3912 = vmatpush1.bf16.msra.mxu0 0
      %3913 = vmatprep.subr.bf16.mxu0 0
      %3914 = vmatpush1.bf16.msra.mxu0 0
      %3915 = vmatprep.subr.bf16.mxu0 0
      %3916 = vmatpush1.bf16.msra.mxu0 0
      %3917 = vmatprep.subr.bf16.mxu0 0
      %3918 = vmatpush1.bf16.msra.mxu0 0
      %3919 = vmatprep.mubr.bf16.mxu0 0
      %3920 = vmatmul.mubr.bf16.gmra.mrb[0].mxu0 %v3852
      %v3921 = vpop.f32.mrb[0].mxu0
      %v3922 = vadd.f32 0.0, %v3921
      %v3923 = vpop.f32.mrb[0].mxu0
      %v3924 = vpop.f32.mrb[0].mxu0
      %v3925 = vadd.f32 0.0, %v3924
      %v3926 = vpop.f32.mrb[0].mxu0
      %3927 = vmatprep.mubr.bf16.mxu0 0
      %3928 = vmatmul.mubr.bf16.gmra.mrb[0].mxu0 %v3854
      %v3929 = vpop.f32.mrb[0].mxu0
      %v3930 = vadd.f32 0.0, %v3929
      %v3931 = vpop.f32.mrb[0].mxu0
      %v3932 = vpop.f32.mrb[0].mxu0
      %v3933 = vadd.f32 0.0, %v3932
      %v3934 = vpop.f32.mrb[0].mxu0
      %3935 = vmatprep.mubr.bf16.mxu0 0
      %3936 = vmatmul.mubr.bf16.gmra.mrb[0].mxu0 %v3856
      %v3937 = vpop.f32.mrb[0].mxu0
      %v3938 = vadd.f32 0.0, %v3937
      %v3939 = vpop.f32.mrb[0].mxu0
      %v3940 = vpop.f32.mrb[0].mxu0
      %v3941 = vadd.f32 0.0, %v3940
      %v3942 = vpop.f32.mrb[0].mxu0
      %3943 = vmatprep.mubr.bf16.mxu0 0
      %3944 = vmatmul.mubr.bf16.gmra.mrb[0].mxu0 %v3858
      %v3945 = vpop.f32.mrb[0].mxu0
      %v3946 = vadd.f32 0.0, %v3945
      %v3947 = vpop.f32.mrb[0].mxu0
      %v3948 = vpop.f32.mrb[0].mxu0
      %v3949 = vadd.f32 0.0, %v3948
      %v3950 = vpop.f32.mrb[0].mxu0
      %3951 = vmatprep.mubr.bf16.mxu0 0
      %3952 = vmatmul.mubr.bf16.gmra.mrb[0].mxu0 %v3860
      %v3953 = vpop.f32.mrb[0].mxu0
      %v3954 = vadd.f32 0.0, %v3953
      %v3955 = vpop.f32.mrb[0].mxu0
      %v3956 = vpop.f32.mrb[0].mxu0
      %v3957 = vadd.f32 0.0, %v3956
      %v3958 = vpop.f32.mrb[0].mxu0
      %3959 = vmatprep.mubr.bf16.mxu0 0
      %3960 = vmatmul.mubr.bf16.gmra.mrb[0].mxu0 %v3862
      %v3961 = vpop.f32.mrb[0].mxu0
      %v3962 = vadd.f32 0.0, %v3961
      %v3963 = vpop.f32.mrb[0].mxu0
      %v3964 = vpop.f32.mrb[0].mxu0
      %v3965 = vadd.f32 0.0, %v3964
      %v3966 = vpop.f32.mrb[0].mxu0
      %3967 = vmatprep.mubr.bf16.mxu0 0
      %3968 = vmatmul.mubr.bf16.gmra.mrb[0].mxu0 %v3864
      %v3969 = vpop.f32.mrb[0].mxu0
      %v3970 = vadd.f32 0.0, %v3969
      %v3971 = vpop.f32.mrb[0].mxu0
      %v3972 = vpop.f32.mrb[0].mxu0
      %v3973 = vadd.f32 0.0, %v3972
      %v3974 = vpop.f32.mrb[0].mxu0
      %3975 = vmatprep.mubr.bf16.mxu0 0
      %3976 = vmatmul.mubr.bf16.gmra.mrb[0].mxu0 %v3866
      %v3977 = vpop.f32.mrb[0].mxu0
      %v3978 = vadd.f32 0.0, %v3977
      %v3979 = vpop.f32.mrb[0].mxu0
      %v3980 = vpop.f32.mrb[0].mxu0
      %v3981 = vadd.f32 0.0, %v3980
      %v3982 = vpop.f32.mrb[0].mxu0
      %3983 = vmatprep.mubr.bf16.mxu0 0
      %3984 = vmatmul.mubr.bf16.gmra.mrb[0].mxu0 %v3868
      %v3985 = vpop.f32.mrb[0].mxu0
      %v3986 = vadd.f32 0.0, %v3985
      %v3987 = vpop.f32.mrb[0].mxu0
      %v3988 = vpop.f32.mrb[0].mxu0
      %v3989 = vadd.f32 0.0, %v3988
      %v3990 = vpop.f32.mrb[0].mxu0
      %3991 = vmatprep.mubr.bf16.mxu0 0
      %3992 = vmatmul.mubr.bf16.gmra.mrb[0].mxu0 %v3870
      %v3993 = vpop.f32.mrb[0].mxu0
      %v3994 = vadd.f32 0.0, %v3993
      %v3995 = vpop.f32.mrb[0].mxu0
      %v3996 = vpop.f32.mrb[0].mxu0
      %v3997 = vadd.f32 0.0, %v3996
      %v3998 = vpop.f32.mrb[0].mxu0
      %3999 = vmatprep.mubr.bf16.mxu0 0
      %4000 = vmatmul.mubr.bf16.gmra.mrb[0].mxu0 %v3872
      %v4001 = vpop.f32.mrb[0].mxu0
      %v4002 = vadd.f32 0.0, %v4001
      %v4003 = vpop.f32.mrb[0].mxu0
      %v4004 = vpop.f32.mrb[0].mxu0
      %v4005 = vadd.f32 0.0, %v4004
      %v4006 = vpop.f32.mrb[0].mxu0
      %4007 = vmatprep.mubr.bf16.mxu0 0
      %4008 = vmatmul.mubr.bf16.gmra.mrb[0].mxu0 %v3874
      %v4009 = vpop.f32.mrb[0].mxu0
      %v4010 = vadd.f32 0.0, %v4009
      %v4011 = vpop.f32.mrb[0].mxu0
      %v4012 = vpop.f32.mrb[0].mxu0
      %v4013 = vadd.f32 0.0, %v4012
      %v4014 = vpop.f32.mrb[0].mxu0
      %4015 = vmatprep.mubr.bf16.mxu0 0
      %4016 = vmatmul.mubr.bf16.gmra.mrb[0].mxu0 %v3876
      %v4017 = vpop.f32.mrb[0].mxu0
      %v4018 = vadd.f32 0.0, %v4017
      %v4019 = vpop.f32.mrb[0].mxu0
      %v4020 = vpop.f32.mrb[0].mxu0
      %v4021 = vadd.f32 0.0, %v4020
      %v4022 = vpop.f32.mrb[0].mxu0
      %4023 = vmatprep.mubr.bf16.mxu0 0
      %4024 = vmatmul.mubr.bf16.gmra.mrb[0].mxu0 %v3878
      %v4025 = vpop.f32.mrb[0].mxu0
      %v4026 = vadd.f32 0.0, %v4025
      %v4027 = vpop.f32.mrb[0].mxu0
      %v4028 = vpop.f32.mrb[0].mxu0
      %v4029 = vadd.f32 0.0, %v4028
      %v4030 = vpop.f32.mrb[0].mxu0
      %4031 = vmatprep.mubr.bf16.mxu0 0
      %4032 = vmatmul.mubr.bf16.gmra.mrb[0].mxu0 %v3880
      %v4033 = vpop.f32.mrb[0].mxu0
      %v4034 = vadd.f32 0.0, %v4033
      %v4035 = vpop.f32.mrb[0].mxu0
      %v4036 = vpop.f32.mrb[0].mxu0
      %v4037 = vadd.f32 0.0, %v4036
      %v4038 = vpop.f32.mrb[0].mxu0
      %4039 = vmatprep.mubr.bf16.mxu0 0
      %4040 = vmatmul.mubr.bf16.gmra.mrb[0].mxu0 %v3882
      %v4041 = vpop.f32.mrb[0].mxu0
      %v4042 = vadd.f32 0.0, %v4041
      %v4043 = vpop.f32.mrb[0].mxu0
      %v4044 = vpop.f32.mrb[0].mxu0
      %v4045 = vadd.f32 0.0, %v4044
      %v4046 = vpop.f32.mrb[0].mxu0
      %4047 = vdwg.mxu0
      %v4048 = vadd.f32 %v2934, %v3922
      %v4049 = vadd.f32 %v2935, %v3925
      %v4050 = vadd.f32 %v2936, %v3930
      %v4051 = vadd.f32 %v2937, %v3933
      %v4052 = vadd.f32 %v2938, %v3938
      %v4053 = vadd.f32 %v2939, %v3941
      %v4054 = vadd.f32 %v2940, %v3946
      %v4055 = vadd.f32 %v2941, %v3949
      %v4056 = vadd.f32 %v2942, %v3954
      %v4057 = vadd.f32 %v2943, %v3957
      %v4058 = vadd.f32 %v2944, %v3962
      %v4059 = vadd.f32 %v2945, %v3965
      %v4060 = vadd.f32 %v2946, %v3970
      %v4061 = vadd.f32 %v2947, %v3973
      %v4062 = vadd.f32 %v2948, %v3978
      %v4063 = vadd.f32 %v2949, %v3981
      %v4064 = vadd.f32 %v2950, %v3986
      %v4065 = vadd.f32 %v2951, %v3989
      %v4066 = vadd.f32 %v2952, %v3994
      %v4067 = vadd.f32 %v2953, %v3997
      %v4068 = vadd.f32 %v2954, %v4002
      %v4069 = vadd.f32 %v2955, %v4005
      %v4070 = vadd.f32 %v2956, %v4010
      %v4071 = vadd.f32 %v2957, %v4013
      %v4072 = vadd.f32 %v2958, %v4018
      %v4073 = vadd.f32 %v2959, %v4021
      %v4074 = vadd.f32 %v2960, %v4026
      %v4075 = vadd.f32 %v2961, %v4029
      %v4076 = vadd.f32 %v2962, %v4034
      %v4077 = vadd.f32 %v2963, %v4037
      %v4078 = vadd.f32 %v2964, %v4042
      %v4079 = vadd.f32 %v2965, %v4045
      %s4080 = scalar_lea.vmem [#allocation2], 36
      %v4081 = vld [vmem:[%s4080] sm:$0xf]
      %v4082 = vld [vmem:[%s4080 + $0x4] sm:$0xf]
      %v4083 = vld [vmem:[%s4080 + $0x8] sm:$0x3]
      %v4084 = vld [vmem:[%s4080 + $0xc] sm:$0xf]
      %v4085 = vld [vmem:[%s4080 + $0x10] sm:$0xf]
      %v4086 = vld [vmem:[%s4080 + $0x14] sm:$0x3]
      %v4087 = vld [vmem:[%s4080 + $0x18] sm:$0xf]
      %v4088 = vld [vmem:[%s4080 + $0x1c] sm:$0xf]
      %v4089 = vld [vmem:[%s4080 + $0x20] sm:$0x3]
      %v4090 = vld [vmem:[%s4080 + $0x24] sm:$0xf]
      %v4091 = vld [vmem:[%s4080 + $0x28] sm:$0xf]
      %v4092 = vld [vmem:[%s4080 + $0x2c] sm:$0x3]
      %v4093 = vld [vmem:[%s4080 + $0x30] sm:$0xf]
      %v4094 = vld [vmem:[%s4080 + $0x34] sm:$0xf]
      %v4095 = vld [vmem:[%s4080 + $0x38] sm:$0x3]
      %v4096 = vld [vmem:[%s4080 + $0x3c] sm:$0xf]
      %v4097 = vld [vmem:[%s4080 + $0x40] sm:$0xf]
      %v4098 = vld [vmem:[%s4080 + $0x44] sm:$0x3]
      %v4099 = vld [vmem:[%s4080 + $0x48] sm:$0xf]
      %v4100 = vld [vmem:[%s4080 + $0x4c] sm:$0xf]
      %v4101 = vld [vmem:[%s4080 + $0x50] sm:$0x3]
      %v4102 = vld [vmem:[%s4080 + $0x54] sm:$0xf]
      %v4103 = vld [vmem:[%s4080 + $0x58] sm:$0xf]
      %v4104 = vld [vmem:[%s4080 + $0x5c] sm:$0x3]
      %v4105 = vld [vmem:[%s4080 + $0x60] sm:$0xf]
      %v4106 = vld [vmem:[%s4080 + $0x64] sm:$0xf]
      %v4107 = vld [vmem:[%s4080 + $0x68] sm:$0x3]
      %v4108 = vld [vmem:[%s4080 + $0x6c] sm:$0xf]
      %v4109 = vld [vmem:[%s4080 + $0x70] sm:$0xf]
      %v4110 = vld [vmem:[%s4080 + $0x74] sm:$0x3]
      %v4111 = vld [vmem:[%s4080 + $0x78] sm:$0xf]
      %v4112 = vld [vmem:[%s4080 + $0x7c] sm:$0xf]
      %v4113 = vld [vmem:[%s4080 + $0x80] sm:$0x3]
      %v4114 = vld [vmem:[%s4080 + $0x84] sm:$0xf]
      %v4115 = vld [vmem:[%s4080 + $0x88] sm:$0xf]
      %v4116 = vld [vmem:[%s4080 + $0x8c] sm:$0x3]
      %v4117 = vld [vmem:[%s4080 + $0x90] sm:$0xf]
      %v4118 = vld [vmem:[%s4080 + $0x94] sm:$0xf]
      %v4119 = vld [vmem:[%s4080 + $0x98] sm:$0x3]
      %v4120 = vld [vmem:[%s4080 + $0x9c] sm:$0xf]
      %v4121 = vld [vmem:[%s4080 + $0xa0] sm:$0xf]
      %v4122 = vld [vmem:[%s4080 + $0xa4] sm:$0x3]
      %v4123 = vld [vmem:[%s4080 + $0xa8] sm:$0xf]
      %v4124 = vld [vmem:[%s4080 + $0xac] sm:$0xf]
      %v4125 = vld [vmem:[%s4080 + $0xb0] sm:$0x3]
      %v4126 = vld [vmem:[%s4080 + $0xb4] sm:$0xf]
      %v4127 = vld [vmem:[%s4080 + $0xb8] sm:$0xf]
      %v4128 = vld [vmem:[%s4080 + $0xbc] sm:$0x3]
      %v4161 = vunpack.c.l.b16 %v4081
      %v4162 = vunpack.c.l.b16 %v4082
      %v4163 = vunpack.c.l.b16 %v4084
      %v4164 = vunpack.c.l.b16 %v4085
      %v4165 = vunpack.c.l.b16 %v4087
      %v4166 = vunpack.c.l.b16 %v4088
      %v4167 = vunpack.c.l.b16 %v4090
      %v4168 = vunpack.c.l.b16 %v4091
      %v4169 = vunpack.c.l.b16 %v4093
      %v4170 = vunpack.c.l.b16 %v4094
      %v4171 = vunpack.c.l.b16 %v4096
      %v4172 = vunpack.c.l.b16 %v4097
      %v4173 = vunpack.c.l.b16 %v4099
      %v4174 = vunpack.c.l.b16 %v4100
      %v4175 = vunpack.c.l.b16 %v4102
      %v4176 = vunpack.c.l.b16 %v4103
      %v4177 = vunpack.c.l.b16 %v4105
      %v4178 = vunpack.c.l.b16 %v4106
      %v4179 = vunpack.c.l.b16 %v4108
      %v4180 = vunpack.c.l.b16 %v4109
      %v4181 = vunpack.c.l.b16 %v4111
      %v4182 = vunpack.c.l.b16 %v4112
      %v4183 = vunpack.c.l.b16 %v4114
      %v4184 = vunpack.c.l.b16 %v4115
      %v4185 = vunpack.c.l.b16 %v4117
      %v4186 = vunpack.c.l.b16 %v4118
      %v4187 = vunpack.c.l.b16 %v4120
      %v4188 = vunpack.c.l.b16 %v4121
      %v4189 = vunpack.c.l.b16 %v4123
      %v4190 = vunpack.c.l.b16 %v4124
      %v4191 = vunpack.c.l.b16 %v4126
      %v4192 = vunpack.c.l.b16 %v4127
      %v4193 = vpack.c.b16 %v4162, %v4161
      %v4194 = vpack.c.b16 %v4164, %v4163
      %v4195 = vpack.c.b16 %v4166, %v4165
      %v4196 = vpack.c.b16 %v4168, %v4167
      %v4197 = vpack.c.b16 %v4170, %v4169
      %v4198 = vpack.c.b16 %v4172, %v4171
      %v4199 = vpack.c.b16 %v4174, %v4173
      %v4200 = vpack.c.b16 %v4176, %v4175
      %v4201 = vpack.c.b16 %v4178, %v4177
      %v4202 = vpack.c.b16 %v4180, %v4179
      %v4203 = vpack.c.b16 %v4182, %v4181
      %v4204 = vpack.c.b16 %v4184, %v4183
      %v4205 = vpack.c.b16 %v4186, %v4185
      %v4206 = vpack.c.b16 %v4188, %v4187
      %v4207 = vpack.c.b16 %v4190, %v4189
      %v4208 = vpack.c.b16 %v4192, %v4191
      %v4225 = vunpack.c.l.b16 %v4083
      %v4226 = vunpack.c.l.b16 %v4086
      %v4227 = vunpack.c.l.b16 %v4089
      %v4228 = vunpack.c.l.b16 %v4092
      %v4229 = vunpack.c.l.b16 %v4095
      %v4230 = vunpack.c.l.b16 %v4098
      %v4231 = vunpack.c.l.b16 %v4101
      %v4232 = vunpack.c.l.b16 %v4104
      %v4233 = vunpack.c.l.b16 %v4107
      %v4234 = vunpack.c.l.b16 %v4110
      %v4235 = vunpack.c.l.b16 %v4113
      %v4236 = vunpack.c.l.b16 %v4116
      %v4237 = vunpack.c.l.b16 %v4119
      %v4238 = vunpack.c.l.b16 %v4122
      %v4239 = vunpack.c.l.b16 %v4125
      %v4240 = vunpack.c.l.b16 %v4128
      %v4241 = vpack.c.b16 %v4225, %v4225
      %v4242 = vpack.c.b16 %v4226, %v4226
      %v4243 = vpack.c.b16 %v4227, %v4227
      %v4244 = vpack.c.b16 %v4228, %v4228
      %v4245 = vpack.c.b16 %v4229, %v4229
      %v4246 = vpack.c.b16 %v4230, %v4230
      %v4247 = vpack.c.b16 %v4231, %v4231
      %v4248 = vpack.c.b16 %v4232, %v4232
      %v4249 = vpack.c.b16 %v4233, %v4233
      %v4250 = vpack.c.b16 %v4234, %v4234
      %v4251 = vpack.c.b16 %v4235, %v4235
      %v4252 = vpack.c.b16 %v4236, %v4236
      %v4253 = vpack.c.b16 %v4237, %v4237
      %v4254 = vpack.c.b16 %v4238, %v4238
      %v4255 = vpack.c.b16 %v4239, %v4239
      %v4256 = vpack.c.b16 %v4240, %v4240
      %v4258 = vshrl.u32 %v4193, 16
      %v4260 = vshll.u32 %v4193, 16
      %v4262 = vrot.slane %v4260, 1
      %v4263 = vor.u32 %v4258, %v4262
      %v4265 = vshll.u32 %v4241, 16
      %v4267 = vrot.slane %v4265, 1
      %v4268 = vsel %vm906, %v4263, %v4267
      %v4270 = vshrl.u32 %v4194, 16
      %v4272 = vshll.u32 %v4194, 16
      %v4274 = vrot.slane %v4272, 1
      %v4275 = vor.u32 %v4270, %v4274
      %v4277 = vshll.u32 %v4242, 16
      %v4279 = vrot.slane %v4277, 1
      %v4280 = vsel %vm906, %v4275, %v4279
      %v4282 = vshrl.u32 %v4195, 16
      %v4284 = vshll.u32 %v4195, 16
      %v4286 = vrot.slane %v4284, 1
      %v4287 = vor.u32 %v4282, %v4286
      %v4289 = vshll.u32 %v4243, 16
      %v4291 = vrot.slane %v4289, 1
      %v4292 = vsel %vm906, %v4287, %v4291
      %v4294 = vshrl.u32 %v4196, 16
      %v4296 = vshll.u32 %v4196, 16
      %v4298 = vrot.slane %v4296, 1
      %v4299 = vor.u32 %v4294, %v4298
      %v4301 = vshll.u32 %v4244, 16
      %v4303 = vrot.slane %v4301, 1
      %v4304 = vsel %vm906, %v4299, %v4303
      %v4306 = vshrl.u32 %v4197, 16
      %v4308 = vshll.u32 %v4197, 16
      %v4310 = vrot.slane %v4308, 1
      %v4311 = vor.u32 %v4306, %v4310
      %v4313 = vshll.u32 %v4245, 16
      %v4315 = vrot.slane %v4313, 1
      %v4316 = vsel %vm906, %v4311, %v4315
      %v4318 = vshrl.u32 %v4198, 16
      %v4320 = vshll.u32 %v4198, 16
      %v4322 = vrot.slane %v4320, 1
      %v4323 = vor.u32 %v4318, %v4322
      %v4325 = vshll.u32 %v4246, 16
      %v4327 = vrot.slane %v4325, 1
      %v4328 = vsel %vm906, %v4323, %v4327
      %v4330 = vshrl.u32 %v4199, 16
      %v4332 = vshll.u32 %v4199, 16
      %v4334 = vrot.slane %v4332, 1
      %v4335 = vor.u32 %v4330, %v4334
      %v4337 = vshll.u32 %v4247, 16
      %v4339 = vrot.slane %v4337, 1
      %v4340 = vsel %vm906, %v4335, %v4339
      %v4342 = vshrl.u32 %v4200, 16
      %v4344 = vshll.u32 %v4200, 16
      %v4346 = vrot.slane %v4344, 1
      %v4347 = vor.u32 %v4342, %v4346
      %v4349 = vshll.u32 %v4248, 16
      %v4351 = vrot.slane %v4349, 1
      %v4352 = vsel %vm906, %v4347, %v4351
      %v4354 = vshrl.u32 %v4201, 16
      %v4356 = vshll.u32 %v4201, 16
      %v4358 = vrot.slane %v4356, 1
      %v4359 = vor.u32 %v4354, %v4358
      %v4361 = vshll.u32 %v4249, 16
      %v4363 = vrot.slane %v4361, 1
      %v4364 = vsel %vm906, %v4359, %v4363
      %v4366 = vshrl.u32 %v4202, 16
      %v4368 = vshll.u32 %v4202, 16
      %v4370 = vrot.slane %v4368, 1
      %v4371 = vor.u32 %v4366, %v4370
      %v4373 = vshll.u32 %v4250, 16
      %v4375 = vrot.slane %v4373, 1
      %v4376 = vsel %vm906, %v4371, %v4375
      %v4378 = vshrl.u32 %v4203, 16
      %v4380 = vshll.u32 %v4203, 16
      %v4382 = vrot.slane %v4380, 1
      %v4383 = vor.u32 %v4378, %v4382
      %v4385 = vshll.u32 %v4251, 16
      %v4387 = vrot.slane %v4385, 1
      %v4388 = vsel %vm906, %v4383, %v4387
      %v4390 = vshrl.u32 %v4204, 16
      %v4392 = vshll.u32 %v4204, 16
      %v4394 = vrot.slane %v4392, 1
      %v4395 = vor.u32 %v4390, %v4394
      %v4397 = vshll.u32 %v4252, 16
      %v4399 = vrot.slane %v4397, 1
      %v4400 = vsel %vm906, %v4395, %v4399
      %v4402 = vshrl.u32 %v4205, 16
      %v4404 = vshll.u32 %v4205, 16
      %v4406 = vrot.slane %v4404, 1
      %v4407 = vor.u32 %v4402, %v4406
      %v4409 = vshll.u32 %v4253, 16
      %v4411 = vrot.slane %v4409, 1
      %v4412 = vsel %vm906, %v4407, %v4411
      %v4414 = vshrl.u32 %v4206, 16
      %v4416 = vshll.u32 %v4206, 16
      %v4418 = vrot.slane %v4416, 1
      %v4419 = vor.u32 %v4414, %v4418
      %v4421 = vshll.u32 %v4254, 16
      %v4423 = vrot.slane %v4421, 1
      %v4424 = vsel %vm906, %v4419, %v4423
      %v4426 = vshrl.u32 %v4207, 16
      %v4428 = vshll.u32 %v4207, 16
      %v4430 = vrot.slane %v4428, 1
      %v4431 = vor.u32 %v4426, %v4430
      %v4433 = vshll.u32 %v4255, 16
      %v4435 = vrot.slane %v4433, 1
      %v4436 = vsel %vm906, %v4431, %v4435
      %v4438 = vshrl.u32 %v4208, 16
      %v4440 = vshll.u32 %v4208, 16
      %v4442 = vrot.slane %v4440, 1
      %v4443 = vor.u32 %v4438, %v4442
      %v4445 = vshll.u32 %v4256, 16
      %v4447 = vrot.slane %v4445, 1
      %v4448 = vsel %vm906, %v4443, %v4447
      %4449 = vrot.lane.b32.xlu0 %v4268, 8
      %v4450 = vpop.permute.xlu0 %4449
      %4451 = vrot.lane.b32.xlu0 %v4280, 8
      %v4452 = vpop.permute.xlu0 %4451
      %4453 = vrot.lane.b32.xlu0 %v4292, 8
      %v4454 = vpop.permute.xlu0 %4453
      %4455 = vrot.lane.b32.xlu0 %v4304, 8
      %v4456 = vpop.permute.xlu0 %4455
      %4457 = vrot.lane.b32.xlu0 %v4316, 8
      %v4458 = vpop.permute.xlu0 %4457
      %4459 = vrot.lane.b32.xlu0 %v4328, 8
      %v4460 = vpop.permute.xlu0 %4459
      %4461 = vrot.lane.b32.xlu0 %v4340, 8
      %v4462 = vpop.permute.xlu0 %4461
      %4463 = vrot.lane.b32.xlu0 %v4352, 8
      %v4464 = vpop.permute.xlu0 %4463
      %4465 = vrot.lane.b32.xlu0 %v4364, 8
      %v4466 = vpop.permute.xlu0 %4465
      %4467 = vrot.lane.b32.xlu0 %v4376, 8
      %v4468 = vpop.permute.xlu0 %4467
      %4469 = vrot.lane.b32.xlu0 %v4388, 8
      %v4470 = vpop.permute.xlu0 %4469
      %4471 = vrot.lane.b32.xlu0 %v4400, 8
      %v4472 = vpop.permute.xlu0 %4471
      %4473 = vrot.lane.b32.xlu0 %v4412, 8
      %v4474 = vpop.permute.xlu0 %4473
      %4475 = vrot.lane.b32.xlu0 %v4424, 8
      %v4476 = vpop.permute.xlu0 %4475
      %4477 = vrot.lane.b32.xlu0 %v4436, 8
      %v4478 = vpop.permute.xlu0 %4477
      %4479 = vrot.lane.b32.xlu0 %v4448, 8
      %v4480 = vpop.permute.xlu0 %4479
      %v4481 = vrot.slane %v4193, 1
      %v4482 = vrot.slane %v4241, 1
      %v4483 = vsel %vm1131, %v4481, %v4482
      %v4484 = vrot.slane %v4194, 1
      %v4485 = vrot.slane %v4242, 1
      %v4486 = vsel %vm1131, %v4484, %v4485
      %v4487 = vrot.slane %v4195, 1
      %v4488 = vrot.slane %v4243, 1
      %v4489 = vsel %vm1131, %v4487, %v4488
      %v4490 = vrot.slane %v4196, 1
      %v4491 = vrot.slane %v4244, 1
      %v4492 = vsel %vm1131, %v4490, %v4491
      %v4493 = vrot.slane %v4197, 1
      %v4494 = vrot.slane %v4245, 1
      %v4495 = vsel %vm1131, %v4493, %v4494
      %v4496 = vrot.slane %v4198, 1
      %v4497 = vrot.slane %v4246, 1
      %v4498 = vsel %vm1131, %v4496, %v4497
      %v4499 = vrot.slane %v4199, 1
      %v4500 = vrot.slane %v4247, 1
      %v4501 = vsel %vm1131, %v4499, %v4500
      %v4502 = vrot.slane %v4200, 1
      %v4503 = vrot.slane %v4248, 1
      %v4504 = vsel %vm1131, %v4502, %v4503
      %v4505 = vrot.slane %v4201, 1
      %v4506 = vrot.slane %v4249, 1
      %v4507 = vsel %vm1131, %v4505, %v4506
      %v4508 = vrot.slane %v4202, 1
      %v4509 = vrot.slane %v4250, 1
      %v4510 = vsel %vm1131, %v4508, %v4509
      %v4511 = vrot.slane %v4203, 1
      %v4512 = vrot.slane %v4251, 1
      %v4513 = vsel %vm1131, %v4511, %v4512
      %v4514 = vrot.slane %v4204, 1
      %v4515 = vrot.slane %v4252, 1
      %v4516 = vsel %vm1131, %v4514, %v4515
      %v4517 = vrot.slane %v4205, 1
      %v4518 = vrot.slane %v4253, 1
      %v4519 = vsel %vm1131, %v4517, %v4518
      %v4520 = vrot.slane %v4206, 1
      %v4521 = vrot.slane %v4254, 1
      %v4522 = vsel %vm1131, %v4520, %v4521
      %v4523 = vrot.slane %v4207, 1
      %v4524 = vrot.slane %v4255, 1
      %v4525 = vsel %vm1131, %v4523, %v4524
      %v4526 = vrot.slane %v4208, 1
      %v4527 = vrot.slane %v4256, 1
      %v4528 = vsel %vm1131, %v4526, %v4527
      %4529 = vrot.lane.b32.xlu0 %v4483, 16
      %v4530 = vpop.permute.xlu0 %4529
      %4531 = vrot.lane.b32.xlu0 %v4486, 16
      %v4532 = vpop.permute.xlu0 %4531
      %4533 = vrot.lane.b32.xlu0 %v4489, 16
      %v4534 = vpop.permute.xlu0 %4533
      %4535 = vrot.lane.b32.xlu0 %v4492, 16
      %v4536 = vpop.permute.xlu0 %4535
      %4537 = vrot.lane.b32.xlu0 %v4495, 16
      %v4538 = vpop.permute.xlu0 %4537
      %4539 = vrot.lane.b32.xlu0 %v4498, 16
      %v4540 = vpop.permute.xlu0 %4539
      %4541 = vrot.lane.b32.xlu0 %v4501, 16
      %v4542 = vpop.permute.xlu0 %4541
      %4543 = vrot.lane.b32.xlu0 %v4504, 16
      %v4544 = vpop.permute.xlu0 %4543
      %4545 = vrot.lane.b32.xlu0 %v4507, 16
      %v4546 = vpop.permute.xlu0 %4545
      %4547 = vrot.lane.b32.xlu0 %v4510, 16
      %v4548 = vpop.permute.xlu0 %4547
      %4549 = vrot.lane.b32.xlu0 %v4513, 16
      %v4550 = vpop.permute.xlu0 %4549
      %4551 = vrot.lane.b32.xlu0 %v4516, 16
      %v4552 = vpop.permute.xlu0 %4551
      %4553 = vrot.lane.b32.xlu0 %v4519, 16
      %v4554 = vpop.permute.xlu0 %4553
      %4555 = vrot.lane.b32.xlu0 %v4522, 16
      %v4556 = vpop.permute.xlu0 %4555
      %4557 = vrot.lane.b32.xlu0 %v4525, 16
      %v4558 = vpop.permute.xlu0 %4557
      %4559 = vrot.lane.b32.xlu0 %v4528, 16
      %v4560 = vpop.permute.xlu0 %4559
      %v4561 = vrot.slane %v4258, 1
      %v4562 = vrot.slane %v4260, 2
      %v4563 = vor.u32 %v4561, %v4562
      %v4564 = vshrl.u32 %v4241, 16
      %v4566 = vrot.slane %v4564, 1
      %v4567 = vrot.slane %v4265, 2
      %v4568 = vor.u32 %v4566, %v4567
      %v4569 = vsel %vm1212, %v4563, %v4568
      %v4570 = vrot.slane %v4270, 1
      %v4571 = vrot.slane %v4272, 2
      %v4572 = vor.u32 %v4570, %v4571
      %v4573 = vshrl.u32 %v4242, 16
      %v4575 = vrot.slane %v4573, 1
      %v4576 = vrot.slane %v4277, 2
      %v4577 = vor.u32 %v4575, %v4576
      %v4578 = vsel %vm1212, %v4572, %v4577
      %v4579 = vrot.slane %v4282, 1
      %v4580 = vrot.slane %v4284, 2
      %v4581 = vor.u32 %v4579, %v4580
      %v4582 = vshrl.u32 %v4243, 16
      %v4584 = vrot.slane %v4582, 1
      %v4585 = vrot.slane %v4289, 2
      %v4586 = vor.u32 %v4584, %v4585
      %v4587 = vsel %vm1212, %v4581, %v4586
      %v4588 = vrot.slane %v4294, 1
      %v4589 = vrot.slane %v4296, 2
      %v4590 = vor.u32 %v4588, %v4589
      %v4591 = vshrl.u32 %v4244, 16
      %v4593 = vrot.slane %v4591, 1
      %v4594 = vrot.slane %v4301, 2
      %v4595 = vor.u32 %v4593, %v4594
      %v4596 = vsel %vm1212, %v4590, %v4595
      %v4597 = vrot.slane %v4306, 1
      %v4598 = vrot.slane %v4308, 2
      %v4599 = vor.u32 %v4597, %v4598
      %v4600 = vshrl.u32 %v4245, 16
      %v4602 = vrot.slane %v4600, 1
      %v4603 = vrot.slane %v4313, 2
      %v4604 = vor.u32 %v4602, %v4603
      %v4605 = vsel %vm1212, %v4599, %v4604
      %v4606 = vrot.slane %v4318, 1
      %v4607 = vrot.slane %v4320, 2
      %v4608 = vor.u32 %v4606, %v4607
      %v4609 = vshrl.u32 %v4246, 16
      %v4611 = vrot.slane %v4609, 1
      %v4612 = vrot.slane %v4325, 2
      %v4613 = vor.u32 %v4611, %v4612
      %v4614 = vsel %vm1212, %v4608, %v4613
      %v4615 = vrot.slane %v4330, 1
      %v4616 = vrot.slane %v4332, 2
      %v4617 = vor.u32 %v4615, %v4616
      %v4618 = vshrl.u32 %v4247, 16
      %v4620 = vrot.slane %v4618, 1
      %v4621 = vrot.slane %v4337, 2
      %v4622 = vor.u32 %v4620, %v4621
      %v4623 = vsel %vm1212, %v4617, %v4622
      %v4624 = vrot.slane %v4342, 1
      %v4625 = vrot.slane %v4344, 2
      %v4626 = vor.u32 %v4624, %v4625
      %v4627 = vshrl.u32 %v4248, 16
      %v4629 = vrot.slane %v4627, 1
      %v4630 = vrot.slane %v4349, 2
      %v4631 = vor.u32 %v4629, %v4630
      %v4632 = vsel %vm1212, %v4626, %v4631
      %v4633 = vrot.slane %v4354, 1
      %v4634 = vrot.slane %v4356, 2
      %v4635 = vor.u32 %v4633, %v4634
      %v4636 = vshrl.u32 %v4249, 16
      %v4638 = vrot.slane %v4636, 1
      %v4639 = vrot.slane %v4361, 2
      %v4640 = vor.u32 %v4638, %v4639
      %v4641 = vsel %vm1212, %v4635, %v4640
      %v4642 = vrot.slane %v4366, 1
      %v4643 = vrot.slane %v4368, 2
      %v4644 = vor.u32 %v4642, %v4643
      %v4645 = vshrl.u32 %v4250, 16
      %v4647 = vrot.slane %v4645, 1
      %v4648 = vrot.slane %v4373, 2
      %v4649 = vor.u32 %v4647, %v4648
      %v4650 = vsel %vm1212, %v4644, %v4649
      %v4651 = vrot.slane %v4378, 1
      %v4652 = vrot.slane %v4380, 2
      %v4653 = vor.u32 %v4651, %v4652
      %v4654 = vshrl.u32 %v4251, 16
      %v4656 = vrot.slane %v4654, 1
      %v4657 = vrot.slane %v4385, 2
      %v4658 = vor.u32 %v4656, %v4657
      %v4659 = vsel %vm1212, %v4653, %v4658
      %v4660 = vrot.slane %v4390, 1
      %v4661 = vrot.slane %v4392, 2
      %v4662 = vor.u32 %v4660, %v4661
      %v4663 = vshrl.u32 %v4252, 16
      %v4665 = vrot.slane %v4663, 1
      %v4666 = vrot.slane %v4397, 2
      %v4667 = vor.u32 %v4665, %v4666
      %v4668 = vsel %vm1212, %v4662, %v4667
      %v4669 = vrot.slane %v4402, 1
      %v4670 = vrot.slane %v4404, 2
      %v4671 = vor.u32 %v4669, %v4670
      %v4672 = vshrl.u32 %v4253, 16
      %v4674 = vrot.slane %v4672, 1
      %v4675 = vrot.slane %v4409, 2
      %v4676 = vor.u32 %v4674, %v4675
      %v4677 = vsel %vm1212, %v4671, %v4676
      %v4678 = vrot.slane %v4414, 1
      %v4679 = vrot.slane %v4416, 2
      %v4680 = vor.u32 %v4678, %v4679
      %v4681 = vshrl.u32 %v4254, 16
      %v4683 = vrot.slane %v4681, 1
      %v4684 = vrot.slane %v4421, 2
      %v4685 = vor.u32 %v4683, %v4684
      %v4686 = vsel %vm1212, %v4680, %v4685
      %v4687 = vrot.slane %v4426, 1
      %v4688 = vrot.slane %v4428, 2
      %v4689 = vor.u32 %v4687, %v4688
      %v4690 = vshrl.u32 %v4255, 16
      %v4692 = vrot.slane %v4690, 1
      %v4693 = vrot.slane %v4433, 2
      %v4694 = vor.u32 %v4692, %v4693
      %v4695 = vsel %vm1212, %v4689, %v4694
      %v4696 = vrot.slane %v4438, 1
      %v4697 = vrot.slane %v4440, 2
      %v4698 = vor.u32 %v4696, %v4697
      %v4699 = vshrl.u32 %v4256, 16
      %v4701 = vrot.slane %v4699, 1
      %v4702 = vrot.slane %v4445, 2
      %v4703 = vor.u32 %v4701, %v4702
      %v4704 = vsel %vm1212, %v4698, %v4703
      %4705 = vrot.lane.b32.xlu0 %v4569, 24
      %v4706 = vpop.permute.xlu0 %4705
      %4707 = vrot.lane.b32.xlu0 %v4578, 24
      %v4708 = vpop.permute.xlu0 %4707
      %4709 = vrot.lane.b32.xlu0 %v4587, 24
      %v4710 = vpop.permute.xlu0 %4709
      %4711 = vrot.lane.b32.xlu0 %v4596, 24
      %v4712 = vpop.permute.xlu0 %4711
      %4713 = vrot.lane.b32.xlu0 %v4605, 24
      %v4714 = vpop.permute.xlu0 %4713
      %4715 = vrot.lane.b32.xlu0 %v4614, 24
      %v4716 = vpop.permute.xlu0 %4715
      %4717 = vrot.lane.b32.xlu0 %v4623, 24
      %v4718 = vpop.permute.xlu0 %4717
      %4719 = vrot.lane.b32.xlu0 %v4632, 24
      %v4720 = vpop.permute.xlu0 %4719
      %4721 = vrot.lane.b32.xlu0 %v4641, 24
      %v4722 = vpop.permute.xlu0 %4721
      %4723 = vrot.lane.b32.xlu0 %v4650, 24
      %v4724 = vpop.permute.xlu0 %4723
      %4725 = vrot.lane.b32.xlu0 %v4659, 24
      %v4726 = vpop.permute.xlu0 %4725
      %4727 = vrot.lane.b32.xlu0 %v4668, 24
      %v4728 = vpop.permute.xlu0 %4727
      %4729 = vrot.lane.b32.xlu0 %v4677, 24
      %v4730 = vpop.permute.xlu0 %4729
      %4731 = vrot.lane.b32.xlu0 %v4686, 24
      %v4732 = vpop.permute.xlu0 %4731
      %4733 = vrot.lane.b32.xlu0 %v4695, 24
      %v4734 = vpop.permute.xlu0 %4733
      %4735 = vrot.lane.b32.xlu0 %v4704, 24
      %v4736 = vpop.permute.xlu0 %4735
      %v4737 = vrot.slane %v4193, 2
      %v4738 = vrot.slane %v4241, 2
      %v4739 = vsel %vm1389, %v4737, %v4738
      %v4740 = vrot.slane %v4194, 2
      %v4741 = vrot.slane %v4242, 2
      %v4742 = vsel %vm1389, %v4740, %v4741
      %v4743 = vrot.slane %v4195, 2
      %v4744 = vrot.slane %v4243, 2
      %v4745 = vsel %vm1389, %v4743, %v4744
      %v4746 = vrot.slane %v4196, 2
      %v4747 = vrot.slane %v4244, 2
      %v4748 = vsel %vm1389, %v4746, %v4747
      %v4749 = vrot.slane %v4197, 2
      %v4750 = vrot.slane %v4245, 2
      %v4751 = vsel %vm1389, %v4749, %v4750
      %v4752 = vrot.slane %v4198, 2
      %v4753 = vrot.slane %v4246, 2
      %v4754 = vsel %vm1389, %v4752, %v4753
      %v4755 = vrot.slane %v4199, 2
      %v4756 = vrot.slane %v4247, 2
      %v4757 = vsel %vm1389, %v4755, %v4756
      %v4758 = vrot.slane %v4200, 2
      %v4759 = vrot.slane %v4248, 2
      %v4760 = vsel %vm1389, %v4758, %v4759
      %v4761 = vrot.slane %v4201, 2
      %v4762 = vrot.slane %v4249, 2
      %v4763 = vsel %vm1389, %v4761, %v4762
      %v4764 = vrot.slane %v4202, 2
      %v4765 = vrot.slane %v4250, 2
      %v4766 = vsel %vm1389, %v4764, %v4765
      %v4767 = vrot.slane %v4203, 2
      %v4768 = vrot.slane %v4251, 2
      %v4769 = vsel %vm1389, %v4767, %v4768
      %v4770 = vrot.slane %v4204, 2
      %v4771 = vrot.slane %v4252, 2
      %v4772 = vsel %vm1389, %v4770, %v4771
      %v4773 = vrot.slane %v4205, 2
      %v4774 = vrot.slane %v4253, 2
      %v4775 = vsel %vm1389, %v4773, %v4774
      %v4776 = vrot.slane %v4206, 2
      %v4777 = vrot.slane %v4254, 2
      %v4778 = vsel %vm1389, %v4776, %v4777
      %v4779 = vrot.slane %v4207, 2
      %v4780 = vrot.slane %v4255, 2
      %v4781 = vsel %vm1389, %v4779, %v4780
      %v4782 = vrot.slane %v4208, 2
      %v4783 = vrot.slane %v4256, 2
      %v4784 = vsel %vm1389, %v4782, %v4783
      %4785 = vrot.lane.b32.xlu0 %v4739, 32
      %v4786 = vpop.permute.xlu0 %4785
      %4787 = vrot.lane.b32.xlu0 %v4742, 32
      %v4788 = vpop.permute.xlu0 %4787
      %4789 = vrot.lane.b32.xlu0 %v4745, 32
      %v4790 = vpop.permute.xlu0 %4789
      %4791 = vrot.lane.b32.xlu0 %v4748, 32
      %v4792 = vpop.permute.xlu0 %4791
      %4793 = vrot.lane.b32.xlu0 %v4751, 32
      %v4794 = vpop.permute.xlu0 %4793
      %4795 = vrot.lane.b32.xlu0 %v4754, 32
      %v4796 = vpop.permute.xlu0 %4795
      %4797 = vrot.lane.b32.xlu0 %v4757, 32
      %v4798 = vpop.permute.xlu0 %4797
      %4799 = vrot.lane.b32.xlu0 %v4760, 32
      %v4800 = vpop.permute.xlu0 %4799
      %4801 = vrot.lane.b32.xlu0 %v4763, 32
      %v4802 = vpop.permute.xlu0 %4801
      %4803 = vrot.lane.b32.xlu0 %v4766, 32
      %v4804 = vpop.permute.xlu0 %4803
      %4805 = vrot.lane.b32.xlu0 %v4769, 32
      %v4806 = vpop.permute.xlu0 %4805
      %4807 = vrot.lane.b32.xlu0 %v4772, 32
      %v4808 = vpop.permute.xlu0 %4807
      %4809 = vrot.lane.b32.xlu0 %v4775, 32
      %v4810 = vpop.permute.xlu0 %4809
      %4811 = vrot.lane.b32.xlu0 %v4778, 32
      %v4812 = vpop.permute.xlu0 %4811
      %4813 = vrot.lane.b32.xlu0 %v4781, 32
      %v4814 = vpop.permute.xlu0 %4813
      %4815 = vrot.lane.b32.xlu0 %v4784, 32
      %v4816 = vpop.permute.xlu0 %4815
      %v4818 = vsel %vm1470, %v4193, %v4450
      %v4820 = vsel %vm1470, %v4194, %v4452
      %v4822 = vsel %vm1470, %v4195, %v4454
      %v4824 = vsel %vm1470, %v4196, %v4456
      %v4826 = vsel %vm1470, %v4197, %v4458
      %v4828 = vsel %vm1470, %v4198, %v4460
      %v4830 = vsel %vm1470, %v4199, %v4462
      %v4832 = vsel %vm1470, %v4200, %v4464
      %v4834 = vsel %vm1470, %v4201, %v4466
      %v4836 = vsel %vm1470, %v4202, %v4468
      %v4838 = vsel %vm1470, %v4203, %v4470
      %v4840 = vsel %vm1470, %v4204, %v4472
      %v4842 = vsel %vm1470, %v4205, %v4474
      %v4844 = vsel %vm1470, %v4206, %v4476
      %v4846 = vsel %vm1470, %v4207, %v4478
      %v4848 = vsel %vm1470, %v4208, %v4480
      %v4850 = vsel %vm1503, %v4818, %v4530
      %v4852 = vsel %vm1503, %v4820, %v4532
      %v4854 = vsel %vm1503, %v4822, %v4534
      %v4856 = vsel %vm1503, %v4824, %v4536
      %v4858 = vsel %vm1503, %v4826, %v4538
      %v4860 = vsel %vm1503, %v4828, %v4540
      %v4862 = vsel %vm1503, %v4830, %v4542
      %v4864 = vsel %vm1503, %v4832, %v4544
      %v4866 = vsel %vm1503, %v4834, %v4546
      %v4868 = vsel %vm1503, %v4836, %v4548
      %v4870 = vsel %vm1503, %v4838, %v4550
      %v4872 = vsel %vm1503, %v4840, %v4552
      %v4874 = vsel %vm1503, %v4842, %v4554
      %v4876 = vsel %vm1503, %v4844, %v4556
      %v4878 = vsel %vm1503, %v4846, %v4558
      %v4880 = vsel %vm1503, %v4848, %v4560
      %v4882 = vsel %vm1536, %v4850, %v4706
      %v4884 = vsel %vm1536, %v4852, %v4708
      %v4886 = vsel %vm1536, %v4854, %v4710
      %v4888 = vsel %vm1536, %v4856, %v4712
      %v4890 = vsel %vm1536, %v4858, %v4714
      %v4892 = vsel %vm1536, %v4860, %v4716
      %v4894 = vsel %vm1536, %v4862, %v4718
      %v4896 = vsel %vm1536, %v4864, %v4720
      %v4898 = vsel %vm1536, %v4866, %v4722
      %v4900 = vsel %vm1536, %v4868, %v4724
      %v4902 = vsel %vm1536, %v4870, %v4726
      %v4904 = vsel %vm1536, %v4872, %v4728
      %v4906 = vsel %vm1536, %v4874, %v4730
      %v4908 = vsel %vm1536, %v4876, %v4732
      %v4910 = vsel %vm1536, %v4878, %v4734
      %v4912 = vsel %vm1536, %v4880, %v4736
      %v4914 = vsel %vm1569, %v4882, %v4786
      %v4916 = vsel %vm1569, %v4884, %v4788
      %v4918 = vsel %vm1569, %v4886, %v4790
      %v4920 = vsel %vm1569, %v4888, %v4792
      %v4922 = vsel %vm1569, %v4890, %v4794
      %v4924 = vsel %vm1569, %v4892, %v4796
      %v4926 = vsel %vm1569, %v4894, %v4798
      %v4928 = vsel %vm1569, %v4896, %v4800
      %v4930 = vsel %vm1569, %v4898, %v4802
      %v4932 = vsel %vm1569, %v4900, %v4804
      %v4934 = vsel %vm1569, %v4902, %v4806
      %v4936 = vsel %vm1569, %v4904, %v4808
      %v4938 = vsel %vm1569, %v4906, %v4810
      %v4940 = vsel %vm1569, %v4908, %v4812
      %v4942 = vsel %vm1569, %v4910, %v4814
      %v4944 = vsel %vm1569, %v4912, %v4816
      %s4945 = scalar_lea.vmem %s1, 60
      %v4946 = vld [vmem:[%s4945] sm:$0xf]
      %v4947 = vld [vmem:[%s4945 + $0x4] sm:$0xf]
      %v4948 = vld [vmem:[%s4945 + $0x8] sm:$0xf]
      %v4949 = vld [vmem:[%s4945 + $0xc] sm:$0xf]
      %v4950 = vld [vmem:[%s4945 + $0x10] sm:$0xf]
      %v4956 = vunpack.c.l.b16 %v4946
      %v4957 = vunpack.c.l.b16 %v4947
      %v4958 = vunpack.c.l.b16 %v4948
      %v4959 = vunpack.c.l.b16 %v4949
      %v4960 = vunpack.c.l.b16 %v4950
      %v4961 = vpack.c.b16 %v4957, %v4956
      %v4962 = vpack.c.b16 %v4959, %v4958
      %v4963 = vpack.c.b16 %v4960, %v4960
      %v4966 = vsel %vm1622, %v4914, 0
      %v4968 = vsel %vm1622, %v4916, 0
      %v4970 = vsel %vm1622, %v4918, 0
      %v4972 = vsel %vm1622, %v4920, 0
      %v4974 = vsel %vm1622, %v4922, 0
      %v4976 = vsel %vm1622, %v4924, 0
      %v4978 = vsel %vm1622, %v4926, 0
      %v4980 = vsel %vm1622, %v4928, 0
      %v4982 = vsel %vm1622, %v4930, 0
      %v4984 = vsel %vm1622, %v4932, 0
      %v4986 = vsel %vm1622, %v4934, 0
      %v4988 = vsel %vm1622, %v4936, 0
      %v4990 = vsel %vm1622, %v4938, 0
      %v4992 = vsel %vm1622, %v4940, 0
      %v4994 = vsel %vm1622, %v4942, 0
      %v4996 = vsel %vm1622, %v4944, 0
      %v4999 = vsel %vm1655, %v4963, 0
      %5001 = vmatprep.subr.bf16.mxu0 0
      %5002 = vmatpush1.bf16.msra.mxu0 %v4961
      %5003 = vmatprep.subr.bf16.mxu0 0
      %5004 = vmatpush1.bf16.msra.mxu0 %v4962
      %5005 = vmatprep.subr.bf16.mxu0 0
      %5006 = vmatpush1.bf16.msra.mxu0 %v4999
      %5007 = vmatprep.subr.bf16.mxu0 0
      %5008 = vmatpush1.bf16.msra.mxu0 0
      %5009 = vmatprep.subr.bf16.mxu0 0
      %5010 = vmatpush1.bf16.msra.mxu0 0
      %5011 = vmatprep.subr.bf16.mxu0 0
      %5012 = vmatpush1.bf16.msra.mxu0 0
      %5013 = vmatprep.subr.bf16.mxu0 0
      %5014 = vmatpush1.bf16.msra.mxu0 0
      %5015 = vmatprep.subr.bf16.mxu0 0
      %5016 = vmatpush1.bf16.msra.mxu0 0
      %5017 = vmatprep.subr.bf16.mxu0 0
      %5018 = vmatpush1.bf16.msra.mxu0 0
      %5019 = vmatprep.subr.bf16.mxu0 0
      %5020 = vmatpush1.bf16.msra.mxu0 0
      %5021 = vmatprep.subr.bf16.mxu0 0
      %5022 = vmatpush1.bf16.msra.mxu0 0
      %5023 = vmatprep.subr.bf16.mxu0 0
      %5024 = vmatpush1.bf16.msra.mxu0 0
      %5025 = vmatprep.subr.bf16.mxu0 0
      %5026 = vmatpush1.bf16.msra.mxu0 0
      %5027 = vmatprep.subr.bf16.mxu0 0
      %5028 = vmatpush1.bf16.msra.mxu0 0
      %5029 = vmatprep.subr.bf16.mxu0 0
      %5030 = vmatpush1.bf16.msra.mxu0 0
      %5031 = vmatprep.subr.bf16.mxu0 0
      %5032 = vmatpush1.bf16.msra.mxu0 0
      %5033 = vmatprep.mubr.bf16.mxu0 0
      %5034 = vmatmul.mubr.bf16.gmra.mrb[0].mxu0 %v4966
      %v5035 = vpop.f32.mrb[0].mxu0
      %v5036 = vadd.f32 0.0, %v5035
      %v5037 = vpop.f32.mrb[0].mxu0
      %v5038 = vpop.f32.mrb[0].mxu0
      %v5039 = vadd.f32 0.0, %v5038
      %v5040 = vpop.f32.mrb[0].mxu0
      %5041 = vmatprep.mubr.bf16.mxu0 0
      %5042 = vmatmul.mubr.bf16.gmra.mrb[0].mxu0 %v4968
      %v5043 = vpop.f32.mrb[0].mxu0
      %v5044 = vadd.f32 0.0, %v5043
      %v5045 = vpop.f32.mrb[0].mxu0
      %v5046 = vpop.f32.mrb[0].mxu0
      %v5047 = vadd.f32 0.0, %v5046
      %v5048 = vpop.f32.mrb[0].mxu0
      %5049 = vmatprep.mubr.bf16.mxu0 0
      %5050 = vmatmul.mubr.bf16.gmra.mrb[0].mxu0 %v4970
      %v5051 = vpop.f32.mrb[0].mxu0
      %v5052 = vadd.f32 0.0, %v5051
      %v5053 = vpop.f32.mrb[0].mxu0
      %v5054 = vpop.f32.mrb[0].mxu0
      %v5055 = vadd.f32 0.0, %v5054
      %v5056 = vpop.f32.mrb[0].mxu0
      %5057 = vmatprep.mubr.bf16.mxu0 0
      %5058 = vmatmul.mubr.bf16.gmra.mrb[0].mxu0 %v4972
      %v5059 = vpop.f32.mrb[0].mxu0
      %v5060 = vadd.f32 0.0, %v5059
      %v5061 = vpop.f32.mrb[0].mxu0
      %v5062 = vpop.f32.mrb[0].mxu0
      %v5063 = vadd.f32 0.0, %v5062
      %v5064 = vpop.f32.mrb[0].mxu0
      %5065 = vmatprep.mubr.bf16.mxu0 0
      %5066 = vmatmul.mubr.bf16.gmra.mrb[0].mxu0 %v4974
      %v5067 = vpop.f32.mrb[0].mxu0
      %v5068 = vadd.f32 0.0, %v5067
      %v5069 = vpop.f32.mrb[0].mxu0
      %v5070 = vpop.f32.mrb[0].mxu0
      %v5071 = vadd.f32 0.0, %v5070
      %v5072 = vpop.f32.mrb[0].mxu0
      %5073 = vmatprep.mubr.bf16.mxu0 0
      %5074 = vmatmul.mubr.bf16.gmra.mrb[0].mxu0 %v4976
      %v5075 = vpop.f32.mrb[0].mxu0
      %v5076 = vadd.f32 0.0, %v5075
      %v5077 = vpop.f32.mrb[0].mxu0
      %v5078 = vpop.f32.mrb[0].mxu0
      %v5079 = vadd.f32 0.0, %v5078
      %v5080 = vpop.f32.mrb[0].mxu0
      %5081 = vmatprep.mubr.bf16.mxu0 0
      %5082 = vmatmul.mubr.bf16.gmra.mrb[0].mxu0 %v4978
      %v5083 = vpop.f32.mrb[0].mxu0
      %v5084 = vadd.f32 0.0, %v5083
      %v5085 = vpop.f32.mrb[0].mxu0
      %v5086 = vpop.f32.mrb[0].mxu0
      %v5087 = vadd.f32 0.0, %v5086
      %v5088 = vpop.f32.mrb[0].mxu0
      %5089 = vmatprep.mubr.bf16.mxu0 0
      %5090 = vmatmul.mubr.bf16.gmra.mrb[0].mxu0 %v4980
      %v5091 = vpop.f32.mrb[0].mxu0
      %v5092 = vadd.f32 0.0, %v5091
      %v5093 = vpop.f32.mrb[0].mxu0
      %v5094 = vpop.f32.mrb[0].mxu0
      %v5095 = vadd.f32 0.0, %v5094
      %v5096 = vpop.f32.mrb[0].mxu0
      %5097 = vmatprep.mubr.bf16.mxu0 0
      %5098 = vmatmul.mubr.bf16.gmra.mrb[0].mxu0 %v4982
      %v5099 = vpop.f32.mrb[0].mxu0
      %v5100 = vadd.f32 0.0, %v5099
      %v5101 = vpop.f32.mrb[0].mxu0
      %v5102 = vpop.f32.mrb[0].mxu0
      %v5103 = vadd.f32 0.0, %v5102
      %v5104 = vpop.f32.mrb[0].mxu0
      %5105 = vmatprep.mubr.bf16.mxu0 0
      %5106 = vmatmul.mubr.bf16.gmra.mrb[0].mxu0 %v4984
      %v5107 = vpop.f32.mrb[0].mxu0
      %v5108 = vadd.f32 0.0, %v5107
      %v5109 = vpop.f32.mrb[0].mxu0
      %v5110 = vpop.f32.mrb[0].mxu0
      %v5111 = vadd.f32 0.0, %v5110
      %v5112 = vpop.f32.mrb[0].mxu0
      %5113 = vmatprep.mubr.bf16.mxu0 0
      %5114 = vmatmul.mubr.bf16.gmra.mrb[0].mxu0 %v4986
      %v5115 = vpop.f32.mrb[0].mxu0
      %v5116 = vadd.f32 0.0, %v5115
      %v5117 = vpop.f32.mrb[0].mxu0
      %v5118 = vpop.f32.mrb[0].mxu0
      %v5119 = vadd.f32 0.0, %v5118
      %v5120 = vpop.f32.mrb[0].mxu0
      %5121 = vmatprep.mubr.bf16.mxu0 0
      %5122 = vmatmul.mubr.bf16.gmra.mrb[0].mxu0 %v4988
      %v5123 = vpop.f32.mrb[0].mxu0
      %v5124 = vadd.f32 0.0, %v5123
      %v5125 = vpop.f32.mrb[0].mxu0
      %v5126 = vpop.f32.mrb[0].mxu0
      %v5127 = vadd.f32 0.0, %v5126
      %v5128 = vpop.f32.mrb[0].mxu0
      %5129 = vmatprep.mubr.bf16.mxu0 0
      %5130 = vmatmul.mubr.bf16.gmra.mrb[0].mxu0 %v4990
      %v5131 = vpop.f32.mrb[0].mxu0
      %v5132 = vadd.f32 0.0, %v5131
      %v5133 = vpop.f32.mrb[0].mxu0
      %v5134 = vpop.f32.mrb[0].mxu0
      %v5135 = vadd.f32 0.0, %v5134
      %v5136 = vpop.f32.mrb[0].mxu0
      %5137 = vmatprep.mubr.bf16.mxu0 0
      %5138 = vmatmul.mubr.bf16.gmra.mrb[0].mxu0 %v4992
      %v5139 = vpop.f32.mrb[0].mxu0
      %v5140 = vadd.f32 0.0, %v5139
      %v5141 = vpop.f32.mrb[0].mxu0
      %v5142 = vpop.f32.mrb[0].mxu0
      %v5143 = vadd.f32 0.0, %v5142
      %v5144 = vpop.f32.mrb[0].mxu0
      %5145 = vmatprep.mubr.bf16.mxu0 0
      %5146 = vmatmul.mubr.bf16.gmra.mrb[0].mxu0 %v4994
      %v5147 = vpop.f32.mrb[0].mxu0
      %v5148 = vadd.f32 0.0, %v5147
      %v5149 = vpop.f32.mrb[0].mxu0
      %v5150 = vpop.f32.mrb[0].mxu0
      %v5151 = vadd.f32 0.0, %v5150
      %v5152 = vpop.f32.mrb[0].mxu0
      %5153 = vmatprep.mubr.bf16.mxu0 0
      %5154 = vmatmul.mubr.bf16.gmra.mrb[0].mxu0 %v4996
      %v5155 = vpop.f32.mrb[0].mxu0
      %v5156 = vadd.f32 0.0, %v5155
      %v5157 = vpop.f32.mrb[0].mxu0
      %v5158 = vpop.f32.mrb[0].mxu0
      %v5159 = vadd.f32 0.0, %v5158
      %v5160 = vpop.f32.mrb[0].mxu0
      %5161 = vdwg.mxu0
      %v5162 = vadd.f32 %v4048, %v5036
      %v5163 = vadd.f32 %v4049, %v5039
      %v5164 = vadd.f32 %v4050, %v5044
      %v5165 = vadd.f32 %v4051, %v5047
      %v5166 = vadd.f32 %v4052, %v5052
      %v5167 = vadd.f32 %v4053, %v5055
      %v5168 = vadd.f32 %v4054, %v5060
      %v5169 = vadd.f32 %v4055, %v5063
      %v5170 = vadd.f32 %v4056, %v5068
      %v5171 = vadd.f32 %v4057, %v5071
      %v5172 = vadd.f32 %v4058, %v5076
      %v5173 = vadd.f32 %v4059, %v5079
      %v5174 = vadd.f32 %v4060, %v5084
      %v5175 = vadd.f32 %v4061, %v5087
      %v5176 = vadd.f32 %v4062, %v5092
      %v5177 = vadd.f32 %v4063, %v5095
      %v5178 = vadd.f32 %v4064, %v5100
      %v5179 = vadd.f32 %v4065, %v5103
      %v5180 = vadd.f32 %v4066, %v5108
      %v5181 = vadd.f32 %v4067, %v5111
      %v5182 = vadd.f32 %v4068, %v5116
      %v5183 = vadd.f32 %v4069, %v5119
      %v5184 = vadd.f32 %v4070, %v5124
      %v5185 = vadd.f32 %v4071, %v5127
      %v5186 = vadd.f32 %v4072, %v5132
      %v5187 = vadd.f32 %v4073, %v5135
      %v5188 = vadd.f32 %v4074, %v5140
      %v5189 = vadd.f32 %v4075, %v5143
      %v5190 = vadd.f32 %v4076, %v5148
      %v5191 = vadd.f32 %v4077, %v5151
      %v5192 = vadd.f32 %v4078, %v5156
      %v5193 = vadd.f32 %v4079, %v5159
      %s5194 = scalar_lea.vmem [#allocation2], 48
      %v5195 = vld [vmem:[%s5194] sm:$0xf]
      %v5196 = vld [vmem:[%s5194 + $0x4] sm:$0xf]
      %v5197 = vld [vmem:[%s5194 + $0x8] sm:$0x3]
      %v5198 = vld [vmem:[%s5194 + $0xc] sm:$0xf]
      %v5199 = vld [vmem:[%s5194 + $0x10] sm:$0xf]
      %v5200 = vld [vmem:[%s5194 + $0x14] sm:$0x3]
      %v5201 = vld [vmem:[%s5194 + $0x18] sm:$0xf]
      %v5202 = vld [vmem:[%s5194 + $0x1c] sm:$0xf]
      %v5203 = vld [vmem:[%s5194 + $0x20] sm:$0x3]
      %v5204 = vld [vmem:[%s5194 + $0x24] sm:$0xf]
      %v5205 = vld [vmem:[%s5194 + $0x28] sm:$0xf]
      %v5206 = vld [vmem:[%s5194 + $0x2c] sm:$0x3]
      %v5207 = vld [vmem:[%s5194 + $0x30] sm:$0xf]
      %v5208 = vld [vmem:[%s5194 + $0x34] sm:$0xf]
      %v5209 = vld [vmem:[%s5194 + $0x38] sm:$0x3]
      %v5210 = vld [vmem:[%s5194 + $0x3c] sm:$0xf]
      %v5211 = vld [vmem:[%s5194 + $0x40] sm:$0xf]
      %v5212 = vld [vmem:[%s5194 + $0x44] sm:$0x3]
      %v5213 = vld [vmem:[%s5194 + $0x48] sm:$0xf]
      %v5214 = vld [vmem:[%s5194 + $0x4c] sm:$0xf]
      %v5215 = vld [vmem:[%s5194 + $0x50] sm:$0x3]
      %v5216 = vld [vmem:[%s5194 + $0x54] sm:$0xf]
      %v5217 = vld [vmem:[%s5194 + $0x58] sm:$0xf]
      %v5218 = vld [vmem:[%s5194 + $0x5c] sm:$0x3]
      %v5219 = vld [vmem:[%s5194 + $0x60] sm:$0xf]
      %v5220 = vld [vmem:[%s5194 + $0x64] sm:$0xf]
      %v5221 = vld [vmem:[%s5194 + $0x68] sm:$0x3]
      %v5222 = vld [vmem:[%s5194 + $0x6c] sm:$0xf]
      %v5223 = vld [vmem:[%s5194 + $0x70] sm:$0xf]
      %v5224 = vld [vmem:[%s5194 + $0x74] sm:$0x3]
      %v5225 = vld [vmem:[%s5194 + $0x78] sm:$0xf]
      %v5226 = vld [vmem:[%s5194 + $0x7c] sm:$0xf]
      %v5227 = vld [vmem:[%s5194 + $0x80] sm:$0x3]
      %v5228 = vld [vmem:[%s5194 + $0x84] sm:$0xf]
      %v5229 = vld [vmem:[%s5194 + $0x88] sm:$0xf]
      %v5230 = vld [vmem:[%s5194 + $0x8c] sm:$0x3]
      %v5231 = vld [vmem:[%s5194 + $0x90] sm:$0xf]
      %v5232 = vld [vmem:[%s5194 + $0x94] sm:$0xf]
      %v5233 = vld [vmem:[%s5194 + $0x98] sm:$0x3]
      %v5234 = vld [vmem:[%s5194 + $0x9c] sm:$0xf]
      %v5235 = vld [vmem:[%s5194 + $0xa0] sm:$0xf]
      %v5236 = vld [vmem:[%s5194 + $0xa4] sm:$0x3]
      %v5237 = vld [vmem:[%s5194 + $0xa8] sm:$0xf]
      %v5238 = vld [vmem:[%s5194 + $0xac] sm:$0xf]
      %v5239 = vld [vmem:[%s5194 + $0xb0] sm:$0x3]
      %v5240 = vld [vmem:[%s5194 + $0xb4] sm:$0xf]
      %v5241 = vld [vmem:[%s5194 + $0xb8] sm:$0xf]
      %v5242 = vld [vmem:[%s5194 + $0xbc] sm:$0x3]
      %v5275 = vunpack.c.l.b16 %v5195
      %v5276 = vunpack.c.l.b16 %v5196
      %v5277 = vunpack.c.l.b16 %v5198
      %v5278 = vunpack.c.l.b16 %v5199
      %v5279 = vunpack.c.l.b16 %v5201
      %v5280 = vunpack.c.l.b16 %v5202
      %v5281 = vunpack.c.l.b16 %v5204
      %v5282 = vunpack.c.l.b16 %v5205
      %v5283 = vunpack.c.l.b16 %v5207
      %v5284 = vunpack.c.l.b16 %v5208
      %v5285 = vunpack.c.l.b16 %v5210
      %v5286 = vunpack.c.l.b16 %v5211
      %v5287 = vunpack.c.l.b16 %v5213
      %v5288 = vunpack.c.l.b16 %v5214
      %v5289 = vunpack.c.l.b16 %v5216
      %v5290 = vunpack.c.l.b16 %v5217
      %v5291 = vunpack.c.l.b16 %v5219
      %v5292 = vunpack.c.l.b16 %v5220
      %v5293 = vunpack.c.l.b16 %v5222
      %v5294 = vunpack.c.l.b16 %v5223
      %v5295 = vunpack.c.l.b16 %v5225
      %v5296 = vunpack.c.l.b16 %v5226
      %v5297 = vunpack.c.l.b16 %v5228
      %v5298 = vunpack.c.l.b16 %v5229
      %v5299 = vunpack.c.l.b16 %v5231
      %v5300 = vunpack.c.l.b16 %v5232
      %v5301 = vunpack.c.l.b16 %v5234
      %v5302 = vunpack.c.l.b16 %v5235
      %v5303 = vunpack.c.l.b16 %v5237
      %v5304 = vunpack.c.l.b16 %v5238
      %v5305 = vunpack.c.l.b16 %v5240
      %v5306 = vunpack.c.l.b16 %v5241
      %v5307 = vpack.c.b16 %v5276, %v5275
      %v5308 = vpack.c.b16 %v5278, %v5277
      %v5309 = vpack.c.b16 %v5280, %v5279
      %v5310 = vpack.c.b16 %v5282, %v5281
      %v5311 = vpack.c.b16 %v5284, %v5283
      %v5312 = vpack.c.b16 %v5286, %v5285
      %v5313 = vpack.c.b16 %v5288, %v5287
      %v5314 = vpack.c.b16 %v5290, %v5289
      %v5315 = vpack.c.b16 %v5292, %v5291
      %v5316 = vpack.c.b16 %v5294, %v5293
      %v5317 = vpack.c.b16 %v5296, %v5295
      %v5318 = vpack.c.b16 %v5298, %v5297
      %v5319 = vpack.c.b16 %v5300, %v5299
      %v5320 = vpack.c.b16 %v5302, %v5301
      %v5321 = vpack.c.b16 %v5304, %v5303
      %v5322 = vpack.c.b16 %v5306, %v5305
      %v5339 = vunpack.c.l.b16 %v5197
      %v5340 = vunpack.c.l.b16 %v5200
      %v5341 = vunpack.c.l.b16 %v5203
      %v5342 = vunpack.c.l.b16 %v5206
      %v5343 = vunpack.c.l.b16 %v5209
      %v5344 = vunpack.c.l.b16 %v5212
      %v5345 = vunpack.c.l.b16 %v5215
      %v5346 = vunpack.c.l.b16 %v5218
      %v5347 = vunpack.c.l.b16 %v5221
      %v5348 = vunpack.c.l.b16 %v5224
      %v5349 = vunpack.c.l.b16 %v5227
      %v5350 = vunpack.c.l.b16 %v5230
      %v5351 = vunpack.c.l.b16 %v5233
      %v5352 = vunpack.c.l.b16 %v5236
      %v5353 = vunpack.c.l.b16 %v5239
      %v5354 = vunpack.c.l.b16 %v5242
      %v5355 = vpack.c.b16 %v5339, %v5339
      %v5356 = vpack.c.b16 %v5340, %v5340
      %v5357 = vpack.c.b16 %v5341, %v5341
      %v5358 = vpack.c.b16 %v5342, %v5342
      %v5359 = vpack.c.b16 %v5343, %v5343
      %v5360 = vpack.c.b16 %v5344, %v5344
      %v5361 = vpack.c.b16 %v5345, %v5345
      %v5362 = vpack.c.b16 %v5346, %v5346
      %v5363 = vpack.c.b16 %v5347, %v5347
      %v5364 = vpack.c.b16 %v5348, %v5348
      %v5365 = vpack.c.b16 %v5349, %v5349
      %v5366 = vpack.c.b16 %v5350, %v5350
      %v5367 = vpack.c.b16 %v5351, %v5351
      %v5368 = vpack.c.b16 %v5352, %v5352
      %v5369 = vpack.c.b16 %v5353, %v5353
      %v5370 = vpack.c.b16 %v5354, %v5354
      %v5372 = vshrl.u32 %v5307, 16
      %v5374 = vshll.u32 %v5307, 16
      %v5376 = vrot.slane %v5374, 1
      %v5377 = vor.u32 %v5372, %v5376
      %v5379 = vshll.u32 %v5355, 16
      %v5381 = vrot.slane %v5379, 1
      %v5382 = vsel %vm906, %v5377, %v5381
      %v5384 = vshrl.u32 %v5308, 16
      %v5386 = vshll.u32 %v5308, 16
      %v5388 = vrot.slane %v5386, 1
      %v5389 = vor.u32 %v5384, %v5388
      %v5391 = vshll.u32 %v5356, 16
      %v5393 = vrot.slane %v5391, 1
      %v5394 = vsel %vm906, %v5389, %v5393
      %v5396 = vshrl.u32 %v5309, 16
      %v5398 = vshll.u32 %v5309, 16
      %v5400 = vrot.slane %v5398, 1
      %v5401 = vor.u32 %v5396, %v5400
      %v5403 = vshll.u32 %v5357, 16
      %v5405 = vrot.slane %v5403, 1
      %v5406 = vsel %vm906, %v5401, %v5405
      %v5408 = vshrl.u32 %v5310, 16
      %v5410 = vshll.u32 %v5310, 16
      %v5412 = vrot.slane %v5410, 1
      %v5413 = vor.u32 %v5408, %v5412
      %v5415 = vshll.u32 %v5358, 16
      %v5417 = vrot.slane %v5415, 1
      %v5418 = vsel %vm906, %v5413, %v5417
      %v5420 = vshrl.u32 %v5311, 16
      %v5422 = vshll.u32 %v5311, 16
      %v5424 = vrot.slane %v5422, 1
      %v5425 = vor.u32 %v5420, %v5424
      %v5427 = vshll.u32 %v5359, 16
      %v5429 = vrot.slane %v5427, 1
      %v5430 = vsel %vm906, %v5425, %v5429
      %v5432 = vshrl.u32 %v5312, 16
      %v5434 = vshll.u32 %v5312, 16
      %v5436 = vrot.slane %v5434, 1
      %v5437 = vor.u32 %v5432, %v5436
      %v5439 = vshll.u32 %v5360, 16
      %v5441 = vrot.slane %v5439, 1
      %v5442 = vsel %vm906, %v5437, %v5441
      %v5444 = vshrl.u32 %v5313, 16
      %v5446 = vshll.u32 %v5313, 16
      %v5448 = vrot.slane %v5446, 1
      %v5449 = vor.u32 %v5444, %v5448
      %v5451 = vshll.u32 %v5361, 16
      %v5453 = vrot.slane %v5451, 1
      %v5454 = vsel %vm906, %v5449, %v5453
      %v5456 = vshrl.u32 %v5314, 16
      %v5458 = vshll.u32 %v5314, 16
      %v5460 = vrot.slane %v5458, 1
      %v5461 = vor.u32 %v5456, %v5460
      %v5463 = vshll.u32 %v5362, 16
      %v5465 = vrot.slane %v5463, 1
      %v5466 = vsel %vm906, %v5461, %v5465
      %v5468 = vshrl.u32 %v5315, 16
      %v5470 = vshll.u32 %v5315, 16
      %v5472 = vrot.slane %v5470, 1
      %v5473 = vor.u32 %v5468, %v5472
      %v5475 = vshll.u32 %v5363, 16
      %v5477 = vrot.slane %v5475, 1
      %v5478 = vsel %vm906, %v5473, %v5477
      %v5480 = vshrl.u32 %v5316, 16
      %v5482 = vshll.u32 %v5316, 16
      %v5484 = vrot.slane %v5482, 1
      %v5485 = vor.u32 %v5480, %v5484
      %v5487 = vshll.u32 %v5364, 16
      %v5489 = vrot.slane %v5487, 1
      %v5490 = vsel %vm906, %v5485, %v5489
      %v5492 = vshrl.u32 %v5317, 16
      %v5494 = vshll.u32 %v5317, 16
      %v5496 = vrot.slane %v5494, 1
      %v5497 = vor.u32 %v5492, %v5496
      %v5499 = vshll.u32 %v5365, 16
      %v5501 = vrot.slane %v5499, 1
      %v5502 = vsel %vm906, %v5497, %v5501
      %v5504 = vshrl.u32 %v5318, 16
      %v5506 = vshll.u32 %v5318, 16
      %v5508 = vrot.slane %v5506, 1
      %v5509 = vor.u32 %v5504, %v5508
      %v5511 = vshll.u32 %v5366, 16
      %v5513 = vrot.slane %v5511, 1
      %v5514 = vsel %vm906, %v5509, %v5513
      %v5516 = vshrl.u32 %v5319, 16
      %v5518 = vshll.u32 %v5319, 16
      %v5520 = vrot.slane %v5518, 1
      %v5521 = vor.u32 %v5516, %v5520
      %v5523 = vshll.u32 %v5367, 16
      %v5525 = vrot.slane %v5523, 1
      %v5526 = vsel %vm906, %v5521, %v5525
      %v5528 = vshrl.u32 %v5320, 16
      %v5530 = vshll.u32 %v5320, 16
      %v5532 = vrot.slane %v5530, 1
      %v5533 = vor.u32 %v5528, %v5532
      %v5535 = vshll.u32 %v5368, 16
      %v5537 = vrot.slane %v5535, 1
      %v5538 = vsel %vm906, %v5533, %v5537
      %v5540 = vshrl.u32 %v5321, 16
      %v5542 = vshll.u32 %v5321, 16
      %v5544 = vrot.slane %v5542, 1
      %v5545 = vor.u32 %v5540, %v5544
      %v5547 = vshll.u32 %v5369, 16
      %v5549 = vrot.slane %v5547, 1
      %v5550 = vsel %vm906, %v5545, %v5549
      %v5552 = vshrl.u32 %v5322, 16
      %v5554 = vshll.u32 %v5322, 16
      %v5556 = vrot.slane %v5554, 1
      %v5557 = vor.u32 %v5552, %v5556
      %v5559 = vshll.u32 %v5370, 16
      %v5561 = vrot.slane %v5559, 1
      %v5562 = vsel %vm906, %v5557, %v5561
      %5563 = vrot.lane.b32.xlu0 %v5382, 8
      %v5564 = vpop.permute.xlu0 %5563
      %5565 = vrot.lane.b32.xlu0 %v5394, 8
      %v5566 = vpop.permute.xlu0 %5565
      %5567 = vrot.lane.b32.xlu0 %v5406, 8
      %v5568 = vpop.permute.xlu0 %5567
      %5569 = vrot.lane.b32.xlu0 %v5418, 8
      %v5570 = vpop.permute.xlu0 %5569
      %5571 = vrot.lane.b32.xlu0 %v5430, 8
      %v5572 = vpop.permute.xlu0 %5571
      %5573 = vrot.lane.b32.xlu0 %v5442, 8
      %v5574 = vpop.permute.xlu0 %5573
      %5575 = vrot.lane.b32.xlu0 %v5454, 8
      %v5576 = vpop.permute.xlu0 %5575
      %5577 = vrot.lane.b32.xlu0 %v5466, 8
      %v5578 = vpop.permute.xlu0 %5577
      %5579 = vrot.lane.b32.xlu0 %v5478, 8
      %v5580 = vpop.permute.xlu0 %5579
      %5581 = vrot.lane.b32.xlu0 %v5490, 8
      %v5582 = vpop.permute.xlu0 %5581
      %5583 = vrot.lane.b32.xlu0 %v5502, 8
      %v5584 = vpop.permute.xlu0 %5583
      %5585 = vrot.lane.b32.xlu0 %v5514, 8
      %v5586 = vpop.permute.xlu0 %5585
      %5587 = vrot.lane.b32.xlu0 %v5526, 8
      %v5588 = vpop.permute.xlu0 %5587
      %5589 = vrot.lane.b32.xlu0 %v5538, 8
      %v5590 = vpop.permute.xlu0 %5589
      %5591 = vrot.lane.b32.xlu0 %v5550, 8
      %v5592 = vpop.permute.xlu0 %5591
      %5593 = vrot.lane.b32.xlu0 %v5562, 8
      %v5594 = vpop.permute.xlu0 %5593
      %v5595 = vrot.slane %v5307, 1
      %v5596 = vrot.slane %v5355, 1
      %v5597 = vsel %vm1131, %v5595, %v5596
      %v5598 = vrot.slane %v5308, 1
      %v5599 = vrot.slane %v5356, 1
      %v5600 = vsel %vm1131, %v5598, %v5599
      %v5601 = vrot.slane %v5309, 1
      %v5602 = vrot.slane %v5357, 1
      %v5603 = vsel %vm1131, %v5601, %v5602
      %v5604 = vrot.slane %v5310, 1
      %v5605 = vrot.slane %v5358, 1
      %v5606 = vsel %vm1131, %v5604, %v5605
      %v5607 = vrot.slane %v5311, 1
      %v5608 = vrot.slane %v5359, 1
      %v5609 = vsel %vm1131, %v5607, %v5608
      %v5610 = vrot.slane %v5312, 1
      %v5611 = vrot.slane %v5360, 1
      %v5612 = vsel %vm1131, %v5610, %v5611
      %v5613 = vrot.slane %v5313, 1
      %v5614 = vrot.slane %v5361, 1
      %v5615 = vsel %vm1131, %v5613, %v5614
      %v5616 = vrot.slane %v5314, 1
      %v5617 = vrot.slane %v5362, 1
      %v5618 = vsel %vm1131, %v5616, %v5617
      %v5619 = vrot.slane %v5315, 1
      %v5620 = vrot.slane %v5363, 1
      %v5621 = vsel %vm1131, %v5619, %v5620
      %v5622 = vrot.slane %v5316, 1
      %v5623 = vrot.slane %v5364, 1
      %v5624 = vsel %vm1131, %v5622, %v5623
      %v5625 = vrot.slane %v5317, 1
      %v5626 = vrot.slane %v5365, 1
      %v5627 = vsel %vm1131, %v5625, %v5626
      %v5628 = vrot.slane %v5318, 1
      %v5629 = vrot.slane %v5366, 1
      %v5630 = vsel %vm1131, %v5628, %v5629
      %v5631 = vrot.slane %v5319, 1
      %v5632 = vrot.slane %v5367, 1
      %v5633 = vsel %vm1131, %v5631, %v5632
      %v5634 = vrot.slane %v5320, 1
      %v5635 = vrot.slane %v5368, 1
      %v5636 = vsel %vm1131, %v5634, %v5635
      %v5637 = vrot.slane %v5321, 1
      %v5638 = vrot.slane %v5369, 1
      %v5639 = vsel %vm1131, %v5637, %v5638
      %v5640 = vrot.slane %v5322, 1
      %v5641 = vrot.slane %v5370, 1
      %v5642 = vsel %vm1131, %v5640, %v5641
      %5643 = vrot.lane.b32.xlu0 %v5597, 16
      %v5644 = vpop.permute.xlu0 %5643
      %5645 = vrot.lane.b32.xlu0 %v5600, 16
      %v5646 = vpop.permute.xlu0 %5645
      %5647 = vrot.lane.b32.xlu0 %v5603, 16
      %v5648 = vpop.permute.xlu0 %5647
      %5649 = vrot.lane.b32.xlu0 %v5606, 16
      %v5650 = vpop.permute.xlu0 %5649
      %5651 = vrot.lane.b32.xlu0 %v5609, 16
      %v5652 = vpop.permute.xlu0 %5651
      %5653 = vrot.lane.b32.xlu0 %v5612, 16
      %v5654 = vpop.permute.xlu0 %5653
      %5655 = vrot.lane.b32.xlu0 %v5615, 16
      %v5656 = vpop.permute.xlu0 %5655
      %5657 = vrot.lane.b32.xlu0 %v5618, 16
      %v5658 = vpop.permute.xlu0 %5657
      %5659 = vrot.lane.b32.xlu0 %v5621, 16
      %v5660 = vpop.permute.xlu0 %5659
      %5661 = vrot.lane.b32.xlu0 %v5624, 16
      %v5662 = vpop.permute.xlu0 %5661
      %5663 = vrot.lane.b32.xlu0 %v5627, 16
      %v5664 = vpop.permute.xlu0 %5663
      %5665 = vrot.lane.b32.xlu0 %v5630, 16
      %v5666 = vpop.permute.xlu0 %5665
      %5667 = vrot.lane.b32.xlu0 %v5633, 16
      %v5668 = vpop.permute.xlu0 %5667
      %5669 = vrot.lane.b32.xlu0 %v5636, 16
      %v5670 = vpop.permute.xlu0 %5669
      %5671 = vrot.lane.b32.xlu0 %v5639, 16
      %v5672 = vpop.permute.xlu0 %5671
      %5673 = vrot.lane.b32.xlu0 %v5642, 16
      %v5674 = vpop.permute.xlu0 %5673
      %v5675 = vrot.slane %v5372, 1
      %v5676 = vrot.slane %v5374, 2
      %v5677 = vor.u32 %v5675, %v5676
      %v5678 = vshrl.u32 %v5355, 16
      %v5680 = vrot.slane %v5678, 1
      %v5681 = vrot.slane %v5379, 2
      %v5682 = vor.u32 %v5680, %v5681
      %v5683 = vsel %vm1212, %v5677, %v5682
      %v5684 = vrot.slane %v5384, 1
      %v5685 = vrot.slane %v5386, 2
      %v5686 = vor.u32 %v5684, %v5685
      %v5687 = vshrl.u32 %v5356, 16
      %v5689 = vrot.slane %v5687, 1
      %v5690 = vrot.slane %v5391, 2
      %v5691 = vor.u32 %v5689, %v5690
      %v5692 = vsel %vm1212, %v5686, %v5691
      %v5693 = vrot.slane %v5396, 1
      %v5694 = vrot.slane %v5398, 2
      %v5695 = vor.u32 %v5693, %v5694
      %v5696 = vshrl.u32 %v5357, 16
      %v5698 = vrot.slane %v5696, 1
      %v5699 = vrot.slane %v5403, 2
      %v5700 = vor.u32 %v5698, %v5699
      %v5701 = vsel %vm1212, %v5695, %v5700
      %v5702 = vrot.slane %v5408, 1
      %v5703 = vrot.slane %v5410, 2
      %v5704 = vor.u32 %v5702, %v5703
      %v5705 = vshrl.u32 %v5358, 16
      %v5707 = vrot.slane %v5705, 1
      %v5708 = vrot.slane %v5415, 2
      %v5709 = vor.u32 %v5707, %v5708
      %v5710 = vsel %vm1212, %v5704, %v5709
      %v5711 = vrot.slane %v5420, 1
      %v5712 = vrot.slane %v5422, 2
      %v5713 = vor.u32 %v5711, %v5712
      %v5714 = vshrl.u32 %v5359, 16
      %v5716 = vrot.slane %v5714, 1
      %v5717 = vrot.slane %v5427, 2
      %v5718 = vor.u32 %v5716, %v5717
      %v5719 = vsel %vm1212, %v5713, %v5718
      %v5720 = vrot.slane %v5432, 1
      %v5721 = vrot.slane %v5434, 2
      %v5722 = vor.u32 %v5720, %v5721
      %v5723 = vshrl.u32 %v5360, 16
      %v5725 = vrot.slane %v5723, 1
      %v5726 = vrot.slane %v5439, 2
      %v5727 = vor.u32 %v5725, %v5726
      %v5728 = vsel %vm1212, %v5722, %v5727
      %v5729 = vrot.slane %v5444, 1
      %v5730 = vrot.slane %v5446, 2
      %v5731 = vor.u32 %v5729, %v5730
      %v5732 = vshrl.u32 %v5361, 16
      %v5734 = vrot.slane %v5732, 1
      %v5735 = vrot.slane %v5451, 2
      %v5736 = vor.u32 %v5734, %v5735
      %v5737 = vsel %vm1212, %v5731, %v5736
      %v5738 = vrot.slane %v5456, 1
      %v5739 = vrot.slane %v5458, 2
      %v5740 = vor.u32 %v5738, %v5739
      %v5741 = vshrl.u32 %v5362, 16
      %v5743 = vrot.slane %v5741, 1
      %v5744 = vrot.slane %v5463, 2
      %v5745 = vor.u32 %v5743, %v5744
      %v5746 = vsel %vm1212, %v5740, %v5745
      %v5747 = vrot.slane %v5468, 1
      %v5748 = vrot.slane %v5470, 2
      %v5749 = vor.u32 %v5747, %v5748
      %v5750 = vshrl.u32 %v5363, 16
      %v5752 = vrot.slane %v5750, 1
      %v5753 = vrot.slane %v5475, 2
      %v5754 = vor.u32 %v5752, %v5753
      %v5755 = vsel %vm1212, %v5749, %v5754
      %v5756 = vrot.slane %v5480, 1
      %v5757 = vrot.slane %v5482, 2
      %v5758 = vor.u32 %v5756, %v5757
      %v5759 = vshrl.u32 %v5364, 16
      %v5761 = vrot.slane %v5759, 1
      %v5762 = vrot.slane %v5487, 2
      %v5763 = vor.u32 %v5761, %v5762
      %v5764 = vsel %vm1212, %v5758, %v5763
      %v5765 = vrot.slane %v5492, 1
      %v5766 = vrot.slane %v5494, 2
      %v5767 = vor.u32 %v5765, %v5766
      %v5768 = vshrl.u32 %v5365, 16
      %v5770 = vrot.slane %v5768, 1
      %v5771 = vrot.slane %v5499, 2
      %v5772 = vor.u32 %v5770, %v5771
      %v5773 = vsel %vm1212, %v5767, %v5772
      %v5774 = vrot.slane %v5504, 1
      %v5775 = vrot.slane %v5506, 2
      %v5776 = vor.u32 %v5774, %v5775
      %v5777 = vshrl.u32 %v5366, 16
      %v5779 = vrot.slane %v5777, 1
      %v5780 = vrot.slane %v5511, 2
      %v5781 = vor.u32 %v5779, %v5780
      %v5782 = vsel %vm1212, %v5776, %v5781
      %v5783 = vrot.slane %v5516, 1
      %v5784 = vrot.slane %v5518, 2
      %v5785 = vor.u32 %v5783, %v5784
      %v5786 = vshrl.u32 %v5367, 16
      %v5788 = vrot.slane %v5786, 1
      %v5789 = vrot.slane %v5523, 2
      %v5790 = vor.u32 %v5788, %v5789
      %v5791 = vsel %vm1212, %v5785, %v5790
      %v5792 = vrot.slane %v5528, 1
      %v5793 = vrot.slane %v5530, 2
      %v5794 = vor.u32 %v5792, %v5793
      %v5795 = vshrl.u32 %v5368, 16
      %v5797 = vrot.slane %v5795, 1
      %v5798 = vrot.slane %v5535, 2
      %v5799 = vor.u32 %v5797, %v5798
      %v5800 = vsel %vm1212, %v5794, %v5799
      %v5801 = vrot.slane %v5540, 1
      %v5802 = vrot.slane %v5542, 2
      %v5803 = vor.u32 %v5801, %v5802
      %v5804 = vshrl.u32 %v5369, 16
      %v5806 = vrot.slane %v5804, 1
      %v5807 = vrot.slane %v5547, 2
      %v5808 = vor.u32 %v5806, %v5807
      %v5809 = vsel %vm1212, %v5803, %v5808
      %v5810 = vrot.slane %v5552, 1
      %v5811 = vrot.slane %v5554, 2
      %v5812 = vor.u32 %v5810, %v5811
      %v5813 = vshrl.u32 %v5370, 16
      %v5815 = vrot.slane %v5813, 1
      %v5816 = vrot.slane %v5559, 2
      %v5817 = vor.u32 %v5815, %v5816
      %v5818 = vsel %vm1212, %v5812, %v5817
      %5819 = vrot.lane.b32.xlu0 %v5683, 24
      %v5820 = vpop.permute.xlu0 %5819
      %5821 = vrot.lane.b32.xlu0 %v5692, 24
      %v5822 = vpop.permute.xlu0 %5821
      %5823 = vrot.lane.b32.xlu0 %v5701, 24
      %v5824 = vpop.permute.xlu0 %5823
      %5825 = vrot.lane.b32.xlu0 %v5710, 24
      %v5826 = vpop.permute.xlu0 %5825
      %5827 = vrot.lane.b32.xlu0 %v5719, 24
      %v5828 = vpop.permute.xlu0 %5827
      %5829 = vrot.lane.b32.xlu0 %v5728, 24
      %v5830 = vpop.permute.xlu0 %5829
      %5831 = vrot.lane.b32.xlu0 %v5737, 24
      %v5832 = vpop.permute.xlu0 %5831
      %5833 = vrot.lane.b32.xlu0 %v5746, 24
      %v5834 = vpop.permute.xlu0 %5833
      %5835 = vrot.lane.b32.xlu0 %v5755, 24
      %v5836 = vpop.permute.xlu0 %5835
      %5837 = vrot.lane.b32.xlu0 %v5764, 24
      %v5838 = vpop.permute.xlu0 %5837
      %5839 = vrot.lane.b32.xlu0 %v5773, 24
      %v5840 = vpop.permute.xlu0 %5839
      %5841 = vrot.lane.b32.xlu0 %v5782, 24
      %v5842 = vpop.permute.xlu0 %5841
      %5843 = vrot.lane.b32.xlu0 %v5791, 24
      %v5844 = vpop.permute.xlu0 %5843
      %5845 = vrot.lane.b32.xlu0 %v5800, 24
      %v5846 = vpop.permute.xlu0 %5845
      %5847 = vrot.lane.b32.xlu0 %v5809, 24
      %v5848 = vpop.permute.xlu0 %5847
      %5849 = vrot.lane.b32.xlu0 %v5818, 24
      %v5850 = vpop.permute.xlu0 %5849
      %v5851 = vrot.slane %v5307, 2
      %v5852 = vrot.slane %v5355, 2
      %v5853 = vsel %vm1389, %v5851, %v5852
      %v5854 = vrot.slane %v5308, 2
      %v5855 = vrot.slane %v5356, 2
      %v5856 = vsel %vm1389, %v5854, %v5855
      %v5857 = vrot.slane %v5309, 2
      %v5858 = vrot.slane %v5357, 2
      %v5859 = vsel %vm1389, %v5857, %v5858
      %v5860 = vrot.slane %v5310, 2
      %v5861 = vrot.slane %v5358, 2
      %v5862 = vsel %vm1389, %v5860, %v5861
      %v5863 = vrot.slane %v5311, 2
      %v5864 = vrot.slane %v5359, 2
      %v5865 = vsel %vm1389, %v5863, %v5864
      %v5866 = vrot.slane %v5312, 2
      %v5867 = vrot.slane %v5360, 2
      %v5868 = vsel %vm1389, %v5866, %v5867
      %v5869 = vrot.slane %v5313, 2
      %v5870 = vrot.slane %v5361, 2
      %v5871 = vsel %vm1389, %v5869, %v5870
      %v5872 = vrot.slane %v5314, 2
      %v5873 = vrot.slane %v5362, 2
      %v5874 = vsel %vm1389, %v5872, %v5873
      %v5875 = vrot.slane %v5315, 2
      %v5876 = vrot.slane %v5363, 2
      %v5877 = vsel %vm1389, %v5875, %v5876
      %v5878 = vrot.slane %v5316, 2
      %v5879 = vrot.slane %v5364, 2
      %v5880 = vsel %vm1389, %v5878, %v5879
      %v5881 = vrot.slane %v5317, 2
      %v5882 = vrot.slane %v5365, 2
      %v5883 = vsel %vm1389, %v5881, %v5882
      %v5884 = vrot.slane %v5318, 2
      %v5885 = vrot.slane %v5366, 2
      %v5886 = vsel %vm1389, %v5884, %v5885
      %v5887 = vrot.slane %v5319, 2
      %v5888 = vrot.slane %v5367, 2
      %v5889 = vsel %vm1389, %v5887, %v5888
      %v5890 = vrot.slane %v5320, 2
      %v5891 = vrot.slane %v5368, 2
      %v5892 = vsel %vm1389, %v5890, %v5891
      %v5893 = vrot.slane %v5321, 2
      %v5894 = vrot.slane %v5369, 2
      %v5895 = vsel %vm1389, %v5893, %v5894
      %v5896 = vrot.slane %v5322, 2
      %v5897 = vrot.slane %v5370, 2
      %v5898 = vsel %vm1389, %v5896, %v5897
      %5899 = vrot.lane.b32.xlu0 %v5853, 32
      %v5900 = vpop.permute.xlu0 %5899
      %5901 = vrot.lane.b32.xlu0 %v5856, 32
      %v5902 = vpop.permute.xlu0 %5901
      %5903 = vrot.lane.b32.xlu0 %v5859, 32
      %v5904 = vpop.permute.xlu0 %5903
      %5905 = vrot.lane.b32.xlu0 %v5862, 32
      %v5906 = vpop.permute.xlu0 %5905
      %5907 = vrot.lane.b32.xlu0 %v5865, 32
      %v5908 = vpop.permute.xlu0 %5907
      %5909 = vrot.lane.b32.xlu0 %v5868, 32
      %v5910 = vpop.permute.xlu0 %5909
      %5911 = vrot.lane.b32.xlu0 %v5871, 32
      %v5912 = vpop.permute.xlu0 %5911
      %5913 = vrot.lane.b32.xlu0 %v5874, 32
      %v5914 = vpop.permute.xlu0 %5913
      %5915 = vrot.lane.b32.xlu0 %v5877, 32
      %v5916 = vpop.permute.xlu0 %5915
      %5917 = vrot.lane.b32.xlu0 %v5880, 32
      %v5918 = vpop.permute.xlu0 %5917
      %5919 = vrot.lane.b32.xlu0 %v5883, 32
      %v5920 = vpop.permute.xlu0 %5919
      %5921 = vrot.lane.b32.xlu0 %v5886, 32
      %v5922 = vpop.permute.xlu0 %5921
      %5923 = vrot.lane.b32.xlu0 %v5889, 32
      %v5924 = vpop.permute.xlu0 %5923
      %5925 = vrot.lane.b32.xlu0 %v5892, 32
      %v5926 = vpop.permute.xlu0 %5925
      %5927 = vrot.lane.b32.xlu0 %v5895, 32
      %v5928 = vpop.permute.xlu0 %5927
      %5929 = vrot.lane.b32.xlu0 %v5898, 32
      %v5930 = vpop.permute.xlu0 %5929
      %v5932 = vsel %vm1470, %v5307, %v5564
      %v5934 = vsel %vm1470, %v5308, %v5566
      %v5936 = vsel %vm1470, %v5309, %v5568
      %v5938 = vsel %vm1470, %v5310, %v5570
      %v5940 = vsel %vm1470, %v5311, %v5572
      %v5942 = vsel %vm1470, %v5312, %v5574
      %v5944 = vsel %vm1470, %v5313, %v5576
      %v5946 = vsel %vm1470, %v5314, %v5578
      %v5948 = vsel %vm1470, %v5315, %v5580
      %v5950 = vsel %vm1470, %v5316, %v5582
      %v5952 = vsel %vm1470, %v5317, %v5584
      %v5954 = vsel %vm1470, %v5318, %v5586
      %v5956 = vsel %vm1470, %v5319, %v5588
      %v5958 = vsel %vm1470, %v5320, %v5590
      %v5960 = vsel %vm1470, %v5321, %v5592
      %v5962 = vsel %vm1470, %v5322, %v5594
      %v5964 = vsel %vm1503, %v5932, %v5644
      %v5966 = vsel %vm1503, %v5934, %v5646
      %v5968 = vsel %vm1503, %v5936, %v5648
      %v5970 = vsel %vm1503, %v5938, %v5650
      %v5972 = vsel %vm1503, %v5940, %v5652
      %v5974 = vsel %vm1503, %v5942, %v5654
      %v5976 = vsel %vm1503, %v5944, %v5656
      %v5978 = vsel %vm1503, %v5946, %v5658
      %v5980 = vsel %vm1503, %v5948, %v5660
      %v5982 = vsel %vm1503, %v5950, %v5662
      %v5984 = vsel %vm1503, %v5952, %v5664
      %v5986 = vsel %vm1503, %v5954, %v5666
      %v5988 = vsel %vm1503, %v5956, %v5668
      %v5990 = vsel %vm1503, %v5958, %v5670
      %v5992 = vsel %vm1503, %v5960, %v5672
      %v5994 = vsel %vm1503, %v5962, %v5674
      %v5996 = vsel %vm1536, %v5964, %v5820
      %v5998 = vsel %vm1536, %v5966, %v5822
      %v6000 = vsel %vm1536, %v5968, %v5824
      %v6002 = vsel %vm1536, %v5970, %v5826
      %v6004 = vsel %vm1536, %v5972, %v5828
      %v6006 = vsel %vm1536, %v5974, %v5830
      %v6008 = vsel %vm1536, %v5976, %v5832
      %v6010 = vsel %vm1536, %v5978, %v5834
      %v6012 = vsel %vm1536, %v5980, %v5836
      %v6014 = vsel %vm1536, %v5982, %v5838
      %v6016 = vsel %vm1536, %v5984, %v5840
      %v6018 = vsel %vm1536, %v5986, %v5842
      %v6020 = vsel %vm1536, %v5988, %v5844
      %v6022 = vsel %vm1536, %v5990, %v5846
      %v6024 = vsel %vm1536, %v5992, %v5848
      %v6026 = vsel %vm1536, %v5994, %v5850
      %v6028 = vsel %vm1569, %v5996, %v5900
      %v6030 = vsel %vm1569, %v5998, %v5902
      %v6032 = vsel %vm1569, %v6000, %v5904
      %v6034 = vsel %vm1569, %v6002, %v5906
      %v6036 = vsel %vm1569, %v6004, %v5908
      %v6038 = vsel %vm1569, %v6006, %v5910
      %v6040 = vsel %vm1569, %v6008, %v5912
      %v6042 = vsel %vm1569, %v6010, %v5914
      %v6044 = vsel %vm1569, %v6012, %v5916
      %v6046 = vsel %vm1569, %v6014, %v5918
      %v6048 = vsel %vm1569, %v6016, %v5920
      %v6050 = vsel %vm1569, %v6018, %v5922
      %v6052 = vsel %vm1569, %v6020, %v5924
      %v6054 = vsel %vm1569, %v6022, %v5926
      %v6056 = vsel %vm1569, %v6024, %v5928
      %v6058 = vsel %vm1569, %v6026, %v5930
      %s6059 = scalar_lea.vmem %s1, 80
      %v6060 = vld [vmem:[%s6059] sm:$0xf]
      %v6061 = vld [vmem:[%s6059 + $0x4] sm:$0xf]
      %v6062 = vld [vmem:[%s6059 + $0x8] sm:$0xf]
      %v6063 = vld [vmem:[%s6059 + $0xc] sm:$0xf]
      %v6064 = vld [vmem:[%s6059 + $0x10] sm:$0xf]
      %v6070 = vunpack.c.l.b16 %v6060
      %v6071 = vunpack.c.l.b16 %v6061
      %v6072 = vunpack.c.l.b16 %v6062
      %v6073 = vunpack.c.l.b16 %v6063
      %v6074 = vunpack.c.l.b16 %v6064
      %v6075 = vpack.c.b16 %v6071, %v6070
      %v6076 = vpack.c.b16 %v6073, %v6072
      %v6077 = vpack.c.b16 %v6074, %v6074
      %v6080 = vsel %vm1622, %v6028, 0
      %v6082 = vsel %vm1622, %v6030, 0
      %v6084 = vsel %vm1622, %v6032, 0
      %v6086 = vsel %vm1622, %v6034, 0
      %v6088 = vsel %vm1622, %v6036, 0
      %v6090 = vsel %vm1622, %v6038, 0
      %v6092 = vsel %vm1622, %v6040, 0
      %v6094 = vsel %vm1622, %v6042, 0
      %v6096 = vsel %vm1622, %v6044, 0
      %v6098 = vsel %vm1622, %v6046, 0
      %v6100 = vsel %vm1622, %v6048, 0
      %v6102 = vsel %vm1622, %v6050, 0
      %v6104 = vsel %vm1622, %v6052, 0
      %v6106 = vsel %vm1622, %v6054, 0
      %v6108 = vsel %vm1622, %v6056, 0
      %v6110 = vsel %vm1622, %v6058, 0
      %v6113 = vsel %vm1655, %v6077, 0
      %6115 = vmatprep.subr.bf16.mxu0 0
      %6116 = vmatpush1.bf16.msra.mxu0 %v6075
      %6117 = vmatprep.subr.bf16.mxu0 0
      %6118 = vmatpush1.bf16.msra.mxu0 %v6076
      %6119 = vmatprep.subr.bf16.mxu0 0
      %6120 = vmatpush1.bf16.msra.mxu0 %v6113
      %6121 = vmatprep.subr.bf16.mxu0 0
      %6122 = vmatpush1.bf16.msra.mxu0 0
      %6123 = vmatprep.subr.bf16.mxu0 0
      %6124 = vmatpush1.bf16.msra.mxu0 0
      %6125 = vmatprep.subr.bf16.mxu0 0
      %6126 = vmatpush1.bf16.msra.mxu0 0
      %6127 = vmatprep.subr.bf16.mxu0 0
      %6128 = vmatpush1.bf16.msra.mxu0 0
      %6129 = vmatprep.subr.bf16.mxu0 0
      %6130 = vmatpush1.bf16.msra.mxu0 0
      %6131 = vmatprep.subr.bf16.mxu0 0
      %6132 = vmatpush1.bf16.msra.mxu0 0
      %6133 = vmatprep.subr.bf16.mxu0 0
      %6134 = vmatpush1.bf16.msra.mxu0 0
      %6135 = vmatprep.subr.bf16.mxu0 0
      %6136 = vmatpush1.bf16.msra.mxu0 0
      %6137 = vmatprep.subr.bf16.mxu0 0
      %6138 = vmatpush1.bf16.msra.mxu0 0
      %6139 = vmatprep.subr.bf16.mxu0 0
      %6140 = vmatpush1.bf16.msra.mxu0 0
      %6141 = vmatprep.subr.bf16.mxu0 0
      %6142 = vmatpush1.bf16.msra.mxu0 0
      %6143 = vmatprep.subr.bf16.mxu0 0
      %6144 = vmatpush1.bf16.msra.mxu0 0
      %6145 = vmatprep.subr.bf16.mxu0 0
      %6146 = vmatpush1.bf16.msra.mxu0 0
      %6147 = vmatprep.mubr.bf16.mxu0 0
      %6148 = vmatmul.mubr.bf16.gmra.mrb[0].mxu0 %v6080
      %v6149 = vpop.f32.mrb[0].mxu0
      %v6150 = vadd.f32 0.0, %v6149
      %v6151 = vpop.f32.mrb[0].mxu0
      %v6152 = vpop.f32.mrb[0].mxu0
      %v6153 = vadd.f32 0.0, %v6152
      %v6154 = vpop.f32.mrb[0].mxu0
      %6155 = vmatprep.mubr.bf16.mxu0 0
      %6156 = vmatmul.mubr.bf16.gmra.mrb[0].mxu0 %v6082
      %v6157 = vpop.f32.mrb[0].mxu0
      %v6158 = vadd.f32 0.0, %v6157
      %v6159 = vpop.f32.mrb[0].mxu0
      %v6160 = vpop.f32.mrb[0].mxu0
      %v6161 = vadd.f32 0.0, %v6160
      %v6162 = vpop.f32.mrb[0].mxu0
      %6163 = vmatprep.mubr.bf16.mxu0 0
      %6164 = vmatmul.mubr.bf16.gmra.mrb[0].mxu0 %v6084
      %v6165 = vpop.f32.mrb[0].mxu0
      %v6166 = vadd.f32 0.0, %v6165
      %v6167 = vpop.f32.mrb[0].mxu0
      %v6168 = vpop.f32.mrb[0].mxu0
      %v6169 = vadd.f32 0.0, %v6168
      %v6170 = vpop.f32.mrb[0].mxu0
      %6171 = vmatprep.mubr.bf16.mxu0 0
      %6172 = vmatmul.mubr.bf16.gmra.mrb[0].mxu0 %v6086
      %v6173 = vpop.f32.mrb[0].mxu0
      %v6174 = vadd.f32 0.0, %v6173
      %v6175 = vpop.f32.mrb[0].mxu0
      %v6176 = vpop.f32.mrb[0].mxu0
      %v6177 = vadd.f32 0.0, %v6176
      %v6178 = vpop.f32.mrb[0].mxu0
      %6179 = vmatprep.mubr.bf16.mxu0 0
      %6180 = vmatmul.mubr.bf16.gmra.mrb[0].mxu0 %v6088
      %v6181 = vpop.f32.mrb[0].mxu0
      %v6182 = vadd.f32 0.0, %v6181
      %v6183 = vpop.f32.mrb[0].mxu0
      %v6184 = vpop.f32.mrb[0].mxu0
      %v6185 = vadd.f32 0.0, %v6184
      %v6186 = vpop.f32.mrb[0].mxu0
      %6187 = vmatprep.mubr.bf16.mxu0 0
      %6188 = vmatmul.mubr.bf16.gmra.mrb[0].mxu0 %v6090
      %v6189 = vpop.f32.mrb[0].mxu0
      %v6190 = vadd.f32 0.0, %v6189
      %v6191 = vpop.f32.mrb[0].mxu0
      %v6192 = vpop.f32.mrb[0].mxu0
      %v6193 = vadd.f32 0.0, %v6192
      %v6194 = vpop.f32.mrb[0].mxu0
      %6195 = vmatprep.mubr.bf16.mxu0 0
      %6196 = vmatmul.mubr.bf16.gmra.mrb[0].mxu0 %v6092
      %v6197 = vpop.f32.mrb[0].mxu0
      %v6198 = vadd.f32 0.0, %v6197
      %v6199 = vpop.f32.mrb[0].mxu0
      %v6200 = vpop.f32.mrb[0].mxu0
      %v6201 = vadd.f32 0.0, %v6200
      %v6202 = vpop.f32.mrb[0].mxu0
      %6203 = vmatprep.mubr.bf16.mxu0 0
      %6204 = vmatmul.mubr.bf16.gmra.mrb[0].mxu0 %v6094
      %v6205 = vpop.f32.mrb[0].mxu0
      %v6206 = vadd.f32 0.0, %v6205
      %v6207 = vpop.f32.mrb[0].mxu0
      %v6208 = vpop.f32.mrb[0].mxu0
      %v6209 = vadd.f32 0.0, %v6208
      %v6210 = vpop.f32.mrb[0].mxu0
      %6211 = vmatprep.mubr.bf16.mxu0 0
      %6212 = vmatmul.mubr.bf16.gmra.mrb[0].mxu0 %v6096
      %v6213 = vpop.f32.mrb[0].mxu0
      %v6214 = vadd.f32 0.0, %v6213
      %v6215 = vpop.f32.mrb[0].mxu0
      %v6216 = vpop.f32.mrb[0].mxu0
      %v6217 = vadd.f32 0.0, %v6216
      %v6218 = vpop.f32.mrb[0].mxu0
      %6219 = vmatprep.mubr.bf16.mxu0 0
      %6220 = vmatmul.mubr.bf16.gmra.mrb[0].mxu0 %v6098
      %v6221 = vpop.f32.mrb[0].mxu0
      %v6222 = vadd.f32 0.0, %v6221
      %v6223 = vpop.f32.mrb[0].mxu0
      %v6224 = vpop.f32.mrb[0].mxu0
      %v6225 = vadd.f32 0.0, %v6224
      %v6226 = vpop.f32.mrb[0].mxu0
      %6227 = vmatprep.mubr.bf16.mxu0 0
      %6228 = vmatmul.mubr.bf16.gmra.mrb[0].mxu0 %v6100
      %v6229 = vpop.f32.mrb[0].mxu0
      %v6230 = vadd.f32 0.0, %v6229
      %v6231 = vpop.f32.mrb[0].mxu0
      %v6232 = vpop.f32.mrb[0].mxu0
      %v6233 = vadd.f32 0.0, %v6232
      %v6234 = vpop.f32.mrb[0].mxu0
      %6235 = vmatprep.mubr.bf16.mxu0 0
      %6236 = vmatmul.mubr.bf16.gmra.mrb[0].mxu0 %v6102
      %v6237 = vpop.f32.mrb[0].mxu0
      %v6238 = vadd.f32 0.0, %v6237
      %v6239 = vpop.f32.mrb[0].mxu0
      %v6240 = vpop.f32.mrb[0].mxu0
      %v6241 = vadd.f32 0.0, %v6240
      %v6242 = vpop.f32.mrb[0].mxu0
      %6243 = vmatprep.mubr.bf16.mxu0 0
      %6244 = vmatmul.mubr.bf16.gmra.mrb[0].mxu0 %v6104
      %v6245 = vpop.f32.mrb[0].mxu0
      %v6246 = vadd.f32 0.0, %v6245
      %v6247 = vpop.f32.mrb[0].mxu0
      %v6248 = vpop.f32.mrb[0].mxu0
      %v6249 = vadd.f32 0.0, %v6248
      %v6250 = vpop.f32.mrb[0].mxu0
      %6251 = vmatprep.mubr.bf16.mxu0 0
      %6252 = vmatmul.mubr.bf16.gmra.mrb[0].mxu0 %v6106
      %v6253 = vpop.f32.mrb[0].mxu0
      %v6254 = vadd.f32 0.0, %v6253
      %v6255 = vpop.f32.mrb[0].mxu0
      %v6256 = vpop.f32.mrb[0].mxu0
      %v6257 = vadd.f32 0.0, %v6256
      %v6258 = vpop.f32.mrb[0].mxu0
      %6259 = vmatprep.mubr.bf16.mxu0 0
      %6260 = vmatmul.mubr.bf16.gmra.mrb[0].mxu0 %v6108
      %v6261 = vpop.f32.mrb[0].mxu0
      %v6262 = vadd.f32 0.0, %v6261
      %v6263 = vpop.f32.mrb[0].mxu0
      %v6264 = vpop.f32.mrb[0].mxu0
      %v6265 = vadd.f32 0.0, %v6264
      %v6266 = vpop.f32.mrb[0].mxu0
      %6267 = vmatprep.mubr.bf16.mxu0 0
      %6268 = vmatmul.mubr.bf16.gmra.mrb[0].mxu0 %v6110
      %v6269 = vpop.f32.mrb[0].mxu0
      %v6270 = vadd.f32 0.0, %v6269
      %v6271 = vpop.f32.mrb[0].mxu0
      %v6272 = vpop.f32.mrb[0].mxu0
      %v6273 = vadd.f32 0.0, %v6272
      %v6274 = vpop.f32.mrb[0].mxu0
      %6275 = vdwg.mxu0
      %v6276 = vadd.f32 %v5162, %v6150
      %v6277 = vadd.f32 %v5163, %v6153
      %v6278 = vadd.f32 %v5164, %v6158
      %v6279 = vadd.f32 %v5165, %v6161
      %v6280 = vadd.f32 %v5166, %v6166
      %v6281 = vadd.f32 %v5167, %v6169
      %v6282 = vadd.f32 %v5168, %v6174
      %v6283 = vadd.f32 %v5169, %v6177
      %v6284 = vadd.f32 %v5170, %v6182
      %v6285 = vadd.f32 %v5171, %v6185
      %v6286 = vadd.f32 %v5172, %v6190
      %v6287 = vadd.f32 %v5173, %v6193
      %v6288 = vadd.f32 %v5174, %v6198
      %v6289 = vadd.f32 %v5175, %v6201
      %v6290 = vadd.f32 %v5176, %v6206
      %v6291 = vadd.f32 %v5177, %v6209
      %v6292 = vadd.f32 %v5178, %v6214
      %v6293 = vadd.f32 %v5179, %v6217
      %v6294 = vadd.f32 %v5180, %v6222
      %v6295 = vadd.f32 %v5181, %v6225
      %v6296 = vadd.f32 %v5182, %v6230
      %v6297 = vadd.f32 %v5183, %v6233
      %v6298 = vadd.f32 %v5184, %v6238
      %v6299 = vadd.f32 %v5185, %v6241
      %v6300 = vadd.f32 %v5186, %v6246
      %v6301 = vadd.f32 %v5187, %v6249
      %v6302 = vadd.f32 %v5188, %v6254
      %v6303 = vadd.f32 %v5189, %v6257
      %v6304 = vadd.f32 %v5190, %v6262
      %v6305 = vadd.f32 %v5191, %v6265
      %v6306 = vadd.f32 %v5192, %v6270
      %v6307 = vadd.f32 %v5193, %v6273
      %v6308 = vmax.f32 %v6276, 0.0
      %v6309 = vmax.f32 %v6277, 0.0
      %v6310 = vmax.f32 %v6278, 0.0
      %v6311 = vmax.f32 %v6279, 0.0
      %v6312 = vmax.f32 %v6280, 0.0
      %v6313 = vmax.f32 %v6281, 0.0
      %v6314 = vmax.f32 %v6282, 0.0
      %v6315 = vmax.f32 %v6283, 0.0
      %v6316 = vmax.f32 %v6284, 0.0
      %v6317 = vmax.f32 %v6285, 0.0
      %v6318 = vmax.f32 %v6286, 0.0
      %v6319 = vmax.f32 %v6287, 0.0
      %v6320 = vmax.f32 %v6288, 0.0
      %v6321 = vmax.f32 %v6289, 0.0
      %v6322 = vmax.f32 %v6290, 0.0
      %v6323 = vmax.f32 %v6291, 0.0
      %v6324 = vmax.f32 %v6292, 0.0
      %v6325 = vmax.f32 %v6293, 0.0
      %v6326 = vmax.f32 %v6294, 0.0
      %v6327 = vmax.f32 %v6295, 0.0
      %v6328 = vmax.f32 %v6296, 0.0
      %v6329 = vmax.f32 %v6297, 0.0
      %v6330 = vmax.f32 %v6298, 0.0
      %v6331 = vmax.f32 %v6299, 0.0
      %v6332 = vmax.f32 %v6300, 0.0
      %v6333 = vmax.f32 %v6301, 0.0
      %v6334 = vmax.f32 %v6302, 0.0
      %v6335 = vmax.f32 %v6303, 0.0
      %v6336 = vmax.f32 %v6304, 0.0
      %v6337 = vmax.f32 %v6305, 0.0
      %v6338 = vmax.f32 %v6306, 0.0
      %v6339 = vmax.f32 %v6307, 0.0
      %v6340 = vpack.c.bf16 %v6309, %v6308
      %v6341 = vpack.c.bf16 %v6311, %v6310
      %v6342 = vpack.c.bf16 %v6313, %v6312
      %v6343 = vpack.c.bf16 %v6315, %v6314
      %v6344 = vpack.c.bf16 %v6317, %v6316
      %v6345 = vpack.c.bf16 %v6319, %v6318
      %v6346 = vpack.c.bf16 %v6321, %v6320
      %v6347 = vpack.c.bf16 %v6323, %v6322
      %v6348 = vpack.c.bf16 %v6325, %v6324
      %v6349 = vpack.c.bf16 %v6327, %v6326
      %v6350 = vpack.c.bf16 %v6329, %v6328
      %v6351 = vpack.c.bf16 %v6331, %v6330
      %v6352 = vpack.c.bf16 %v6333, %v6332
      %v6353 = vpack.c.bf16 %v6335, %v6334
      %v6354 = vpack.c.bf16 %v6337, %v6336
      %v6355 = vpack.c.bf16 %v6339, %v6338
      %v6372 = vunpack.c.l.b16 %v6340
      %v6373 = vunpack.c.h.b16 %v6340
      %v6374 = vunpack.c.l.b16 %v6341
      %v6375 = vunpack.c.h.b16 %v6341
      %v6376 = vunpack.c.l.b16 %v6342
      %v6377 = vunpack.c.h.b16 %v6342
      %v6378 = vunpack.c.l.b16 %v6343
      %v6379 = vunpack.c.h.b16 %v6343
      %v6380 = vunpack.c.l.b16 %v6344
      %v6381 = vunpack.c.h.b16 %v6344
      %v6382 = vunpack.c.l.b16 %v6345
      %v6383 = vunpack.c.h.b16 %v6345
      %v6384 = vunpack.c.l.b16 %v6346
      %v6385 = vunpack.c.h.b16 %v6346
      %v6386 = vunpack.c.l.b16 %v6347
      %v6387 = vunpack.c.h.b16 %v6347
      %v6388 = vunpack.c.l.b16 %v6348
      %v6389 = vunpack.c.h.b16 %v6348
      %v6390 = vunpack.c.l.b16 %v6349
      %v6391 = vunpack.c.h.b16 %v6349
      %v6392 = vunpack.c.l.b16 %v6350
      %v6393 = vunpack.c.h.b16 %v6350
      %v6394 = vunpack.c.l.b16 %v6351
      %v6395 = vunpack.c.h.b16 %v6351
      %v6396 = vunpack.c.l.b16 %v6352
      %v6397 = vunpack.c.h.b16 %v6352
      %v6398 = vunpack.c.l.b16 %v6353
      %v6399 = vunpack.c.h.b16 %v6353
      %v6400 = vunpack.c.l.b16 %v6354
      %v6401 = vunpack.c.h.b16 %v6354
      %v6402 = vunpack.c.l.b16 %v6355
      %v6403 = vunpack.c.h.b16 %v6355
      %v6404 = vpack.c.b16 %v6372, %v6372
      %v6405 = vpack.c.b16 %v6373, %v6373
      %v6406 = vpack.c.b16 %v6374, %v6374
      %v6407 = vpack.c.b16 %v6375, %v6375
      %v6408 = vpack.c.b16 %v6376, %v6376
      %v6409 = vpack.c.b16 %v6377, %v6377
      %v6410 = vpack.c.b16 %v6378, %v6378
      %v6411 = vpack.c.b16 %v6379, %v6379
      %v6412 = vpack.c.b16 %v6380, %v6380
      %v6413 = vpack.c.b16 %v6381, %v6381
      %v6414 = vpack.c.b16 %v6382, %v6382
      %v6415 = vpack.c.b16 %v6383, %v6383
      %v6416 = vpack.c.b16 %v6384, %v6384
      %v6417 = vpack.c.b16 %v6385, %v6385
      %v6418 = vpack.c.b16 %v6386, %v6386
      %v6419 = vpack.c.b16 %v6387, %v6387
      %v6420 = vpack.c.b16 %v6388, %v6388
      %v6421 = vpack.c.b16 %v6389, %v6389
      %v6422 = vpack.c.b16 %v6390, %v6390
      %v6423 = vpack.c.b16 %v6391, %v6391
      %v6424 = vpack.c.b16 %v6392, %v6392
      %v6425 = vpack.c.b16 %v6393, %v6393
      %v6426 = vpack.c.b16 %v6394, %v6394
      %v6427 = vpack.c.b16 %v6395, %v6395
      %v6428 = vpack.c.b16 %v6396, %v6396
      %v6429 = vpack.c.b16 %v6397, %v6397
      %v6430 = vpack.c.b16 %v6398, %v6398
      %v6431 = vpack.c.b16 %v6399, %v6399
      %v6432 = vpack.c.b16 %v6400, %v6400
      %v6433 = vpack.c.b16 %v6401, %v6401
      %v6434 = vpack.c.b16 %v6402, %v6402
      %v6435 = vpack.c.b16 %v6403, %v6403
      %vm6436 = vcmask 1040384
      %vm6437 = vcmask 1044484
      %vm6438 = vmor %vm6436, %vm6437
      %v6439 = vrot.slane %v6404, 7
      %v6440 = vrot.slane %v6439, 4
      %v6441 = vrot.slane %v6405, 7
      %v6442 = vsel %vm6438, %v6440, %v6441
      %v6443 = vrot.slane %v6441, 4
      %v6444 = vrot.slane %v6406, 7
      %v6445 = vrot.slane %v6444, 4
      %v6446 = vrot.slane %v6407, 7
      %v6447 = vsel %vm6438, %v6445, %v6446
      %v6448 = vrot.slane %v6446, 4
      %v6449 = vrot.slane %v6408, 7
      %v6450 = vrot.slane %v6449, 4
      %v6451 = vrot.slane %v6409, 7
      %v6452 = vsel %vm6438, %v6450, %v6451
      %v6453 = vrot.slane %v6451, 4
      %v6454 = vrot.slane %v6410, 7
      %v6455 = vrot.slane %v6454, 4
      %v6456 = vrot.slane %v6411, 7
      %v6457 = vsel %vm6438, %v6455, %v6456
      %v6458 = vrot.slane %v6456, 4
      %v6459 = vrot.slane %v6412, 7
      %v6460 = vrot.slane %v6459, 4
      %v6461 = vrot.slane %v6413, 7
      %v6462 = vsel %vm6438, %v6460, %v6461
      %v6463 = vrot.slane %v6461, 4
      %v6464 = vrot.slane %v6414, 7
      %v6465 = vrot.slane %v6464, 4
      %v6466 = vrot.slane %v6415, 7
      %v6467 = vsel %vm6438, %v6465, %v6466
      %v6468 = vrot.slane %v6466, 4
      %v6469 = vrot.slane %v6416, 7
      %v6470 = vrot.slane %v6469, 4
      %v6471 = vrot.slane %v6417, 7
      %v6472 = vsel %vm6438, %v6470, %v6471
      %v6473 = vrot.slane %v6471, 4
      %v6474 = vrot.slane %v6418, 7
      %v6475 = vrot.slane %v6474, 4
      %v6476 = vrot.slane %v6419, 7
      %v6477 = vsel %vm6438, %v6475, %v6476
      %v6478 = vrot.slane %v6476, 4
      %v6479 = vrot.slane %v6420, 7
      %v6480 = vrot.slane %v6479, 4
      %v6481 = vrot.slane %v6421, 7
      %v6482 = vsel %vm6438, %v6480, %v6481
      %v6483 = vrot.slane %v6481, 4
      %v6484 = vrot.slane %v6422, 7
      %v6485 = vrot.slane %v6484, 4
      %v6486 = vrot.slane %v6423, 7
      %v6487 = vsel %vm6438, %v6485, %v6486
      %v6488 = vrot.slane %v6486, 4
      %v6489 = vrot.slane %v6424, 7
      %v6490 = vrot.slane %v6489, 4
      %v6491 = vrot.slane %v6425, 7
      %v6492 = vsel %vm6438, %v6490, %v6491
      %v6493 = vrot.slane %v6491, 4
      %v6494 = vrot.slane %v6426, 7
      %v6495 = vrot.slane %v6494, 4
      %v6496 = vrot.slane %v6427, 7
      %v6497 = vsel %vm6438, %v6495, %v6496
      %v6498 = vrot.slane %v6496, 4
      %v6499 = vrot.slane %v6428, 7
      %v6500 = vrot.slane %v6499, 4
      %v6501 = vrot.slane %v6429, 7
      %v6502 = vsel %vm6438, %v6500, %v6501
      %v6503 = vrot.slane %v6501, 4
      %v6504 = vrot.slane %v6430, 7
      %v6505 = vrot.slane %v6504, 4
      %v6506 = vrot.slane %v6431, 7
      %v6507 = vsel %vm6438, %v6505, %v6506
      %v6508 = vrot.slane %v6506, 4
      %v6509 = vrot.slane %v6432, 7
      %v6510 = vrot.slane %v6509, 4
      %v6511 = vrot.slane %v6433, 7
      %v6512 = vsel %vm6438, %v6510, %v6511
      %v6513 = vrot.slane %v6511, 4
      %v6514 = vrot.slane %v6434, 7
      %v6515 = vrot.slane %v6514, 4
      %v6516 = vrot.slane %v6435, 7
      %v6517 = vsel %vm6438, %v6515, %v6516
      %v6518 = vrot.slane %v6516, 4
      %s6567 = scalar_lea.vmem [#allocation3], 24
      %vm6568 = vcmask 60417
      %6569 = vst.msk [vmem:[%s6567] sm:$0xe] %vm6568, %v6439
      %6570 = vst.msk [vmem:[%s6567 + $0x4] sm:$0xf] %vm606, %v6442
      %6571 = vst.msk [vmem:[%s6567 + $0x8] sm:$0x1] %vm681, %v6443
      %6572 = vst.msk [vmem:[%s6567 + $0xc] sm:$0xe] %vm6568, %v6444
      %6573 = vst.msk [vmem:[%s6567 + $0x10] sm:$0xf] %vm606, %v6447
      %6574 = vst.msk [vmem:[%s6567 + $0x14] sm:$0x1] %vm681, %v6448
      %6575 = vst.msk [vmem:[%s6567 + $0x18] sm:$0xe] %vm6568, %v6449
      %6576 = vst.msk [vmem:[%s6567 + $0x1c] sm:$0xf] %vm606, %v6452
      %6577 = vst.msk [vmem:[%s6567 + $0x20] sm:$0x1] %vm681, %v6453
      %6578 = vst.msk [vmem:[%s6567 + $0x24] sm:$0xe] %vm6568, %v6454
      %6579 = vst.msk [vmem:[%s6567 + $0x28] sm:$0xf] %vm606, %v6457
      %6580 = vst.msk [vmem:[%s6567 + $0x2c] sm:$0x1] %vm681, %v6458
      %6581 = vst.msk [vmem:[%s6567 + $0x30] sm:$0xe] %vm6568, %v6459
      %6582 = vst.msk [vmem:[%s6567 + $0x34] sm:$0xf] %vm606, %v6462
      %6583 = vst.msk [vmem:[%s6567 + $0x38] sm:$0x1] %vm681, %v6463
      %6584 = vst.msk [vmem:[%s6567 + $0x3c] sm:$0xe] %vm6568, %v6464
      %6585 = vst.msk [vmem:[%s6567 + $0x40] sm:$0xf] %vm606, %v6467
      %6586 = vst.msk [vmem:[%s6567 + $0x44] sm:$0x1] %vm681, %v6468
      %6587 = vst.msk [vmem:[%s6567 + $0x48] sm:$0xe] %vm6568, %v6469
      %6588 = vst.msk [vmem:[%s6567 + $0x4c] sm:$0xf] %vm606, %v6472
      %6589 = vst.msk [vmem:[%s6567 + $0x50] sm:$0x1] %vm681, %v6473
      %6590 = vst.msk [vmem:[%s6567 + $0x54] sm:$0xe] %vm6568, %v6474
      %6591 = vst.msk [vmem:[%s6567 + $0x58] sm:$0xf] %vm606, %v6477
      %6592 = vst.msk [vmem:[%s6567 + $0x5c] sm:$0x1] %vm681, %v6478
      %6593 = vst.msk [vmem:[%s6567 + $0x60] sm:$0xe] %vm6568, %v6479
      %6594 = vst.msk [vmem:[%s6567 + $0x64] sm:$0xf] %vm606, %v6482
      %6595 = vst.msk [vmem:[%s6567 + $0x68] sm:$0x1] %vm681, %v6483
      %6596 = vst.msk [vmem:[%s6567 + $0x6c] sm:$0xe] %vm6568, %v6484
      %6597 = vst.msk [vmem:[%s6567 + $0x70] sm:$0xf] %vm606, %v6487
      %6598 = vst.msk [vmem:[%s6567 + $0x74] sm:$0x1] %vm681, %v6488
      %6599 = vst.msk [vmem:[%s6567 + $0x78] sm:$0xe] %vm6568, %v6489
      %6600 = vst.msk [vmem:[%s6567 + $0x7c] sm:$0xf] %vm606, %v6492
      %6601 = vst.msk [vmem:[%s6567 + $0x80] sm:$0x1] %vm681, %v6493
      %6602 = vst.msk [vmem:[%s6567 + $0x84] sm:$0xe] %vm6568, %v6494
      %6603 = vst.msk [vmem:[%s6567 + $0x88] sm:$0xf] %vm606, %v6497
      %6604 = vst.msk [vmem:[%s6567 + $0x8c] sm:$0x1] %vm681, %v6498
      %6605 = vst.msk [vmem:[%s6567 + $0x90] sm:$0xe] %vm6568, %v6499
      %6606 = vst.msk [vmem:[%s6567 + $0x94] sm:$0xf] %vm606, %v6502
      %6607 = vst.msk [vmem:[%s6567 + $0x98] sm:$0x1] %vm681, %v6503
      %6608 = vst.msk [vmem:[%s6567 + $0x9c] sm:$0xe] %vm6568, %v6504
      %6609 = vst.msk [vmem:[%s6567 + $0xa0] sm:$0xf] %vm606, %v6507
      %6610 = vst.msk [vmem:[%s6567 + $0xa4] sm:$0x1] %vm681, %v6508
      %6611 = vst.msk [vmem:[%s6567 + $0xa8] sm:$0xe] %vm6568, %v6509
      %6612 = vst.msk [vmem:[%s6567 + $0xac] sm:$0xf] %vm606, %v6512
      %6613 = vst.msk [vmem:[%s6567 + $0xb0] sm:$0x1] %vm681, %v6513
      %6614 = vst.msk [vmem:[%s6567 + $0xb4] sm:$0xe] %vm6568, %v6514
      %6615 = vst.msk [vmem:[%s6567 + $0xb8] sm:$0xf] %vm606, %v6517
      %6616 = vst.msk [vmem:[%s6567 + $0xbc] sm:$0x1] %vm681, %v6518
      %v6617 = vld [vmem:[%s4] sm:$0x1]
      %v6619 = vlaneseq
      %v6620 = vshrl.u32 %v6619, 7
      %v6621 = vsub.s32 0, %v6620
      %v6622 = vrot.slane %v6617, %v6621
      %v6624 = vld [vmem:[#allocation3] sm:$0xf]
      %v6625 = vld [vmem:[#allocation3 + $0x4] sm:$0xf]
      %v6626 = vld [vmem:[#allocation3 + $0x8] sm:$0x3]
      %v6627 = vld [vmem:[#allocation3 + $0xc] sm:$0xf]
      %v6628 = vld [vmem:[#allocation3 + $0x10] sm:$0xf]
      %v6629 = vld [vmem:[#allocation3 + $0x14] sm:$0x3]
      %v6630 = vld [vmem:[#allocation3 + $0x18] sm:$0xf]
      %v6631 = vld [vmem:[#allocation3 + $0x1c] sm:$0xf]
      %v6632 = vld [vmem:[#allocation3 + $0x20] sm:$0x3]
      %v6633 = vld [vmem:[#allocation3 + $0x24] sm:$0xf]
      %v6634 = vld [vmem:[#allocation3 + $0x28] sm:$0xf]
      %v6635 = vld [vmem:[#allocation3 + $0x2c] sm:$0x3]
      %v6636 = vld [vmem:[#allocation3 + $0x30] sm:$0xf]
      %v6637 = vld [vmem:[#allocation3 + $0x34] sm:$0xf]
      %v6638 = vld [vmem:[#allocation3 + $0x38] sm:$0x3]
      %v6639 = vld [vmem:[#allocation3 + $0x3c] sm:$0xf]
      %v6640 = vld [vmem:[#allocation3 + $0x40] sm:$0xf]
      %v6641 = vld [vmem:[#allocation3 + $0x44] sm:$0x3]
      %v6642 = vld [vmem:[#allocation3 + $0x48] sm:$0xf]
      %v6643 = vld [vmem:[#allocation3 + $0x4c] sm:$0xf]
      %v6644 = vld [vmem:[#allocation3 + $0x50] sm:$0x3]
      %v6645 = vld [vmem:[#allocation3 + $0x54] sm:$0xf]
      %v6646 = vld [vmem:[#allocation3 + $0x58] sm:$0xf]
      %v6647 = vld [vmem:[#allocation3 + $0x5c] sm:$0x3]
      %v6648 = vld [vmem:[#allocation3 + $0x60] sm:$0xf]
      %v6649 = vld [vmem:[#allocation3 + $0x64] sm:$0xf]
      %v6650 = vld [vmem:[#allocation3 + $0x68] sm:$0x3]
      %v6651 = vld [vmem:[#allocation3 + $0x6c] sm:$0xf]
      %v6652 = vld [vmem:[#allocation3 + $0x70] sm:$0xf]
      %v6653 = vld [vmem:[#allocation3 + $0x74] sm:$0x3]
      %v6654 = vld [vmem:[#allocation3 + $0x78] sm:$0xf]
      %v6655 = vld [vmem:[#allocation3 + $0x7c] sm:$0xf]
      %v6656 = vld [vmem:[#allocation3 + $0x80] sm:$0x3]
      %v6657 = vld [vmem:[#allocation3 + $0x84] sm:$0xf]
      %v6658 = vld [vmem:[#allocation3 + $0x88] sm:$0xf]
      %v6659 = vld [vmem:[#allocation3 + $0x8c] sm:$0x3]
      %v6660 = vld [vmem:[#allocation3 + $0x90] sm:$0xf]
      %v6661 = vld [vmem:[#allocation3 + $0x94] sm:$0xf]
      %v6662 = vld [vmem:[#allocation3 + $0x98] sm:$0x3]
      %v6663 = vld [vmem:[#allocation3 + $0x9c] sm:$0xf]
      %v6664 = vld [vmem:[#allocation3 + $0xa0] sm:$0xf]
      %v6665 = vld [vmem:[#allocation3 + $0xa4] sm:$0x3]
      %v6666 = vld [vmem:[#allocation3 + $0xa8] sm:$0xf]
      %v6667 = vld [vmem:[#allocation3 + $0xac] sm:$0xf]
      %v6668 = vld [vmem:[#allocation3 + $0xb0] sm:$0x3]
      %v6669 = vld [vmem:[#allocation3 + $0xb4] sm:$0xf]
      %v6670 = vld [vmem:[#allocation3 + $0xb8] sm:$0xf]
      %v6671 = vld [vmem:[#allocation3 + $0xbc] sm:$0x3]
      %v6704 = vunpack.c.l.b16 %v6624
      %v6705 = vunpack.c.l.b16 %v6625
      %v6706 = vunpack.c.l.b16 %v6627
      %v6707 = vunpack.c.l.b16 %v6628
      %v6708 = vunpack.c.l.b16 %v6630
      %v6709 = vunpack.c.l.b16 %v6631
      %v6710 = vunpack.c.l.b16 %v6633
      %v6711 = vunpack.c.l.b16 %v6634
      %v6712 = vunpack.c.l.b16 %v6636
      %v6713 = vunpack.c.l.b16 %v6637
      %v6714 = vunpack.c.l.b16 %v6639
      %v6715 = vunpack.c.l.b16 %v6640
      %v6716 = vunpack.c.l.b16 %v6642
      %v6717 = vunpack.c.l.b16 %v6643
      %v6718 = vunpack.c.l.b16 %v6645
      %v6719 = vunpack.c.l.b16 %v6646
      %v6720 = vunpack.c.l.b16 %v6648
      %v6721 = vunpack.c.l.b16 %v6649
      %v6722 = vunpack.c.l.b16 %v6651
      %v6723 = vunpack.c.l.b16 %v6652
      %v6724 = vunpack.c.l.b16 %v6654
      %v6725 = vunpack.c.l.b16 %v6655
      %v6726 = vunpack.c.l.b16 %v6657
      %v6727 = vunpack.c.l.b16 %v6658
      %v6728 = vunpack.c.l.b16 %v6660
      %v6729 = vunpack.c.l.b16 %v6661
      %v6730 = vunpack.c.l.b16 %v6663
      %v6731 = vunpack.c.l.b16 %v6664
      %v6732 = vunpack.c.l.b16 %v6666
      %v6733 = vunpack.c.l.b16 %v6667
      %v6734 = vunpack.c.l.b16 %v6669
      %v6735 = vunpack.c.l.b16 %v6670
      %v6736 = vpack.c.b16 %v6705, %v6704
      %v6737 = vpack.c.b16 %v6707, %v6706
      %v6738 = vpack.c.b16 %v6709, %v6708
      %v6739 = vpack.c.b16 %v6711, %v6710
      %v6740 = vpack.c.b16 %v6713, %v6712
      %v6741 = vpack.c.b16 %v6715, %v6714
      %v6742 = vpack.c.b16 %v6717, %v6716
      %v6743 = vpack.c.b16 %v6719, %v6718
      %v6744 = vpack.c.b16 %v6721, %v6720
      %v6745 = vpack.c.b16 %v6723, %v6722
      %v6746 = vpack.c.b16 %v6725, %v6724
      %v6747 = vpack.c.b16 %v6727, %v6726
      %v6748 = vpack.c.b16 %v6729, %v6728
      %v6749 = vpack.c.b16 %v6731, %v6730
      %v6750 = vpack.c.b16 %v6733, %v6732
      %v6751 = vpack.c.b16 %v6735, %v6734
      %v6768 = vunpack.c.l.b16 %v6626
      %v6769 = vunpack.c.l.b16 %v6629
      %v6770 = vunpack.c.l.b16 %v6632
      %v6771 = vunpack.c.l.b16 %v6635
      %v6772 = vunpack.c.l.b16 %v6638
      %v6773 = vunpack.c.l.b16 %v6641
      %v6774 = vunpack.c.l.b16 %v6644
      %v6775 = vunpack.c.l.b16 %v6647
      %v6776 = vunpack.c.l.b16 %v6650
      %v6777 = vunpack.c.l.b16 %v6653
      %v6778 = vunpack.c.l.b16 %v6656
      %v6779 = vunpack.c.l.b16 %v6659
      %v6780 = vunpack.c.l.b16 %v6662
      %v6781 = vunpack.c.l.b16 %v6665
      %v6782 = vunpack.c.l.b16 %v6668
      %v6783 = vunpack.c.l.b16 %v6671
      %v6784 = vpack.c.b16 %v6768, %v6768
      %v6785 = vpack.c.b16 %v6769, %v6769
      %v6786 = vpack.c.b16 %v6770, %v6770
      %v6787 = vpack.c.b16 %v6771, %v6771
      %v6788 = vpack.c.b16 %v6772, %v6772
      %v6789 = vpack.c.b16 %v6773, %v6773
      %v6790 = vpack.c.b16 %v6774, %v6774
      %v6791 = vpack.c.b16 %v6775, %v6775
      %v6792 = vpack.c.b16 %v6776, %v6776
      %v6793 = vpack.c.b16 %v6777, %v6777
      %v6794 = vpack.c.b16 %v6778, %v6778
      %v6795 = vpack.c.b16 %v6779, %v6779
      %v6796 = vpack.c.b16 %v6780, %v6780
      %v6797 = vpack.c.b16 %v6781, %v6781
      %v6798 = vpack.c.b16 %v6782, %v6782
      %v6799 = vpack.c.b16 %v6783, %v6783
      %v6801 = vshrl.u32 %v6736, 16
      %v6803 = vshll.u32 %v6736, 16
      %v6805 = vrot.slane %v6803, 1
      %v6806 = vor.u32 %v6801, %v6805
      %v6808 = vshll.u32 %v6784, 16
      %v6810 = vrot.slane %v6808, 1
      %v6811 = vsel %vm906, %v6806, %v6810
      %v6813 = vshrl.u32 %v6737, 16
      %v6815 = vshll.u32 %v6737, 16
      %v6817 = vrot.slane %v6815, 1
      %v6818 = vor.u32 %v6813, %v6817
      %v6820 = vshll.u32 %v6785, 16
      %v6822 = vrot.slane %v6820, 1
      %v6823 = vsel %vm906, %v6818, %v6822
      %v6825 = vshrl.u32 %v6738, 16
      %v6827 = vshll.u32 %v6738, 16
      %v6829 = vrot.slane %v6827, 1
      %v6830 = vor.u32 %v6825, %v6829
      %v6832 = vshll.u32 %v6786, 16
      %v6834 = vrot.slane %v6832, 1
      %v6835 = vsel %vm906, %v6830, %v6834
      %v6837 = vshrl.u32 %v6739, 16
      %v6839 = vshll.u32 %v6739, 16
      %v6841 = vrot.slane %v6839, 1
      %v6842 = vor.u32 %v6837, %v6841
      %v6844 = vshll.u32 %v6787, 16
      %v6846 = vrot.slane %v6844, 1
      %v6847 = vsel %vm906, %v6842, %v6846
      %v6849 = vshrl.u32 %v6740, 16
      %v6851 = vshll.u32 %v6740, 16
      %v6853 = vrot.slane %v6851, 1
      %v6854 = vor.u32 %v6849, %v6853
      %v6856 = vshll.u32 %v6788, 16
      %v6858 = vrot.slane %v6856, 1
      %v6859 = vsel %vm906, %v6854, %v6858
      %v6861 = vshrl.u32 %v6741, 16
      %v6863 = vshll.u32 %v6741, 16
      %v6865 = vrot.slane %v6863, 1
      %v6866 = vor.u32 %v6861, %v6865
      %v6868 = vshll.u32 %v6789, 16
      %v6870 = vrot.slane %v6868, 1
      %v6871 = vsel %vm906, %v6866, %v6870
      %v6873 = vshrl.u32 %v6742, 16
      %v6875 = vshll.u32 %v6742, 16
      %v6877 = vrot.slane %v6875, 1
      %v6878 = vor.u32 %v6873, %v6877
      %v6880 = vshll.u32 %v6790, 16
      %v6882 = vrot.slane %v6880, 1
      %v6883 = vsel %vm906, %v6878, %v6882
      %v6885 = vshrl.u32 %v6743, 16
      %v6887 = vshll.u32 %v6743, 16
      %v6889 = vrot.slane %v6887, 1
      %v6890 = vor.u32 %v6885, %v6889
      %v6892 = vshll.u32 %v6791, 16
      %v6894 = vrot.slane %v6892, 1
      %v6895 = vsel %vm906, %v6890, %v6894
      %v6897 = vshrl.u32 %v6744, 16
      %v6899 = vshll.u32 %v6744, 16
      %v6901 = vrot.slane %v6899, 1
      %v6902 = vor.u32 %v6897, %v6901
      %v6904 = vshll.u32 %v6792, 16
      %v6906 = vrot.slane %v6904, 1
      %v6907 = vsel %vm906, %v6902, %v6906
      %v6909 = vshrl.u32 %v6745, 16
      %v6911 = vshll.u32 %v6745, 16
      %v6913 = vrot.slane %v6911, 1
      %v6914 = vor.u32 %v6909, %v6913
      %v6916 = vshll.u32 %v6793, 16
      %v6918 = vrot.slane %v6916, 1
      %v6919 = vsel %vm906, %v6914, %v6918
      %v6921 = vshrl.u32 %v6746, 16
      %v6923 = vshll.u32 %v6746, 16
      %v6925 = vrot.slane %v6923, 1
      %v6926 = vor.u32 %v6921, %v6925
      %v6928 = vshll.u32 %v6794, 16
      %v6930 = vrot.slane %v6928, 1
      %v6931 = vsel %vm906, %v6926, %v6930
      %v6933 = vshrl.u32 %v6747, 16
      %v6935 = vshll.u32 %v6747, 16
      %v6937 = vrot.slane %v6935, 1
      %v6938 = vor.u32 %v6933, %v6937
      %v6940 = vshll.u32 %v6795, 16
      %v6942 = vrot.slane %v6940, 1
      %v6943 = vsel %vm906, %v6938, %v6942
      %v6945 = vshrl.u32 %v6748, 16
      %v6947 = vshll.u32 %v6748, 16
      %v6949 = vrot.slane %v6947, 1
      %v6950 = vor.u32 %v6945, %v6949
      %v6952 = vshll.u32 %v6796, 16
      %v6954 = vrot.slane %v6952, 1
      %v6955 = vsel %vm906, %v6950, %v6954
      %v6957 = vshrl.u32 %v6749, 16
      %v6959 = vshll.u32 %v6749, 16
      %v6961 = vrot.slane %v6959, 1
      %v6962 = vor.u32 %v6957, %v6961
      %v6964 = vshll.u32 %v6797, 16
      %v6966 = vrot.slane %v6964, 1
      %v6967 = vsel %vm906, %v6962, %v6966
      %v6969 = vshrl.u32 %v6750, 16
      %v6971 = vshll.u32 %v6750, 16
      %v6973 = vrot.slane %v6971, 1
      %v6974 = vor.u32 %v6969, %v6973
      %v6976 = vshll.u32 %v6798, 16
      %v6978 = vrot.slane %v6976, 1
      %v6979 = vsel %vm906, %v6974, %v6978
      %v6981 = vshrl.u32 %v6751, 16
      %v6983 = vshll.u32 %v6751, 16
      %v6985 = vrot.slane %v6983, 1
      %v6986 = vor.u32 %v6981, %v6985
      %v6988 = vshll.u32 %v6799, 16
      %v6990 = vrot.slane %v6988, 1
      %v6991 = vsel %vm906, %v6986, %v6990
      %6992 = vrot.lane.b32.xlu0 %v6811, 8
      %v6993 = vpop.permute.xlu0 %6992
      %6994 = vrot.lane.b32.xlu0 %v6823, 8
      %v6995 = vpop.permute.xlu0 %6994
      %6996 = vrot.lane.b32.xlu0 %v6835, 8
      %v6997 = vpop.permute.xlu0 %6996
      %6998 = vrot.lane.b32.xlu0 %v6847, 8
      %v6999 = vpop.permute.xlu0 %6998
      %7000 = vrot.lane.b32.xlu0 %v6859, 8
      %v7001 = vpop.permute.xlu0 %7000
      %7002 = vrot.lane.b32.xlu0 %v6871, 8
      %v7003 = vpop.permute.xlu0 %7002
      %7004 = vrot.lane.b32.xlu0 %v6883, 8
      %v7005 = vpop.permute.xlu0 %7004
      %7006 = vrot.lane.b32.xlu0 %v6895, 8
      %v7007 = vpop.permute.xlu0 %7006
      %7008 = vrot.lane.b32.xlu0 %v6907, 8
      %v7009 = vpop.permute.xlu0 %7008
      %7010 = vrot.lane.b32.xlu0 %v6919, 8
      %v7011 = vpop.permute.xlu0 %7010
      %7012 = vrot.lane.b32.xlu0 %v6931, 8
      %v7013 = vpop.permute.xlu0 %7012
      %7014 = vrot.lane.b32.xlu0 %v6943, 8
      %v7015 = vpop.permute.xlu0 %7014
      %7016 = vrot.lane.b32.xlu0 %v6955, 8
      %v7017 = vpop.permute.xlu0 %7016
      %7018 = vrot.lane.b32.xlu0 %v6967, 8
      %v7019 = vpop.permute.xlu0 %7018
      %7020 = vrot.lane.b32.xlu0 %v6979, 8
      %v7021 = vpop.permute.xlu0 %7020
      %7022 = vrot.lane.b32.xlu0 %v6991, 8
      %v7023 = vpop.permute.xlu0 %7022
      %v7024 = vrot.slane %v6736, 1
      %v7025 = vrot.slane %v6784, 1
      %v7026 = vsel %vm1131, %v7024, %v7025
      %v7027 = vrot.slane %v6737, 1
      %v7028 = vrot.slane %v6785, 1
      %v7029 = vsel %vm1131, %v7027, %v7028
      %v7030 = vrot.slane %v6738, 1
      %v7031 = vrot.slane %v6786, 1
      %v7032 = vsel %vm1131, %v7030, %v7031
      %v7033 = vrot.slane %v6739, 1
      %v7034 = vrot.slane %v6787, 1
      %v7035 = vsel %vm1131, %v7033, %v7034
      %v7036 = vrot.slane %v6740, 1
      %v7037 = vrot.slane %v6788, 1
      %v7038 = vsel %vm1131, %v7036, %v7037
      %v7039 = vrot.slane %v6741, 1
      %v7040 = vrot.slane %v6789, 1
      %v7041 = vsel %vm1131, %v7039, %v7040
      %v7042 = vrot.slane %v6742, 1
      %v7043 = vrot.slane %v6790, 1
      %v7044 = vsel %vm1131, %v7042, %v7043
      %v7045 = vrot.slane %v6743, 1
      %v7046 = vrot.slane %v6791, 1
      %v7047 = vsel %vm1131, %v7045, %v7046
      %v7048 = vrot.slane %v6744, 1
      %v7049 = vrot.slane %v6792, 1
      %v7050 = vsel %vm1131, %v7048, %v7049
      %v7051 = vrot.slane %v6745, 1
      %v7052 = vrot.slane %v6793, 1
      %v7053 = vsel %vm1131, %v7051, %v7052
      %v7054 = vrot.slane %v6746, 1
      %v7055 = vrot.slane %v6794, 1
      %v7056 = vsel %vm1131, %v7054, %v7055
      %v7057 = vrot.slane %v6747, 1
      %v7058 = vrot.slane %v6795, 1
      %v7059 = vsel %vm1131, %v7057, %v7058
      %v7060 = vrot.slane %v6748, 1
      %v7061 = vrot.slane %v6796, 1
      %v7062 = vsel %vm1131, %v7060, %v7061
      %v7063 = vrot.slane %v6749, 1
      %v7064 = vrot.slane %v6797, 1
      %v7065 = vsel %vm1131, %v7063, %v7064
      %v7066 = vrot.slane %v6750, 1
      %v7067 = vrot.slane %v6798, 1
      %v7068 = vsel %vm1131, %v7066, %v7067
      %v7069 = vrot.slane %v6751, 1
      %v7070 = vrot.slane %v6799, 1
      %v7071 = vsel %vm1131, %v7069, %v7070
      %7072 = vrot.lane.b32.xlu0 %v7026, 16
      %v7073 = vpop.permute.xlu0 %7072
      %7074 = vrot.lane.b32.xlu0 %v7029, 16
      %v7075 = vpop.permute.xlu0 %7074
      %7076 = vrot.lane.b32.xlu0 %v7032, 16
      %v7077 = vpop.permute.xlu0 %7076
      %7078 = vrot.lane.b32.xlu0 %v7035, 16
      %v7079 = vpop.permute.xlu0 %7078
      %7080 = vrot.lane.b32.xlu0 %v7038, 16
      %v7081 = vpop.permute.xlu0 %7080
      %7082 = vrot.lane.b32.xlu0 %v7041, 16
      %v7083 = vpop.permute.xlu0 %7082
      %7084 = vrot.lane.b32.xlu0 %v7044, 16
      %v7085 = vpop.permute.xlu0 %7084
      %7086 = vrot.lane.b32.xlu0 %v7047, 16
      %v7087 = vpop.permute.xlu0 %7086
      %7088 = vrot.lane.b32.xlu0 %v7050, 16
      %v7089 = vpop.permute.xlu0 %7088
      %7090 = vrot.lane.b32.xlu0 %v7053, 16
      %v7091 = vpop.permute.xlu0 %7090
      %7092 = vrot.lane.b32.xlu0 %v7056, 16
      %v7093 = vpop.permute.xlu0 %7092
      %7094 = vrot.lane.b32.xlu0 %v7059, 16
      %v7095 = vpop.permute.xlu0 %7094
      %7096 = vrot.lane.b32.xlu0 %v7062, 16
      %v7097 = vpop.permute.xlu0 %7096
      %7098 = vrot.lane.b32.xlu0 %v7065, 16
      %v7099 = vpop.permute.xlu0 %7098
      %7100 = vrot.lane.b32.xlu0 %v7068, 16
      %v7101 = vpop.permute.xlu0 %7100
      %7102 = vrot.lane.b32.xlu0 %v7071, 16
      %v7103 = vpop.permute.xlu0 %7102
      %v7104 = vrot.slane %v6801, 1
      %v7105 = vrot.slane %v6803, 2
      %v7106 = vor.u32 %v7104, %v7105
      %v7107 = vshrl.u32 %v6784, 16
      %v7109 = vrot.slane %v7107, 1
      %v7110 = vrot.slane %v6808, 2
      %v7111 = vor.u32 %v7109, %v7110
      %v7112 = vsel %vm1212, %v7106, %v7111
      %v7113 = vrot.slane %v6813, 1
      %v7114 = vrot.slane %v6815, 2
      %v7115 = vor.u32 %v7113, %v7114
      %v7116 = vshrl.u32 %v6785, 16
      %v7118 = vrot.slane %v7116, 1
      %v7119 = vrot.slane %v6820, 2
      %v7120 = vor.u32 %v7118, %v7119
      %v7121 = vsel %vm1212, %v7115, %v7120
      %v7122 = vrot.slane %v6825, 1
      %v7123 = vrot.slane %v6827, 2
      %v7124 = vor.u32 %v7122, %v7123
      %v7125 = vshrl.u32 %v6786, 16
      %v7127 = vrot.slane %v7125, 1
      %v7128 = vrot.slane %v6832, 2
      %v7129 = vor.u32 %v7127, %v7128
      %v7130 = vsel %vm1212, %v7124, %v7129
      %v7131 = vrot.slane %v6837, 1
      %v7132 = vrot.slane %v6839, 2
      %v7133 = vor.u32 %v7131, %v7132
      %v7134 = vshrl.u32 %v6787, 16
      %v7136 = vrot.slane %v7134, 1
      %v7137 = vrot.slane %v6844, 2
      %v7138 = vor.u32 %v7136, %v7137
      %v7139 = vsel %vm1212, %v7133, %v7138
      %v7140 = vrot.slane %v6849, 1
      %v7141 = vrot.slane %v6851, 2
      %v7142 = vor.u32 %v7140, %v7141
      %v7143 = vshrl.u32 %v6788, 16
      %v7145 = vrot.slane %v7143, 1
      %v7146 = vrot.slane %v6856, 2
      %v7147 = vor.u32 %v7145, %v7146
      %v7148 = vsel %vm1212, %v7142, %v7147
      %v7149 = vrot.slane %v6861, 1
      %v7150 = vrot.slane %v6863, 2
      %v7151 = vor.u32 %v7149, %v7150
      %v7152 = vshrl.u32 %v6789, 16
      %v7154 = vrot.slane %v7152, 1
      %v7155 = vrot.slane %v6868, 2
      %v7156 = vor.u32 %v7154, %v7155
      %v7157 = vsel %vm1212, %v7151, %v7156
      %v7158 = vrot.slane %v6873, 1
      %v7159 = vrot.slane %v6875, 2
      %v7160 = vor.u32 %v7158, %v7159
      %v7161 = vshrl.u32 %v6790, 16
      %v7163 = vrot.slane %v7161, 1
      %v7164 = vrot.slane %v6880, 2
      %v7165 = vor.u32 %v7163, %v7164
      %v7166 = vsel %vm1212, %v7160, %v7165
      %v7167 = vrot.slane %v6885, 1
      %v7168 = vrot.slane %v6887, 2
      %v7169 = vor.u32 %v7167, %v7168
      %v7170 = vshrl.u32 %v6791, 16
      %v7172 = vrot.slane %v7170, 1
      %v7173 = vrot.slane %v6892, 2
      %v7174 = vor.u32 %v7172, %v7173
      %v7175 = vsel %vm1212, %v7169, %v7174
      %v7176 = vrot.slane %v6897, 1
      %v7177 = vrot.slane %v6899, 2
      %v7178 = vor.u32 %v7176, %v7177
      %v7179 = vshrl.u32 %v6792, 16
      %v7181 = vrot.slane %v7179, 1
      %v7182 = vrot.slane %v6904, 2
      %v7183 = vor.u32 %v7181, %v7182
      %v7184 = vsel %vm1212, %v7178, %v7183
      %v7185 = vrot.slane %v6909, 1
      %v7186 = vrot.slane %v6911, 2
      %v7187 = vor.u32 %v7185, %v7186
      %v7188 = vshrl.u32 %v6793, 16
      %v7190 = vrot.slane %v7188, 1
      %v7191 = vrot.slane %v6916, 2
      %v7192 = vor.u32 %v7190, %v7191
      %v7193 = vsel %vm1212, %v7187, %v7192
      %v7194 = vrot.slane %v6921, 1
      %v7195 = vrot.slane %v6923, 2
      %v7196 = vor.u32 %v7194, %v7195
      %v7197 = vshrl.u32 %v6794, 16
      %v7199 = vrot.slane %v7197, 1
      %v7200 = vrot.slane %v6928, 2
      %v7201 = vor.u32 %v7199, %v7200
      %v7202 = vsel %vm1212, %v7196, %v7201
      %v7203 = vrot.slane %v6933, 1
      %v7204 = vrot.slane %v6935, 2
      %v7205 = vor.u32 %v7203, %v7204
      %v7206 = vshrl.u32 %v6795, 16
      %v7208 = vrot.slane %v7206, 1
      %v7209 = vrot.slane %v6940, 2
      %v7210 = vor.u32 %v7208, %v7209
      %v7211 = vsel %vm1212, %v7205, %v7210
      %v7212 = vrot.slane %v6945, 1
      %v7213 = vrot.slane %v6947, 2
      %v7214 = vor.u32 %v7212, %v7213
      %v7215 = vshrl.u32 %v6796, 16
      %v7217 = vrot.slane %v7215, 1
      %v7218 = vrot.slane %v6952, 2
      %v7219 = vor.u32 %v7217, %v7218
      %v7220 = vsel %vm1212, %v7214, %v7219
      %v7221 = vrot.slane %v6957, 1
      %v7222 = vrot.slane %v6959, 2
      %v7223 = vor.u32 %v7221, %v7222
      %v7224 = vshrl.u32 %v6797, 16
      %v7226 = vrot.slane %v7224, 1
      %v7227 = vrot.slane %v6964, 2
      %v7228 = vor.u32 %v7226, %v7227
      %v7229 = vsel %vm1212, %v7223, %v7228
      %v7230 = vrot.slane %v6969, 1
      %v7231 = vrot.slane %v6971, 2
      %v7232 = vor.u32 %v7230, %v7231
      %v7233 = vshrl.u32 %v6798, 16
      %v7235 = vrot.slane %v7233, 1
      %v7236 = vrot.slane %v6976, 2
      %v7237 = vor.u32 %v7235, %v7236
      %v7238 = vsel %vm1212, %v7232, %v7237
      %v7239 = vrot.slane %v6981, 1
      %v7240 = vrot.slane %v6983, 2
      %v7241 = vor.u32 %v7239, %v7240
      %v7242 = vshrl.u32 %v6799, 16
      %v7244 = vrot.slane %v7242, 1
      %v7245 = vrot.slane %v6988, 2
      %v7246 = vor.u32 %v7244, %v7245
      %v7247 = vsel %vm1212, %v7241, %v7246
      %7248 = vrot.lane.b32.xlu0 %v7112, 24
      %v7249 = vpop.permute.xlu0 %7248
      %7250 = vrot.lane.b32.xlu0 %v7121, 24
      %v7251 = vpop.permute.xlu0 %7250
      %7252 = vrot.lane.b32.xlu0 %v7130, 24
      %v7253 = vpop.permute.xlu0 %7252
      %7254 = vrot.lane.b32.xlu0 %v7139, 24
      %v7255 = vpop.permute.xlu0 %7254
      %7256 = vrot.lane.b32.xlu0 %v7148, 24
      %v7257 = vpop.permute.xlu0 %7256
      %7258 = vrot.lane.b32.xlu0 %v7157, 24
      %v7259 = vpop.permute.xlu0 %7258
      %7260 = vrot.lane.b32.xlu0 %v7166, 24
      %v7261 = vpop.permute.xlu0 %7260
      %7262 = vrot.lane.b32.xlu0 %v7175, 24
      %v7263 = vpop.permute.xlu0 %7262
      %7264 = vrot.lane.b32.xlu0 %v7184, 24
      %v7265 = vpop.permute.xlu0 %7264
      %7266 = vrot.lane.b32.xlu0 %v7193, 24
      %v7267 = vpop.permute.xlu0 %7266
      %7268 = vrot.lane.b32.xlu0 %v7202, 24
      %v7269 = vpop.permute.xlu0 %7268
      %7270 = vrot.lane.b32.xlu0 %v7211, 24
      %v7271 = vpop.permute.xlu0 %7270
      %7272 = vrot.lane.b32.xlu0 %v7220, 24
      %v7273 = vpop.permute.xlu0 %7272
      %7274 = vrot.lane.b32.xlu0 %v7229, 24
      %v7275 = vpop.permute.xlu0 %7274
      %7276 = vrot.lane.b32.xlu0 %v7238, 24
      %v7277 = vpop.permute.xlu0 %7276
      %7278 = vrot.lane.b32.xlu0 %v7247, 24
      %v7279 = vpop.permute.xlu0 %7278
      %v7280 = vrot.slane %v6736, 2
      %v7281 = vrot.slane %v6784, 2
      %v7282 = vsel %vm1389, %v7280, %v7281
      %v7283 = vrot.slane %v6737, 2
      %v7284 = vrot.slane %v6785, 2
      %v7285 = vsel %vm1389, %v7283, %v7284
      %v7286 = vrot.slane %v6738, 2
      %v7287 = vrot.slane %v6786, 2
      %v7288 = vsel %vm1389, %v7286, %v7287
      %v7289 = vrot.slane %v6739, 2
      %v7290 = vrot.slane %v6787, 2
      %v7291 = vsel %vm1389, %v7289, %v7290
      %v7292 = vrot.slane %v6740, 2
      %v7293 = vrot.slane %v6788, 2
      %v7294 = vsel %vm1389, %v7292, %v7293
      %v7295 = vrot.slane %v6741, 2
      %v7296 = vrot.slane %v6789, 2
      %v7297 = vsel %vm1389, %v7295, %v7296
      %v7298 = vrot.slane %v6742, 2
      %v7299 = vrot.slane %v6790, 2
      %v7300 = vsel %vm1389, %v7298, %v7299
      %v7301 = vrot.slane %v6743, 2
      %v7302 = vrot.slane %v6791, 2
      %v7303 = vsel %vm1389, %v7301, %v7302
      %v7304 = vrot.slane %v6744, 2
      %v7305 = vrot.slane %v6792, 2
      %v7306 = vsel %vm1389, %v7304, %v7305
      %v7307 = vrot.slane %v6745, 2
      %v7308 = vrot.slane %v6793, 2
      %v7309 = vsel %vm1389, %v7307, %v7308
      %v7310 = vrot.slane %v6746, 2
      %v7311 = vrot.slane %v6794, 2
      %v7312 = vsel %vm1389, %v7310, %v7311
      %v7313 = vrot.slane %v6747, 2
      %v7314 = vrot.slane %v6795, 2
      %v7315 = vsel %vm1389, %v7313, %v7314
      %v7316 = vrot.slane %v6748, 2
      %v7317 = vrot.slane %v6796, 2
      %v7318 = vsel %vm1389, %v7316, %v7317
      %v7319 = vrot.slane %v6749, 2
      %v7320 = vrot.slane %v6797, 2
      %v7321 = vsel %vm1389, %v7319, %v7320
      %v7322 = vrot.slane %v6750, 2
      %v7323 = vrot.slane %v6798, 2
      %v7324 = vsel %vm1389, %v7322, %v7323
      %v7325 = vrot.slane %v6751, 2
      %v7326 = vrot.slane %v6799, 2
      %v7327 = vsel %vm1389, %v7325, %v7326
      %7328 = vrot.lane.b32.xlu0 %v7282, 32
      %v7329 = vpop.permute.xlu0 %7328
      %7330 = vrot.lane.b32.xlu0 %v7285, 32
      %v7331 = vpop.permute.xlu0 %7330
      %7332 = vrot.lane.b32.xlu0 %v7288, 32
      %v7333 = vpop.permute.xlu0 %7332
      %7334 = vrot.lane.b32.xlu0 %v7291, 32
      %v7335 = vpop.permute.xlu0 %7334
      %7336 = vrot.lane.b32.xlu0 %v7294, 32
      %v7337 = vpop.permute.xlu0 %7336
      %7338 = vrot.lane.b32.xlu0 %v7297, 32
      %v7339 = vpop.permute.xlu0 %7338
      %7340 = vrot.lane.b32.xlu0 %v7300, 32
      %v7341 = vpop.permute.xlu0 %7340
      %7342 = vrot.lane.b32.xlu0 %v7303, 32
      %v7343 = vpop.permute.xlu0 %7342
      %7344 = vrot.lane.b32.xlu0 %v7306, 32
      %v7345 = vpop.permute.xlu0 %7344
      %7346 = vrot.lane.b32.xlu0 %v7309, 32
      %v7347 = vpop.permute.xlu0 %7346
      %7348 = vrot.lane.b32.xlu0 %v7312, 32
      %v7349 = vpop.permute.xlu0 %7348
      %7350 = vrot.lane.b32.xlu0 %v7315, 32
      %v7351 = vpop.permute.xlu0 %7350
      %7352 = vrot.lane.b32.xlu0 %v7318, 32
      %v7353 = vpop.permute.xlu0 %7352
      %7354 = vrot.lane.b32.xlu0 %v7321, 32
      %v7355 = vpop.permute.xlu0 %7354
      %7356 = vrot.lane.b32.xlu0 %v7324, 32
      %v7357 = vpop.permute.xlu0 %7356
      %7358 = vrot.lane.b32.xlu0 %v7327, 32
      %v7359 = vpop.permute.xlu0 %7358
      %v7361 = vsel %vm1470, %v6736, %v6993
      %v7363 = vsel %vm1470, %v6737, %v6995
      %v7365 = vsel %vm1470, %v6738, %v6997
      %v7367 = vsel %vm1470, %v6739, %v6999
      %v7369 = vsel %vm1470, %v6740, %v7001
      %v7371 = vsel %vm1470, %v6741, %v7003
      %v7373 = vsel %vm1470, %v6742, %v7005
      %v7375 = vsel %vm1470, %v6743, %v7007
      %v7377 = vsel %vm1470, %v6744, %v7009
      %v7379 = vsel %vm1470, %v6745, %v7011
      %v7381 = vsel %vm1470, %v6746, %v7013
      %v7383 = vsel %vm1470, %v6747, %v7015
      %v7385 = vsel %vm1470, %v6748, %v7017
      %v7387 = vsel %vm1470, %v6749, %v7019
      %v7389 = vsel %vm1470, %v6750, %v7021
      %v7391 = vsel %vm1470, %v6751, %v7023
      %v7393 = vsel %vm1503, %v7361, %v7073
      %v7395 = vsel %vm1503, %v7363, %v7075
      %v7397 = vsel %vm1503, %v7365, %v7077
      %v7399 = vsel %vm1503, %v7367, %v7079
      %v7401 = vsel %vm1503, %v7369, %v7081
      %v7403 = vsel %vm1503, %v7371, %v7083
      %v7405 = vsel %vm1503, %v7373, %v7085
      %v7407 = vsel %vm1503, %v7375, %v7087
      %v7409 = vsel %vm1503, %v7377, %v7089
      %v7411 = vsel %vm1503, %v7379, %v7091
      %v7413 = vsel %vm1503, %v7381, %v7093
      %v7415 = vsel %vm1503, %v7383, %v7095
      %v7417 = vsel %vm1503, %v7385, %v7097
      %v7419 = vsel %vm1503, %v7387, %v7099
      %v7421 = vsel %vm1503, %v7389, %v7101
      %v7423 = vsel %vm1503, %v7391, %v7103
      %v7425 = vsel %vm1536, %v7393, %v7249
      %v7427 = vsel %vm1536, %v7395, %v7251
      %v7429 = vsel %vm1536, %v7397, %v7253
      %v7431 = vsel %vm1536, %v7399, %v7255
      %v7433 = vsel %vm1536, %v7401, %v7257
      %v7435 = vsel %vm1536, %v7403, %v7259
      %v7437 = vsel %vm1536, %v7405, %v7261
      %v7439 = vsel %vm1536, %v7407, %v7263
      %v7441 = vsel %vm1536, %v7409, %v7265
      %v7443 = vsel %vm1536, %v7411, %v7267
      %v7445 = vsel %vm1536, %v7413, %v7269
      %v7447 = vsel %vm1536, %v7415, %v7271
      %v7449 = vsel %vm1536, %v7417, %v7273
      %v7451 = vsel %vm1536, %v7419, %v7275
      %v7453 = vsel %vm1536, %v7421, %v7277
      %v7455 = vsel %vm1536, %v7423, %v7279
      %v7457 = vsel %vm1569, %v7425, %v7329
      %v7459 = vsel %vm1569, %v7427, %v7331
      %v7461 = vsel %vm1569, %v7429, %v7333
      %v7463 = vsel %vm1569, %v7431, %v7335
      %v7465 = vsel %vm1569, %v7433, %v7337
      %v7467 = vsel %vm1569, %v7435, %v7339
      %v7469 = vsel %vm1569, %v7437, %v7341
      %v7471 = vsel %vm1569, %v7439, %v7343
      %v7473 = vsel %vm1569, %v7441, %v7345
      %v7475 = vsel %vm1569, %v7443, %v7347
      %v7477 = vsel %vm1569, %v7445, %v7349
      %v7479 = vsel %vm1569, %v7447, %v7351
      %v7481 = vsel %vm1569, %v7449, %v7353
      %v7483 = vsel %vm1569, %v7451, %v7355
      %v7485 = vsel %vm1569, %v7453, %v7357
      %v7487 = vsel %vm1569, %v7455, %v7359
      %v7488 = vld [vmem:[%s3] sm:$0xf]
      %v7489 = vld [vmem:[%s3 + $0x4] sm:$0xf]
      %v7490 = vld [vmem:[%s3 + $0x8] sm:$0xf]
      %v7491 = vld [vmem:[%s3 + $0xc] sm:$0xf]
      %v7492 = vld [vmem:[%s3 + $0x10] sm:$0xf]
      %v7498 = vunpack.c.l.b16 %v7488
      %v7499 = vunpack.c.l.b16 %v7489
      %v7500 = vunpack.c.l.b16 %v7490
      %v7501 = vunpack.c.l.b16 %v7491
      %v7502 = vunpack.c.l.b16 %v7492
      %v7503 = vpack.c.b16 %v7499, %v7498
      %v7504 = vpack.c.b16 %v7501, %v7500
      %v7505 = vpack.c.b16 %v7502, %v7502
      %v7508 = vsel %vm1622, %v7457, 0
      %v7510 = vsel %vm1622, %v7459, 0
      %v7512 = vsel %vm1622, %v7461, 0
      %v7514 = vsel %vm1622, %v7463, 0
      %v7516 = vsel %vm1622, %v7465, 0
      %v7518 = vsel %vm1622, %v7467, 0
      %v7520 = vsel %vm1622, %v7469, 0
      %v7522 = vsel %vm1622, %v7471, 0
      %v7524 = vsel %vm1622, %v7473, 0
      %v7526 = vsel %vm1622, %v7475, 0
      %v7528 = vsel %vm1622, %v7477, 0
      %v7530 = vsel %vm1622, %v7479, 0
      %v7532 = vsel %vm1622, %v7481, 0
      %v7534 = vsel %vm1622, %v7483, 0
      %v7536 = vsel %vm1622, %v7485, 0
      %v7538 = vsel %vm1622, %v7487, 0
      %v7541 = vsel %vm1655, %v7505, 0
      %7543 = vmatprep.subr.bf16.mxu0 0
      %7544 = vmatpush1.bf16.msra.mxu0 %v7503
      %7545 = vmatprep.subr.bf16.mxu0 0
      %7546 = vmatpush1.bf16.msra.mxu0 %v7504
      %7547 = vmatprep.subr.bf16.mxu0 0
      %7548 = vmatpush1.bf16.msra.mxu0 %v7541
      %7549 = vmatprep.subr.bf16.mxu0 0
      %7550 = vmatpush1.bf16.msra.mxu0 0
      %7551 = vmatprep.subr.bf16.mxu0 0
      %7552 = vmatpush1.bf16.msra.mxu0 0
      %7553 = vmatprep.subr.bf16.mxu0 0
      %7554 = vmatpush1.bf16.msra.mxu0 0
      %7555 = vmatprep.subr.bf16.mxu0 0
      %7556 = vmatpush1.bf16.msra.mxu0 0
      %7557 = vmatprep.subr.bf16.mxu0 0
      %7558 = vmatpush1.bf16.msra.mxu0 0
      %7559 = vmatprep.subr.bf16.mxu0 0
      %7560 = vmatpush1.bf16.msra.mxu0 0
      %7561 = vmatprep.subr.bf16.mxu0 0
      %7562 = vmatpush1.bf16.msra.mxu0 0
      %7563 = vmatprep.subr.bf16.mxu0 0
      %7564 = vmatpush1.bf16.msra.mxu0 0
      %7565 = vmatprep.subr.bf16.mxu0 0
      %7566 = vmatpush1.bf16.msra.mxu0 0
      %7567 = vmatprep.subr.bf16.mxu0 0
      %7568 = vmatpush1.bf16.msra.mxu0 0
      %7569 = vmatprep.subr.bf16.mxu0 0
      %7570 = vmatpush1.bf16.msra.mxu0 0
      %7571 = vmatprep.subr.bf16.mxu0 0
      %7572 = vmatpush1.bf16.msra.mxu0 0
      %7573 = vmatprep.subr.bf16.mxu0 0
      %7574 = vmatpush1.bf16.msra.mxu0 0
      %7575 = vmatprep.mubr.bf16.mxu0 0
      %7576 = vmatmul.mubr.bf16.gmra.mrb[0].mxu0 %v7508
      %v7577 = vpop.f32.mrb[0].mxu0
      %v7578 = vadd.f32 0.0, %v7577
      %v7579 = vpop.f32.mrb[0].mxu0
      %v7580 = vpop.f32.mrb[0].mxu0
      %v7581 = vadd.f32 0.0, %v7580
      %v7582 = vpop.f32.mrb[0].mxu0
      %7583 = vmatprep.mubr.bf16.mxu0 0
      %7584 = vmatmul.mubr.bf16.gmra.mrb[0].mxu0 %v7510
      %v7585 = vpop.f32.mrb[0].mxu0
      %v7586 = vadd.f32 0.0, %v7585
      %v7587 = vpop.f32.mrb[0].mxu0
      %v7588 = vpop.f32.mrb[0].mxu0
      %v7589 = vadd.f32 0.0, %v7588
      %v7590 = vpop.f32.mrb[0].mxu0
      %7591 = vmatprep.mubr.bf16.mxu0 0
      %7592 = vmatmul.mubr.bf16.gmra.mrb[0].mxu0 %v7512
      %v7593 = vpop.f32.mrb[0].mxu0
      %v7594 = vadd.f32 0.0, %v7593
      %v7595 = vpop.f32.mrb[0].mxu0
      %v7596 = vpop.f32.mrb[0].mxu0
      %v7597 = vadd.f32 0.0, %v7596
      %v7598 = vpop.f32.mrb[0].mxu0
      %7599 = vmatprep.mubr.bf16.mxu0 0
      %7600 = vmatmul.mubr.bf16.gmra.mrb[0].mxu0 %v7514
      %v7601 = vpop.f32.mrb[0].mxu0
      %v7602 = vadd.f32 0.0, %v7601
      %v7603 = vpop.f32.mrb[0].mxu0
      %v7604 = vpop.f32.mrb[0].mxu0
      %v7605 = vadd.f32 0.0, %v7604
      %v7606 = vpop.f32.mrb[0].mxu0
      %7607 = vmatprep.mubr.bf16.mxu0 0
      %7608 = vmatmul.mubr.bf16.gmra.mrb[0].mxu0 %v7516
      %v7609 = vpop.f32.mrb[0].mxu0
      %v7610 = vadd.f32 0.0, %v7609
      %v7611 = vpop.f32.mrb[0].mxu0
      %v7612 = vpop.f32.mrb[0].mxu0
      %v7613 = vadd.f32 0.0, %v7612
      %v7614 = vpop.f32.mrb[0].mxu0
      %7615 = vmatprep.mubr.bf16.mxu0 0
      %7616 = vmatmul.mubr.bf16.gmra.mrb[0].mxu0 %v7518
      %v7617 = vpop.f32.mrb[0].mxu0
      %v7618 = vadd.f32 0.0, %v7617
      %v7619 = vpop.f32.mrb[0].mxu0
      %v7620 = vpop.f32.mrb[0].mxu0
      %v7621 = vadd.f32 0.0, %v7620
      %v7622 = vpop.f32.mrb[0].mxu0
      %7623 = vmatprep.mubr.bf16.mxu0 0
      %7624 = vmatmul.mubr.bf16.gmra.mrb[0].mxu0 %v7520
      %v7625 = vpop.f32.mrb[0].mxu0
      %v7626 = vadd.f32 0.0, %v7625
      %v7627 = vpop.f32.mrb[0].mxu0
      %v7628 = vpop.f32.mrb[0].mxu0
      %v7629 = vadd.f32 0.0, %v7628
      %v7630 = vpop.f32.mrb[0].mxu0
      %7631 = vmatprep.mubr.bf16.mxu0 0
      %7632 = vmatmul.mubr.bf16.gmra.mrb[0].mxu0 %v7522
      %v7633 = vpop.f32.mrb[0].mxu0
      %v7634 = vadd.f32 0.0, %v7633
      %v7635 = vpop.f32.mrb[0].mxu0
      %v7636 = vpop.f32.mrb[0].mxu0
      %v7637 = vadd.f32 0.0, %v7636
      %v7638 = vpop.f32.mrb[0].mxu0
      %7639 = vmatprep.mubr.bf16.mxu0 0
      %7640 = vmatmul.mubr.bf16.gmra.mrb[0].mxu0 %v7524
      %v7641 = vpop.f32.mrb[0].mxu0
      %v7642 = vadd.f32 0.0, %v7641
      %v7643 = vpop.f32.mrb[0].mxu0
      %v7644 = vpop.f32.mrb[0].mxu0
      %v7645 = vadd.f32 0.0, %v7644
      %v7646 = vpop.f32.mrb[0].mxu0
      %7647 = vmatprep.mubr.bf16.mxu0 0
      %7648 = vmatmul.mubr.bf16.gmra.mrb[0].mxu0 %v7526
      %v7649 = vpop.f32.mrb[0].mxu0
      %v7650 = vadd.f32 0.0, %v7649
      %v7651 = vpop.f32.mrb[0].mxu0
      %v7652 = vpop.f32.mrb[0].mxu0
      %v7653 = vadd.f32 0.0, %v7652
      %v7654 = vpop.f32.mrb[0].mxu0
      %7655 = vmatprep.mubr.bf16.mxu0 0
      %7656 = vmatmul.mubr.bf16.gmra.mrb[0].mxu0 %v7528
      %v7657 = vpop.f32.mrb[0].mxu0
      %v7658 = vadd.f32 0.0, %v7657
      %v7659 = vpop.f32.mrb[0].mxu0
      %v7660 = vpop.f32.mrb[0].mxu0
      %v7661 = vadd.f32 0.0, %v7660
      %v7662 = vpop.f32.mrb[0].mxu0
      %7663 = vmatprep.mubr.bf16.mxu0 0
      %7664 = vmatmul.mubr.bf16.gmra.mrb[0].mxu0 %v7530
      %v7665 = vpop.f32.mrb[0].mxu0
      %v7666 = vadd.f32 0.0, %v7665
      %v7667 = vpop.f32.mrb[0].mxu0
      %v7668 = vpop.f32.mrb[0].mxu0
      %v7669 = vadd.f32 0.0, %v7668
      %v7670 = vpop.f32.mrb[0].mxu0
      %7671 = vmatprep.mubr.bf16.mxu0 0
      %7672 = vmatmul.mubr.bf16.gmra.mrb[0].mxu0 %v7532
      %v7673 = vpop.f32.mrb[0].mxu0
      %v7674 = vadd.f32 0.0, %v7673
      %v7675 = vpop.f32.mrb[0].mxu0
      %v7676 = vpop.f32.mrb[0].mxu0
      %v7677 = vadd.f32 0.0, %v7676
      %v7678 = vpop.f32.mrb[0].mxu0
      %7679 = vmatprep.mubr.bf16.mxu0 0
      %7680 = vmatmul.mubr.bf16.gmra.mrb[0].mxu0 %v7534
      %v7681 = vpop.f32.mrb[0].mxu0
      %v7682 = vadd.f32 0.0, %v7681
      %v7683 = vpop.f32.mrb[0].mxu0
      %v7684 = vpop.f32.mrb[0].mxu0
      %v7685 = vadd.f32 0.0, %v7684
      %v7686 = vpop.f32.mrb[0].mxu0
      %7687 = vmatprep.mubr.bf16.mxu0 0
      %7688 = vmatmul.mubr.bf16.gmra.mrb[0].mxu0 %v7536
      %v7689 = vpop.f32.mrb[0].mxu0
      %v7690 = vadd.f32 0.0, %v7689
      %v7691 = vpop.f32.mrb[0].mxu0
      %v7692 = vpop.f32.mrb[0].mxu0
      %v7693 = vadd.f32 0.0, %v7692
      %v7694 = vpop.f32.mrb[0].mxu0
      %7695 = vmatprep.mubr.bf16.mxu0 0
      %7696 = vmatmul.mubr.bf16.gmra.mrb[0].mxu0 %v7538
      %v7697 = vpop.f32.mrb[0].mxu0
      %v7698 = vadd.f32 0.0, %v7697
      %v7699 = vpop.f32.mrb[0].mxu0
      %v7700 = vpop.f32.mrb[0].mxu0
      %v7701 = vadd.f32 0.0, %v7700
      %v7702 = vpop.f32.mrb[0].mxu0
      %7703 = vdwg.mxu0
      %v7704 = vadd.f32 %v6622, %v7578
      %v7705 = vadd.f32 %v6622, %v7581
      %v7706 = vadd.f32 %v6622, %v7586
      %v7707 = vadd.f32 %v6622, %v7589
      %v7708 = vadd.f32 %v6622, %v7594
      %v7709 = vadd.f32 %v6622, %v7597
      %v7710 = vadd.f32 %v6622, %v7602
      %v7711 = vadd.f32 %v6622, %v7605
      %v7712 = vadd.f32 %v6622, %v7610
      %v7713 = vadd.f32 %v6622, %v7613
      %v7714 = vadd.f32 %v6622, %v7618
      %v7715 = vadd.f32 %v6622, %v7621
      %v7716 = vadd.f32 %v6622, %v7626
      %v7717 = vadd.f32 %v6622, %v7629
      %v7718 = vadd.f32 %v6622, %v7634
      %v7719 = vadd.f32 %v6622, %v7637
      %v7720 = vadd.f32 %v6622, %v7642
      %v7721 = vadd.f32 %v6622, %v7645
      %v7722 = vadd.f32 %v6622, %v7650
      %v7723 = vadd.f32 %v6622, %v7653
      %v7724 = vadd.f32 %v6622, %v7658
      %v7725 = vadd.f32 %v6622, %v7661
      %v7726 = vadd.f32 %v6622, %v7666
      %v7727 = vadd.f32 %v6622, %v7669
      %v7728 = vadd.f32 %v6622, %v7674
      %v7729 = vadd.f32 %v6622, %v7677
      %v7730 = vadd.f32 %v6622, %v7682
      %v7731 = vadd.f32 %v6622, %v7685
      %v7732 = vadd.f32 %v6622, %v7690
      %v7733 = vadd.f32 %v6622, %v7693
      %v7734 = vadd.f32 %v6622, %v7698
      %v7735 = vadd.f32 %v6622, %v7701
      %s7736 = scalar_lea.vmem [#allocation3], 12
      %v7737 = vld [vmem:[%s7736] sm:$0xf]
      %v7738 = vld [vmem:[%s7736 + $0x4] sm:$0xf]
      %v7739 = vld [vmem:[%s7736 + $0x8] sm:$0x3]
      %v7740 = vld [vmem:[%s7736 + $0xc] sm:$0xf]
      %v7741 = vld [vmem:[%s7736 + $0x10] sm:$0xf]
      %v7742 = vld [vmem:[%s7736 + $0x14] sm:$0x3]
      %v7743 = vld [vmem:[%s7736 + $0x18] sm:$0xf]
      %v7744 = vld [vmem:[%s7736 + $0x1c] sm:$0xf]
      %v7745 = vld [vmem:[%s7736 + $0x20] sm:$0x3]
      %v7746 = vld [vmem:[%s7736 + $0x24] sm:$0xf]
      %v7747 = vld [vmem:[%s7736 + $0x28] sm:$0xf]
      %v7748 = vld [vmem:[%s7736 + $0x2c] sm:$0x3]
      %v7749 = vld [vmem:[%s7736 + $0x30] sm:$0xf]
      %v7750 = vld [vmem:[%s7736 + $0x34] sm:$0xf]
      %v7751 = vld [vmem:[%s7736 + $0x38] sm:$0x3]
      %v7752 = vld [vmem:[%s7736 + $0x3c] sm:$0xf]
      %v7753 = vld [vmem:[%s7736 + $0x40] sm:$0xf]
      %v7754 = vld [vmem:[%s7736 + $0x44] sm:$0x3]
      %v7755 = vld [vmem:[%s7736 + $0x48] sm:$0xf]
      %v7756 = vld [vmem:[%s7736 + $0x4c] sm:$0xf]
      %v7757 = vld [vmem:[%s7736 + $0x50] sm:$0x3]
      %v7758 = vld [vmem:[%s7736 + $0x54] sm:$0xf]
      %v7759 = vld [vmem:[%s7736 + $0x58] sm:$0xf]
      %v7760 = vld [vmem:[%s7736 + $0x5c] sm:$0x3]
      %v7761 = vld [vmem:[%s7736 + $0x60] sm:$0xf]
      %v7762 = vld [vmem:[%s7736 + $0x64] sm:$0xf]
      %v7763 = vld [vmem:[%s7736 + $0x68] sm:$0x3]
      %v7764 = vld [vmem:[%s7736 + $0x6c] sm:$0xf]
      %v7765 = vld [vmem:[%s7736 + $0x70] sm:$0xf]
      %v7766 = vld [vmem:[%s7736 + $0x74] sm:$0x3]
      %v7767 = vld [vmem:[%s7736 + $0x78] sm:$0xf]
      %v7768 = vld [vmem:[%s7736 + $0x7c] sm:$0xf]
      %v7769 = vld [vmem:[%s7736 + $0x80] sm:$0x3]
      %v7770 = vld [vmem:[%s7736 + $0x84] sm:$0xf]
      %v7771 = vld [vmem:[%s7736 + $0x88] sm:$0xf]
      %v7772 = vld [vmem:[%s7736 + $0x8c] sm:$0x3]
      %v7773 = vld [vmem:[%s7736 + $0x90] sm:$0xf]
      %v7774 = vld [vmem:[%s7736 + $0x94] sm:$0xf]
      %v7775 = vld [vmem:[%s7736 + $0x98] sm:$0x3]
      %v7776 = vld [vmem:[%s7736 + $0x9c] sm:$0xf]
      %v7777 = vld [vmem:[%s7736 + $0xa0] sm:$0xf]
      %v7778 = vld [vmem:[%s7736 + $0xa4] sm:$0x3]
      %v7779 = vld [vmem:[%s7736 + $0xa8] sm:$0xf]
      %v7780 = vld [vmem:[%s7736 + $0xac] sm:$0xf]
      %v7781 = vld [vmem:[%s7736 + $0xb0] sm:$0x3]
      %v7782 = vld [vmem:[%s7736 + $0xb4] sm:$0xf]
      %v7783 = vld [vmem:[%s7736 + $0xb8] sm:$0xf]
      %v7784 = vld [vmem:[%s7736 + $0xbc] sm:$0x3]
      %v7817 = vunpack.c.l.b16 %v7737
      %v7818 = vunpack.c.l.b16 %v7738
      %v7819 = vunpack.c.l.b16 %v7740
      %v7820 = vunpack.c.l.b16 %v7741
      %v7821 = vunpack.c.l.b16 %v7743
      %v7822 = vunpack.c.l.b16 %v7744
      %v7823 = vunpack.c.l.b16 %v7746
      %v7824 = vunpack.c.l.b16 %v7747
      %v7825 = vunpack.c.l.b16 %v7749
      %v7826 = vunpack.c.l.b16 %v7750
      %v7827 = vunpack.c.l.b16 %v7752
      %v7828 = vunpack.c.l.b16 %v7753
      %v7829 = vunpack.c.l.b16 %v7755
      %v7830 = vunpack.c.l.b16 %v7756
      %v7831 = vunpack.c.l.b16 %v7758
      %v7832 = vunpack.c.l.b16 %v7759
      %v7833 = vunpack.c.l.b16 %v7761
      %v7834 = vunpack.c.l.b16 %v7762
      %v7835 = vunpack.c.l.b16 %v7764
      %v7836 = vunpack.c.l.b16 %v7765
      %v7837 = vunpack.c.l.b16 %v7767
      %v7838 = vunpack.c.l.b16 %v7768
      %v7839 = vunpack.c.l.b16 %v7770
      %v7840 = vunpack.c.l.b16 %v7771
      %v7841 = vunpack.c.l.b16 %v7773
      %v7842 = vunpack.c.l.b16 %v7774
      %v7843 = vunpack.c.l.b16 %v7776
      %v7844 = vunpack.c.l.b16 %v7777
      %v7845 = vunpack.c.l.b16 %v7779
      %v7846 = vunpack.c.l.b16 %v7780
      %v7847 = vunpack.c.l.b16 %v7782
      %v7848 = vunpack.c.l.b16 %v7783
      %v7849 = vpack.c.b16 %v7818, %v7817
      %v7850 = vpack.c.b16 %v7820, %v7819
      %v7851 = vpack.c.b16 %v7822, %v7821
      %v7852 = vpack.c.b16 %v7824, %v7823
      %v7853 = vpack.c.b16 %v7826, %v7825
      %v7854 = vpack.c.b16 %v7828, %v7827
      %v7855 = vpack.c.b16 %v7830, %v7829
      %v7856 = vpack.c.b16 %v7832, %v7831
      %v7857 = vpack.c.b16 %v7834, %v7833
      %v7858 = vpack.c.b16 %v7836, %v7835
      %v7859 = vpack.c.b16 %v7838, %v7837
      %v7860 = vpack.c.b16 %v7840, %v7839
      %v7861 = vpack.c.b16 %v7842, %v7841
      %v7862 = vpack.c.b16 %v7844, %v7843
      %v7863 = vpack.c.b16 %v7846, %v7845
      %v7864 = vpack.c.b16 %v7848, %v7847
      %v7881 = vunpack.c.l.b16 %v7739
      %v7882 = vunpack.c.l.b16 %v7742
      %v7883 = vunpack.c.l.b16 %v7745
      %v7884 = vunpack.c.l.b16 %v7748
      %v7885 = vunpack.c.l.b16 %v7751
      %v7886 = vunpack.c.l.b16 %v7754
      %v7887 = vunpack.c.l.b16 %v7757
      %v7888 = vunpack.c.l.b16 %v7760
      %v7889 = vunpack.c.l.b16 %v7763
      %v7890 = vunpack.c.l.b16 %v7766
      %v7891 = vunpack.c.l.b16 %v7769
      %v7892 = vunpack.c.l.b16 %v7772
      %v7893 = vunpack.c.l.b16 %v7775
      %v7894 = vunpack.c.l.b16 %v7778
      %v7895 = vunpack.c.l.b16 %v7781
      %v7896 = vunpack.c.l.b16 %v7784
      %v7897 = vpack.c.b16 %v7881, %v7881
      %v7898 = vpack.c.b16 %v7882, %v7882
      %v7899 = vpack.c.b16 %v7883, %v7883
      %v7900 = vpack.c.b16 %v7884, %v7884
      %v7901 = vpack.c.b16 %v7885, %v7885
      %v7902 = vpack.c.b16 %v7886, %v7886
      %v7903 = vpack.c.b16 %v7887, %v7887
      %v7904 = vpack.c.b16 %v7888, %v7888
      %v7905 = vpack.c.b16 %v7889, %v7889
      %v7906 = vpack.c.b16 %v7890, %v7890
      %v7907 = vpack.c.b16 %v7891, %v7891
      %v7908 = vpack.c.b16 %v7892, %v7892
      %v7909 = vpack.c.b16 %v7893, %v7893
      %v7910 = vpack.c.b16 %v7894, %v7894
      %v7911 = vpack.c.b16 %v7895, %v7895
      %v7912 = vpack.c.b16 %v7896, %v7896
      %v7914 = vshrl.u32 %v7849, 16
      %v7916 = vshll.u32 %v7849, 16
      %v7918 = vrot.slane %v7916, 1
      %v7919 = vor.u32 %v7914, %v7918
      %v7921 = vshll.u32 %v7897, 16
      %v7923 = vrot.slane %v7921, 1
      %v7924 = vsel %vm906, %v7919, %v7923
      %v7926 = vshrl.u32 %v7850, 16
      %v7928 = vshll.u32 %v7850, 16
      %v7930 = vrot.slane %v7928, 1
      %v7931 = vor.u32 %v7926, %v7930
      %v7933 = vshll.u32 %v7898, 16
      %v7935 = vrot.slane %v7933, 1
      %v7936 = vsel %vm906, %v7931, %v7935
      %v7938 = vshrl.u32 %v7851, 16
      %v7940 = vshll.u32 %v7851, 16
      %v7942 = vrot.slane %v7940, 1
      %v7943 = vor.u32 %v7938, %v7942
      %v7945 = vshll.u32 %v7899, 16
      %v7947 = vrot.slane %v7945, 1
      %v7948 = vsel %vm906, %v7943, %v7947
      %v7950 = vshrl.u32 %v7852, 16
      %v7952 = vshll.u32 %v7852, 16
      %v7954 = vrot.slane %v7952, 1
      %v7955 = vor.u32 %v7950, %v7954
      %v7957 = vshll.u32 %v7900, 16
      %v7959 = vrot.slane %v7957, 1
      %v7960 = vsel %vm906, %v7955, %v7959
      %v7962 = vshrl.u32 %v7853, 16
      %v7964 = vshll.u32 %v7853, 16
      %v7966 = vrot.slane %v7964, 1
      %v7967 = vor.u32 %v7962, %v7966
      %v7969 = vshll.u32 %v7901, 16
      %v7971 = vrot.slane %v7969, 1
      %v7972 = vsel %vm906, %v7967, %v7971
      %v7974 = vshrl.u32 %v7854, 16
      %v7976 = vshll.u32 %v7854, 16
      %v7978 = vrot.slane %v7976, 1
      %v7979 = vor.u32 %v7974, %v7978
      %v7981 = vshll.u32 %v7902, 16
      %v7983 = vrot.slane %v7981, 1
      %v7984 = vsel %vm906, %v7979, %v7983
      %v7986 = vshrl.u32 %v7855, 16
      %v7988 = vshll.u32 %v7855, 16
      %v7990 = vrot.slane %v7988, 1
      %v7991 = vor.u32 %v7986, %v7990
      %v7993 = vshll.u32 %v7903, 16
      %v7995 = vrot.slane %v7993, 1
      %v7996 = vsel %vm906, %v7991, %v7995
      %v7998 = vshrl.u32 %v7856, 16
      %v8000 = vshll.u32 %v7856, 16
      %v8002 = vrot.slane %v8000, 1
      %v8003 = vor.u32 %v7998, %v8002
      %v8005 = vshll.u32 %v7904, 16
      %v8007 = vrot.slane %v8005, 1
      %v8008 = vsel %vm906, %v8003, %v8007
      %v8010 = vshrl.u32 %v7857, 16
      %v8012 = vshll.u32 %v7857, 16
      %v8014 = vrot.slane %v8012, 1
      %v8015 = vor.u32 %v8010, %v8014
      %v8017 = vshll.u32 %v7905, 16
      %v8019 = vrot.slane %v8017, 1
      %v8020 = vsel %vm906, %v8015, %v8019
      %v8022 = vshrl.u32 %v7858, 16
      %v8024 = vshll.u32 %v7858, 16
      %v8026 = vrot.slane %v8024, 1
      %v8027 = vor.u32 %v8022, %v8026
      %v8029 = vshll.u32 %v7906, 16
      %v8031 = vrot.slane %v8029, 1
      %v8032 = vsel %vm906, %v8027, %v8031
      %v8034 = vshrl.u32 %v7859, 16
      %v8036 = vshll.u32 %v7859, 16
      %v8038 = vrot.slane %v8036, 1
      %v8039 = vor.u32 %v8034, %v8038
      %v8041 = vshll.u32 %v7907, 16
      %v8043 = vrot.slane %v8041, 1
      %v8044 = vsel %vm906, %v8039, %v8043
      %v8046 = vshrl.u32 %v7860, 16
      %v8048 = vshll.u32 %v7860, 16
      %v8050 = vrot.slane %v8048, 1
      %v8051 = vor.u32 %v8046, %v8050
      %v8053 = vshll.u32 %v7908, 16
      %v8055 = vrot.slane %v8053, 1
      %v8056 = vsel %vm906, %v8051, %v8055
      %v8058 = vshrl.u32 %v7861, 16
      %v8060 = vshll.u32 %v7861, 16
      %v8062 = vrot.slane %v8060, 1
      %v8063 = vor.u32 %v8058, %v8062
      %v8065 = vshll.u32 %v7909, 16
      %v8067 = vrot.slane %v8065, 1
      %v8068 = vsel %vm906, %v8063, %v8067
      %v8070 = vshrl.u32 %v7862, 16
      %v8072 = vshll.u32 %v7862, 16
      %v8074 = vrot.slane %v8072, 1
      %v8075 = vor.u32 %v8070, %v8074
      %v8077 = vshll.u32 %v7910, 16
      %v8079 = vrot.slane %v8077, 1
      %v8080 = vsel %vm906, %v8075, %v8079
      %v8082 = vshrl.u32 %v7863, 16
      %v8084 = vshll.u32 %v7863, 16
      %v8086 = vrot.slane %v8084, 1
      %v8087 = vor.u32 %v8082, %v8086
      %v8089 = vshll.u32 %v7911, 16
      %v8091 = vrot.slane %v8089, 1
      %v8092 = vsel %vm906, %v8087, %v8091
      %v8094 = vshrl.u32 %v7864, 16
      %v8096 = vshll.u32 %v7864, 16
      %v8098 = vrot.slane %v8096, 1
      %v8099 = vor.u32 %v8094, %v8098
      %v8101 = vshll.u32 %v7912, 16
      %v8103 = vrot.slane %v8101, 1
      %v8104 = vsel %vm906, %v8099, %v8103
      %8105 = vrot.lane.b32.xlu0 %v7924, 8
      %v8106 = vpop.permute.xlu0 %8105
      %8107 = vrot.lane.b32.xlu0 %v7936, 8
      %v8108 = vpop.permute.xlu0 %8107
      %8109 = vrot.lane.b32.xlu0 %v7948, 8
      %v8110 = vpop.permute.xlu0 %8109
      %8111 = vrot.lane.b32.xlu0 %v7960, 8
      %v8112 = vpop.permute.xlu0 %8111
      %8113 = vrot.lane.b32.xlu0 %v7972, 8
      %v8114 = vpop.permute.xlu0 %8113
      %8115 = vrot.lane.b32.xlu0 %v7984, 8
      %v8116 = vpop.permute.xlu0 %8115
      %8117 = vrot.lane.b32.xlu0 %v7996, 8
      %v8118 = vpop.permute.xlu0 %8117
      %8119 = vrot.lane.b32.xlu0 %v8008, 8
      %v8120 = vpop.permute.xlu0 %8119
      %8121 = vrot.lane.b32.xlu0 %v8020, 8
      %v8122 = vpop.permute.xlu0 %8121
      %8123 = vrot.lane.b32.xlu0 %v8032, 8
      %v8124 = vpop.permute.xlu0 %8123
      %8125 = vrot.lane.b32.xlu0 %v8044, 8
      %v8126 = vpop.permute.xlu0 %8125
      %8127 = vrot.lane.b32.xlu0 %v8056, 8
      %v8128 = vpop.permute.xlu0 %8127
      %8129 = vrot.lane.b32.xlu0 %v8068, 8
      %v8130 = vpop.permute.xlu0 %8129
      %8131 = vrot.lane.b32.xlu0 %v8080, 8
      %v8132 = vpop.permute.xlu0 %8131
      %8133 = vrot.lane.b32.xlu0 %v8092, 8
      %v8134 = vpop.permute.xlu0 %8133
      %8135 = vrot.lane.b32.xlu0 %v8104, 8
      %v8136 = vpop.permute.xlu0 %8135
      %v8137 = vrot.slane %v7849, 1
      %v8138 = vrot.slane %v7897, 1
      %v8139 = vsel %vm1131, %v8137, %v8138
      %v8140 = vrot.slane %v7850, 1
      %v8141 = vrot.slane %v7898, 1
      %v8142 = vsel %vm1131, %v8140, %v8141
      %v8143 = vrot.slane %v7851, 1
      %v8144 = vrot.slane %v7899, 1
      %v8145 = vsel %vm1131, %v8143, %v8144
      %v8146 = vrot.slane %v7852, 1
      %v8147 = vrot.slane %v7900, 1
      %v8148 = vsel %vm1131, %v8146, %v8147
      %v8149 = vrot.slane %v7853, 1
      %v8150 = vrot.slane %v7901, 1
      %v8151 = vsel %vm1131, %v8149, %v8150
      %v8152 = vrot.slane %v7854, 1
      %v8153 = vrot.slane %v7902, 1
      %v8154 = vsel %vm1131, %v8152, %v8153
      %v8155 = vrot.slane %v7855, 1
      %v8156 = vrot.slane %v7903, 1
      %v8157 = vsel %vm1131, %v8155, %v8156
      %v8158 = vrot.slane %v7856, 1
      %v8159 = vrot.slane %v7904, 1
      %v8160 = vsel %vm1131, %v8158, %v8159
      %v8161 = vrot.slane %v7857, 1
      %v8162 = vrot.slane %v7905, 1
      %v8163 = vsel %vm1131, %v8161, %v8162
      %v8164 = vrot.slane %v7858, 1
      %v8165 = vrot.slane %v7906, 1
      %v8166 = vsel %vm1131, %v8164, %v8165
      %v8167 = vrot.slane %v7859, 1
      %v8168 = vrot.slane %v7907, 1
      %v8169 = vsel %vm1131, %v8167, %v8168
      %v8170 = vrot.slane %v7860, 1
      %v8171 = vrot.slane %v7908, 1
      %v8172 = vsel %vm1131, %v8170, %v8171
      %v8173 = vrot.slane %v7861, 1
      %v8174 = vrot.slane %v7909, 1
      %v8175 = vsel %vm1131, %v8173, %v8174
      %v8176 = vrot.slane %v7862, 1
      %v8177 = vrot.slane %v7910, 1
      %v8178 = vsel %vm1131, %v8176, %v8177
      %v8179 = vrot.slane %v7863, 1
      %v8180 = vrot.slane %v7911, 1
      %v8181 = vsel %vm1131, %v8179, %v8180
      %v8182 = vrot.slane %v7864, 1
      %v8183 = vrot.slane %v7912, 1
      %v8184 = vsel %vm1131, %v8182, %v8183
      %8185 = vrot.lane.b32.xlu0 %v8139, 16
      %v8186 = vpop.permute.xlu0 %8185
      %8187 = vrot.lane.b32.xlu0 %v8142, 16
      %v8188 = vpop.permute.xlu0 %8187
      %8189 = vrot.lane.b32.xlu0 %v8145, 16
      %v8190 = vpop.permute.xlu0 %8189
      %8191 = vrot.lane.b32.xlu0 %v8148, 16
      %v8192 = vpop.permute.xlu0 %8191
      %8193 = vrot.lane.b32.xlu0 %v8151, 16
      %v8194 = vpop.permute.xlu0 %8193
      %8195 = vrot.lane.b32.xlu0 %v8154, 16
      %v8196 = vpop.permute.xlu0 %8195
      %8197 = vrot.lane.b32.xlu0 %v8157, 16
      %v8198 = vpop.permute.xlu0 %8197
      %8199 = vrot.lane.b32.xlu0 %v8160, 16
      %v8200 = vpop.permute.xlu0 %8199
      %8201 = vrot.lane.b32.xlu0 %v8163, 16
      %v8202 = vpop.permute.xlu0 %8201
      %8203 = vrot.lane.b32.xlu0 %v8166, 16
      %v8204 = vpop.permute.xlu0 %8203
      %8205 = vrot.lane.b32.xlu0 %v8169, 16
      %v8206 = vpop.permute.xlu0 %8205
      %8207 = vrot.lane.b32.xlu0 %v8172, 16
      %v8208 = vpop.permute.xlu0 %8207
      %8209 = vrot.lane.b32.xlu0 %v8175, 16
      %v8210 = vpop.permute.xlu0 %8209
      %8211 = vrot.lane.b32.xlu0 %v8178, 16
      %v8212 = vpop.permute.xlu0 %8211
      %8213 = vrot.lane.b32.xlu0 %v8181, 16
      %v8214 = vpop.permute.xlu0 %8213
      %8215 = vrot.lane.b32.xlu0 %v8184, 16
      %v8216 = vpop.permute.xlu0 %8215
      %v8217 = vrot.slane %v7914, 1
      %v8218 = vrot.slane %v7916, 2
      %v8219 = vor.u32 %v8217, %v8218
      %v8220 = vshrl.u32 %v7897, 16
      %v8222 = vrot.slane %v8220, 1
      %v8223 = vrot.slane %v7921, 2
      %v8224 = vor.u32 %v8222, %v8223
      %v8225 = vsel %vm1212, %v8219, %v8224
      %v8226 = vrot.slane %v7926, 1
      %v8227 = vrot.slane %v7928, 2
      %v8228 = vor.u32 %v8226, %v8227
      %v8229 = vshrl.u32 %v7898, 16
      %v8231 = vrot.slane %v8229, 1
      %v8232 = vrot.slane %v7933, 2
      %v8233 = vor.u32 %v8231, %v8232
      %v8234 = vsel %vm1212, %v8228, %v8233
      %v8235 = vrot.slane %v7938, 1
      %v8236 = vrot.slane %v7940, 2
      %v8237 = vor.u32 %v8235, %v8236
      %v8238 = vshrl.u32 %v7899, 16
      %v8240 = vrot.slane %v8238, 1
      %v8241 = vrot.slane %v7945, 2
      %v8242 = vor.u32 %v8240, %v8241
      %v8243 = vsel %vm1212, %v8237, %v8242
      %v8244 = vrot.slane %v7950, 1
      %v8245 = vrot.slane %v7952, 2
      %v8246 = vor.u32 %v8244, %v8245
      %v8247 = vshrl.u32 %v7900, 16
      %v8249 = vrot.slane %v8247, 1
      %v8250 = vrot.slane %v7957, 2
      %v8251 = vor.u32 %v8249, %v8250
      %v8252 = vsel %vm1212, %v8246, %v8251
      %v8253 = vrot.slane %v7962, 1
      %v8254 = vrot.slane %v7964, 2
      %v8255 = vor.u32 %v8253, %v8254
      %v8256 = vshrl.u32 %v7901, 16
      %v8258 = vrot.slane %v8256, 1
      %v8259 = vrot.slane %v7969, 2
      %v8260 = vor.u32 %v8258, %v8259
      %v8261 = vsel %vm1212, %v8255, %v8260
      %v8262 = vrot.slane %v7974, 1
      %v8263 = vrot.slane %v7976, 2
      %v8264 = vor.u32 %v8262, %v8263
      %v8265 = vshrl.u32 %v7902, 16
      %v8267 = vrot.slane %v8265, 1
      %v8268 = vrot.slane %v7981, 2
      %v8269 = vor.u32 %v8267, %v8268
      %v8270 = vsel %vm1212, %v8264, %v8269
      %v8271 = vrot.slane %v7986, 1
      %v8272 = vrot.slane %v7988, 2
      %v8273 = vor.u32 %v8271, %v8272
      %v8274 = vshrl.u32 %v7903, 16
      %v8276 = vrot.slane %v8274, 1
      %v8277 = vrot.slane %v7993, 2
      %v8278 = vor.u32 %v8276, %v8277
      %v8279 = vsel %vm1212, %v8273, %v8278
      %v8280 = vrot.slane %v7998, 1
      %v8281 = vrot.slane %v8000, 2
      %v8282 = vor.u32 %v8280, %v8281
      %v8283 = vshrl.u32 %v7904, 16
      %v8285 = vrot.slane %v8283, 1
      %v8286 = vrot.slane %v8005, 2
      %v8287 = vor.u32 %v8285, %v8286
      %v8288 = vsel %vm1212, %v8282, %v8287
      %v8289 = vrot.slane %v8010, 1
      %v8290 = vrot.slane %v8012, 2
      %v8291 = vor.u32 %v8289, %v8290
      %v8292 = vshrl.u32 %v7905, 16
      %v8294 = vrot.slane %v8292, 1
      %v8295 = vrot.slane %v8017, 2
      %v8296 = vor.u32 %v8294, %v8295
      %v8297 = vsel %vm1212, %v8291, %v8296
      %v8298 = vrot.slane %v8022, 1
      %v8299 = vrot.slane %v8024, 2
      %v8300 = vor.u32 %v8298, %v8299
      %v8301 = vshrl.u32 %v7906, 16
      %v8303 = vrot.slane %v8301, 1
      %v8304 = vrot.slane %v8029, 2
      %v8305 = vor.u32 %v8303, %v8304
      %v8306 = vsel %vm1212, %v8300, %v8305
      %v8307 = vrot.slane %v8034, 1
      %v8308 = vrot.slane %v8036, 2
      %v8309 = vor.u32 %v8307, %v8308
      %v8310 = vshrl.u32 %v7907, 16
      %v8312 = vrot.slane %v8310, 1
      %v8313 = vrot.slane %v8041, 2
      %v8314 = vor.u32 %v8312, %v8313
      %v8315 = vsel %vm1212, %v8309, %v8314
      %v8316 = vrot.slane %v8046, 1
      %v8317 = vrot.slane %v8048, 2
      %v8318 = vor.u32 %v8316, %v8317
      %v8319 = vshrl.u32 %v7908, 16
      %v8321 = vrot.slane %v8319, 1
      %v8322 = vrot.slane %v8053, 2
      %v8323 = vor.u32 %v8321, %v8322
      %v8324 = vsel %vm1212, %v8318, %v8323
      %v8325 = vrot.slane %v8058, 1
      %v8326 = vrot.slane %v8060, 2
      %v8327 = vor.u32 %v8325, %v8326
      %v8328 = vshrl.u32 %v7909, 16
      %v8330 = vrot.slane %v8328, 1
      %v8331 = vrot.slane %v8065, 2
      %v8332 = vor.u32 %v8330, %v8331
      %v8333 = vsel %vm1212, %v8327, %v8332
      %v8334 = vrot.slane %v8070, 1
      %v8335 = vrot.slane %v8072, 2
      %v8336 = vor.u32 %v8334, %v8335
      %v8337 = vshrl.u32 %v7910, 16
      %v8339 = vrot.slane %v8337, 1
      %v8340 = vrot.slane %v8077, 2
      %v8341 = vor.u32 %v8339, %v8340
      %v8342 = vsel %vm1212, %v8336, %v8341
      %v8343 = vrot.slane %v8082, 1
      %v8344 = vrot.slane %v8084, 2
      %v8345 = vor.u32 %v8343, %v8344
      %v8346 = vshrl.u32 %v7911, 16
      %v8348 = vrot.slane %v8346, 1
      %v8349 = vrot.slane %v8089, 2
      %v8350 = vor.u32 %v8348, %v8349
      %v8351 = vsel %vm1212, %v8345, %v8350
      %v8352 = vrot.slane %v8094, 1
      %v8353 = vrot.slane %v8096, 2
      %v8354 = vor.u32 %v8352, %v8353
      %v8355 = vshrl.u32 %v7912, 16
      %v8357 = vrot.slane %v8355, 1
      %v8358 = vrot.slane %v8101, 2
      %v8359 = vor.u32 %v8357, %v8358
      %v8360 = vsel %vm1212, %v8354, %v8359
      %8361 = vrot.lane.b32.xlu0 %v8225, 24
      %v8362 = vpop.permute.xlu0 %8361
      %8363 = vrot.lane.b32.xlu0 %v8234, 24
      %v8364 = vpop.permute.xlu0 %8363
      %8365 = vrot.lane.b32.xlu0 %v8243, 24
      %v8366 = vpop.permute.xlu0 %8365
      %8367 = vrot.lane.b32.xlu0 %v8252, 24
      %v8368 = vpop.permute.xlu0 %8367
      %8369 = vrot.lane.b32.xlu0 %v8261, 24
      %v8370 = vpop.permute.xlu0 %8369
      %8371 = vrot.lane.b32.xlu0 %v8270, 24
      %v8372 = vpop.permute.xlu0 %8371
      %8373 = vrot.lane.b32.xlu0 %v8279, 24
      %v8374 = vpop.permute.xlu0 %8373
      %8375 = vrot.lane.b32.xlu0 %v8288, 24
      %v8376 = vpop.permute.xlu0 %8375
      %8377 = vrot.lane.b32.xlu0 %v8297, 24
      %v8378 = vpop.permute.xlu0 %8377
      %8379 = vrot.lane.b32.xlu0 %v8306, 24
      %v8380 = vpop.permute.xlu0 %8379
      %8381 = vrot.lane.b32.xlu0 %v8315, 24
      %v8382 = vpop.permute.xlu0 %8381
      %8383 = vrot.lane.b32.xlu0 %v8324, 24
      %v8384 = vpop.permute.xlu0 %8383
      %8385 = vrot.lane.b32.xlu0 %v8333, 24
      %v8386 = vpop.permute.xlu0 %8385
      %8387 = vrot.lane.b32.xlu0 %v8342, 24
      %v8388 = vpop.permute.xlu0 %8387
      %8389 = vrot.lane.b32.xlu0 %v8351, 24
      %v8390 = vpop.permute.xlu0 %8389
      %8391 = vrot.lane.b32.xlu0 %v8360, 24
      %v8392 = vpop.permute.xlu0 %8391
      %v8393 = vrot.slane %v7849, 2
      %v8394 = vrot.slane %v7897, 2
      %v8395 = vsel %vm1389, %v8393, %v8394
      %v8396 = vrot.slane %v7850, 2
      %v8397 = vrot.slane %v7898, 2
      %v8398 = vsel %vm1389, %v8396, %v8397
      %v8399 = vrot.slane %v7851, 2
      %v8400 = vrot.slane %v7899, 2
      %v8401 = vsel %vm1389, %v8399, %v8400
      %v8402 = vrot.slane %v7852, 2
      %v8403 = vrot.slane %v7900, 2
      %v8404 = vsel %vm1389, %v8402, %v8403
      %v8405 = vrot.slane %v7853, 2
      %v8406 = vrot.slane %v7901, 2
      %v8407 = vsel %vm1389, %v8405, %v8406
      %v8408 = vrot.slane %v7854, 2
      %v8409 = vrot.slane %v7902, 2
      %v8410 = vsel %vm1389, %v8408, %v8409
      %v8411 = vrot.slane %v7855, 2
      %v8412 = vrot.slane %v7903, 2
      %v8413 = vsel %vm1389, %v8411, %v8412
      %v8414 = vrot.slane %v7856, 2
      %v8415 = vrot.slane %v7904, 2
      %v8416 = vsel %vm1389, %v8414, %v8415
      %v8417 = vrot.slane %v7857, 2
      %v8418 = vrot.slane %v7905, 2
      %v8419 = vsel %vm1389, %v8417, %v8418
      %v8420 = vrot.slane %v7858, 2
      %v8421 = vrot.slane %v7906, 2
      %v8422 = vsel %vm1389, %v8420, %v8421
      %v8423 = vrot.slane %v7859, 2
      %v8424 = vrot.slane %v7907, 2
      %v8425 = vsel %vm1389, %v8423, %v8424
      %v8426 = vrot.slane %v7860, 2
      %v8427 = vrot.slane %v7908, 2
      %v8428 = vsel %vm1389, %v8426, %v8427
      %v8429 = vrot.slane %v7861, 2
      %v8430 = vrot.slane %v7909, 2
      %v8431 = vsel %vm1389, %v8429, %v8430
      %v8432 = vrot.slane %v7862, 2
      %v8433 = vrot.slane %v7910, 2
      %v8434 = vsel %vm1389, %v8432, %v8433
      %v8435 = vrot.slane %v7863, 2
      %v8436 = vrot.slane %v7911, 2
      %v8437 = vsel %vm1389, %v8435, %v8436
      %v8438 = vrot.slane %v7864, 2
      %v8439 = vrot.slane %v7912, 2
      %v8440 = vsel %vm1389, %v8438, %v8439
      %8441 = vrot.lane.b32.xlu0 %v8395, 32
      %v8442 = vpop.permute.xlu0 %8441
      %8443 = vrot.lane.b32.xlu0 %v8398, 32
      %v8444 = vpop.permute.xlu0 %8443
      %8445 = vrot.lane.b32.xlu0 %v8401, 32
      %v8446 = vpop.permute.xlu0 %8445
      %8447 = vrot.lane.b32.xlu0 %v8404, 32
      %v8448 = vpop.permute.xlu0 %8447
      %8449 = vrot.lane.b32.xlu0 %v8407, 32
      %v8450 = vpop.permute.xlu0 %8449
      %8451 = vrot.lane.b32.xlu0 %v8410, 32
      %v8452 = vpop.permute.xlu0 %8451
      %8453 = vrot.lane.b32.xlu0 %v8413, 32
      %v8454 = vpop.permute.xlu0 %8453
      %8455 = vrot.lane.b32.xlu0 %v8416, 32
      %v8456 = vpop.permute.xlu0 %8455
      %8457 = vrot.lane.b32.xlu0 %v8419, 32
      %v8458 = vpop.permute.xlu0 %8457
      %8459 = vrot.lane.b32.xlu0 %v8422, 32
      %v8460 = vpop.permute.xlu0 %8459
      %8461 = vrot.lane.b32.xlu0 %v8425, 32
      %v8462 = vpop.permute.xlu0 %8461
      %8463 = vrot.lane.b32.xlu0 %v8428, 32
      %v8464 = vpop.permute.xlu0 %8463
      %8465 = vrot.lane.b32.xlu0 %v8431, 32
      %v8466 = vpop.permute.xlu0 %8465
      %8467 = vrot.lane.b32.xlu0 %v8434, 32
      %v8468 = vpop.permute.xlu0 %8467
      %8469 = vrot.lane.b32.xlu0 %v8437, 32
      %v8470 = vpop.permute.xlu0 %8469
      %8471 = vrot.lane.b32.xlu0 %v8440, 32
      %v8472 = vpop.permute.xlu0 %8471
      %v8474 = vsel %vm1470, %v7849, %v8106
      %v8476 = vsel %vm1470, %v7850, %v8108
      %v8478 = vsel %vm1470, %v7851, %v8110
      %v8480 = vsel %vm1470, %v7852, %v8112
      %v8482 = vsel %vm1470, %v7853, %v8114
      %v8484 = vsel %vm1470, %v7854, %v8116
      %v8486 = vsel %vm1470, %v7855, %v8118
      %v8488 = vsel %vm1470, %v7856, %v8120
      %v8490 = vsel %vm1470, %v7857, %v8122
      %v8492 = vsel %vm1470, %v7858, %v8124
      %v8494 = vsel %vm1470, %v7859, %v8126
      %v8496 = vsel %vm1470, %v7860, %v8128
      %v8498 = vsel %vm1470, %v7861, %v8130
      %v8500 = vsel %vm1470, %v7862, %v8132
      %v8502 = vsel %vm1470, %v7863, %v8134
      %v8504 = vsel %vm1470, %v7864, %v8136
      %v8506 = vsel %vm1503, %v8474, %v8186
      %v8508 = vsel %vm1503, %v8476, %v8188
      %v8510 = vsel %vm1503, %v8478, %v8190
      %v8512 = vsel %vm1503, %v8480, %v8192
      %v8514 = vsel %vm1503, %v8482, %v8194
      %v8516 = vsel %vm1503, %v8484, %v8196
      %v8518 = vsel %vm1503, %v8486, %v8198
      %v8520 = vsel %vm1503, %v8488, %v8200
      %v8522 = vsel %vm1503, %v8490, %v8202
      %v8524 = vsel %vm1503, %v8492, %v8204
      %v8526 = vsel %vm1503, %v8494, %v8206
      %v8528 = vsel %vm1503, %v8496, %v8208
      %v8530 = vsel %vm1503, %v8498, %v8210
      %v8532 = vsel %vm1503, %v8500, %v8212
      %v8534 = vsel %vm1503, %v8502, %v8214
      %v8536 = vsel %vm1503, %v8504, %v8216
      %v8538 = vsel %vm1536, %v8506, %v8362
      %v8540 = vsel %vm1536, %v8508, %v8364
      %v8542 = vsel %vm1536, %v8510, %v8366
      %v8544 = vsel %vm1536, %v8512, %v8368
      %v8546 = vsel %vm1536, %v8514, %v8370
      %v8548 = vsel %vm1536, %v8516, %v8372
      %v8550 = vsel %vm1536, %v8518, %v8374
      %v8552 = vsel %vm1536, %v8520, %v8376
      %v8554 = vsel %vm1536, %v8522, %v8378
      %v8556 = vsel %vm1536, %v8524, %v8380
      %v8558 = vsel %vm1536, %v8526, %v8382
      %v8560 = vsel %vm1536, %v8528, %v8384
      %v8562 = vsel %vm1536, %v8530, %v8386
      %v8564 = vsel %vm1536, %v8532, %v8388
      %v8566 = vsel %vm1536, %v8534, %v8390
      %v8568 = vsel %vm1536, %v8536, %v8392
      %v8570 = vsel %vm1569, %v8538, %v8442
      %v8572 = vsel %vm1569, %v8540, %v8444
      %v8574 = vsel %vm1569, %v8542, %v8446
      %v8576 = vsel %vm1569, %v8544, %v8448
      %v8578 = vsel %vm1569, %v8546, %v8450
      %v8580 = vsel %vm1569, %v8548, %v8452
      %v8582 = vsel %vm1569, %v8550, %v8454
      %v8584 = vsel %vm1569, %v8552, %v8456
      %v8586 = vsel %vm1569, %v8554, %v8458
      %v8588 = vsel %vm1569, %v8556, %v8460
      %v8590 = vsel %vm1569, %v8558, %v8462
      %v8592 = vsel %vm1569, %v8560, %v8464
      %v8594 = vsel %vm1569, %v8562, %v8466
      %v8596 = vsel %vm1569, %v8564, %v8468
      %v8598 = vsel %vm1569, %v8566, %v8470
      %v8600 = vsel %vm1569, %v8568, %v8472
      %s8601 = scalar_lea.vmem %s3, 20
      %v8602 = vld [vmem:[%s8601] sm:$0xf]
      %v8603 = vld [vmem:[%s8601 + $0x4] sm:$0xf]
      %v8604 = vld [vmem:[%s8601 + $0x8] sm:$0xf]
      %v8605 = vld [vmem:[%s8601 + $0xc] sm:$0xf]
      %v8606 = vld [vmem:[%s8601 + $0x10] sm:$0xf]
      %v8612 = vunpack.c.l.b16 %v8602
      %v8613 = vunpack.c.l.b16 %v8603
      %v8614 = vunpack.c.l.b16 %v8604
      %v8615 = vunpack.c.l.b16 %v8605
      %v8616 = vunpack.c.l.b16 %v8606
      %v8617 = vpack.c.b16 %v8613, %v8612
      %v8618 = vpack.c.b16 %v8615, %v8614
      %v8619 = vpack.c.b16 %v8616, %v8616
      %v8622 = vsel %vm1622, %v8570, 0
      %v8624 = vsel %vm1622, %v8572, 0
      %v8626 = vsel %vm1622, %v8574, 0
      %v8628 = vsel %vm1622, %v8576, 0
      %v8630 = vsel %vm1622, %v8578, 0
      %v8632 = vsel %vm1622, %v8580, 0
      %v8634 = vsel %vm1622, %v8582, 0
      %v8636 = vsel %vm1622, %v8584, 0
      %v8638 = vsel %vm1622, %v8586, 0
      %v8640 = vsel %vm1622, %v8588, 0
      %v8642 = vsel %vm1622, %v8590, 0
      %v8644 = vsel %vm1622, %v8592, 0
      %v8646 = vsel %vm1622, %v8594, 0
      %v8648 = vsel %vm1622, %v8596, 0
      %v8650 = vsel %vm1622, %v8598, 0
      %v8652 = vsel %vm1622, %v8600, 0
      %v8655 = vsel %vm1655, %v8619, 0
      %8657 = vmatprep.subr.bf16.mxu0 0
      %8658 = vmatpush1.bf16.msra.mxu0 %v8617
      %8659 = vmatprep.subr.bf16.mxu0 0
      %8660 = vmatpush1.bf16.msra.mxu0 %v8618
      %8661 = vmatprep.subr.bf16.mxu0 0
      %8662 = vmatpush1.bf16.msra.mxu0 %v8655
      %8663 = vmatprep.subr.bf16.mxu0 0
      %8664 = vmatpush1.bf16.msra.mxu0 0
      %8665 = vmatprep.subr.bf16.mxu0 0
      %8666 = vmatpush1.bf16.msra.mxu0 0
      %8667 = vmatprep.subr.bf16.mxu0 0
      %8668 = vmatpush1.bf16.msra.mxu0 0
      %8669 = vmatprep.subr.bf16.mxu0 0
      %8670 = vmatpush1.bf16.msra.mxu0 0
      %8671 = vmatprep.subr.bf16.mxu0 0
      %8672 = vmatpush1.bf16.msra.mxu0 0
      %8673 = vmatprep.subr.bf16.mxu0 0
      %8674 = vmatpush1.bf16.msra.mxu0 0
      %8675 = vmatprep.subr.bf16.mxu0 0
      %8676 = vmatpush1.bf16.msra.mxu0 0
      %8677 = vmatprep.subr.bf16.mxu0 0
      %8678 = vmatpush1.bf16.msra.mxu0 0
      %8679 = vmatprep.subr.bf16.mxu0 0
      %8680 = vmatpush1.bf16.msra.mxu0 0
      %8681 = vmatprep.subr.bf16.mxu0 0
      %8682 = vmatpush1.bf16.msra.mxu0 0
      %8683 = vmatprep.subr.bf16.mxu0 0
      %8684 = vmatpush1.bf16.msra.mxu0 0
      %8685 = vmatprep.subr.bf16.mxu0 0
      %8686 = vmatpush1.bf16.msra.mxu0 0
      %8687 = vmatprep.subr.bf16.mxu0 0
      %8688 = vmatpush1.bf16.msra.mxu0 0
      %8689 = vmatprep.mubr.bf16.mxu0 0
      %8690 = vmatmul.mubr.bf16.gmra.mrb[0].mxu0 %v8622
      %v8691 = vpop.f32.mrb[0].mxu0
      %v8692 = vadd.f32 0.0, %v8691
      %v8693 = vpop.f32.mrb[0].mxu0
      %v8694 = vpop.f32.mrb[0].mxu0
      %v8695 = vadd.f32 0.0, %v8694
      %v8696 = vpop.f32.mrb[0].mxu0
      %8697 = vmatprep.mubr.bf16.mxu0 0
      %8698 = vmatmul.mubr.bf16.gmra.mrb[0].mxu0 %v8624
      %v8699 = vpop.f32.mrb[0].mxu0
      %v8700 = vadd.f32 0.0, %v8699
      %v8701 = vpop.f32.mrb[0].mxu0
      %v8702 = vpop.f32.mrb[0].mxu0
      %v8703 = vadd.f32 0.0, %v8702
      %v8704 = vpop.f32.mrb[0].mxu0
      %8705 = vmatprep.mubr.bf16.mxu0 0
      %8706 = vmatmul.mubr.bf16.gmra.mrb[0].mxu0 %v8626
      %v8707 = vpop.f32.mrb[0].mxu0
      %v8708 = vadd.f32 0.0, %v8707
      %v8709 = vpop.f32.mrb[0].mxu0
      %v8710 = vpop.f32.mrb[0].mxu0
      %v8711 = vadd.f32 0.0, %v8710
      %v8712 = vpop.f32.mrb[0].mxu0
      %8713 = vmatprep.mubr.bf16.mxu0 0
      %8714 = vmatmul.mubr.bf16.gmra.mrb[0].mxu0 %v8628
      %v8715 = vpop.f32.mrb[0].mxu0
      %v8716 = vadd.f32 0.0, %v8715
      %v8717 = vpop.f32.mrb[0].mxu0
      %v8718 = vpop.f32.mrb[0].mxu0
      %v8719 = vadd.f32 0.0, %v8718
      %v8720 = vpop.f32.mrb[0].mxu0
      %8721 = vmatprep.mubr.bf16.mxu0 0
      %8722 = vmatmul.mubr.bf16.gmra.mrb[0].mxu0 %v8630
      %v8723 = vpop.f32.mrb[0].mxu0
      %v8724 = vadd.f32 0.0, %v8723
      %v8725 = vpop.f32.mrb[0].mxu0
      %v8726 = vpop.f32.mrb[0].mxu0
      %v8727 = vadd.f32 0.0, %v8726
      %v8728 = vpop.f32.mrb[0].mxu0
      %8729 = vmatprep.mubr.bf16.mxu0 0
      %8730 = vmatmul.mubr.bf16.gmra.mrb[0].mxu0 %v8632
      %v8731 = vpop.f32.mrb[0].mxu0
      %v8732 = vadd.f32 0.0, %v8731
      %v8733 = vpop.f32.mrb[0].mxu0
      %v8734 = vpop.f32.mrb[0].mxu0
      %v8735 = vadd.f32 0.0, %v8734
      %v8736 = vpop.f32.mrb[0].mxu0
      %8737 = vmatprep.mubr.bf16.mxu0 0
      %8738 = vmatmul.mubr.bf16.gmra.mrb[0].mxu0 %v8634
      %v8739 = vpop.f32.mrb[0].mxu0
      %v8740 = vadd.f32 0.0, %v8739
      %v8741 = vpop.f32.mrb[0].mxu0
      %v8742 = vpop.f32.mrb[0].mxu0
      %v8743 = vadd.f32 0.0, %v8742
      %v8744 = vpop.f32.mrb[0].mxu0
      %8745 = vmatprep.mubr.bf16.mxu0 0
      %8746 = vmatmul.mubr.bf16.gmra.mrb[0].mxu0 %v8636
      %v8747 = vpop.f32.mrb[0].mxu0
      %v8748 = vadd.f32 0.0, %v8747
      %v8749 = vpop.f32.mrb[0].mxu0
      %v8750 = vpop.f32.mrb[0].mxu0
      %v8751 = vadd.f32 0.0, %v8750
      %v8752 = vpop.f32.mrb[0].mxu0
      %8753 = vmatprep.mubr.bf16.mxu0 0
      %8754 = vmatmul.mubr.bf16.gmra.mrb[0].mxu0 %v8638
      %v8755 = vpop.f32.mrb[0].mxu0
      %v8756 = vadd.f32 0.0, %v8755
      %v8757 = vpop.f32.mrb[0].mxu0
      %v8758 = vpop.f32.mrb[0].mxu0
      %v8759 = vadd.f32 0.0, %v8758
      %v8760 = vpop.f32.mrb[0].mxu0
      %8761 = vmatprep.mubr.bf16.mxu0 0
      %8762 = vmatmul.mubr.bf16.gmra.mrb[0].mxu0 %v8640
      %v8763 = vpop.f32.mrb[0].mxu0
      %v8764 = vadd.f32 0.0, %v8763
      %v8765 = vpop.f32.mrb[0].mxu0
      %v8766 = vpop.f32.mrb[0].mxu0
      %v8767 = vadd.f32 0.0, %v8766
      %v8768 = vpop.f32.mrb[0].mxu0
      %8769 = vmatprep.mubr.bf16.mxu0 0
      %8770 = vmatmul.mubr.bf16.gmra.mrb[0].mxu0 %v8642
      %v8771 = vpop.f32.mrb[0].mxu0
      %v8772 = vadd.f32 0.0, %v8771
      %v8773 = vpop.f32.mrb[0].mxu0
      %v8774 = vpop.f32.mrb[0].mxu0
      %v8775 = vadd.f32 0.0, %v8774
      %v8776 = vpop.f32.mrb[0].mxu0
      %8777 = vmatprep.mubr.bf16.mxu0 0
      %8778 = vmatmul.mubr.bf16.gmra.mrb[0].mxu0 %v8644
      %v8779 = vpop.f32.mrb[0].mxu0
      %v8780 = vadd.f32 0.0, %v8779
      %v8781 = vpop.f32.mrb[0].mxu0
      %v8782 = vpop.f32.mrb[0].mxu0
      %v8783 = vadd.f32 0.0, %v8782
      %v8784 = vpop.f32.mrb[0].mxu0
      %8785 = vmatprep.mubr.bf16.mxu0 0
      %8786 = vmatmul.mubr.bf16.gmra.mrb[0].mxu0 %v8646
      %v8787 = vpop.f32.mrb[0].mxu0
      %v8788 = vadd.f32 0.0, %v8787
      %v8789 = vpop.f32.mrb[0].mxu0
      %v8790 = vpop.f32.mrb[0].mxu0
      %v8791 = vadd.f32 0.0, %v8790
      %v8792 = vpop.f32.mrb[0].mxu0
      %8793 = vmatprep.mubr.bf16.mxu0 0
      %8794 = vmatmul.mubr.bf16.gmra.mrb[0].mxu0 %v8648
      %v8795 = vpop.f32.mrb[0].mxu0
      %v8796 = vadd.f32 0.0, %v8795
      %v8797 = vpop.f32.mrb[0].mxu0
      %v8798 = vpop.f32.mrb[0].mxu0
      %v8799 = vadd.f32 0.0, %v8798
      %v8800 = vpop.f32.mrb[0].mxu0
      %8801 = vmatprep.mubr.bf16.mxu0 0
      %8802 = vmatmul.mubr.bf16.gmra.mrb[0].mxu0 %v8650
      %v8803 = vpop.f32.mrb[0].mxu0
      %v8804 = vadd.f32 0.0, %v8803
      %v8805 = vpop.f32.mrb[0].mxu0
      %v8806 = vpop.f32.mrb[0].mxu0
      %v8807 = vadd.f32 0.0, %v8806
      %v8808 = vpop.f32.mrb[0].mxu0
      %8809 = vmatprep.mubr.bf16.mxu0 0
      %8810 = vmatmul.mubr.bf16.gmra.mrb[0].mxu0 %v8652
      %v8811 = vpop.f32.mrb[0].mxu0
      %v8812 = vadd.f32 0.0, %v8811
      %v8813 = vpop.f32.mrb[0].mxu0
      %v8814 = vpop.f32.mrb[0].mxu0
      %v8815 = vadd.f32 0.0, %v8814
      %v8816 = vpop.f32.mrb[0].mxu0
      %8817 = vdwg.mxu0
      %v8818 = vadd.f32 %v7704, %v8692
      %v8819 = vadd.f32 %v7705, %v8695
      %v8820 = vadd.f32 %v7706, %v8700
      %v8821 = vadd.f32 %v7707, %v8703
      %v8822 = vadd.f32 %v7708, %v8708
      %v8823 = vadd.f32 %v7709, %v8711
      %v8824 = vadd.f32 %v7710, %v8716
      %v8825 = vadd.f32 %v7711, %v8719
      %v8826 = vadd.f32 %v7712, %v8724
      %v8827 = vadd.f32 %v7713, %v8727
      %v8828 = vadd.f32 %v7714, %v8732
      %v8829 = vadd.f32 %v7715, %v8735
      %v8830 = vadd.f32 %v7716, %v8740
      %v8831 = vadd.f32 %v7717, %v8743
      %v8832 = vadd.f32 %v7718, %v8748
      %v8833 = vadd.f32 %v7719, %v8751
      %v8834 = vadd.f32 %v7720, %v8756
      %v8835 = vadd.f32 %v7721, %v8759
      %v8836 = vadd.f32 %v7722, %v8764
      %v8837 = vadd.f32 %v7723, %v8767
      %v8838 = vadd.f32 %v7724, %v8772
      %v8839 = vadd.f32 %v7725, %v8775
      %v8840 = vadd.f32 %v7726, %v8780
      %v8841 = vadd.f32 %v7727, %v8783
      %v8842 = vadd.f32 %v7728, %v8788
      %v8843 = vadd.f32 %v7729, %v8791
      %v8844 = vadd.f32 %v7730, %v8796
      %v8845 = vadd.f32 %v7731, %v8799
      %v8846 = vadd.f32 %v7732, %v8804
      %v8847 = vadd.f32 %v7733, %v8807
      %v8848 = vadd.f32 %v7734, %v8812
      %v8849 = vadd.f32 %v7735, %v8815
      %v8850 = vld [vmem:[%s6567] sm:$0xf]
      %v8851 = vld [vmem:[%s6567 + $0x4] sm:$0xf]
      %v8852 = vld [vmem:[%s6567 + $0x8] sm:$0x3]
      %v8853 = vld [vmem:[%s6567 + $0xc] sm:$0xf]
      %v8854 = vld [vmem:[%s6567 + $0x10] sm:$0xf]
      %v8855 = vld [vmem:[%s6567 + $0x14] sm:$0x3]
      %v8856 = vld [vmem:[%s6567 + $0x18] sm:$0xf]
      %v8857 = vld [vmem:[%s6567 + $0x1c] sm:$0xf]
      %v8858 = vld [vmem:[%s6567 + $0x20] sm:$0x3]
      %v8859 = vld [vmem:[%s6567 + $0x24] sm:$0xf]
      %v8860 = vld [vmem:[%s6567 + $0x28] sm:$0xf]
      %v8861 = vld [vmem:[%s6567 + $0x2c] sm:$0x3]
      %v8862 = vld [vmem:[%s6567 + $0x30] sm:$0xf]
      %v8863 = vld [vmem:[%s6567 + $0x34] sm:$0xf]
      %v8864 = vld [vmem:[%s6567 + $0x38] sm:$0x3]
      %v8865 = vld [vmem:[%s6567 + $0x3c] sm:$0xf]
      %v8866 = vld [vmem:[%s6567 + $0x40] sm:$0xf]
      %v8867 = vld [vmem:[%s6567 + $0x44] sm:$0x3]
      %v8868 = vld [vmem:[%s6567 + $0x48] sm:$0xf]
      %v8869 = vld [vmem:[%s6567 + $0x4c] sm:$0xf]
      %v8870 = vld [vmem:[%s6567 + $0x50] sm:$0x3]
      %v8871 = vld [vmem:[%s6567 + $0x54] sm:$0xf]
      %v8872 = vld [vmem:[%s6567 + $0x58] sm:$0xf]
      %v8873 = vld [vmem:[%s6567 + $0x5c] sm:$0x3]
      %v8874 = vld [vmem:[%s6567 + $0x60] sm:$0xf]
      %v8875 = vld [vmem:[%s6567 + $0x64] sm:$0xf]
      %v8876 = vld [vmem:[%s6567 + $0x68] sm:$0x3]
      %v8877 = vld [vmem:[%s6567 + $0x6c] sm:$0xf]
      %v8878 = vld [vmem:[%s6567 + $0x70] sm:$0xf]
      %v8879 = vld [vmem:[%s6567 + $0x74] sm:$0x3]
      %v8880 = vld [vmem:[%s6567 + $0x78] sm:$0xf]
      %v8881 = vld [vmem:[%s6567 + $0x7c] sm:$0xf]
      %v8882 = vld [vmem:[%s6567 + $0x80] sm:$0x3]
      %v8883 = vld [vmem:[%s6567 + $0x84] sm:$0xf]
      %v8884 = vld [vmem:[%s6567 + $0x88] sm:$0xf]
      %v8885 = vld [vmem:[%s6567 + $0x8c] sm:$0x3]
      %v8886 = vld [vmem:[%s6567 + $0x90] sm:$0xf]
      %v8887 = vld [vmem:[%s6567 + $0x94] sm:$0xf]
      %v8888 = vld [vmem:[%s6567 + $0x98] sm:$0x3]
      %v8889 = vld [vmem:[%s6567 + $0x9c] sm:$0xf]
      %v8890 = vld [vmem:[%s6567 + $0xa0] sm:$0xf]
      %v8891 = vld [vmem:[%s6567 + $0xa4] sm:$0x3]
      %v8892 = vld [vmem:[%s6567 + $0xa8] sm:$0xf]
      %v8893 = vld [vmem:[%s6567 + $0xac] sm:$0xf]
      %v8894 = vld [vmem:[%s6567 + $0xb0] sm:$0x3]
      %v8895 = vld [vmem:[%s6567 + $0xb4] sm:$0xf]
      %v8896 = vld [vmem:[%s6567 + $0xb8] sm:$0xf]
      %v8897 = vld [vmem:[%s6567 + $0xbc] sm:$0x3]
      %v8930 = vunpack.c.l.b16 %v8850
      %v8931 = vunpack.c.l.b16 %v8851
      %v8932 = vunpack.c.l.b16 %v8853
      %v8933 = vunpack.c.l.b16 %v8854
      %v8934 = vunpack.c.l.b16 %v8856
      %v8935 = vunpack.c.l.b16 %v8857
      %v8936 = vunpack.c.l.b16 %v8859
      %v8937 = vunpack.c.l.b16 %v8860
      %v8938 = vunpack.c.l.b16 %v8862
      %v8939 = vunpack.c.l.b16 %v8863
      %v8940 = vunpack.c.l.b16 %v8865
      %v8941 = vunpack.c.l.b16 %v8866
      %v8942 = vunpack.c.l.b16 %v8868
      %v8943 = vunpack.c.l.b16 %v8869
      %v8944 = vunpack.c.l.b16 %v8871
      %v8945 = vunpack.c.l.b16 %v8872
      %v8946 = vunpack.c.l.b16 %v8874
      %v8947 = vunpack.c.l.b16 %v8875
      %v8948 = vunpack.c.l.b16 %v8877
      %v8949 = vunpack.c.l.b16 %v8878
      %v8950 = vunpack.c.l.b16 %v8880
      %v8951 = vunpack.c.l.b16 %v8881
      %v8952 = vunpack.c.l.b16 %v8883
      %v8953 = vunpack.c.l.b16 %v8884
      %v8954 = vunpack.c.l.b16 %v8886
      %v8955 = vunpack.c.l.b16 %v8887
      %v8956 = vunpack.c.l.b16 %v8889
      %v8957 = vunpack.c.l.b16 %v8890
      %v8958 = vunpack.c.l.b16 %v8892
      %v8959 = vunpack.c.l.b16 %v8893
      %v8960 = vunpack.c.l.b16 %v8895
      %v8961 = vunpack.c.l.b16 %v8896
      %v8962 = vpack.c.b16 %v8931, %v8930
      %v8963 = vpack.c.b16 %v8933, %v8932
      %v8964 = vpack.c.b16 %v8935, %v8934
      %v8965 = vpack.c.b16 %v8937, %v8936
      %v8966 = vpack.c.b16 %v8939, %v8938
      %v8967 = vpack.c.b16 %v8941, %v8940
      %v8968 = vpack.c.b16 %v8943, %v8942
      %v8969 = vpack.c.b16 %v8945, %v8944
      %v8970 = vpack.c.b16 %v8947, %v8946
      %v8971 = vpack.c.b16 %v8949, %v8948
      %v8972 = vpack.c.b16 %v8951, %v8950
      %v8973 = vpack.c.b16 %v8953, %v8952
      %v8974 = vpack.c.b16 %v8955, %v8954
      %v8975 = vpack.c.b16 %v8957, %v8956
      %v8976 = vpack.c.b16 %v8959, %v8958
      %v8977 = vpack.c.b16 %v8961, %v8960
      %v8994 = vunpack.c.l.b16 %v8852
      %v8995 = vunpack.c.l.b16 %v8855
      %v8996 = vunpack.c.l.b16 %v8858
      %v8997 = vunpack.c.l.b16 %v8861
      %v8998 = vunpack.c.l.b16 %v8864
      %v8999 = vunpack.c.l.b16 %v8867
      %v9000 = vunpack.c.l.b16 %v8870
      %v9001 = vunpack.c.l.b16 %v8873
      %v9002 = vunpack.c.l.b16 %v8876
      %v9003 = vunpack.c.l.b16 %v8879
      %v9004 = vunpack.c.l.b16 %v8882
      %v9005 = vunpack.c.l.b16 %v8885
      %v9006 = vunpack.c.l.b16 %v8888
      %v9007 = vunpack.c.l.b16 %v8891
      %v9008 = vunpack.c.l.b16 %v8894
      %v9009 = vunpack.c.l.b16 %v8897
      %v9010 = vpack.c.b16 %v8994, %v8994
      %v9011 = vpack.c.b16 %v8995, %v8995
      %v9012 = vpack.c.b16 %v8996, %v8996
      %v9013 = vpack.c.b16 %v8997, %v8997
      %v9014 = vpack.c.b16 %v8998, %v8998
      %v9015 = vpack.c.b16 %v8999, %v8999
      %v9016 = vpack.c.b16 %v9000, %v9000
      %v9017 = vpack.c.b16 %v9001, %v9001
      %v9018 = vpack.c.b16 %v9002, %v9002
      %v9019 = vpack.c.b16 %v9003, %v9003
      %v9020 = vpack.c.b16 %v9004, %v9004
      %v9021 = vpack.c.b16 %v9005, %v9005
      %v9022 = vpack.c.b16 %v9006, %v9006
      %v9023 = vpack.c.b16 %v9007, %v9007
      %v9024 = vpack.c.b16 %v9008, %v9008
      %v9025 = vpack.c.b16 %v9009, %v9009
      %v9027 = vshrl.u32 %v8962, 16
      %v9029 = vshll.u32 %v8962, 16
      %v9031 = vrot.slane %v9029, 1
      %v9032 = vor.u32 %v9027, %v9031
      %v9034 = vshll.u32 %v9010, 16
      %v9036 = vrot.slane %v9034, 1
      %v9037 = vsel %vm906, %v9032, %v9036
      %v9039 = vshrl.u32 %v8963, 16
      %v9041 = vshll.u32 %v8963, 16
      %v9043 = vrot.slane %v9041, 1
      %v9044 = vor.u32 %v9039, %v9043
      %v9046 = vshll.u32 %v9011, 16
      %v9048 = vrot.slane %v9046, 1
      %v9049 = vsel %vm906, %v9044, %v9048
      %v9051 = vshrl.u32 %v8964, 16
      %v9053 = vshll.u32 %v8964, 16
      %v9055 = vrot.slane %v9053, 1
      %v9056 = vor.u32 %v9051, %v9055
      %v9058 = vshll.u32 %v9012, 16
      %v9060 = vrot.slane %v9058, 1
      %v9061 = vsel %vm906, %v9056, %v9060
      %v9063 = vshrl.u32 %v8965, 16
      %v9065 = vshll.u32 %v8965, 16
      %v9067 = vrot.slane %v9065, 1
      %v9068 = vor.u32 %v9063, %v9067
      %v9070 = vshll.u32 %v9013, 16
      %v9072 = vrot.slane %v9070, 1
      %v9073 = vsel %vm906, %v9068, %v9072
      %v9075 = vshrl.u32 %v8966, 16
      %v9077 = vshll.u32 %v8966, 16
      %v9079 = vrot.slane %v9077, 1
      %v9080 = vor.u32 %v9075, %v9079
      %v9082 = vshll.u32 %v9014, 16
      %v9084 = vrot.slane %v9082, 1
      %v9085 = vsel %vm906, %v9080, %v9084
      %v9087 = vshrl.u32 %v8967, 16
      %v9089 = vshll.u32 %v8967, 16
      %v9091 = vrot.slane %v9089, 1
      %v9092 = vor.u32 %v9087, %v9091
      %v9094 = vshll.u32 %v9015, 16
      %v9096 = vrot.slane %v9094, 1
      %v9097 = vsel %vm906, %v9092, %v9096
      %v9099 = vshrl.u32 %v8968, 16
      %v9101 = vshll.u32 %v8968, 16
      %v9103 = vrot.slane %v9101, 1
      %v9104 = vor.u32 %v9099, %v9103
      %v9106 = vshll.u32 %v9016, 16
      %v9108 = vrot.slane %v9106, 1
      %v9109 = vsel %vm906, %v9104, %v9108
      %v9111 = vshrl.u32 %v8969, 16
      %v9113 = vshll.u32 %v8969, 16
      %v9115 = vrot.slane %v9113, 1
      %v9116 = vor.u32 %v9111, %v9115
      %v9118 = vshll.u32 %v9017, 16
      %v9120 = vrot.slane %v9118, 1
      %v9121 = vsel %vm906, %v9116, %v9120
      %v9123 = vshrl.u32 %v8970, 16
      %v9125 = vshll.u32 %v8970, 16
      %v9127 = vrot.slane %v9125, 1
      %v9128 = vor.u32 %v9123, %v9127
      %v9130 = vshll.u32 %v9018, 16
      %v9132 = vrot.slane %v9130, 1
      %v9133 = vsel %vm906, %v9128, %v9132
      %v9135 = vshrl.u32 %v8971, 16
      %v9137 = vshll.u32 %v8971, 16
      %v9139 = vrot.slane %v9137, 1
      %v9140 = vor.u32 %v9135, %v9139
      %v9142 = vshll.u32 %v9019, 16
      %v9144 = vrot.slane %v9142, 1
      %v9145 = vsel %vm906, %v9140, %v9144
      %v9147 = vshrl.u32 %v8972, 16
      %v9149 = vshll.u32 %v8972, 16
      %v9151 = vrot.slane %v9149, 1
      %v9152 = vor.u32 %v9147, %v9151
      %v9154 = vshll.u32 %v9020, 16
      %v9156 = vrot.slane %v9154, 1
      %v9157 = vsel %vm906, %v9152, %v9156
      %v9159 = vshrl.u32 %v8973, 16
      %v9161 = vshll.u32 %v8973, 16
      %v9163 = vrot.slane %v9161, 1
      %v9164 = vor.u32 %v9159, %v9163
      %v9166 = vshll.u32 %v9021, 16
      %v9168 = vrot.slane %v9166, 1
      %v9169 = vsel %vm906, %v9164, %v9168
      %v9171 = vshrl.u32 %v8974, 16
      %v9173 = vshll.u32 %v8974, 16
      %v9175 = vrot.slane %v9173, 1
      %v9176 = vor.u32 %v9171, %v9175
      %v9178 = vshll.u32 %v9022, 16
      %v9180 = vrot.slane %v9178, 1
      %v9181 = vsel %vm906, %v9176, %v9180
      %v9183 = vshrl.u32 %v8975, 16
      %v9185 = vshll.u32 %v8975, 16
      %v9187 = vrot.slane %v9185, 1
      %v9188 = vor.u32 %v9183, %v9187
      %v9190 = vshll.u32 %v9023, 16
      %v9192 = vrot.slane %v9190, 1
      %v9193 = vsel %vm906, %v9188, %v9192
      %v9195 = vshrl.u32 %v8976, 16
      %v9197 = vshll.u32 %v8976, 16
      %v9199 = vrot.slane %v9197, 1
      %v9200 = vor.u32 %v9195, %v9199
      %v9202 = vshll.u32 %v9024, 16
      %v9204 = vrot.slane %v9202, 1
      %v9205 = vsel %vm906, %v9200, %v9204
      %v9207 = vshrl.u32 %v8977, 16
      %v9209 = vshll.u32 %v8977, 16
      %v9211 = vrot.slane %v9209, 1
      %v9212 = vor.u32 %v9207, %v9211
      %v9214 = vshll.u32 %v9025, 16
      %v9216 = vrot.slane %v9214, 1
      %v9217 = vsel %vm906, %v9212, %v9216
      %9218 = vrot.lane.b32.xlu0 %v9037, 8
      %v9219 = vpop.permute.xlu0 %9218
      %9220 = vrot.lane.b32.xlu0 %v9049, 8
      %v9221 = vpop.permute.xlu0 %9220
      %9222 = vrot.lane.b32.xlu0 %v9061, 8
      %v9223 = vpop.permute.xlu0 %9222
      %9224 = vrot.lane.b32.xlu0 %v9073, 8
      %v9225 = vpop.permute.xlu0 %9224
      %9226 = vrot.lane.b32.xlu0 %v9085, 8
      %v9227 = vpop.permute.xlu0 %9226
      %9228 = vrot.lane.b32.xlu0 %v9097, 8
      %v9229 = vpop.permute.xlu0 %9228
      %9230 = vrot.lane.b32.xlu0 %v9109, 8
      %v9231 = vpop.permute.xlu0 %9230
      %9232 = vrot.lane.b32.xlu0 %v9121, 8
      %v9233 = vpop.permute.xlu0 %9232
      %9234 = vrot.lane.b32.xlu0 %v9133, 8
      %v9235 = vpop.permute.xlu0 %9234
      %9236 = vrot.lane.b32.xlu0 %v9145, 8
      %v9237 = vpop.permute.xlu0 %9236
      %9238 = vrot.lane.b32.xlu0 %v9157, 8
      %v9239 = vpop.permute.xlu0 %9238
      %9240 = vrot.lane.b32.xlu0 %v9169, 8
      %v9241 = vpop.permute.xlu0 %9240
      %9242 = vrot.lane.b32.xlu0 %v9181, 8
      %v9243 = vpop.permute.xlu0 %9242
      %9244 = vrot.lane.b32.xlu0 %v9193, 8
      %v9245 = vpop.permute.xlu0 %9244
      %9246 = vrot.lane.b32.xlu0 %v9205, 8
      %v9247 = vpop.permute.xlu0 %9246
      %9248 = vrot.lane.b32.xlu0 %v9217, 8
      %v9249 = vpop.permute.xlu0 %9248
      %v9250 = vrot.slane %v8962, 1
      %v9251 = vrot.slane %v9010, 1
      %v9252 = vsel %vm1131, %v9250, %v9251
      %v9253 = vrot.slane %v8963, 1
      %v9254 = vrot.slane %v9011, 1
      %v9255 = vsel %vm1131, %v9253, %v9254
      %v9256 = vrot.slane %v8964, 1
      %v9257 = vrot.slane %v9012, 1
      %v9258 = vsel %vm1131, %v9256, %v9257
      %v9259 = vrot.slane %v8965, 1
      %v9260 = vrot.slane %v9013, 1
      %v9261 = vsel %vm1131, %v9259, %v9260
      %v9262 = vrot.slane %v8966, 1
      %v9263 = vrot.slane %v9014, 1
      %v9264 = vsel %vm1131, %v9262, %v9263
      %v9265 = vrot.slane %v8967, 1
      %v9266 = vrot.slane %v9015, 1
      %v9267 = vsel %vm1131, %v9265, %v9266
      %v9268 = vrot.slane %v8968, 1
      %v9269 = vrot.slane %v9016, 1
      %v9270 = vsel %vm1131, %v9268, %v9269
      %v9271 = vrot.slane %v8969, 1
      %v9272 = vrot.slane %v9017, 1
      %v9273 = vsel %vm1131, %v9271, %v9272
      %v9274 = vrot.slane %v8970, 1
      %v9275 = vrot.slane %v9018, 1
      %v9276 = vsel %vm1131, %v9274, %v9275
      %v9277 = vrot.slane %v8971, 1
      %v9278 = vrot.slane %v9019, 1
      %v9279 = vsel %vm1131, %v9277, %v9278
      %v9280 = vrot.slane %v8972, 1
      %v9281 = vrot.slane %v9020, 1
      %v9282 = vsel %vm1131, %v9280, %v9281
      %v9283 = vrot.slane %v8973, 1
      %v9284 = vrot.slane %v9021, 1
      %v9285 = vsel %vm1131, %v9283, %v9284
      %v9286 = vrot.slane %v8974, 1
      %v9287 = vrot.slane %v9022, 1
      %v9288 = vsel %vm1131, %v9286, %v9287
      %v9289 = vrot.slane %v8975, 1
      %v9290 = vrot.slane %v9023, 1
      %v9291 = vsel %vm1131, %v9289, %v9290
      %v9292 = vrot.slane %v8976, 1
      %v9293 = vrot.slane %v9024, 1
      %v9294 = vsel %vm1131, %v9292, %v9293
      %v9295 = vrot.slane %v8977, 1
      %v9296 = vrot.slane %v9025, 1
      %v9297 = vsel %vm1131, %v9295, %v9296
      %9298 = vrot.lane.b32.xlu0 %v9252, 16
      %v9299 = vpop.permute.xlu0 %9298
      %9300 = vrot.lane.b32.xlu0 %v9255, 16
      %v9301 = vpop.permute.xlu0 %9300
      %9302 = vrot.lane.b32.xlu0 %v9258, 16
      %v9303 = vpop.permute.xlu0 %9302
      %9304 = vrot.lane.b32.xlu0 %v9261, 16
      %v9305 = vpop.permute.xlu0 %9304
      %9306 = vrot.lane.b32.xlu0 %v9264, 16
      %v9307 = vpop.permute.xlu0 %9306
      %9308 = vrot.lane.b32.xlu0 %v9267, 16
      %v9309 = vpop.permute.xlu0 %9308
      %9310 = vrot.lane.b32.xlu0 %v9270, 16
      %v9311 = vpop.permute.xlu0 %9310
      %9312 = vrot.lane.b32.xlu0 %v9273, 16
      %v9313 = vpop.permute.xlu0 %9312
      %9314 = vrot.lane.b32.xlu0 %v9276, 16
      %v9315 = vpop.permute.xlu0 %9314
      %9316 = vrot.lane.b32.xlu0 %v9279, 16
      %v9317 = vpop.permute.xlu0 %9316
      %9318 = vrot.lane.b32.xlu0 %v9282, 16
      %v9319 = vpop.permute.xlu0 %9318
      %9320 = vrot.lane.b32.xlu0 %v9285, 16
      %v9321 = vpop.permute.xlu0 %9320
      %9322 = vrot.lane.b32.xlu0 %v9288, 16
      %v9323 = vpop.permute.xlu0 %9322
      %9324 = vrot.lane.b32.xlu0 %v9291, 16
      %v9325 = vpop.permute.xlu0 %9324
      %9326 = vrot.lane.b32.xlu0 %v9294, 16
      %v9327 = vpop.permute.xlu0 %9326
      %9328 = vrot.lane.b32.xlu0 %v9297, 16
      %v9329 = vpop.permute.xlu0 %9328
      %v9330 = vrot.slane %v9027, 1
      %v9331 = vrot.slane %v9029, 2
      %v9332 = vor.u32 %v9330, %v9331
      %v9333 = vshrl.u32 %v9010, 16
      %v9335 = vrot.slane %v9333, 1
      %v9336 = vrot.slane %v9034, 2
      %v9337 = vor.u32 %v9335, %v9336
      %v9338 = vsel %vm1212, %v9332, %v9337
      %v9339 = vrot.slane %v9039, 1
      %v9340 = vrot.slane %v9041, 2
      %v9341 = vor.u32 %v9339, %v9340
      %v9342 = vshrl.u32 %v9011, 16
      %v9344 = vrot.slane %v9342, 1
      %v9345 = vrot.slane %v9046, 2
      %v9346 = vor.u32 %v9344, %v9345
      %v9347 = vsel %vm1212, %v9341, %v9346
      %v9348 = vrot.slane %v9051, 1
      %v9349 = vrot.slane %v9053, 2
      %v9350 = vor.u32 %v9348, %v9349
      %v9351 = vshrl.u32 %v9012, 16
      %v9353 = vrot.slane %v9351, 1
      %v9354 = vrot.slane %v9058, 2
      %v9355 = vor.u32 %v9353, %v9354
      %v9356 = vsel %vm1212, %v9350, %v9355
      %v9357 = vrot.slane %v9063, 1
      %v9358 = vrot.slane %v9065, 2
      %v9359 = vor.u32 %v9357, %v9358
      %v9360 = vshrl.u32 %v9013, 16
      %v9362 = vrot.slane %v9360, 1
      %v9363 = vrot.slane %v9070, 2
      %v9364 = vor.u32 %v9362, %v9363
      %v9365 = vsel %vm1212, %v9359, %v9364
      %v9366 = vrot.slane %v9075, 1
      %v9367 = vrot.slane %v9077, 2
      %v9368 = vor.u32 %v9366, %v9367
      %v9369 = vshrl.u32 %v9014, 16
      %v9371 = vrot.slane %v9369, 1
      %v9372 = vrot.slane %v9082, 2
      %v9373 = vor.u32 %v9371, %v9372
      %v9374 = vsel %vm1212, %v9368, %v9373
      %v9375 = vrot.slane %v9087, 1
      %v9376 = vrot.slane %v9089, 2
      %v9377 = vor.u32 %v9375, %v9376
      %v9378 = vshrl.u32 %v9015, 16
      %v9380 = vrot.slane %v9378, 1
      %v9381 = vrot.slane %v9094, 2
      %v9382 = vor.u32 %v9380, %v9381
      %v9383 = vsel %vm1212, %v9377, %v9382
      %v9384 = vrot.slane %v9099, 1
      %v9385 = vrot.slane %v9101, 2
      %v9386 = vor.u32 %v9384, %v9385
      %v9387 = vshrl.u32 %v9016, 16
      %v9389 = vrot.slane %v9387, 1
      %v9390 = vrot.slane %v9106, 2
      %v9391 = vor.u32 %v9389, %v9390
      %v9392 = vsel %vm1212, %v9386, %v9391
      %v9393 = vrot.slane %v9111, 1
      %v9394 = vrot.slane %v9113, 2
      %v9395 = vor.u32 %v9393, %v9394
      %v9396 = vshrl.u32 %v9017, 16
      %v9398 = vrot.slane %v9396, 1
      %v9399 = vrot.slane %v9118, 2
      %v9400 = vor.u32 %v9398, %v9399
      %v9401 = vsel %vm1212, %v9395, %v9400
      %v9402 = vrot.slane %v9123, 1
      %v9403 = vrot.slane %v9125, 2
      %v9404 = vor.u32 %v9402, %v9403
      %v9405 = vshrl.u32 %v9018, 16
      %v9407 = vrot.slane %v9405, 1
      %v9408 = vrot.slane %v9130, 2
      %v9409 = vor.u32 %v9407, %v9408
      %v9410 = vsel %vm1212, %v9404, %v9409
      %v9411 = vrot.slane %v9135, 1
      %v9412 = vrot.slane %v9137, 2
      %v9413 = vor.u32 %v9411, %v9412
      %v9414 = vshrl.u32 %v9019, 16
      %v9416 = vrot.slane %v9414, 1
      %v9417 = vrot.slane %v9142, 2
      %v9418 = vor.u32 %v9416, %v9417
      %v9419 = vsel %vm1212, %v9413, %v9418
      %v9420 = vrot.slane %v9147, 1
      %v9421 = vrot.slane %v9149, 2
      %v9422 = vor.u32 %v9420, %v9421
      %v9423 = vshrl.u32 %v9020, 16
      %v9425 = vrot.slane %v9423, 1
      %v9426 = vrot.slane %v9154, 2
      %v9427 = vor.u32 %v9425, %v9426
      %v9428 = vsel %vm1212, %v9422, %v9427
      %v9429 = vrot.slane %v9159, 1
      %v9430 = vrot.slane %v9161, 2
      %v9431 = vor.u32 %v9429, %v9430
      %v9432 = vshrl.u32 %v9021, 16
      %v9434 = vrot.slane %v9432, 1
      %v9435 = vrot.slane %v9166, 2
      %v9436 = vor.u32 %v9434, %v9435
      %v9437 = vsel %vm1212, %v9431, %v9436
      %v9438 = vrot.slane %v9171, 1
      %v9439 = vrot.slane %v9173, 2
      %v9440 = vor.u32 %v9438, %v9439
      %v9441 = vshrl.u32 %v9022, 16
      %v9443 = vrot.slane %v9441, 1
      %v9444 = vrot.slane %v9178, 2
      %v9445 = vor.u32 %v9443, %v9444
      %v9446 = vsel %vm1212, %v9440, %v9445
      %v9447 = vrot.slane %v9183, 1
      %v9448 = vrot.slane %v9185, 2
      %v9449 = vor.u32 %v9447, %v9448
      %v9450 = vshrl.u32 %v9023, 16
      %v9452 = vrot.slane %v9450, 1
      %v9453 = vrot.slane %v9190, 2
      %v9454 = vor.u32 %v9452, %v9453
      %v9455 = vsel %vm1212, %v9449, %v9454
      %v9456 = vrot.slane %v9195, 1
      %v9457 = vrot.slane %v9197, 2
      %v9458 = vor.u32 %v9456, %v9457
      %v9459 = vshrl.u32 %v9024, 16
      %v9461 = vrot.slane %v9459, 1
      %v9462 = vrot.slane %v9202, 2
      %v9463 = vor.u32 %v9461, %v9462
      %v9464 = vsel %vm1212, %v9458, %v9463
      %v9465 = vrot.slane %v9207, 1
      %v9466 = vrot.slane %v9209, 2
      %v9467 = vor.u32 %v9465, %v9466
      %v9468 = vshrl.u32 %v9025, 16
      %v9470 = vrot.slane %v9468, 1
      %v9471 = vrot.slane %v9214, 2
      %v9472 = vor.u32 %v9470, %v9471
      %v9473 = vsel %vm1212, %v9467, %v9472
      %9474 = vrot.lane.b32.xlu0 %v9338, 24
      %v9475 = vpop.permute.xlu0 %9474
      %9476 = vrot.lane.b32.xlu0 %v9347, 24
      %v9477 = vpop.permute.xlu0 %9476
      %9478 = vrot.lane.b32.xlu0 %v9356, 24
      %v9479 = vpop.permute.xlu0 %9478
      %9480 = vrot.lane.b32.xlu0 %v9365, 24
      %v9481 = vpop.permute.xlu0 %9480
      %9482 = vrot.lane.b32.xlu0 %v9374, 24
      %v9483 = vpop.permute.xlu0 %9482
      %9484 = vrot.lane.b32.xlu0 %v9383, 24
      %v9485 = vpop.permute.xlu0 %9484
      %9486 = vrot.lane.b32.xlu0 %v9392, 24
      %v9487 = vpop.permute.xlu0 %9486
      %9488 = vrot.lane.b32.xlu0 %v9401, 24
      %v9489 = vpop.permute.xlu0 %9488
      %9490 = vrot.lane.b32.xlu0 %v9410, 24
      %v9491 = vpop.permute.xlu0 %9490
      %9492 = vrot.lane.b32.xlu0 %v9419, 24
      %v9493 = vpop.permute.xlu0 %9492
      %9494 = vrot.lane.b32.xlu0 %v9428, 24
      %v9495 = vpop.permute.xlu0 %9494
      %9496 = vrot.lane.b32.xlu0 %v9437, 24
      %v9497 = vpop.permute.xlu0 %9496
      %9498 = vrot.lane.b32.xlu0 %v9446, 24
      %v9499 = vpop.permute.xlu0 %9498
      %9500 = vrot.lane.b32.xlu0 %v9455, 24
      %v9501 = vpop.permute.xlu0 %9500
      %9502 = vrot.lane.b32.xlu0 %v9464, 24
      %v9503 = vpop.permute.xlu0 %9502
      %9504 = vrot.lane.b32.xlu0 %v9473, 24
      %v9505 = vpop.permute.xlu0 %9504
      %v9506 = vrot.slane %v8962, 2
      %v9507 = vrot.slane %v9010, 2
      %v9508 = vsel %vm1389, %v9506, %v9507
      %v9509 = vrot.slane %v8963, 2
      %v9510 = vrot.slane %v9011, 2
      %v9511 = vsel %vm1389, %v9509, %v9510
      %v9512 = vrot.slane %v8964, 2
      %v9513 = vrot.slane %v9012, 2
      %v9514 = vsel %vm1389, %v9512, %v9513
      %v9515 = vrot.slane %v8965, 2
      %v9516 = vrot.slane %v9013, 2
      %v9517 = vsel %vm1389, %v9515, %v9516
      %v9518 = vrot.slane %v8966, 2
      %v9519 = vrot.slane %v9014, 2
      %v9520 = vsel %vm1389, %v9518, %v9519
      %v9521 = vrot.slane %v8967, 2
      %v9522 = vrot.slane %v9015, 2
      %v9523 = vsel %vm1389, %v9521, %v9522
      %v9524 = vrot.slane %v8968, 2
      %v9525 = vrot.slane %v9016, 2
      %v9526 = vsel %vm1389, %v9524, %v9525
      %v9527 = vrot.slane %v8969, 2
      %v9528 = vrot.slane %v9017, 2
      %v9529 = vsel %vm1389, %v9527, %v9528
      %v9530 = vrot.slane %v8970, 2
      %v9531 = vrot.slane %v9018, 2
      %v9532 = vsel %vm1389, %v9530, %v9531
      %v9533 = vrot.slane %v8971, 2
      %v9534 = vrot.slane %v9019, 2
      %v9535 = vsel %vm1389, %v9533, %v9534
      %v9536 = vrot.slane %v8972, 2
      %v9537 = vrot.slane %v9020, 2
      %v9538 = vsel %vm1389, %v9536, %v9537
      %v9539 = vrot.slane %v8973, 2
      %v9540 = vrot.slane %v9021, 2
      %v9541 = vsel %vm1389, %v9539, %v9540
      %v9542 = vrot.slane %v8974, 2
      %v9543 = vrot.slane %v9022, 2
      %v9544 = vsel %vm1389, %v9542, %v9543
      %v9545 = vrot.slane %v8975, 2
      %v9546 = vrot.slane %v9023, 2
      %v9547 = vsel %vm1389, %v9545, %v9546
      %v9548 = vrot.slane %v8976, 2
      %v9549 = vrot.slane %v9024, 2
      %v9550 = vsel %vm1389, %v9548, %v9549
      %v9551 = vrot.slane %v8977, 2
      %v9552 = vrot.slane %v9025, 2
      %v9553 = vsel %vm1389, %v9551, %v9552
      %9554 = vrot.lane.b32.xlu0 %v9508, 32
      %v9555 = vpop.permute.xlu0 %9554
      %9556 = vrot.lane.b32.xlu0 %v9511, 32
      %v9557 = vpop.permute.xlu0 %9556
      %9558 = vrot.lane.b32.xlu0 %v9514, 32
      %v9559 = vpop.permute.xlu0 %9558
      %9560 = vrot.lane.b32.xlu0 %v9517, 32
      %v9561 = vpop.permute.xlu0 %9560
      %9562 = vrot.lane.b32.xlu0 %v9520, 32
      %v9563 = vpop.permute.xlu0 %9562
      %9564 = vrot.lane.b32.xlu0 %v9523, 32
      %v9565 = vpop.permute.xlu0 %9564
      %9566 = vrot.lane.b32.xlu0 %v9526, 32
      %v9567 = vpop.permute.xlu0 %9566
      %9568 = vrot.lane.b32.xlu0 %v9529, 32
      %v9569 = vpop.permute.xlu0 %9568
      %9570 = vrot.lane.b32.xlu0 %v9532, 32
      %v9571 = vpop.permute.xlu0 %9570
      %9572 = vrot.lane.b32.xlu0 %v9535, 32
      %v9573 = vpop.permute.xlu0 %9572
      %9574 = vrot.lane.b32.xlu0 %v9538, 32
      %v9575 = vpop.permute.xlu0 %9574
      %9576 = vrot.lane.b32.xlu0 %v9541, 32
      %v9577 = vpop.permute.xlu0 %9576
      %9578 = vrot.lane.b32.xlu0 %v9544, 32
      %v9579 = vpop.permute.xlu0 %9578
      %9580 = vrot.lane.b32.xlu0 %v9547, 32
      %v9581 = vpop.permute.xlu0 %9580
      %9582 = vrot.lane.b32.xlu0 %v9550, 32
      %v9583 = vpop.permute.xlu0 %9582
      %9584 = vrot.lane.b32.xlu0 %v9553, 32
      %v9585 = vpop.permute.xlu0 %9584
      %v9587 = vsel %vm1470, %v8962, %v9219
      %v9589 = vsel %vm1470, %v8963, %v9221
      %v9591 = vsel %vm1470, %v8964, %v9223
      %v9593 = vsel %vm1470, %v8965, %v9225
      %v9595 = vsel %vm1470, %v8966, %v9227
      %v9597 = vsel %vm1470, %v8967, %v9229
      %v9599 = vsel %vm1470, %v8968, %v9231
      %v9601 = vsel %vm1470, %v8969, %v9233
      %v9603 = vsel %vm1470, %v8970, %v9235
      %v9605 = vsel %vm1470, %v8971, %v9237
      %v9607 = vsel %vm1470, %v8972, %v9239
      %v9609 = vsel %vm1470, %v8973, %v9241
      %v9611 = vsel %vm1470, %v8974, %v9243
      %v9613 = vsel %vm1470, %v8975, %v9245
      %v9615 = vsel %vm1470, %v8976, %v9247
      %v9617 = vsel %vm1470, %v8977, %v9249
      %v9619 = vsel %vm1503, %v9587, %v9299
      %v9621 = vsel %vm1503, %v9589, %v9301
      %v9623 = vsel %vm1503, %v9591, %v9303
      %v9625 = vsel %vm1503, %v9593, %v9305
      %v9627 = vsel %vm1503, %v9595, %v9307
      %v9629 = vsel %vm1503, %v9597, %v9309
      %v9631 = vsel %vm1503, %v9599, %v9311
      %v9633 = vsel %vm1503, %v9601, %v9313
      %v9635 = vsel %vm1503, %v9603, %v9315
      %v9637 = vsel %vm1503, %v9605, %v9317
      %v9639 = vsel %vm1503, %v9607, %v9319
      %v9641 = vsel %vm1503, %v9609, %v9321
      %v9643 = vsel %vm1503, %v9611, %v9323
      %v9645 = vsel %vm1503, %v9613, %v9325
      %v9647 = vsel %vm1503, %v9615, %v9327
      %v9649 = vsel %vm1503, %v9617, %v9329
      %v9651 = vsel %vm1536, %v9619, %v9475
      %v9653 = vsel %vm1536, %v9621, %v9477
      %v9655 = vsel %vm1536, %v9623, %v9479
      %v9657 = vsel %vm1536, %v9625, %v9481
      %v9659 = vsel %vm1536, %v9627, %v9483
      %v9661 = vsel %vm1536, %v9629, %v9485
      %v9663 = vsel %vm1536, %v9631, %v9487
      %v9665 = vsel %vm1536, %v9633, %v9489
      %v9667 = vsel %vm1536, %v9635, %v9491
      %v9669 = vsel %vm1536, %v9637, %v9493
      %v9671 = vsel %vm1536, %v9639, %v9495
      %v9673 = vsel %vm1536, %v9641, %v9497
      %v9675 = vsel %vm1536, %v9643, %v9499
      %v9677 = vsel %vm1536, %v9645, %v9501
      %v9679 = vsel %vm1536, %v9647, %v9503
      %v9681 = vsel %vm1536, %v9649, %v9505
      %v9683 = vsel %vm1569, %v9651, %v9555
      %v9685 = vsel %vm1569, %v9653, %v9557
      %v9687 = vsel %vm1569, %v9655, %v9559
      %v9689 = vsel %vm1569, %v9657, %v9561
      %v9691 = vsel %vm1569, %v9659, %v9563
      %v9693 = vsel %vm1569, %v9661, %v9565
      %v9695 = vsel %vm1569, %v9663, %v9567
      %v9697 = vsel %vm1569, %v9665, %v9569
      %v9699 = vsel %vm1569, %v9667, %v9571
      %v9701 = vsel %vm1569, %v9669, %v9573
      %v9703 = vsel %vm1569, %v9671, %v9575
      %v9705 = vsel %vm1569, %v9673, %v9577
      %v9707 = vsel %vm1569, %v9675, %v9579
      %v9709 = vsel %vm1569, %v9677, %v9581
      %v9711 = vsel %vm1569, %v9679, %v9583
      %v9713 = vsel %vm1569, %v9681, %v9585
      %s9714 = scalar_lea.vmem %s3, 40
      %v9715 = vld [vmem:[%s9714] sm:$0xf]
      %v9716 = vld [vmem:[%s9714 + $0x4] sm:$0xf]
      %v9717 = vld [vmem:[%s9714 + $0x8] sm:$0xf]
      %v9718 = vld [vmem:[%s9714 + $0xc] sm:$0xf]
      %v9719 = vld [vmem:[%s9714 + $0x10] sm:$0xf]
      %v9725 = vunpack.c.l.b16 %v9715
      %v9726 = vunpack.c.l.b16 %v9716
      %v9727 = vunpack.c.l.b16 %v9717
      %v9728 = vunpack.c.l.b16 %v9718
      %v9729 = vunpack.c.l.b16 %v9719
      %v9730 = vpack.c.b16 %v9726, %v9725
      %v9731 = vpack.c.b16 %v9728, %v9727
      %v9732 = vpack.c.b16 %v9729, %v9729
      %v9735 = vsel %vm1622, %v9683, 0
      %v9737 = vsel %vm1622, %v9685, 0
      %v9739 = vsel %vm1622, %v9687, 0
      %v9741 = vsel %vm1622, %v9689, 0
      %v9743 = vsel %vm1622, %v9691, 0
      %v9745 = vsel %vm1622, %v9693, 0
      %v9747 = vsel %vm1622, %v9695, 0
      %v9749 = vsel %vm1622, %v9697, 0
      %v9751 = vsel %vm1622, %v9699, 0
      %v9753 = vsel %vm1622, %v9701, 0
      %v9755 = vsel %vm1622, %v9703, 0
      %v9757 = vsel %vm1622, %v9705, 0
      %v9759 = vsel %vm1622, %v9707, 0
      %v9761 = vsel %vm1622, %v9709, 0
      %v9763 = vsel %vm1622, %v9711, 0
      %v9765 = vsel %vm1622, %v9713, 0
      %v9768 = vsel %vm1655, %v9732, 0
      %9770 = vmatprep.subr.bf16.mxu0 0
      %9771 = vmatpush1.bf16.msra.mxu0 %v9730
      %9772 = vmatprep.subr.bf16.mxu0 0
      %9773 = vmatpush1.bf16.msra.mxu0 %v9731
      %9774 = vmatprep.subr.bf16.mxu0 0
      %9775 = vmatpush1.bf16.msra.mxu0 %v9768
      %9776 = vmatprep.subr.bf16.mxu0 0
      %9777 = vmatpush1.bf16.msra.mxu0 0
      %9778 = vmatprep.subr.bf16.mxu0 0
      %9779 = vmatpush1.bf16.msra.mxu0 0
      %9780 = vmatprep.subr.bf16.mxu0 0
      %9781 = vmatpush1.bf16.msra.mxu0 0
      %9782 = vmatprep.subr.bf16.mxu0 0
      %9783 = vmatpush1.bf16.msra.mxu0 0
      %9784 = vmatprep.subr.bf16.mxu0 0
      %9785 = vmatpush1.bf16.msra.mxu0 0
      %9786 = vmatprep.subr.bf16.mxu0 0
      %9787 = vmatpush1.bf16.msra.mxu0 0
      %9788 = vmatprep.subr.bf16.mxu0 0
      %9789 = vmatpush1.bf16.msra.mxu0 0
      %9790 = vmatprep.subr.bf16.mxu0 0
      %9791 = vmatpush1.bf16.msra.mxu0 0
      %9792 = vmatprep.subr.bf16.mxu0 0
      %9793 = vmatpush1.bf16.msra.mxu0 0
      %9794 = vmatprep.subr.bf16.mxu0 0
      %9795 = vmatpush1.bf16.msra.mxu0 0
      %9796 = vmatprep.subr.bf16.mxu0 0
      %9797 = vmatpush1.bf16.msra.mxu0 0
      %9798 = vmatprep.subr.bf16.mxu0 0
      %9799 = vmatpush1.bf16.msra.mxu0 0
      %9800 = vmatprep.subr.bf16.mxu0 0
      %9801 = vmatpush1.bf16.msra.mxu0 0
      %9802 = vmatprep.mubr.bf16.mxu0 0
      %9803 = vmatmul.mubr.bf16.gmra.mrb[0].mxu0 %v9735
      %v9804 = vpop.f32.mrb[0].mxu0
      %v9805 = vadd.f32 0.0, %v9804
      %v9806 = vpop.f32.mrb[0].mxu0
      %v9807 = vpop.f32.mrb[0].mxu0
      %v9808 = vadd.f32 0.0, %v9807
      %v9809 = vpop.f32.mrb[0].mxu0
      %9810 = vmatprep.mubr.bf16.mxu0 0
      %9811 = vmatmul.mubr.bf16.gmra.mrb[0].mxu0 %v9737
      %v9812 = vpop.f32.mrb[0].mxu0
      %v9813 = vadd.f32 0.0, %v9812
      %v9814 = vpop.f32.mrb[0].mxu0
      %v9815 = vpop.f32.mrb[0].mxu0
      %v9816 = vadd.f32 0.0, %v9815
      %v9817 = vpop.f32.mrb[0].mxu0
      %9818 = vmatprep.mubr.bf16.mxu0 0
      %9819 = vmatmul.mubr.bf16.gmra.mrb[0].mxu0 %v9739
      %v9820 = vpop.f32.mrb[0].mxu0
      %v9821 = vadd.f32 0.0, %v9820
      %v9822 = vpop.f32.mrb[0].mxu0
      %v9823 = vpop.f32.mrb[0].mxu0
      %v9824 = vadd.f32 0.0, %v9823
      %v9825 = vpop.f32.mrb[0].mxu0
      %9826 = vmatprep.mubr.bf16.mxu0 0
      %9827 = vmatmul.mubr.bf16.gmra.mrb[0].mxu0 %v9741
      %v9828 = vpop.f32.mrb[0].mxu0
      %v9829 = vadd.f32 0.0, %v9828
      %v9830 = vpop.f32.mrb[0].mxu0
      %v9831 = vpop.f32.mrb[0].mxu0
      %v9832 = vadd.f32 0.0, %v9831
      %v9833 = vpop.f32.mrb[0].mxu0
      %9834 = vmatprep.mubr.bf16.mxu0 0
      %9835 = vmatmul.mubr.bf16.gmra.mrb[0].mxu0 %v9743
      %v9836 = vpop.f32.mrb[0].mxu0
      %v9837 = vadd.f32 0.0, %v9836
      %v9838 = vpop.f32.mrb[0].mxu0
      %v9839 = vpop.f32.mrb[0].mxu0
      %v9840 = vadd.f32 0.0, %v9839
      %v9841 = vpop.f32.mrb[0].mxu0
      %9842 = vmatprep.mubr.bf16.mxu0 0
      %9843 = vmatmul.mubr.bf16.gmra.mrb[0].mxu0 %v9745
      %v9844 = vpop.f32.mrb[0].mxu0
      %v9845 = vadd.f32 0.0, %v9844
      %v9846 = vpop.f32.mrb[0].mxu0
      %v9847 = vpop.f32.mrb[0].mxu0
      %v9848 = vadd.f32 0.0, %v9847
      %v9849 = vpop.f32.mrb[0].mxu0
      %9850 = vmatprep.mubr.bf16.mxu0 0
      %9851 = vmatmul.mubr.bf16.gmra.mrb[0].mxu0 %v9747
      %v9852 = vpop.f32.mrb[0].mxu0
      %v9853 = vadd.f32 0.0, %v9852
      %v9854 = vpop.f32.mrb[0].mxu0
      %v9855 = vpop.f32.mrb[0].mxu0
      %v9856 = vadd.f32 0.0, %v9855
      %v9857 = vpop.f32.mrb[0].mxu0
      %9858 = vmatprep.mubr.bf16.mxu0 0
      %9859 = vmatmul.mubr.bf16.gmra.mrb[0].mxu0 %v9749
      %v9860 = vpop.f32.mrb[0].mxu0
      %v9861 = vadd.f32 0.0, %v9860
      %v9862 = vpop.f32.mrb[0].mxu0
      %v9863 = vpop.f32.mrb[0].mxu0
      %v9864 = vadd.f32 0.0, %v9863
      %v9865 = vpop.f32.mrb[0].mxu0
      %9866 = vmatprep.mubr.bf16.mxu0 0
      %9867 = vmatmul.mubr.bf16.gmra.mrb[0].mxu0 %v9751
      %v9868 = vpop.f32.mrb[0].mxu0
      %v9869 = vadd.f32 0.0, %v9868
      %v9870 = vpop.f32.mrb[0].mxu0
      %v9871 = vpop.f32.mrb[0].mxu0
      %v9872 = vadd.f32 0.0, %v9871
      %v9873 = vpop.f32.mrb[0].mxu0
      %9874 = vmatprep.mubr.bf16.mxu0 0
      %9875 = vmatmul.mubr.bf16.gmra.mrb[0].mxu0 %v9753
      %v9876 = vpop.f32.mrb[0].mxu0
      %v9877 = vadd.f32 0.0, %v9876
      %v9878 = vpop.f32.mrb[0].mxu0
      %v9879 = vpop.f32.mrb[0].mxu0
      %v9880 = vadd.f32 0.0, %v9879
      %v9881 = vpop.f32.mrb[0].mxu0
      %9882 = vmatprep.mubr.bf16.mxu0 0
      %9883 = vmatmul.mubr.bf16.gmra.mrb[0].mxu0 %v9755
      %v9884 = vpop.f32.mrb[0].mxu0
      %v9885 = vadd.f32 0.0, %v9884
      %v9886 = vpop.f32.mrb[0].mxu0
      %v9887 = vpop.f32.mrb[0].mxu0
      %v9888 = vadd.f32 0.0, %v9887
      %v9889 = vpop.f32.mrb[0].mxu0
      %9890 = vmatprep.mubr.bf16.mxu0 0
      %9891 = vmatmul.mubr.bf16.gmra.mrb[0].mxu0 %v9757
      %v9892 = vpop.f32.mrb[0].mxu0
      %v9893 = vadd.f32 0.0, %v9892
      %v9894 = vpop.f32.mrb[0].mxu0
      %v9895 = vpop.f32.mrb[0].mxu0
      %v9896 = vadd.f32 0.0, %v9895
      %v9897 = vpop.f32.mrb[0].mxu0
      %9898 = vmatprep.mubr.bf16.mxu0 0
      %9899 = vmatmul.mubr.bf16.gmra.mrb[0].mxu0 %v9759
      %v9900 = vpop.f32.mrb[0].mxu0
      %v9901 = vadd.f32 0.0, %v9900
      %v9902 = vpop.f32.mrb[0].mxu0
      %v9903 = vpop.f32.mrb[0].mxu0
      %v9904 = vadd.f32 0.0, %v9903
      %v9905 = vpop.f32.mrb[0].mxu0
      %9906 = vmatprep.mubr.bf16.mxu0 0
      %9907 = vmatmul.mubr.bf16.gmra.mrb[0].mxu0 %v9761
      %v9908 = vpop.f32.mrb[0].mxu0
      %v9909 = vadd.f32 0.0, %v9908
      %v9910 = vpop.f32.mrb[0].mxu0
      %v9911 = vpop.f32.mrb[0].mxu0
      %v9912 = vadd.f32 0.0, %v9911
      %v9913 = vpop.f32.mrb[0].mxu0
      %9914 = vmatprep.mubr.bf16.mxu0 0
      %9915 = vmatmul.mubr.bf16.gmra.mrb[0].mxu0 %v9763
      %v9916 = vpop.f32.mrb[0].mxu0
      %v9917 = vadd.f32 0.0, %v9916
      %v9918 = vpop.f32.mrb[0].mxu0
      %v9919 = vpop.f32.mrb[0].mxu0
      %v9920 = vadd.f32 0.0, %v9919
      %v9921 = vpop.f32.mrb[0].mxu0
      %9922 = vmatprep.mubr.bf16.mxu0 0
      %9923 = vmatmul.mubr.bf16.gmra.mrb[0].mxu0 %v9765
      %v9924 = vpop.f32.mrb[0].mxu0
      %v9925 = vadd.f32 0.0, %v9924
      %v9926 = vpop.f32.mrb[0].mxu0
      %v9927 = vpop.f32.mrb[0].mxu0
      %v9928 = vadd.f32 0.0, %v9927
      %v9929 = vpop.f32.mrb[0].mxu0
      %9930 = vdwg.mxu0
      %v9931 = vadd.f32 %v8818, %v9805
      %v9932 = vadd.f32 %v8819, %v9808
      %v9933 = vadd.f32 %v8820, %v9813
      %v9934 = vadd.f32 %v8821, %v9816
      %v9935 = vadd.f32 %v8822, %v9821
      %v9936 = vadd.f32 %v8823, %v9824
      %v9937 = vadd.f32 %v8824, %v9829
      %v9938 = vadd.f32 %v8825, %v9832
      %v9939 = vadd.f32 %v8826, %v9837
      %v9940 = vadd.f32 %v8827, %v9840
      %v9941 = vadd.f32 %v8828, %v9845
      %v9942 = vadd.f32 %v8829, %v9848
      %v9943 = vadd.f32 %v8830, %v9853
      %v9944 = vadd.f32 %v8831, %v9856
      %v9945 = vadd.f32 %v8832, %v9861
      %v9946 = vadd.f32 %v8833, %v9864
      %v9947 = vadd.f32 %v8834, %v9869
      %v9948 = vadd.f32 %v8835, %v9872
      %v9949 = vadd.f32 %v8836, %v9877
      %v9950 = vadd.f32 %v8837, %v9880
      %v9951 = vadd.f32 %v8838, %v9885
      %v9952 = vadd.f32 %v8839, %v9888
      %v9953 = vadd.f32 %v8840, %v9893
      %v9954 = vadd.f32 %v8841, %v9896
      %v9955 = vadd.f32 %v8842, %v9901
      %v9956 = vadd.f32 %v8843, %v9904
      %v9957 = vadd.f32 %v8844, %v9909
      %v9958 = vadd.f32 %v8845, %v9912
      %v9959 = vadd.f32 %v8846, %v9917
      %v9960 = vadd.f32 %v8847, %v9920
      %v9961 = vadd.f32 %v8848, %v9925
      %v9962 = vadd.f32 %v8849, %v9928
      %s9963 = scalar_lea.vmem [#allocation3], 36
      %v9964 = vld [vmem:[%s9963] sm:$0xf]
      %v9965 = vld [vmem:[%s9963 + $0x4] sm:$0xf]
      %v9966 = vld [vmem:[%s9963 + $0x8] sm:$0x3]
      %v9967 = vld [vmem:[%s9963 + $0xc] sm:$0xf]
      %v9968 = vld [vmem:[%s9963 + $0x10] sm:$0xf]
      %v9969 = vld [vmem:[%s9963 + $0x14] sm:$0x3]
      %v9970 = vld [vmem:[%s9963 + $0x18] sm:$0xf]
      %v9971 = vld [vmem:[%s9963 + $0x1c] sm:$0xf]
      %v9972 = vld [vmem:[%s9963 + $0x20] sm:$0x3]
      %v9973 = vld [vmem:[%s9963 + $0x24] sm:$0xf]
      %v9974 = vld [vmem:[%s9963 + $0x28] sm:$0xf]
      %v9975 = vld [vmem:[%s9963 + $0x2c] sm:$0x3]
      %v9976 = vld [vmem:[%s9963 + $0x30] sm:$0xf]
      %v9977 = vld [vmem:[%s9963 + $0x34] sm:$0xf]
      %v9978 = vld [vmem:[%s9963 + $0x38] sm:$0x3]
      %v9979 = vld [vmem:[%s9963 + $0x3c] sm:$0xf]
      %v9980 = vld [vmem:[%s9963 + $0x40] sm:$0xf]
      %v9981 = vld [vmem:[%s9963 + $0x44] sm:$0x3]
      %v9982 = vld [vmem:[%s9963 + $0x48] sm:$0xf]
      %v9983 = vld [vmem:[%s9963 + $0x4c] sm:$0xf]
      %v9984 = vld [vmem:[%s9963 + $0x50] sm:$0x3]
      %v9985 = vld [vmem:[%s9963 + $0x54] sm:$0xf]
      %v9986 = vld [vmem:[%s9963 + $0x58] sm:$0xf]
      %v9987 = vld [vmem:[%s9963 + $0x5c] sm:$0x3]
      %v9988 = vld [vmem:[%s9963 + $0x60] sm:$0xf]
      %v9989 = vld [vmem:[%s9963 + $0x64] sm:$0xf]
      %v9990 = vld [vmem:[%s9963 + $0x68] sm:$0x3]
      %v9991 = vld [vmem:[%s9963 + $0x6c] sm:$0xf]
      %v9992 = vld [vmem:[%s9963 + $0x70] sm:$0xf]
      %v9993 = vld [vmem:[%s9963 + $0x74] sm:$0x3]
      %v9994 = vld [vmem:[%s9963 + $0x78] sm:$0xf]
      %v9995 = vld [vmem:[%s9963 + $0x7c] sm:$0xf]
      %v9996 = vld [vmem:[%s9963 + $0x80] sm:$0x3]
      %v9997 = vld [vmem:[%s9963 + $0x84] sm:$0xf]
      %v9998 = vld [vmem:[%s9963 + $0x88] sm:$0xf]
      %v9999 = vld [vmem:[%s9963 + $0x8c] sm:$0x3]
      %v10000 = vld [vmem:[%s9963 + $0x90] sm:$0xf]
      %v10001 = vld [vmem:[%s9963 + $0x94] sm:$0xf]
      %v10002 = vld [vmem:[%s9963 + $0x98] sm:$0x3]
      %v10003 = vld [vmem:[%s9963 + $0x9c] sm:$0xf]
      %v10004 = vld [vmem:[%s9963 + $0xa0] sm:$0xf]
      %v10005 = vld [vmem:[%s9963 + $0xa4] sm:$0x3]
      %v10006 = vld [vmem:[%s9963 + $0xa8] sm:$0xf]
      %v10007 = vld [vmem:[%s9963 + $0xac] sm:$0xf]
      %v10008 = vld [vmem:[%s9963 + $0xb0] sm:$0x3]
      %v10009 = vld [vmem:[%s9963 + $0xb4] sm:$0xf]
      %v10010 = vld [vmem:[%s9963 + $0xb8] sm:$0xf]
      %v10011 = vld [vmem:[%s9963 + $0xbc] sm:$0x3]
      %v10044 = vunpack.c.l.b16 %v9964
      %v10045 = vunpack.c.l.b16 %v9965
      %v10046 = vunpack.c.l.b16 %v9967
      %v10047 = vunpack.c.l.b16 %v9968
      %v10048 = vunpack.c.l.b16 %v9970
      %v10049 = vunpack.c.l.b16 %v9971
      %v10050 = vunpack.c.l.b16 %v9973
      %v10051 = vunpack.c.l.b16 %v9974
      %v10052 = vunpack.c.l.b16 %v9976
      %v10053 = vunpack.c.l.b16 %v9977
      %v10054 = vunpack.c.l.b16 %v9979
      %v10055 = vunpack.c.l.b16 %v9980
      %v10056 = vunpack.c.l.b16 %v9982
      %v10057 = vunpack.c.l.b16 %v9983
      %v10058 = vunpack.c.l.b16 %v9985
      %v10059 = vunpack.c.l.b16 %v9986
      %v10060 = vunpack.c.l.b16 %v9988
      %v10061 = vunpack.c.l.b16 %v9989
      %v10062 = vunpack.c.l.b16 %v9991
      %v10063 = vunpack.c.l.b16 %v9992
      %v10064 = vunpack.c.l.b16 %v9994
      %v10065 = vunpack.c.l.b16 %v9995
      %v10066 = vunpack.c.l.b16 %v9997
      %v10067 = vunpack.c.l.b16 %v9998
      %v10068 = vunpack.c.l.b16 %v10000
      %v10069 = vunpack.c.l.b16 %v10001
      %v10070 = vunpack.c.l.b16 %v10003
      %v10071 = vunpack.c.l.b16 %v10004
      %v10072 = vunpack.c.l.b16 %v10006
      %v10073 = vunpack.c.l.b16 %v10007
      %v10074 = vunpack.c.l.b16 %v10009
      %v10075 = vunpack.c.l.b16 %v10010
      %v10076 = vpack.c.b16 %v10045, %v10044
      %v10077 = vpack.c.b16 %v10047, %v10046
      %v10078 = vpack.c.b16 %v10049, %v10048
      %v10079 = vpack.c.b16 %v10051, %v10050
      %v10080 = vpack.c.b16 %v10053, %v10052
      %v10081 = vpack.c.b16 %v10055, %v10054
      %v10082 = vpack.c.b16 %v10057, %v10056
      %v10083 = vpack.c.b16 %v10059, %v10058
      %v10084 = vpack.c.b16 %v10061, %v10060
      %v10085 = vpack.c.b16 %v10063, %v10062
      %v10086 = vpack.c.b16 %v10065, %v10064
      %v10087 = vpack.c.b16 %v10067, %v10066
      %v10088 = vpack.c.b16 %v10069, %v10068
      %v10089 = vpack.c.b16 %v10071, %v10070
      %v10090 = vpack.c.b16 %v10073, %v10072
      %v10091 = vpack.c.b16 %v10075, %v10074
      %v10108 = vunpack.c.l.b16 %v9966
      %v10109 = vunpack.c.l.b16 %v9969
      %v10110 = vunpack.c.l.b16 %v9972
      %v10111 = vunpack.c.l.b16 %v9975
      %v10112 = vunpack.c.l.b16 %v9978
      %v10113 = vunpack.c.l.b16 %v9981
      %v10114 = vunpack.c.l.b16 %v9984
      %v10115 = vunpack.c.l.b16 %v9987
      %v10116 = vunpack.c.l.b16 %v9990
      %v10117 = vunpack.c.l.b16 %v9993
      %v10118 = vunpack.c.l.b16 %v9996
      %v10119 = vunpack.c.l.b16 %v9999
      %v10120 = vunpack.c.l.b16 %v10002
      %v10121 = vunpack.c.l.b16 %v10005
      %v10122 = vunpack.c.l.b16 %v10008
      %v10123 = vunpack.c.l.b16 %v10011
      %v10124 = vpack.c.b16 %v10108, %v10108
      %v10125 = vpack.c.b16 %v10109, %v10109
      %v10126 = vpack.c.b16 %v10110, %v10110
      %v10127 = vpack.c.b16 %v10111, %v10111
      %v10128 = vpack.c.b16 %v10112, %v10112
      %v10129 = vpack.c.b16 %v10113, %v10113
      %v10130 = vpack.c.b16 %v10114, %v10114
      %v10131 = vpack.c.b16 %v10115, %v10115
      %v10132 = vpack.c.b16 %v10116, %v10116
      %v10133 = vpack.c.b16 %v10117, %v10117
      %v10134 = vpack.c.b16 %v10118, %v10118
      %v10135 = vpack.c.b16 %v10119, %v10119
      %v10136 = vpack.c.b16 %v10120, %v10120
      %v10137 = vpack.c.b16 %v10121, %v10121
      %v10138 = vpack.c.b16 %v10122, %v10122
      %v10139 = vpack.c.b16 %v10123, %v10123
      %v10141 = vshrl.u32 %v10076, 16
      %v10143 = vshll.u32 %v10076, 16
      %v10145 = vrot.slane %v10143, 1
      %v10146 = vor.u32 %v10141, %v10145
      %v10148 = vshll.u32 %v10124, 16
      %v10150 = vrot.slane %v10148, 1
      %v10151 = vsel %vm906, %v10146, %v10150
      %v10153 = vshrl.u32 %v10077, 16
      %v10155 = vshll.u32 %v10077, 16
      %v10157 = vrot.slane %v10155, 1
      %v10158 = vor.u32 %v10153, %v10157
      %v10160 = vshll.u32 %v10125, 16
      %v10162 = vrot.slane %v10160, 1
      %v10163 = vsel %vm906, %v10158, %v10162
      %v10165 = vshrl.u32 %v10078, 16
      %v10167 = vshll.u32 %v10078, 16
      %v10169 = vrot.slane %v10167, 1
      %v10170 = vor.u32 %v10165, %v10169
      %v10172 = vshll.u32 %v10126, 16
      %v10174 = vrot.slane %v10172, 1
      %v10175 = vsel %vm906, %v10170, %v10174
      %v10177 = vshrl.u32 %v10079, 16
      %v10179 = vshll.u32 %v10079, 16
      %v10181 = vrot.slane %v10179, 1
      %v10182 = vor.u32 %v10177, %v10181
      %v10184 = vshll.u32 %v10127, 16
      %v10186 = vrot.slane %v10184, 1
      %v10187 = vsel %vm906, %v10182, %v10186
      %v10189 = vshrl.u32 %v10080, 16
      %v10191 = vshll.u32 %v10080, 16
      %v10193 = vrot.slane %v10191, 1
      %v10194 = vor.u32 %v10189, %v10193
      %v10196 = vshll.u32 %v10128, 16
      %v10198 = vrot.slane %v10196, 1
      %v10199 = vsel %vm906, %v10194, %v10198
      %v10201 = vshrl.u32 %v10081, 16
      %v10203 = vshll.u32 %v10081, 16
      %v10205 = vrot.slane %v10203, 1
      %v10206 = vor.u32 %v10201, %v10205
      %v10208 = vshll.u32 %v10129, 16
      %v10210 = vrot.slane %v10208, 1
      %v10211 = vsel %vm906, %v10206, %v10210
      %v10213 = vshrl.u32 %v10082, 16
      %v10215 = vshll.u32 %v10082, 16
      %v10217 = vrot.slane %v10215, 1
      %v10218 = vor.u32 %v10213, %v10217
      %v10220 = vshll.u32 %v10130, 16
      %v10222 = vrot.slane %v10220, 1
      %v10223 = vsel %vm906, %v10218, %v10222
      %v10225 = vshrl.u32 %v10083, 16
      %v10227 = vshll.u32 %v10083, 16
      %v10229 = vrot.slane %v10227, 1
      %v10230 = vor.u32 %v10225, %v10229
      %v10232 = vshll.u32 %v10131, 16
      %v10234 = vrot.slane %v10232, 1
      %v10235 = vsel %vm906, %v10230, %v10234
      %v10237 = vshrl.u32 %v10084, 16
      %v10239 = vshll.u32 %v10084, 16
      %v10241 = vrot.slane %v10239, 1
      %v10242 = vor.u32 %v10237, %v10241
      %v10244 = vshll.u32 %v10132, 16
      %v10246 = vrot.slane %v10244, 1
      %v10247 = vsel %vm906, %v10242, %v10246
      %v10249 = vshrl.u32 %v10085, 16
      %v10251 = vshll.u32 %v10085, 16
      %v10253 = vrot.slane %v10251, 1
      %v10254 = vor.u32 %v10249, %v10253
      %v10256 = vshll.u32 %v10133, 16
      %v10258 = vrot.slane %v10256, 1
      %v10259 = vsel %vm906, %v10254, %v10258
      %v10261 = vshrl.u32 %v10086, 16
      %v10263 = vshll.u32 %v10086, 16
      %v10265 = vrot.slane %v10263, 1
      %v10266 = vor.u32 %v10261, %v10265
      %v10268 = vshll.u32 %v10134, 16
      %v10270 = vrot.slane %v10268, 1
      %v10271 = vsel %vm906, %v10266, %v10270
      %v10273 = vshrl.u32 %v10087, 16
      %v10275 = vshll.u32 %v10087, 16
      %v10277 = vrot.slane %v10275, 1
      %v10278 = vor.u32 %v10273, %v10277
      %v10280 = vshll.u32 %v10135, 16
      %v10282 = vrot.slane %v10280, 1
      %v10283 = vsel %vm906, %v10278, %v10282
      %v10285 = vshrl.u32 %v10088, 16
      %v10287 = vshll.u32 %v10088, 16
      %v10289 = vrot.slane %v10287, 1
      %v10290 = vor.u32 %v10285, %v10289
      %v10292 = vshll.u32 %v10136, 16
      %v10294 = vrot.slane %v10292, 1
      %v10295 = vsel %vm906, %v10290, %v10294
      %v10297 = vshrl.u32 %v10089, 16
      %v10299 = vshll.u32 %v10089, 16
      %v10301 = vrot.slane %v10299, 1
      %v10302 = vor.u32 %v10297, %v10301
      %v10304 = vshll.u32 %v10137, 16
      %v10306 = vrot.slane %v10304, 1
      %v10307 = vsel %vm906, %v10302, %v10306
      %v10309 = vshrl.u32 %v10090, 16
      %v10311 = vshll.u32 %v10090, 16
      %v10313 = vrot.slane %v10311, 1
      %v10314 = vor.u32 %v10309, %v10313
      %v10316 = vshll.u32 %v10138, 16
      %v10318 = vrot.slane %v10316, 1
      %v10319 = vsel %vm906, %v10314, %v10318
      %v10321 = vshrl.u32 %v10091, 16
      %v10323 = vshll.u32 %v10091, 16
      %v10325 = vrot.slane %v10323, 1
      %v10326 = vor.u32 %v10321, %v10325
      %v10328 = vshll.u32 %v10139, 16
      %v10330 = vrot.slane %v10328, 1
      %v10331 = vsel %vm906, %v10326, %v10330
      %10332 = vrot.lane.b32.xlu0 %v10151, 8
      %v10333 = vpop.permute.xlu0 %10332
      %10334 = vrot.lane.b32.xlu0 %v10163, 8
      %v10335 = vpop.permute.xlu0 %10334
      %10336 = vrot.lane.b32.xlu0 %v10175, 8
      %v10337 = vpop.permute.xlu0 %10336
      %10338 = vrot.lane.b32.xlu0 %v10187, 8
      %v10339 = vpop.permute.xlu0 %10338
      %10340 = vrot.lane.b32.xlu0 %v10199, 8
      %v10341 = vpop.permute.xlu0 %10340
      %10342 = vrot.lane.b32.xlu0 %v10211, 8
      %v10343 = vpop.permute.xlu0 %10342
      %10344 = vrot.lane.b32.xlu0 %v10223, 8
      %v10345 = vpop.permute.xlu0 %10344
      %10346 = vrot.lane.b32.xlu0 %v10235, 8
      %v10347 = vpop.permute.xlu0 %10346
      %10348 = vrot.lane.b32.xlu0 %v10247, 8
      %v10349 = vpop.permute.xlu0 %10348
      %10350 = vrot.lane.b32.xlu0 %v10259, 8
      %v10351 = vpop.permute.xlu0 %10350
      %10352 = vrot.lane.b32.xlu0 %v10271, 8
      %v10353 = vpop.permute.xlu0 %10352
      %10354 = vrot.lane.b32.xlu0 %v10283, 8
      %v10355 = vpop.permute.xlu0 %10354
      %10356 = vrot.lane.b32.xlu0 %v10295, 8
      %v10357 = vpop.permute.xlu0 %10356
      %10358 = vrot.lane.b32.xlu0 %v10307, 8
      %v10359 = vpop.permute.xlu0 %10358
      %10360 = vrot.lane.b32.xlu0 %v10319, 8
      %v10361 = vpop.permute.xlu0 %10360
      %10362 = vrot.lane.b32.xlu0 %v10331, 8
      %v10363 = vpop.permute.xlu0 %10362
      %v10364 = vrot.slane %v10076, 1
      %v10365 = vrot.slane %v10124, 1
      %v10366 = vsel %vm1131, %v10364, %v10365
      %v10367 = vrot.slane %v10077, 1
      %v10368 = vrot.slane %v10125, 1
      %v10369 = vsel %vm1131, %v10367, %v10368
      %v10370 = vrot.slane %v10078, 1
      %v10371 = vrot.slane %v10126, 1
      %v10372 = vsel %vm1131, %v10370, %v10371
      %v10373 = vrot.slane %v10079, 1
      %v10374 = vrot.slane %v10127, 1
      %v10375 = vsel %vm1131, %v10373, %v10374
      %v10376 = vrot.slane %v10080, 1
      %v10377 = vrot.slane %v10128, 1
      %v10378 = vsel %vm1131, %v10376, %v10377
      %v10379 = vrot.slane %v10081, 1
      %v10380 = vrot.slane %v10129, 1
      %v10381 = vsel %vm1131, %v10379, %v10380
      %v10382 = vrot.slane %v10082, 1
      %v10383 = vrot.slane %v10130, 1
      %v10384 = vsel %vm1131, %v10382, %v10383
      %v10385 = vrot.slane %v10083, 1
      %v10386 = vrot.slane %v10131, 1
      %v10387 = vsel %vm1131, %v10385, %v10386
      %v10388 = vrot.slane %v10084, 1
      %v10389 = vrot.slane %v10132, 1
      %v10390 = vsel %vm1131, %v10388, %v10389
      %v10391 = vrot.slane %v10085, 1
      %v10392 = vrot.slane %v10133, 1
      %v10393 = vsel %vm1131, %v10391, %v10392
      %v10394 = vrot.slane %v10086, 1
      %v10395 = vrot.slane %v10134, 1
      %v10396 = vsel %vm1131, %v10394, %v10395
      %v10397 = vrot.slane %v10087, 1
      %v10398 = vrot.slane %v10135, 1
      %v10399 = vsel %vm1131, %v10397, %v10398
      %v10400 = vrot.slane %v10088, 1
      %v10401 = vrot.slane %v10136, 1
      %v10402 = vsel %vm1131, %v10400, %v10401
      %v10403 = vrot.slane %v10089, 1
      %v10404 = vrot.slane %v10137, 1
      %v10405 = vsel %vm1131, %v10403, %v10404
      %v10406 = vrot.slane %v10090, 1
      %v10407 = vrot.slane %v10138, 1
      %v10408 = vsel %vm1131, %v10406, %v10407
      %v10409 = vrot.slane %v10091, 1
      %v10410 = vrot.slane %v10139, 1
      %v10411 = vsel %vm1131, %v10409, %v10410
      %10412 = vrot.lane.b32.xlu0 %v10366, 16
      %v10413 = vpop.permute.xlu0 %10412
      %10414 = vrot.lane.b32.xlu0 %v10369, 16
      %v10415 = vpop.permute.xlu0 %10414
      %10416 = vrot.lane.b32.xlu0 %v10372, 16
      %v10417 = vpop.permute.xlu0 %10416
      %10418 = vrot.lane.b32.xlu0 %v10375, 16
      %v10419 = vpop.permute.xlu0 %10418
      %10420 = vrot.lane.b32.xlu0 %v10378, 16
      %v10421 = vpop.permute.xlu0 %10420
      %10422 = vrot.lane.b32.xlu0 %v10381, 16
      %v10423 = vpop.permute.xlu0 %10422
      %10424 = vrot.lane.b32.xlu0 %v10384, 16
      %v10425 = vpop.permute.xlu0 %10424
      %10426 = vrot.lane.b32.xlu0 %v10387, 16
      %v10427 = vpop.permute.xlu0 %10426
      %10428 = vrot.lane.b32.xlu0 %v10390, 16
      %v10429 = vpop.permute.xlu0 %10428
      %10430 = vrot.lane.b32.xlu0 %v10393, 16
      %v10431 = vpop.permute.xlu0 %10430
      %10432 = vrot.lane.b32.xlu0 %v10396, 16
      %v10433 = vpop.permute.xlu0 %10432
      %10434 = vrot.lane.b32.xlu0 %v10399, 16
      %v10435 = vpop.permute.xlu0 %10434
      %10436 = vrot.lane.b32.xlu0 %v10402, 16
      %v10437 = vpop.permute.xlu0 %10436
      %10438 = vrot.lane.b32.xlu0 %v10405, 16
      %v10439 = vpop.permute.xlu0 %10438
      %10440 = vrot.lane.b32.xlu0 %v10408, 16
      %v10441 = vpop.permute.xlu0 %10440
      %10442 = vrot.lane.b32.xlu0 %v10411, 16
      %v10443 = vpop.permute.xlu0 %10442
      %v10444 = vrot.slane %v10141, 1
      %v10445 = vrot.slane %v10143, 2
      %v10446 = vor.u32 %v10444, %v10445
      %v10447 = vshrl.u32 %v10124, 16
      %v10449 = vrot.slane %v10447, 1
      %v10450 = vrot.slane %v10148, 2
      %v10451 = vor.u32 %v10449, %v10450
      %v10452 = vsel %vm1212, %v10446, %v10451
      %v10453 = vrot.slane %v10153, 1
      %v10454 = vrot.slane %v10155, 2
      %v10455 = vor.u32 %v10453, %v10454
      %v10456 = vshrl.u32 %v10125, 16
      %v10458 = vrot.slane %v10456, 1
      %v10459 = vrot.slane %v10160, 2
      %v10460 = vor.u32 %v10458, %v10459
      %v10461 = vsel %vm1212, %v10455, %v10460
      %v10462 = vrot.slane %v10165, 1
      %v10463 = vrot.slane %v10167, 2
      %v10464 = vor.u32 %v10462, %v10463
      %v10465 = vshrl.u32 %v10126, 16
      %v10467 = vrot.slane %v10465, 1
      %v10468 = vrot.slane %v10172, 2
      %v10469 = vor.u32 %v10467, %v10468
      %v10470 = vsel %vm1212, %v10464, %v10469
      %v10471 = vrot.slane %v10177, 1
      %v10472 = vrot.slane %v10179, 2
      %v10473 = vor.u32 %v10471, %v10472
      %v10474 = vshrl.u32 %v10127, 16
      %v10476 = vrot.slane %v10474, 1
      %v10477 = vrot.slane %v10184, 2
      %v10478 = vor.u32 %v10476, %v10477
      %v10479 = vsel %vm1212, %v10473, %v10478
      %v10480 = vrot.slane %v10189, 1
      %v10481 = vrot.slane %v10191, 2
      %v10482 = vor.u32 %v10480, %v10481
      %v10483 = vshrl.u32 %v10128, 16
      %v10485 = vrot.slane %v10483, 1
      %v10486 = vrot.slane %v10196, 2
      %v10487 = vor.u32 %v10485, %v10486
      %v10488 = vsel %vm1212, %v10482, %v10487
      %v10489 = vrot.slane %v10201, 1
      %v10490 = vrot.slane %v10203, 2
      %v10491 = vor.u32 %v10489, %v10490
      %v10492 = vshrl.u32 %v10129, 16
      %v10494 = vrot.slane %v10492, 1
      %v10495 = vrot.slane %v10208, 2
      %v10496 = vor.u32 %v10494, %v10495
      %v10497 = vsel %vm1212, %v10491, %v10496
      %v10498 = vrot.slane %v10213, 1
      %v10499 = vrot.slane %v10215, 2
      %v10500 = vor.u32 %v10498, %v10499
      %v10501 = vshrl.u32 %v10130, 16
      %v10503 = vrot.slane %v10501, 1
      %v10504 = vrot.slane %v10220, 2
      %v10505 = vor.u32 %v10503, %v10504
      %v10506 = vsel %vm1212, %v10500, %v10505
      %v10507 = vrot.slane %v10225, 1
      %v10508 = vrot.slane %v10227, 2
      %v10509 = vor.u32 %v10507, %v10508
      %v10510 = vshrl.u32 %v10131, 16
      %v10512 = vrot.slane %v10510, 1
      %v10513 = vrot.slane %v10232, 2
      %v10514 = vor.u32 %v10512, %v10513
      %v10515 = vsel %vm1212, %v10509, %v10514
      %v10516 = vrot.slane %v10237, 1
      %v10517 = vrot.slane %v10239, 2
      %v10518 = vor.u32 %v10516, %v10517
      %v10519 = vshrl.u32 %v10132, 16
      %v10521 = vrot.slane %v10519, 1
      %v10522 = vrot.slane %v10244, 2
      %v10523 = vor.u32 %v10521, %v10522
      %v10524 = vsel %vm1212, %v10518, %v10523
      %v10525 = vrot.slane %v10249, 1
      %v10526 = vrot.slane %v10251, 2
      %v10527 = vor.u32 %v10525, %v10526
      %v10528 = vshrl.u32 %v10133, 16
      %v10530 = vrot.slane %v10528, 1
      %v10531 = vrot.slane %v10256, 2
      %v10532 = vor.u32 %v10530, %v10531
      %v10533 = vsel %vm1212, %v10527, %v10532
      %v10534 = vrot.slane %v10261, 1
      %v10535 = vrot.slane %v10263, 2
      %v10536 = vor.u32 %v10534, %v10535
      %v10537 = vshrl.u32 %v10134, 16
      %v10539 = vrot.slane %v10537, 1
      %v10540 = vrot.slane %v10268, 2
      %v10541 = vor.u32 %v10539, %v10540
      %v10542 = vsel %vm1212, %v10536, %v10541
      %v10543 = vrot.slane %v10273, 1
      %v10544 = vrot.slane %v10275, 2
      %v10545 = vor.u32 %v10543, %v10544
      %v10546 = vshrl.u32 %v10135, 16
      %v10548 = vrot.slane %v10546, 1
      %v10549 = vrot.slane %v10280, 2
      %v10550 = vor.u32 %v10548, %v10549
      %v10551 = vsel %vm1212, %v10545, %v10550
      %v10552 = vrot.slane %v10285, 1
      %v10553 = vrot.slane %v10287, 2
      %v10554 = vor.u32 %v10552, %v10553
      %v10555 = vshrl.u32 %v10136, 16
      %v10557 = vrot.slane %v10555, 1
      %v10558 = vrot.slane %v10292, 2
      %v10559 = vor.u32 %v10557, %v10558
      %v10560 = vsel %vm1212, %v10554, %v10559
      %v10561 = vrot.slane %v10297, 1
      %v10562 = vrot.slane %v10299, 2
      %v10563 = vor.u32 %v10561, %v10562
      %v10564 = vshrl.u32 %v10137, 16
      %v10566 = vrot.slane %v10564, 1
      %v10567 = vrot.slane %v10304, 2
      %v10568 = vor.u32 %v10566, %v10567
      %v10569 = vsel %vm1212, %v10563, %v10568
      %v10570 = vrot.slane %v10309, 1
      %v10571 = vrot.slane %v10311, 2
      %v10572 = vor.u32 %v10570, %v10571
      %v10573 = vshrl.u32 %v10138, 16
      %v10575 = vrot.slane %v10573, 1
      %v10576 = vrot.slane %v10316, 2
      %v10577 = vor.u32 %v10575, %v10576
      %v10578 = vsel %vm1212, %v10572, %v10577
      %v10579 = vrot.slane %v10321, 1
      %v10580 = vrot.slane %v10323, 2
      %v10581 = vor.u32 %v10579, %v10580
      %v10582 = vshrl.u32 %v10139, 16
      %v10584 = vrot.slane %v10582, 1
      %v10585 = vrot.slane %v10328, 2
      %v10586 = vor.u32 %v10584, %v10585
      %v10587 = vsel %vm1212, %v10581, %v10586
      %10588 = vrot.lane.b32.xlu0 %v10452, 24
      %v10589 = vpop.permute.xlu0 %10588
      %10590 = vrot.lane.b32.xlu0 %v10461, 24
      %v10591 = vpop.permute.xlu0 %10590
      %10592 = vrot.lane.b32.xlu0 %v10470, 24
      %v10593 = vpop.permute.xlu0 %10592
      %10594 = vrot.lane.b32.xlu0 %v10479, 24
      %v10595 = vpop.permute.xlu0 %10594
      %10596 = vrot.lane.b32.xlu0 %v10488, 24
      %v10597 = vpop.permute.xlu0 %10596
      %10598 = vrot.lane.b32.xlu0 %v10497, 24
      %v10599 = vpop.permute.xlu0 %10598
      %10600 = vrot.lane.b32.xlu0 %v10506, 24
      %v10601 = vpop.permute.xlu0 %10600
      %10602 = vrot.lane.b32.xlu0 %v10515, 24
      %v10603 = vpop.permute.xlu0 %10602
      %10604 = vrot.lane.b32.xlu0 %v10524, 24
      %v10605 = vpop.permute.xlu0 %10604
      %10606 = vrot.lane.b32.xlu0 %v10533, 24
      %v10607 = vpop.permute.xlu0 %10606
      %10608 = vrot.lane.b32.xlu0 %v10542, 24
      %v10609 = vpop.permute.xlu0 %10608
      %10610 = vrot.lane.b32.xlu0 %v10551, 24
      %v10611 = vpop.permute.xlu0 %10610
      %10612 = vrot.lane.b32.xlu0 %v10560, 24
      %v10613 = vpop.permute.xlu0 %10612
      %10614 = vrot.lane.b32.xlu0 %v10569, 24
      %v10615 = vpop.permute.xlu0 %10614
      %10616 = vrot.lane.b32.xlu0 %v10578, 24
      %v10617 = vpop.permute.xlu0 %10616
      %10618 = vrot.lane.b32.xlu0 %v10587, 24
      %v10619 = vpop.permute.xlu0 %10618
      %v10620 = vrot.slane %v10076, 2
      %v10621 = vrot.slane %v10124, 2
      %v10622 = vsel %vm1389, %v10620, %v10621
      %v10623 = vrot.slane %v10077, 2
      %v10624 = vrot.slane %v10125, 2
      %v10625 = vsel %vm1389, %v10623, %v10624
      %v10626 = vrot.slane %v10078, 2
      %v10627 = vrot.slane %v10126, 2
      %v10628 = vsel %vm1389, %v10626, %v10627
      %v10629 = vrot.slane %v10079, 2
      %v10630 = vrot.slane %v10127, 2
      %v10631 = vsel %vm1389, %v10629, %v10630
      %v10632 = vrot.slane %v10080, 2
      %v10633 = vrot.slane %v10128, 2
      %v10634 = vsel %vm1389, %v10632, %v10633
      %v10635 = vrot.slane %v10081, 2
      %v10636 = vrot.slane %v10129, 2
      %v10637 = vsel %vm1389, %v10635, %v10636
      %v10638 = vrot.slane %v10082, 2
      %v10639 = vrot.slane %v10130, 2
      %v10640 = vsel %vm1389, %v10638, %v10639
      %v10641 = vrot.slane %v10083, 2
      %v10642 = vrot.slane %v10131, 2
      %v10643 = vsel %vm1389, %v10641, %v10642
      %v10644 = vrot.slane %v10084, 2
      %v10645 = vrot.slane %v10132, 2
      %v10646 = vsel %vm1389, %v10644, %v10645
      %v10647 = vrot.slane %v10085, 2
      %v10648 = vrot.slane %v10133, 2
      %v10649 = vsel %vm1389, %v10647, %v10648
      %v10650 = vrot.slane %v10086, 2
      %v10651 = vrot.slane %v10134, 2
      %v10652 = vsel %vm1389, %v10650, %v10651
      %v10653 = vrot.slane %v10087, 2
      %v10654 = vrot.slane %v10135, 2
      %v10655 = vsel %vm1389, %v10653, %v10654
      %v10656 = vrot.slane %v10088, 2
      %v10657 = vrot.slane %v10136, 2
      %v10658 = vsel %vm1389, %v10656, %v10657
      %v10659 = vrot.slane %v10089, 2
      %v10660 = vrot.slane %v10137, 2
      %v10661 = vsel %vm1389, %v10659, %v10660
      %v10662 = vrot.slane %v10090, 2
      %v10663 = vrot.slane %v10138, 2
      %v10664 = vsel %vm1389, %v10662, %v10663
      %v10665 = vrot.slane %v10091, 2
      %v10666 = vrot.slane %v10139, 2
      %v10667 = vsel %vm1389, %v10665, %v10666
      %10668 = vrot.lane.b32.xlu0 %v10622, 32
      %v10669 = vpop.permute.xlu0 %10668
      %10670 = vrot.lane.b32.xlu0 %v10625, 32
      %v10671 = vpop.permute.xlu0 %10670
      %10672 = vrot.lane.b32.xlu0 %v10628, 32
      %v10673 = vpop.permute.xlu0 %10672
      %10674 = vrot.lane.b32.xlu0 %v10631, 32
      %v10675 = vpop.permute.xlu0 %10674
      %10676 = vrot.lane.b32.xlu0 %v10634, 32
      %v10677 = vpop.permute.xlu0 %10676
      %10678 = vrot.lane.b32.xlu0 %v10637, 32
      %v10679 = vpop.permute.xlu0 %10678
      %10680 = vrot.lane.b32.xlu0 %v10640, 32
      %v10681 = vpop.permute.xlu0 %10680
      %10682 = vrot.lane.b32.xlu0 %v10643, 32
      %v10683 = vpop.permute.xlu0 %10682
      %10684 = vrot.lane.b32.xlu0 %v10646, 32
      %v10685 = vpop.permute.xlu0 %10684
      %10686 = vrot.lane.b32.xlu0 %v10649, 32
      %v10687 = vpop.permute.xlu0 %10686
      %10688 = vrot.lane.b32.xlu0 %v10652, 32
      %v10689 = vpop.permute.xlu0 %10688
      %10690 = vrot.lane.b32.xlu0 %v10655, 32
      %v10691 = vpop.permute.xlu0 %10690
      %10692 = vrot.lane.b32.xlu0 %v10658, 32
      %v10693 = vpop.permute.xlu0 %10692
      %10694 = vrot.lane.b32.xlu0 %v10661, 32
      %v10695 = vpop.permute.xlu0 %10694
      %10696 = vrot.lane.b32.xlu0 %v10664, 32
      %v10697 = vpop.permute.xlu0 %10696
      %10698 = vrot.lane.b32.xlu0 %v10667, 32
      %v10699 = vpop.permute.xlu0 %10698
      %v10701 = vsel %vm1470, %v10076, %v10333
      %v10703 = vsel %vm1470, %v10077, %v10335
      %v10705 = vsel %vm1470, %v10078, %v10337
      %v10707 = vsel %vm1470, %v10079, %v10339
      %v10709 = vsel %vm1470, %v10080, %v10341
      %v10711 = vsel %vm1470, %v10081, %v10343
      %v10713 = vsel %vm1470, %v10082, %v10345
      %v10715 = vsel %vm1470, %v10083, %v10347
      %v10717 = vsel %vm1470, %v10084, %v10349
      %v10719 = vsel %vm1470, %v10085, %v10351
      %v10721 = vsel %vm1470, %v10086, %v10353
      %v10723 = vsel %vm1470, %v10087, %v10355
      %v10725 = vsel %vm1470, %v10088, %v10357
      %v10727 = vsel %vm1470, %v10089, %v10359
      %v10729 = vsel %vm1470, %v10090, %v10361
      %v10731 = vsel %vm1470, %v10091, %v10363
      %v10733 = vsel %vm1503, %v10701, %v10413
      %v10735 = vsel %vm1503, %v10703, %v10415
      %v10737 = vsel %vm1503, %v10705, %v10417
      %v10739 = vsel %vm1503, %v10707, %v10419
      %v10741 = vsel %vm1503, %v10709, %v10421
      %v10743 = vsel %vm1503, %v10711, %v10423
      %v10745 = vsel %vm1503, %v10713, %v10425
      %v10747 = vsel %vm1503, %v10715, %v10427
      %v10749 = vsel %vm1503, %v10717, %v10429
      %v10751 = vsel %vm1503, %v10719, %v10431
      %v10753 = vsel %vm1503, %v10721, %v10433
      %v10755 = vsel %vm1503, %v10723, %v10435
      %v10757 = vsel %vm1503, %v10725, %v10437
      %v10759 = vsel %vm1503, %v10727, %v10439
      %v10761 = vsel %vm1503, %v10729, %v10441
      %v10763 = vsel %vm1503, %v10731, %v10443
      %v10765 = vsel %vm1536, %v10733, %v10589
      %v10767 = vsel %vm1536, %v10735, %v10591
      %v10769 = vsel %vm1536, %v10737, %v10593
      %v10771 = vsel %vm1536, %v10739, %v10595
      %v10773 = vsel %vm1536, %v10741, %v10597
      %v10775 = vsel %vm1536, %v10743, %v10599
      %v10777 = vsel %vm1536, %v10745, %v10601
      %v10779 = vsel %vm1536, %v10747, %v10603
      %v10781 = vsel %vm1536, %v10749, %v10605
      %v10783 = vsel %vm1536, %v10751, %v10607
      %v10785 = vsel %vm1536, %v10753, %v10609
      %v10787 = vsel %vm1536, %v10755, %v10611
      %v10789 = vsel %vm1536, %v10757, %v10613
      %v10791 = vsel %vm1536, %v10759, %v10615
      %v10793 = vsel %vm1536, %v10761, %v10617
      %v10795 = vsel %vm1536, %v10763, %v10619
      %v10797 = vsel %vm1569, %v10765, %v10669
      %v10799 = vsel %vm1569, %v10767, %v10671
      %v10801 = vsel %vm1569, %v10769, %v10673
      %v10803 = vsel %vm1569, %v10771, %v10675
      %v10805 = vsel %vm1569, %v10773, %v10677
      %v10807 = vsel %vm1569, %v10775, %v10679
      %v10809 = vsel %vm1569, %v10777, %v10681
      %v10811 = vsel %vm1569, %v10779, %v10683
      %v10813 = vsel %vm1569, %v10781, %v10685
      %v10815 = vsel %vm1569, %v10783, %v10687
      %v10817 = vsel %vm1569, %v10785, %v10689
      %v10819 = vsel %vm1569, %v10787, %v10691
      %v10821 = vsel %vm1569, %v10789, %v10693
      %v10823 = vsel %vm1569, %v10791, %v10695
      %v10825 = vsel %vm1569, %v10793, %v10697
      %v10827 = vsel %vm1569, %v10795, %v10699
      %s10828 = scalar_lea.vmem %s3, 60
      %v10829 = vld [vmem:[%s10828] sm:$0xf]
      %v10830 = vld [vmem:[%s10828 + $0x4] sm:$0xf]
      %v10831 = vld [vmem:[%s10828 + $0x8] sm:$0xf]
      %v10832 = vld [vmem:[%s10828 + $0xc] sm:$0xf]
      %v10833 = vld [vmem:[%s10828 + $0x10] sm:$0xf]
      %v10839 = vunpack.c.l.b16 %v10829
      %v10840 = vunpack.c.l.b16 %v10830
      %v10841 = vunpack.c.l.b16 %v10831
      %v10842 = vunpack.c.l.b16 %v10832
      %v10843 = vunpack.c.l.b16 %v10833
      %v10844 = vpack.c.b16 %v10840, %v10839
      %v10845 = vpack.c.b16 %v10842, %v10841
      %v10846 = vpack.c.b16 %v10843, %v10843
      %v10849 = vsel %vm1622, %v10797, 0
      %v10851 = vsel %vm1622, %v10799, 0
      %v10853 = vsel %vm1622, %v10801, 0
      %v10855 = vsel %vm1622, %v10803, 0
      %v10857 = vsel %vm1622, %v10805, 0
      %v10859 = vsel %vm1622, %v10807, 0
      %v10861 = vsel %vm1622, %v10809, 0
      %v10863 = vsel %vm1622, %v10811, 0
      %v10865 = vsel %vm1622, %v10813, 0
      %v10867 = vsel %vm1622, %v10815, 0
      %v10869 = vsel %vm1622, %v10817, 0
      %v10871 = vsel %vm1622, %v10819, 0
      %v10873 = vsel %vm1622, %v10821, 0
      %v10875 = vsel %vm1622, %v10823, 0
      %v10877 = vsel %vm1622, %v10825, 0
      %v10879 = vsel %vm1622, %v10827, 0
      %v10882 = vsel %vm1655, %v10846, 0
      %10884 = vmatprep.subr.bf16.mxu0 0
      %10885 = vmatpush1.bf16.msra.mxu0 %v10844
      %10886 = vmatprep.subr.bf16.mxu0 0
      %10887 = vmatpush1.bf16.msra.mxu0 %v10845
      %10888 = vmatprep.subr.bf16.mxu0 0
      %10889 = vmatpush1.bf16.msra.mxu0 %v10882
      %10890 = vmatprep.subr.bf16.mxu0 0
      %10891 = vmatpush1.bf16.msra.mxu0 0
      %10892 = vmatprep.subr.bf16.mxu0 0
      %10893 = vmatpush1.bf16.msra.mxu0 0
      %10894 = vmatprep.subr.bf16.mxu0 0
      %10895 = vmatpush1.bf16.msra.mxu0 0
      %10896 = vmatprep.subr.bf16.mxu0 0
      %10897 = vmatpush1.bf16.msra.mxu0 0
      %10898 = vmatprep.subr.bf16.mxu0 0
      %10899 = vmatpush1.bf16.msra.mxu0 0
      %10900 = vmatprep.subr.bf16.mxu0 0
      %10901 = vmatpush1.bf16.msra.mxu0 0
      %10902 = vmatprep.subr.bf16.mxu0 0
      %10903 = vmatpush1.bf16.msra.mxu0 0
      %10904 = vmatprep.subr.bf16.mxu0 0
      %10905 = vmatpush1.bf16.msra.mxu0 0
      %10906 = vmatprep.subr.bf16.mxu0 0
      %10907 = vmatpush1.bf16.msra.mxu0 0
      %10908 = vmatprep.subr.bf16.mxu0 0
      %10909 = vmatpush1.bf16.msra.mxu0 0
      %10910 = vmatprep.subr.bf16.mxu0 0
      %10911 = vmatpush1.bf16.msra.mxu0 0
      %10912 = vmatprep.subr.bf16.mxu0 0
      %10913 = vmatpush1.bf16.msra.mxu0 0
      %10914 = vmatprep.subr.bf16.mxu0 0
      %10915 = vmatpush1.bf16.msra.mxu0 0
      %10916 = vmatprep.mubr.bf16.mxu0 0
      %10917 = vmatmul.mubr.bf16.gmra.mrb[0].mxu0 %v10849
      %v10918 = vpop.f32.mrb[0].mxu0
      %v10919 = vadd.f32 0.0, %v10918
      %v10920 = vpop.f32.mrb[0].mxu0
      %v10921 = vpop.f32.mrb[0].mxu0
      %v10922 = vadd.f32 0.0, %v10921
      %v10923 = vpop.f32.mrb[0].mxu0
      %10924 = vmatprep.mubr.bf16.mxu0 0
      %10925 = vmatmul.mubr.bf16.gmra.mrb[0].mxu0 %v10851
      %v10926 = vpop.f32.mrb[0].mxu0
      %v10927 = vadd.f32 0.0, %v10926
      %v10928 = vpop.f32.mrb[0].mxu0
      %v10929 = vpop.f32.mrb[0].mxu0
      %v10930 = vadd.f32 0.0, %v10929
      %v10931 = vpop.f32.mrb[0].mxu0
      %10932 = vmatprep.mubr.bf16.mxu0 0
      %10933 = vmatmul.mubr.bf16.gmra.mrb[0].mxu0 %v10853
      %v10934 = vpop.f32.mrb[0].mxu0
      %v10935 = vadd.f32 0.0, %v10934
      %v10936 = vpop.f32.mrb[0].mxu0
      %v10937 = vpop.f32.mrb[0].mxu0
      %v10938 = vadd.f32 0.0, %v10937
      %v10939 = vpop.f32.mrb[0].mxu0
      %10940 = vmatprep.mubr.bf16.mxu0 0
      %10941 = vmatmul.mubr.bf16.gmra.mrb[0].mxu0 %v10855
      %v10942 = vpop.f32.mrb[0].mxu0
      %v10943 = vadd.f32 0.0, %v10942
      %v10944 = vpop.f32.mrb[0].mxu0
      %v10945 = vpop.f32.mrb[0].mxu0
      %v10946 = vadd.f32 0.0, %v10945
      %v10947 = vpop.f32.mrb[0].mxu0
      %10948 = vmatprep.mubr.bf16.mxu0 0
      %10949 = vmatmul.mubr.bf16.gmra.mrb[0].mxu0 %v10857
      %v10950 = vpop.f32.mrb[0].mxu0
      %v10951 = vadd.f32 0.0, %v10950
      %v10952 = vpop.f32.mrb[0].mxu0
      %v10953 = vpop.f32.mrb[0].mxu0
      %v10954 = vadd.f32 0.0, %v10953
      %v10955 = vpop.f32.mrb[0].mxu0
      %10956 = vmatprep.mubr.bf16.mxu0 0
      %10957 = vmatmul.mubr.bf16.gmra.mrb[0].mxu0 %v10859
      %v10958 = vpop.f32.mrb[0].mxu0
      %v10959 = vadd.f32 0.0, %v10958
      %v10960 = vpop.f32.mrb[0].mxu0
      %v10961 = vpop.f32.mrb[0].mxu0
      %v10962 = vadd.f32 0.0, %v10961
      %v10963 = vpop.f32.mrb[0].mxu0
      %10964 = vmatprep.mubr.bf16.mxu0 0
      %10965 = vmatmul.mubr.bf16.gmra.mrb[0].mxu0 %v10861
      %v10966 = vpop.f32.mrb[0].mxu0
      %v10967 = vadd.f32 0.0, %v10966
      %v10968 = vpop.f32.mrb[0].mxu0
      %v10969 = vpop.f32.mrb[0].mxu0
      %v10970 = vadd.f32 0.0, %v10969
      %v10971 = vpop.f32.mrb[0].mxu0
      %10972 = vmatprep.mubr.bf16.mxu0 0
      %10973 = vmatmul.mubr.bf16.gmra.mrb[0].mxu0 %v10863
      %v10974 = vpop.f32.mrb[0].mxu0
      %v10975 = vadd.f32 0.0, %v10974
      %v10976 = vpop.f32.mrb[0].mxu0
      %v10977 = vpop.f32.mrb[0].mxu0
      %v10978 = vadd.f32 0.0, %v10977
      %v10979 = vpop.f32.mrb[0].mxu0
      %10980 = vmatprep.mubr.bf16.mxu0 0
      %10981 = vmatmul.mubr.bf16.gmra.mrb[0].mxu0 %v10865
      %v10982 = vpop.f32.mrb[0].mxu0
      %v10983 = vadd.f32 0.0, %v10982
      %v10984 = vpop.f32.mrb[0].mxu0
      %v10985 = vpop.f32.mrb[0].mxu0
      %v10986 = vadd.f32 0.0, %v10985
      %v10987 = vpop.f32.mrb[0].mxu0
      %10988 = vmatprep.mubr.bf16.mxu0 0
      %10989 = vmatmul.mubr.bf16.gmra.mrb[0].mxu0 %v10867
      %v10990 = vpop.f32.mrb[0].mxu0
      %v10991 = vadd.f32 0.0, %v10990
      %v10992 = vpop.f32.mrb[0].mxu0
      %v10993 = vpop.f32.mrb[0].mxu0
      %v10994 = vadd.f32 0.0, %v10993
      %v10995 = vpop.f32.mrb[0].mxu0
      %10996 = vmatprep.mubr.bf16.mxu0 0
      %10997 = vmatmul.mubr.bf16.gmra.mrb[0].mxu0 %v10869
      %v10998 = vpop.f32.mrb[0].mxu0
      %v10999 = vadd.f32 0.0, %v10998
      %v11000 = vpop.f32.mrb[0].mxu0
      %v11001 = vpop.f32.mrb[0].mxu0
      %v11002 = vadd.f32 0.0, %v11001
      %v11003 = vpop.f32.mrb[0].mxu0
      %11004 = vmatprep.mubr.bf16.mxu0 0
      %11005 = vmatmul.mubr.bf16.gmra.mrb[0].mxu0 %v10871
      %v11006 = vpop.f32.mrb[0].mxu0
      %v11007 = vadd.f32 0.0, %v11006
      %v11008 = vpop.f32.mrb[0].mxu0
      %v11009 = vpop.f32.mrb[0].mxu0
      %v11010 = vadd.f32 0.0, %v11009
      %v11011 = vpop.f32.mrb[0].mxu0
      %11012 = vmatprep.mubr.bf16.mxu0 0
      %11013 = vmatmul.mubr.bf16.gmra.mrb[0].mxu0 %v10873
      %v11014 = vpop.f32.mrb[0].mxu0
      %v11015 = vadd.f32 0.0, %v11014
      %v11016 = vpop.f32.mrb[0].mxu0
      %v11017 = vpop.f32.mrb[0].mxu0
      %v11018 = vadd.f32 0.0, %v11017
      %v11019 = vpop.f32.mrb[0].mxu0
      %11020 = vmatprep.mubr.bf16.mxu0 0
      %11021 = vmatmul.mubr.bf16.gmra.mrb[0].mxu0 %v10875
      %v11022 = vpop.f32.mrb[0].mxu0
      %v11023 = vadd.f32 0.0, %v11022
      %v11024 = vpop.f32.mrb[0].mxu0
      %v11025 = vpop.f32.mrb[0].mxu0
      %v11026 = vadd.f32 0.0, %v11025
      %v11027 = vpop.f32.mrb[0].mxu0
      %11028 = vmatprep.mubr.bf16.mxu0 0
      %11029 = vmatmul.mubr.bf16.gmra.mrb[0].mxu0 %v10877
      %v11030 = vpop.f32.mrb[0].mxu0
      %v11031 = vadd.f32 0.0, %v11030
      %v11032 = vpop.f32.mrb[0].mxu0
      %v11033 = vpop.f32.mrb[0].mxu0
      %v11034 = vadd.f32 0.0, %v11033
      %v11035 = vpop.f32.mrb[0].mxu0
      %11036 = vmatprep.mubr.bf16.mxu0 0
      %11037 = vmatmul.mubr.bf16.gmra.mrb[0].mxu0 %v10879
      %v11038 = vpop.f32.mrb[0].mxu0
      %v11039 = vadd.f32 0.0, %v11038
      %v11040 = vpop.f32.mrb[0].mxu0
      %v11041 = vpop.f32.mrb[0].mxu0
      %v11042 = vadd.f32 0.0, %v11041
      %v11043 = vpop.f32.mrb[0].mxu0
      %11044 = vdwg.mxu0
      %v11045 = vadd.f32 %v9931, %v10919
      %v11046 = vadd.f32 %v9932, %v10922
      %v11047 = vadd.f32 %v9933, %v10927
      %v11048 = vadd.f32 %v9934, %v10930
      %v11049 = vadd.f32 %v9935, %v10935
      %v11050 = vadd.f32 %v9936, %v10938
      %v11051 = vadd.f32 %v9937, %v10943
      %v11052 = vadd.f32 %v9938, %v10946
      %v11053 = vadd.f32 %v9939, %v10951
      %v11054 = vadd.f32 %v9940, %v10954
      %v11055 = vadd.f32 %v9941, %v10959
      %v11056 = vadd.f32 %v9942, %v10962
      %v11057 = vadd.f32 %v9943, %v10967
      %v11058 = vadd.f32 %v9944, %v10970
      %v11059 = vadd.f32 %v9945, %v10975
      %v11060 = vadd.f32 %v9946, %v10978
      %v11061 = vadd.f32 %v9947, %v10983
      %v11062 = vadd.f32 %v9948, %v10986
      %v11063 = vadd.f32 %v9949, %v10991
      %v11064 = vadd.f32 %v9950, %v10994
      %v11065 = vadd.f32 %v9951, %v10999
      %v11066 = vadd.f32 %v9952, %v11002
      %v11067 = vadd.f32 %v9953, %v11007
      %v11068 = vadd.f32 %v9954, %v11010
      %v11069 = vadd.f32 %v9955, %v11015
      %v11070 = vadd.f32 %v9956, %v11018
      %v11071 = vadd.f32 %v9957, %v11023
      %v11072 = vadd.f32 %v9958, %v11026
      %v11073 = vadd.f32 %v9959, %v11031
      %v11074 = vadd.f32 %v9960, %v11034
      %v11075 = vadd.f32 %v9961, %v11039
      %v11076 = vadd.f32 %v9962, %v11042
      %s11077 = scalar_lea.vmem [#allocation3], 48
      %v11078 = vld [vmem:[%s11077] sm:$0xf]
      %v11079 = vld [vmem:[%s11077 + $0x4] sm:$0xf]
      %v11080 = vld [vmem:[%s11077 + $0x8] sm:$0x3]
      %v11081 = vld [vmem:[%s11077 + $0xc] sm:$0xf]
      %v11082 = vld [vmem:[%s11077 + $0x10] sm:$0xf]
      %v11083 = vld [vmem:[%s11077 + $0x14] sm:$0x3]
      %v11084 = vld [vmem:[%s11077 + $0x18] sm:$0xf]
      %v11085 = vld [vmem:[%s11077 + $0x1c] sm:$0xf]
      %v11086 = vld [vmem:[%s11077 + $0x20] sm:$0x3]
      %v11087 = vld [vmem:[%s11077 + $0x24] sm:$0xf]
      %v11088 = vld [vmem:[%s11077 + $0x28] sm:$0xf]
      %v11089 = vld [vmem:[%s11077 + $0x2c] sm:$0x3]
      %v11090 = vld [vmem:[%s11077 + $0x30] sm:$0xf]
      %v11091 = vld [vmem:[%s11077 + $0x34] sm:$0xf]
      %v11092 = vld [vmem:[%s11077 + $0x38] sm:$0x3]
      %v11093 = vld [vmem:[%s11077 + $0x3c] sm:$0xf]
      %v11094 = vld [vmem:[%s11077 + $0x40] sm:$0xf]
      %v11095 = vld [vmem:[%s11077 + $0x44] sm:$0x3]
      %v11096 = vld [vmem:[%s11077 + $0x48] sm:$0xf]
      %v11097 = vld [vmem:[%s11077 + $0x4c] sm:$0xf]
      %v11098 = vld [vmem:[%s11077 + $0x50] sm:$0x3]
      %v11099 = vld [vmem:[%s11077 + $0x54] sm:$0xf]
      %v11100 = vld [vmem:[%s11077 + $0x58] sm:$0xf]
      %v11101 = vld [vmem:[%s11077 + $0x5c] sm:$0x3]
      %v11102 = vld [vmem:[%s11077 + $0x60] sm:$0xf]
      %v11103 = vld [vmem:[%s11077 + $0x64] sm:$0xf]
      %v11104 = vld [vmem:[%s11077 + $0x68] sm:$0x3]
      %v11105 = vld [vmem:[%s11077 + $0x6c] sm:$0xf]
      %v11106 = vld [vmem:[%s11077 + $0x70] sm:$0xf]
      %v11107 = vld [vmem:[%s11077 + $0x74] sm:$0x3]
      %v11108 = vld [vmem:[%s11077 + $0x78] sm:$0xf]
      %v11109 = vld [vmem:[%s11077 + $0x7c] sm:$0xf]
      %v11110 = vld [vmem:[%s11077 + $0x80] sm:$0x3]
      %v11111 = vld [vmem:[%s11077 + $0x84] sm:$0xf]
      %v11112 = vld [vmem:[%s11077 + $0x88] sm:$0xf]
      %v11113 = vld [vmem:[%s11077 + $0x8c] sm:$0x3]
      %v11114 = vld [vmem:[%s11077 + $0x90] sm:$0xf]
      %v11115 = vld [vmem:[%s11077 + $0x94] sm:$0xf]
      %v11116 = vld [vmem:[%s11077 + $0x98] sm:$0x3]
      %v11117 = vld [vmem:[%s11077 + $0x9c] sm:$0xf]
      %v11118 = vld [vmem:[%s11077 + $0xa0] sm:$0xf]
      %v11119 = vld [vmem:[%s11077 + $0xa4] sm:$0x3]
      %v11120 = vld [vmem:[%s11077 + $0xa8] sm:$0xf]
      %v11121 = vld [vmem:[%s11077 + $0xac] sm:$0xf]
      %v11122 = vld [vmem:[%s11077 + $0xb0] sm:$0x3]
      %v11123 = vld [vmem:[%s11077 + $0xb4] sm:$0xf]
      %v11124 = vld [vmem:[%s11077 + $0xb8] sm:$0xf]
      %v11125 = vld [vmem:[%s11077 + $0xbc] sm:$0x3]
      %v11158 = vunpack.c.l.b16 %v11078
      %v11159 = vunpack.c.l.b16 %v11079
      %v11160 = vunpack.c.l.b16 %v11081
      %v11161 = vunpack.c.l.b16 %v11082
      %v11162 = vunpack.c.l.b16 %v11084
      %v11163 = vunpack.c.l.b16 %v11085
      %v11164 = vunpack.c.l.b16 %v11087
      %v11165 = vunpack.c.l.b16 %v11088
      %v11166 = vunpack.c.l.b16 %v11090
      %v11167 = vunpack.c.l.b16 %v11091
      %v11168 = vunpack.c.l.b16 %v11093
      %v11169 = vunpack.c.l.b16 %v11094
      %v11170 = vunpack.c.l.b16 %v11096
      %v11171 = vunpack.c.l.b16 %v11097
      %v11172 = vunpack.c.l.b16 %v11099
      %v11173 = vunpack.c.l.b16 %v11100
      %v11174 = vunpack.c.l.b16 %v11102
      %v11175 = vunpack.c.l.b16 %v11103
      %v11176 = vunpack.c.l.b16 %v11105
      %v11177 = vunpack.c.l.b16 %v11106
      %v11178 = vunpack.c.l.b16 %v11108
      %v11179 = vunpack.c.l.b16 %v11109
      %v11180 = vunpack.c.l.b16 %v11111
      %v11181 = vunpack.c.l.b16 %v11112
      %v11182 = vunpack.c.l.b16 %v11114
      %v11183 = vunpack.c.l.b16 %v11115
      %v11184 = vunpack.c.l.b16 %v11117
      %v11185 = vunpack.c.l.b16 %v11118
      %v11186 = vunpack.c.l.b16 %v11120
      %v11187 = vunpack.c.l.b16 %v11121
      %v11188 = vunpack.c.l.b16 %v11123
      %v11189 = vunpack.c.l.b16 %v11124
      %v11190 = vpack.c.b16 %v11159, %v11158
      %v11191 = vpack.c.b16 %v11161, %v11160
      %v11192 = vpack.c.b16 %v11163, %v11162
      %v11193 = vpack.c.b16 %v11165, %v11164
      %v11194 = vpack.c.b16 %v11167, %v11166
      %v11195 = vpack.c.b16 %v11169, %v11168
      %v11196 = vpack.c.b16 %v11171, %v11170
      %v11197 = vpack.c.b16 %v11173, %v11172
      %v11198 = vpack.c.b16 %v11175, %v11174
      %v11199 = vpack.c.b16 %v11177, %v11176
      %v11200 = vpack.c.b16 %v11179, %v11178
      %v11201 = vpack.c.b16 %v11181, %v11180
      %v11202 = vpack.c.b16 %v11183, %v11182
      %v11203 = vpack.c.b16 %v11185, %v11184
      %v11204 = vpack.c.b16 %v11187, %v11186
      %v11205 = vpack.c.b16 %v11189, %v11188
      %v11222 = vunpack.c.l.b16 %v11080
      %v11223 = vunpack.c.l.b16 %v11083
      %v11224 = vunpack.c.l.b16 %v11086
      %v11225 = vunpack.c.l.b16 %v11089
      %v11226 = vunpack.c.l.b16 %v11092
      %v11227 = vunpack.c.l.b16 %v11095
      %v11228 = vunpack.c.l.b16 %v11098
      %v11229 = vunpack.c.l.b16 %v11101
      %v11230 = vunpack.c.l.b16 %v11104
      %v11231 = vunpack.c.l.b16 %v11107
      %v11232 = vunpack.c.l.b16 %v11110
      %v11233 = vunpack.c.l.b16 %v11113
      %v11234 = vunpack.c.l.b16 %v11116
      %v11235 = vunpack.c.l.b16 %v11119
      %v11236 = vunpack.c.l.b16 %v11122
      %v11237 = vunpack.c.l.b16 %v11125
      %v11238 = vpack.c.b16 %v11222, %v11222
      %v11239 = vpack.c.b16 %v11223, %v11223
      %v11240 = vpack.c.b16 %v11224, %v11224
      %v11241 = vpack.c.b16 %v11225, %v11225
      %v11242 = vpack.c.b16 %v11226, %v11226
      %v11243 = vpack.c.b16 %v11227, %v11227
      %v11244 = vpack.c.b16 %v11228, %v11228
      %v11245 = vpack.c.b16 %v11229, %v11229
      %v11246 = vpack.c.b16 %v11230, %v11230
      %v11247 = vpack.c.b16 %v11231, %v11231
      %v11248 = vpack.c.b16 %v11232, %v11232
      %v11249 = vpack.c.b16 %v11233, %v11233
      %v11250 = vpack.c.b16 %v11234, %v11234
      %v11251 = vpack.c.b16 %v11235, %v11235
      %v11252 = vpack.c.b16 %v11236, %v11236
      %v11253 = vpack.c.b16 %v11237, %v11237
      %v11255 = vshrl.u32 %v11190, 16
      %v11257 = vshll.u32 %v11190, 16
      %v11259 = vrot.slane %v11257, 1
      %v11260 = vor.u32 %v11255, %v11259
      %v11262 = vshll.u32 %v11238, 16
      %v11264 = vrot.slane %v11262, 1
      %v11265 = vsel %vm906, %v11260, %v11264
      %v11267 = vshrl.u32 %v11191, 16
      %v11269 = vshll.u32 %v11191, 16
      %v11271 = vrot.slane %v11269, 1
      %v11272 = vor.u32 %v11267, %v11271
      %v11274 = vshll.u32 %v11239, 16
      %v11276 = vrot.slane %v11274, 1
      %v11277 = vsel %vm906, %v11272, %v11276
      %v11279 = vshrl.u32 %v11192, 16
      %v11281 = vshll.u32 %v11192, 16
      %v11283 = vrot.slane %v11281, 1
      %v11284 = vor.u32 %v11279, %v11283
      %v11286 = vshll.u32 %v11240, 16
      %v11288 = vrot.slane %v11286, 1
      %v11289 = vsel %vm906, %v11284, %v11288
      %v11291 = vshrl.u32 %v11193, 16
      %v11293 = vshll.u32 %v11193, 16
      %v11295 = vrot.slane %v11293, 1
      %v11296 = vor.u32 %v11291, %v11295
      %v11298 = vshll.u32 %v11241, 16
      %v11300 = vrot.slane %v11298, 1
      %v11301 = vsel %vm906, %v11296, %v11300
      %v11303 = vshrl.u32 %v11194, 16
      %v11305 = vshll.u32 %v11194, 16
      %v11307 = vrot.slane %v11305, 1
      %v11308 = vor.u32 %v11303, %v11307
      %v11310 = vshll.u32 %v11242, 16
      %v11312 = vrot.slane %v11310, 1
      %v11313 = vsel %vm906, %v11308, %v11312
      %v11315 = vshrl.u32 %v11195, 16
      %v11317 = vshll.u32 %v11195, 16
      %v11319 = vrot.slane %v11317, 1
      %v11320 = vor.u32 %v11315, %v11319
      %v11322 = vshll.u32 %v11243, 16
      %v11324 = vrot.slane %v11322, 1
      %v11325 = vsel %vm906, %v11320, %v11324
      %v11327 = vshrl.u32 %v11196, 16
      %v11329 = vshll.u32 %v11196, 16
      %v11331 = vrot.slane %v11329, 1
      %v11332 = vor.u32 %v11327, %v11331
      %v11334 = vshll.u32 %v11244, 16
      %v11336 = vrot.slane %v11334, 1
      %v11337 = vsel %vm906, %v11332, %v11336
      %v11339 = vshrl.u32 %v11197, 16
      %v11341 = vshll.u32 %v11197, 16
      %v11343 = vrot.slane %v11341, 1
      %v11344 = vor.u32 %v11339, %v11343
      %v11346 = vshll.u32 %v11245, 16
      %v11348 = vrot.slane %v11346, 1
      %v11349 = vsel %vm906, %v11344, %v11348
      %v11351 = vshrl.u32 %v11198, 16
      %v11353 = vshll.u32 %v11198, 16
      %v11355 = vrot.slane %v11353, 1
      %v11356 = vor.u32 %v11351, %v11355
      %v11358 = vshll.u32 %v11246, 16
      %v11360 = vrot.slane %v11358, 1
      %v11361 = vsel %vm906, %v11356, %v11360
      %v11363 = vshrl.u32 %v11199, 16
      %v11365 = vshll.u32 %v11199, 16
      %v11367 = vrot.slane %v11365, 1
      %v11368 = vor.u32 %v11363, %v11367
      %v11370 = vshll.u32 %v11247, 16
      %v11372 = vrot.slane %v11370, 1
      %v11373 = vsel %vm906, %v11368, %v11372
      %v11375 = vshrl.u32 %v11200, 16
      %v11377 = vshll.u32 %v11200, 16
      %v11379 = vrot.slane %v11377, 1
      %v11380 = vor.u32 %v11375, %v11379
      %v11382 = vshll.u32 %v11248, 16
      %v11384 = vrot.slane %v11382, 1
      %v11385 = vsel %vm906, %v11380, %v11384
      %v11387 = vshrl.u32 %v11201, 16
      %v11389 = vshll.u32 %v11201, 16
      %v11391 = vrot.slane %v11389, 1
      %v11392 = vor.u32 %v11387, %v11391
      %v11394 = vshll.u32 %v11249, 16
      %v11396 = vrot.slane %v11394, 1
      %v11397 = vsel %vm906, %v11392, %v11396
      %v11399 = vshrl.u32 %v11202, 16
      %v11401 = vshll.u32 %v11202, 16
      %v11403 = vrot.slane %v11401, 1
      %v11404 = vor.u32 %v11399, %v11403
      %v11406 = vshll.u32 %v11250, 16
      %v11408 = vrot.slane %v11406, 1
      %v11409 = vsel %vm906, %v11404, %v11408
      %v11411 = vshrl.u32 %v11203, 16
      %v11413 = vshll.u32 %v11203, 16
      %v11415 = vrot.slane %v11413, 1
      %v11416 = vor.u32 %v11411, %v11415
      %v11418 = vshll.u32 %v11251, 16
      %v11420 = vrot.slane %v11418, 1
      %v11421 = vsel %vm906, %v11416, %v11420
      %v11423 = vshrl.u32 %v11204, 16
      %v11425 = vshll.u32 %v11204, 16
      %v11427 = vrot.slane %v11425, 1
      %v11428 = vor.u32 %v11423, %v11427
      %v11430 = vshll.u32 %v11252, 16
      %v11432 = vrot.slane %v11430, 1
      %v11433 = vsel %vm906, %v11428, %v11432
      %v11435 = vshrl.u32 %v11205, 16
      %v11437 = vshll.u32 %v11205, 16
      %v11439 = vrot.slane %v11437, 1
      %v11440 = vor.u32 %v11435, %v11439
      %v11442 = vshll.u32 %v11253, 16
      %v11444 = vrot.slane %v11442, 1
      %v11445 = vsel %vm906, %v11440, %v11444
      %11446 = vrot.lane.b32.xlu0 %v11265, 8
      %v11447 = vpop.permute.xlu0 %11446
      %11448 = vrot.lane.b32.xlu0 %v11277, 8
      %v11449 = vpop.permute.xlu0 %11448
      %11450 = vrot.lane.b32.xlu0 %v11289, 8
      %v11451 = vpop.permute.xlu0 %11450
      %11452 = vrot.lane.b32.xlu0 %v11301, 8
      %v11453 = vpop.permute.xlu0 %11452
      %11454 = vrot.lane.b32.xlu0 %v11313, 8
      %v11455 = vpop.permute.xlu0 %11454
      %11456 = vrot.lane.b32.xlu0 %v11325, 8
      %v11457 = vpop.permute.xlu0 %11456
      %11458 = vrot.lane.b32.xlu0 %v11337, 8
      %v11459 = vpop.permute.xlu0 %11458
      %11460 = vrot.lane.b32.xlu0 %v11349, 8
      %v11461 = vpop.permute.xlu0 %11460
      %11462 = vrot.lane.b32.xlu0 %v11361, 8
      %v11463 = vpop.permute.xlu0 %11462
      %11464 = vrot.lane.b32.xlu0 %v11373, 8
      %v11465 = vpop.permute.xlu0 %11464
      %11466 = vrot.lane.b32.xlu0 %v11385, 8
      %v11467 = vpop.permute.xlu0 %11466
      %11468 = vrot.lane.b32.xlu0 %v11397, 8
      %v11469 = vpop.permute.xlu0 %11468
      %11470 = vrot.lane.b32.xlu0 %v11409, 8
      %v11471 = vpop.permute.xlu0 %11470
      %11472 = vrot.lane.b32.xlu0 %v11421, 8
      %v11473 = vpop.permute.xlu0 %11472
      %11474 = vrot.lane.b32.xlu0 %v11433, 8
      %v11475 = vpop.permute.xlu0 %11474
      %11476 = vrot.lane.b32.xlu0 %v11445, 8
      %v11477 = vpop.permute.xlu0 %11476
      %v11478 = vrot.slane %v11190, 1
      %v11479 = vrot.slane %v11238, 1
      %v11480 = vsel %vm1131, %v11478, %v11479
      %v11481 = vrot.slane %v11191, 1
      %v11482 = vrot.slane %v11239, 1
      %v11483 = vsel %vm1131, %v11481, %v11482
      %v11484 = vrot.slane %v11192, 1
      %v11485 = vrot.slane %v11240, 1
      %v11486 = vsel %vm1131, %v11484, %v11485
      %v11487 = vrot.slane %v11193, 1
      %v11488 = vrot.slane %v11241, 1
      %v11489 = vsel %vm1131, %v11487, %v11488
      %v11490 = vrot.slane %v11194, 1
      %v11491 = vrot.slane %v11242, 1
      %v11492 = vsel %vm1131, %v11490, %v11491
      %v11493 = vrot.slane %v11195, 1
      %v11494 = vrot.slane %v11243, 1
      %v11495 = vsel %vm1131, %v11493, %v11494
      %v11496 = vrot.slane %v11196, 1
      %v11497 = vrot.slane %v11244, 1
      %v11498 = vsel %vm1131, %v11496, %v11497
      %v11499 = vrot.slane %v11197, 1
      %v11500 = vrot.slane %v11245, 1
      %v11501 = vsel %vm1131, %v11499, %v11500
      %v11502 = vrot.slane %v11198, 1
      %v11503 = vrot.slane %v11246, 1
      %v11504 = vsel %vm1131, %v11502, %v11503
      %v11505 = vrot.slane %v11199, 1
      %v11506 = vrot.slane %v11247, 1
      %v11507 = vsel %vm1131, %v11505, %v11506
      %v11508 = vrot.slane %v11200, 1
      %v11509 = vrot.slane %v11248, 1
      %v11510 = vsel %vm1131, %v11508, %v11509
      %v11511 = vrot.slane %v11201, 1
      %v11512 = vrot.slane %v11249, 1
      %v11513 = vsel %vm1131, %v11511, %v11512
      %v11514 = vrot.slane %v11202, 1
      %v11515 = vrot.slane %v11250, 1
      %v11516 = vsel %vm1131, %v11514, %v11515
      %v11517 = vrot.slane %v11203, 1
      %v11518 = vrot.slane %v11251, 1
      %v11519 = vsel %vm1131, %v11517, %v11518
      %v11520 = vrot.slane %v11204, 1
      %v11521 = vrot.slane %v11252, 1
      %v11522 = vsel %vm1131, %v11520, %v11521
      %v11523 = vrot.slane %v11205, 1
      %v11524 = vrot.slane %v11253, 1
      %v11525 = vsel %vm1131, %v11523, %v11524
      %11526 = vrot.lane.b32.xlu0 %v11480, 16
      %v11527 = vpop.permute.xlu0 %11526
      %11528 = vrot.lane.b32.xlu0 %v11483, 16
      %v11529 = vpop.permute.xlu0 %11528
      %11530 = vrot.lane.b32.xlu0 %v11486, 16
      %v11531 = vpop.permute.xlu0 %11530
      %11532 = vrot.lane.b32.xlu0 %v11489, 16
      %v11533 = vpop.permute.xlu0 %11532
      %11534 = vrot.lane.b32.xlu0 %v11492, 16
      %v11535 = vpop.permute.xlu0 %11534
      %11536 = vrot.lane.b32.xlu0 %v11495, 16
      %v11537 = vpop.permute.xlu0 %11536
      %11538 = vrot.lane.b32.xlu0 %v11498, 16
      %v11539 = vpop.permute.xlu0 %11538
      %11540 = vrot.lane.b32.xlu0 %v11501, 16
      %v11541 = vpop.permute.xlu0 %11540
      %11542 = vrot.lane.b32.xlu0 %v11504, 16
      %v11543 = vpop.permute.xlu0 %11542
      %11544 = vrot.lane.b32.xlu0 %v11507, 16
      %v11545 = vpop.permute.xlu0 %11544
      %11546 = vrot.lane.b32.xlu0 %v11510, 16
      %v11547 = vpop.permute.xlu0 %11546
      %11548 = vrot.lane.b32.xlu0 %v11513, 16
      %v11549 = vpop.permute.xlu0 %11548
      %11550 = vrot.lane.b32.xlu0 %v11516, 16
      %v11551 = vpop.permute.xlu0 %11550
      %11552 = vrot.lane.b32.xlu0 %v11519, 16
      %v11553 = vpop.permute.xlu0 %11552
      %11554 = vrot.lane.b32.xlu0 %v11522, 16
      %v11555 = vpop.permute.xlu0 %11554
      %11556 = vrot.lane.b32.xlu0 %v11525, 16
      %v11557 = vpop.permute.xlu0 %11556
      %v11558 = vrot.slane %v11255, 1
      %v11559 = vrot.slane %v11257, 2
      %v11560 = vor.u32 %v11558, %v11559
      %v11561 = vshrl.u32 %v11238, 16
      %v11563 = vrot.slane %v11561, 1
      %v11564 = vrot.slane %v11262, 2
      %v11565 = vor.u32 %v11563, %v11564
      %v11566 = vsel %vm1212, %v11560, %v11565
      %v11567 = vrot.slane %v11267, 1
      %v11568 = vrot.slane %v11269, 2
      %v11569 = vor.u32 %v11567, %v11568
      %v11570 = vshrl.u32 %v11239, 16
      %v11572 = vrot.slane %v11570, 1
      %v11573 = vrot.slane %v11274, 2
      %v11574 = vor.u32 %v11572, %v11573
      %v11575 = vsel %vm1212, %v11569, %v11574
      %v11576 = vrot.slane %v11279, 1
      %v11577 = vrot.slane %v11281, 2
      %v11578 = vor.u32 %v11576, %v11577
      %v11579 = vshrl.u32 %v11240, 16
      %v11581 = vrot.slane %v11579, 1
      %v11582 = vrot.slane %v11286, 2
      %v11583 = vor.u32 %v11581, %v11582
      %v11584 = vsel %vm1212, %v11578, %v11583
      %v11585 = vrot.slane %v11291, 1
      %v11586 = vrot.slane %v11293, 2
      %v11587 = vor.u32 %v11585, %v11586
      %v11588 = vshrl.u32 %v11241, 16
      %v11590 = vrot.slane %v11588, 1
      %v11591 = vrot.slane %v11298, 2
      %v11592 = vor.u32 %v11590, %v11591
      %v11593 = vsel %vm1212, %v11587, %v11592
      %v11594 = vrot.slane %v11303, 1
      %v11595 = vrot.slane %v11305, 2
      %v11596 = vor.u32 %v11594, %v11595
      %v11597 = vshrl.u32 %v11242, 16
      %v11599 = vrot.slane %v11597, 1
      %v11600 = vrot.slane %v11310, 2
      %v11601 = vor.u32 %v11599, %v11600
      %v11602 = vsel %vm1212, %v11596, %v11601
      %v11603 = vrot.slane %v11315, 1
      %v11604 = vrot.slane %v11317, 2
      %v11605 = vor.u32 %v11603, %v11604
      %v11606 = vshrl.u32 %v11243, 16
      %v11608 = vrot.slane %v11606, 1
      %v11609 = vrot.slane %v11322, 2
      %v11610 = vor.u32 %v11608, %v11609
      %v11611 = vsel %vm1212, %v11605, %v11610
      %v11612 = vrot.slane %v11327, 1
      %v11613 = vrot.slane %v11329, 2
      %v11614 = vor.u32 %v11612, %v11613
      %v11615 = vshrl.u32 %v11244, 16
      %v11617 = vrot.slane %v11615, 1
      %v11618 = vrot.slane %v11334, 2
      %v11619 = vor.u32 %v11617, %v11618
      %v11620 = vsel %vm1212, %v11614, %v11619
      %v11621 = vrot.slane %v11339, 1
      %v11622 = vrot.slane %v11341, 2
      %v11623 = vor.u32 %v11621, %v11622
      %v11624 = vshrl.u32 %v11245, 16
      %v11626 = vrot.slane %v11624, 1
      %v11627 = vrot.slane %v11346, 2
      %v11628 = vor.u32 %v11626, %v11627
      %v11629 = vsel %vm1212, %v11623, %v11628
      %v11630 = vrot.slane %v11351, 1
      %v11631 = vrot.slane %v11353, 2
      %v11632 = vor.u32 %v11630, %v11631
      %v11633 = vshrl.u32 %v11246, 16
      %v11635 = vrot.slane %v11633, 1
      %v11636 = vrot.slane %v11358, 2
      %v11637 = vor.u32 %v11635, %v11636
      %v11638 = vsel %vm1212, %v11632, %v11637
      %v11639 = vrot.slane %v11363, 1
      %v11640 = vrot.slane %v11365, 2
      %v11641 = vor.u32 %v11639, %v11640
      %v11642 = vshrl.u32 %v11247, 16
      %v11644 = vrot.slane %v11642, 1
      %v11645 = vrot.slane %v11370, 2
      %v11646 = vor.u32 %v11644, %v11645
      %v11647 = vsel %vm1212, %v11641, %v11646
      %v11648 = vrot.slane %v11375, 1
      %v11649 = vrot.slane %v11377, 2
      %v11650 = vor.u32 %v11648, %v11649
      %v11651 = vshrl.u32 %v11248, 16
      %v11653 = vrot.slane %v11651, 1
      %v11654 = vrot.slane %v11382, 2
      %v11655 = vor.u32 %v11653, %v11654
      %v11656 = vsel %vm1212, %v11650, %v11655
      %v11657 = vrot.slane %v11387, 1
      %v11658 = vrot.slane %v11389, 2
      %v11659 = vor.u32 %v11657, %v11658
      %v11660 = vshrl.u32 %v11249, 16
      %v11662 = vrot.slane %v11660, 1
      %v11663 = vrot.slane %v11394, 2
      %v11664 = vor.u32 %v11662, %v11663
      %v11665 = vsel %vm1212, %v11659, %v11664
      %v11666 = vrot.slane %v11399, 1
      %v11667 = vrot.slane %v11401, 2
      %v11668 = vor.u32 %v11666, %v11667
      %v11669 = vshrl.u32 %v11250, 16
      %v11671 = vrot.slane %v11669, 1
      %v11672 = vrot.slane %v11406, 2
      %v11673 = vor.u32 %v11671, %v11672
      %v11674 = vsel %vm1212, %v11668, %v11673
      %v11675 = vrot.slane %v11411, 1
      %v11676 = vrot.slane %v11413, 2
      %v11677 = vor.u32 %v11675, %v11676
      %v11678 = vshrl.u32 %v11251, 16
      %v11680 = vrot.slane %v11678, 1
      %v11681 = vrot.slane %v11418, 2
      %v11682 = vor.u32 %v11680, %v11681
      %v11683 = vsel %vm1212, %v11677, %v11682
      %v11684 = vrot.slane %v11423, 1
      %v11685 = vrot.slane %v11425, 2
      %v11686 = vor.u32 %v11684, %v11685
      %v11687 = vshrl.u32 %v11252, 16
      %v11689 = vrot.slane %v11687, 1
      %v11690 = vrot.slane %v11430, 2
      %v11691 = vor.u32 %v11689, %v11690
      %v11692 = vsel %vm1212, %v11686, %v11691
      %v11693 = vrot.slane %v11435, 1
      %v11694 = vrot.slane %v11437, 2
      %v11695 = vor.u32 %v11693, %v11694
      %v11696 = vshrl.u32 %v11253, 16
      %v11698 = vrot.slane %v11696, 1
      %v11699 = vrot.slane %v11442, 2
      %v11700 = vor.u32 %v11698, %v11699
      %v11701 = vsel %vm1212, %v11695, %v11700
      %11702 = vrot.lane.b32.xlu0 %v11566, 24
      %v11703 = vpop.permute.xlu0 %11702
      %11704 = vrot.lane.b32.xlu0 %v11575, 24
      %v11705 = vpop.permute.xlu0 %11704
      %11706 = vrot.lane.b32.xlu0 %v11584, 24
      %v11707 = vpop.permute.xlu0 %11706
      %11708 = vrot.lane.b32.xlu0 %v11593, 24
      %v11709 = vpop.permute.xlu0 %11708
      %11710 = vrot.lane.b32.xlu0 %v11602, 24
      %v11711 = vpop.permute.xlu0 %11710
      %11712 = vrot.lane.b32.xlu0 %v11611, 24
      %v11713 = vpop.permute.xlu0 %11712
      %11714 = vrot.lane.b32.xlu0 %v11620, 24
      %v11715 = vpop.permute.xlu0 %11714
      %11716 = vrot.lane.b32.xlu0 %v11629, 24
      %v11717 = vpop.permute.xlu0 %11716
      %11718 = vrot.lane.b32.xlu0 %v11638, 24
      %v11719 = vpop.permute.xlu0 %11718
      %11720 = vrot.lane.b32.xlu0 %v11647, 24
      %v11721 = vpop.permute.xlu0 %11720
      %11722 = vrot.lane.b32.xlu0 %v11656, 24
      %v11723 = vpop.permute.xlu0 %11722
      %11724 = vrot.lane.b32.xlu0 %v11665, 24
      %v11725 = vpop.permute.xlu0 %11724
      %11726 = vrot.lane.b32.xlu0 %v11674, 24
      %v11727 = vpop.permute.xlu0 %11726
      %11728 = vrot.lane.b32.xlu0 %v11683, 24
      %v11729 = vpop.permute.xlu0 %11728
      %11730 = vrot.lane.b32.xlu0 %v11692, 24
      %v11731 = vpop.permute.xlu0 %11730
      %11732 = vrot.lane.b32.xlu0 %v11701, 24
      %v11733 = vpop.permute.xlu0 %11732
      %v11734 = vrot.slane %v11190, 2
      %v11735 = vrot.slane %v11238, 2
      %v11736 = vsel %vm1389, %v11734, %v11735
      %v11737 = vrot.slane %v11191, 2
      %v11738 = vrot.slane %v11239, 2
      %v11739 = vsel %vm1389, %v11737, %v11738
      %v11740 = vrot.slane %v11192, 2
      %v11741 = vrot.slane %v11240, 2
      %v11742 = vsel %vm1389, %v11740, %v11741
      %v11743 = vrot.slane %v11193, 2
      %v11744 = vrot.slane %v11241, 2
      %v11745 = vsel %vm1389, %v11743, %v11744
      %v11746 = vrot.slane %v11194, 2
      %v11747 = vrot.slane %v11242, 2
      %v11748 = vsel %vm1389, %v11746, %v11747
      %v11749 = vrot.slane %v11195, 2
      %v11750 = vrot.slane %v11243, 2
      %v11751 = vsel %vm1389, %v11749, %v11750
      %v11752 = vrot.slane %v11196, 2
      %v11753 = vrot.slane %v11244, 2
      %v11754 = vsel %vm1389, %v11752, %v11753
      %v11755 = vrot.slane %v11197, 2
      %v11756 = vrot.slane %v11245, 2
      %v11757 = vsel %vm1389, %v11755, %v11756
      %v11758 = vrot.slane %v11198, 2
      %v11759 = vrot.slane %v11246, 2
      %v11760 = vsel %vm1389, %v11758, %v11759
      %v11761 = vrot.slane %v11199, 2
      %v11762 = vrot.slane %v11247, 2
      %v11763 = vsel %vm1389, %v11761, %v11762
      %v11764 = vrot.slane %v11200, 2
      %v11765 = vrot.slane %v11248, 2
      %v11766 = vsel %vm1389, %v11764, %v11765
      %v11767 = vrot.slane %v11201, 2
      %v11768 = vrot.slane %v11249, 2
      %v11769 = vsel %vm1389, %v11767, %v11768
      %v11770 = vrot.slane %v11202, 2
      %v11771 = vrot.slane %v11250, 2
      %v11772 = vsel %vm1389, %v11770, %v11771
      %v11773 = vrot.slane %v11203, 2
      %v11774 = vrot.slane %v11251, 2
      %v11775 = vsel %vm1389, %v11773, %v11774
      %v11776 = vrot.slane %v11204, 2
      %v11777 = vrot.slane %v11252, 2
      %v11778 = vsel %vm1389, %v11776, %v11777
      %v11779 = vrot.slane %v11205, 2
      %v11780 = vrot.slane %v11253, 2
      %v11781 = vsel %vm1389, %v11779, %v11780
      %11782 = vrot.lane.b32.xlu0 %v11736, 32
      %v11783 = vpop.permute.xlu0 %11782
      %11784 = vrot.lane.b32.xlu0 %v11739, 32
      %v11785 = vpop.permute.xlu0 %11784
      %11786 = vrot.lane.b32.xlu0 %v11742, 32
      %v11787 = vpop.permute.xlu0 %11786
      %11788 = vrot.lane.b32.xlu0 %v11745, 32
      %v11789 = vpop.permute.xlu0 %11788
      %11790 = vrot.lane.b32.xlu0 %v11748, 32
      %v11791 = vpop.permute.xlu0 %11790
      %11792 = vrot.lane.b32.xlu0 %v11751, 32
      %v11793 = vpop.permute.xlu0 %11792
      %11794 = vrot.lane.b32.xlu0 %v11754, 32
      %v11795 = vpop.permute.xlu0 %11794
      %11796 = vrot.lane.b32.xlu0 %v11757, 32
      %v11797 = vpop.permute.xlu0 %11796
      %11798 = vrot.lane.b32.xlu0 %v11760, 32
      %v11799 = vpop.permute.xlu0 %11798
      %11800 = vrot.lane.b32.xlu0 %v11763, 32
      %v11801 = vpop.permute.xlu0 %11800
      %11802 = vrot.lane.b32.xlu0 %v11766, 32
      %v11803 = vpop.permute.xlu0 %11802
      %11804 = vrot.lane.b32.xlu0 %v11769, 32
      %v11805 = vpop.permute.xlu0 %11804
      %11806 = vrot.lane.b32.xlu0 %v11772, 32
      %v11807 = vpop.permute.xlu0 %11806
      %11808 = vrot.lane.b32.xlu0 %v11775, 32
      %v11809 = vpop.permute.xlu0 %11808
      %11810 = vrot.lane.b32.xlu0 %v11778, 32
      %v11811 = vpop.permute.xlu0 %11810
      %11812 = vrot.lane.b32.xlu0 %v11781, 32
      %v11813 = vpop.permute.xlu0 %11812
      %v11815 = vsel %vm1470, %v11190, %v11447
      %v11817 = vsel %vm1470, %v11191, %v11449
      %v11819 = vsel %vm1470, %v11192, %v11451
      %v11821 = vsel %vm1470, %v11193, %v11453
      %v11823 = vsel %vm1470, %v11194, %v11455
      %v11825 = vsel %vm1470, %v11195, %v11457
      %v11827 = vsel %vm1470, %v11196, %v11459
      %v11829 = vsel %vm1470, %v11197, %v11461
      %v11831 = vsel %vm1470, %v11198, %v11463
      %v11833 = vsel %vm1470, %v11199, %v11465
      %v11835 = vsel %vm1470, %v11200, %v11467
      %v11837 = vsel %vm1470, %v11201, %v11469
      %v11839 = vsel %vm1470, %v11202, %v11471
      %v11841 = vsel %vm1470, %v11203, %v11473
      %v11843 = vsel %vm1470, %v11204, %v11475
      %v11845 = vsel %vm1470, %v11205, %v11477
      %v11847 = vsel %vm1503, %v11815, %v11527
      %v11849 = vsel %vm1503, %v11817, %v11529
      %v11851 = vsel %vm1503, %v11819, %v11531
      %v11853 = vsel %vm1503, %v11821, %v11533
      %v11855 = vsel %vm1503, %v11823, %v11535
      %v11857 = vsel %vm1503, %v11825, %v11537
      %v11859 = vsel %vm1503, %v11827, %v11539
      %v11861 = vsel %vm1503, %v11829, %v11541
      %v11863 = vsel %vm1503, %v11831, %v11543
      %v11865 = vsel %vm1503, %v11833, %v11545
      %v11867 = vsel %vm1503, %v11835, %v11547
      %v11869 = vsel %vm1503, %v11837, %v11549
      %v11871 = vsel %vm1503, %v11839, %v11551
      %v11873 = vsel %vm1503, %v11841, %v11553
      %v11875 = vsel %vm1503, %v11843, %v11555
      %v11877 = vsel %vm1503, %v11845, %v11557
      %v11879 = vsel %vm1536, %v11847, %v11703
      %v11881 = vsel %vm1536, %v11849, %v11705
      %v11883 = vsel %vm1536, %v11851, %v11707
      %v11885 = vsel %vm1536, %v11853, %v11709
      %v11887 = vsel %vm1536, %v11855, %v11711
      %v11889 = vsel %vm1536, %v11857, %v11713
      %v11891 = vsel %vm1536, %v11859, %v11715
      %v11893 = vsel %vm1536, %v11861, %v11717
      %v11895 = vsel %vm1536, %v11863, %v11719
      %v11897 = vsel %vm1536, %v11865, %v11721
      %v11899 = vsel %vm1536, %v11867, %v11723
      %v11901 = vsel %vm1536, %v11869, %v11725
      %v11903 = vsel %vm1536, %v11871, %v11727
      %v11905 = vsel %vm1536, %v11873, %v11729
      %v11907 = vsel %vm1536, %v11875, %v11731
      %v11909 = vsel %vm1536, %v11877, %v11733
      %v11911 = vsel %vm1569, %v11879, %v11783
      %v11913 = vsel %vm1569, %v11881, %v11785
      %v11915 = vsel %vm1569, %v11883, %v11787
      %v11917 = vsel %vm1569, %v11885, %v11789
      %v11919 = vsel %vm1569, %v11887, %v11791
      %v11921 = vsel %vm1569, %v11889, %v11793
      %v11923 = vsel %vm1569, %v11891, %v11795
      %v11925 = vsel %vm1569, %v11893, %v11797
      %v11927 = vsel %vm1569, %v11895, %v11799
      %v11929 = vsel %vm1569, %v11897, %v11801
      %v11931 = vsel %vm1569, %v11899, %v11803
      %v11933 = vsel %vm1569, %v11901, %v11805
      %v11935 = vsel %vm1569, %v11903, %v11807
      %v11937 = vsel %vm1569, %v11905, %v11809
      %v11939 = vsel %vm1569, %v11907, %v11811
      %v11941 = vsel %vm1569, %v11909, %v11813
      %s11942 = scalar_lea.vmem %s3, 80
      %v11943 = vld [vmem:[%s11942] sm:$0xf]
      %v11944 = vld [vmem:[%s11942 + $0x4] sm:$0xf]
      %v11945 = vld [vmem:[%s11942 + $0x8] sm:$0xf]
      %v11946 = vld [vmem:[%s11942 + $0xc] sm:$0xf]
      %v11947 = vld [vmem:[%s11942 + $0x10] sm:$0xf]
      %v11953 = vunpack.c.l.b16 %v11943
      %v11954 = vunpack.c.l.b16 %v11944
      %v11955 = vunpack.c.l.b16 %v11945
      %v11956 = vunpack.c.l.b16 %v11946
      %v11957 = vunpack.c.l.b16 %v11947
      %v11958 = vpack.c.b16 %v11954, %v11953
      %v11959 = vpack.c.b16 %v11956, %v11955
      %v11960 = vpack.c.b16 %v11957, %v11957
      %v11963 = vsel %vm1622, %v11911, 0
      %v11965 = vsel %vm1622, %v11913, 0
      %v11967 = vsel %vm1622, %v11915, 0
      %v11969 = vsel %vm1622, %v11917, 0
      %v11971 = vsel %vm1622, %v11919, 0
      %v11973 = vsel %vm1622, %v11921, 0
      %v11975 = vsel %vm1622, %v11923, 0
      %v11977 = vsel %vm1622, %v11925, 0
      %v11979 = vsel %vm1622, %v11927, 0
      %v11981 = vsel %vm1622, %v11929, 0
      %v11983 = vsel %vm1622, %v11931, 0
      %v11985 = vsel %vm1622, %v11933, 0
      %v11987 = vsel %vm1622, %v11935, 0
      %v11989 = vsel %vm1622, %v11937, 0
      %v11991 = vsel %vm1622, %v11939, 0
      %v11993 = vsel %vm1622, %v11941, 0
      %v11996 = vsel %vm1655, %v11960, 0
      %11998 = vmatprep.subr.bf16.mxu0 0
      %11999 = vmatpush1.bf16.msra.mxu0 %v11958
      %12000 = vmatprep.subr.bf16.mxu0 0
      %12001 = vmatpush1.bf16.msra.mxu0 %v11959
      %12002 = vmatprep.subr.bf16.mxu0 0
      %12003 = vmatpush1.bf16.msra.mxu0 %v11996
      %12004 = vmatprep.subr.bf16.mxu0 0
      %12005 = vmatpush1.bf16.msra.mxu0 0
      %12006 = vmatprep.subr.bf16.mxu0 0
      %12007 = vmatpush1.bf16.msra.mxu0 0
      %12008 = vmatprep.subr.bf16.mxu0 0
      %12009 = vmatpush1.bf16.msra.mxu0 0
      %12010 = vmatprep.subr.bf16.mxu0 0
      %12011 = vmatpush1.bf16.msra.mxu0 0
      %12012 = vmatprep.subr.bf16.mxu0 0
      %12013 = vmatpush1.bf16.msra.mxu0 0
      %12014 = vmatprep.subr.bf16.mxu0 0
      %12015 = vmatpush1.bf16.msra.mxu0 0
      %12016 = vmatprep.subr.bf16.mxu0 0
      %12017 = vmatpush1.bf16.msra.mxu0 0
      %12018 = vmatprep.subr.bf16.mxu0 0
      %12019 = vmatpush1.bf16.msra.mxu0 0
      %12020 = vmatprep.subr.bf16.mxu0 0
      %12021 = vmatpush1.bf16.msra.mxu0 0
      %12022 = vmatprep.subr.bf16.mxu0 0
      %12023 = vmatpush1.bf16.msra.mxu0 0
      %12024 = vmatprep.subr.bf16.mxu0 0
      %12025 = vmatpush1.bf16.msra.mxu0 0
      %12026 = vmatprep.subr.bf16.mxu0 0
      %12027 = vmatpush1.bf16.msra.mxu0 0
      %12028 = vmatprep.subr.bf16.mxu0 0
      %12029 = vmatpush1.bf16.msra.mxu0 0
      %12030 = vmatprep.mubr.bf16.mxu0 0
      %12031 = vmatmul.mubr.bf16.gmra.mrb[0].mxu0 %v11963
      %v12032 = vpop.f32.mrb[0].mxu0
      %v12033 = vadd.f32 0.0, %v12032
      %v12034 = vpop.f32.mrb[0].mxu0
      %v12035 = vpop.f32.mrb[0].mxu0
      %v12036 = vadd.f32 0.0, %v12035
      %v12037 = vpop.f32.mrb[0].mxu0
      %12038 = vmatprep.mubr.bf16.mxu0 0
      %12039 = vmatmul.mubr.bf16.gmra.mrb[0].mxu0 %v11965
      %v12040 = vpop.f32.mrb[0].mxu0
      %v12041 = vadd.f32 0.0, %v12040
      %v12042 = vpop.f32.mrb[0].mxu0
      %v12043 = vpop.f32.mrb[0].mxu0
      %v12044 = vadd.f32 0.0, %v12043
      %v12045 = vpop.f32.mrb[0].mxu0
      %12046 = vmatprep.mubr.bf16.mxu0 0
      %12047 = vmatmul.mubr.bf16.gmra.mrb[0].mxu0 %v11967
      %v12048 = vpop.f32.mrb[0].mxu0
      %v12049 = vadd.f32 0.0, %v12048
      %v12050 = vpop.f32.mrb[0].mxu0
      %v12051 = vpop.f32.mrb[0].mxu0
      %v12052 = vadd.f32 0.0, %v12051
      %v12053 = vpop.f32.mrb[0].mxu0
      %12054 = vmatprep.mubr.bf16.mxu0 0
      %12055 = vmatmul.mubr.bf16.gmra.mrb[0].mxu0 %v11969
      %v12056 = vpop.f32.mrb[0].mxu0
      %v12057 = vadd.f32 0.0, %v12056
      %v12058 = vpop.f32.mrb[0].mxu0
      %v12059 = vpop.f32.mrb[0].mxu0
      %v12060 = vadd.f32 0.0, %v12059
      %v12061 = vpop.f32.mrb[0].mxu0
      %12062 = vmatprep.mubr.bf16.mxu0 0
      %12063 = vmatmul.mubr.bf16.gmra.mrb[0].mxu0 %v11971
      %v12064 = vpop.f32.mrb[0].mxu0
      %v12065 = vadd.f32 0.0, %v12064
      %v12066 = vpop.f32.mrb[0].mxu0
      %v12067 = vpop.f32.mrb[0].mxu0
      %v12068 = vadd.f32 0.0, %v12067
      %v12069 = vpop.f32.mrb[0].mxu0
      %12070 = vmatprep.mubr.bf16.mxu0 0
      %12071 = vmatmul.mubr.bf16.gmra.mrb[0].mxu0 %v11973
      %v12072 = vpop.f32.mrb[0].mxu0
      %v12073 = vadd.f32 0.0, %v12072
      %v12074 = vpop.f32.mrb[0].mxu0
      %v12075 = vpop.f32.mrb[0].mxu0
      %v12076 = vadd.f32 0.0, %v12075
      %v12077 = vpop.f32.mrb[0].mxu0
      %12078 = vmatprep.mubr.bf16.mxu0 0
      %12079 = vmatmul.mubr.bf16.gmra.mrb[0].mxu0 %v11975
      %v12080 = vpop.f32.mrb[0].mxu0
      %v12081 = vadd.f32 0.0, %v12080
      %v12082 = vpop.f32.mrb[0].mxu0
      %v12083 = vpop.f32.mrb[0].mxu0
      %v12084 = vadd.f32 0.0, %v12083
      %v12085 = vpop.f32.mrb[0].mxu0
      %12086 = vmatprep.mubr.bf16.mxu0 0
      %12087 = vmatmul.mubr.bf16.gmra.mrb[0].mxu0 %v11977
      %v12088 = vpop.f32.mrb[0].mxu0
      %v12089 = vadd.f32 0.0, %v12088
      %v12090 = vpop.f32.mrb[0].mxu0
      %v12091 = vpop.f32.mrb[0].mxu0
      %v12092 = vadd.f32 0.0, %v12091
      %v12093 = vpop.f32.mrb[0].mxu0
      %12094 = vmatprep.mubr.bf16.mxu0 0
      %12095 = vmatmul.mubr.bf16.gmra.mrb[0].mxu0 %v11979
      %v12096 = vpop.f32.mrb[0].mxu0
      %v12097 = vadd.f32 0.0, %v12096
      %v12098 = vpop.f32.mrb[0].mxu0
      %v12099 = vpop.f32.mrb[0].mxu0
      %v12100 = vadd.f32 0.0, %v12099
      %v12101 = vpop.f32.mrb[0].mxu0
      %12102 = vmatprep.mubr.bf16.mxu0 0
      %12103 = vmatmul.mubr.bf16.gmra.mrb[0].mxu0 %v11981
      %v12104 = vpop.f32.mrb[0].mxu0
      %v12105 = vadd.f32 0.0, %v12104
      %v12106 = vpop.f32.mrb[0].mxu0
      %v12107 = vpop.f32.mrb[0].mxu0
      %v12108 = vadd.f32 0.0, %v12107
      %v12109 = vpop.f32.mrb[0].mxu0
      %12110 = vmatprep.mubr.bf16.mxu0 0
      %12111 = vmatmul.mubr.bf16.gmra.mrb[0].mxu0 %v11983
      %v12112 = vpop.f32.mrb[0].mxu0
      %v12113 = vadd.f32 0.0, %v12112
      %v12114 = vpop.f32.mrb[0].mxu0
      %v12115 = vpop.f32.mrb[0].mxu0
      %v12116 = vadd.f32 0.0, %v12115
      %v12117 = vpop.f32.mrb[0].mxu0
      %12118 = vmatprep.mubr.bf16.mxu0 0
      %12119 = vmatmul.mubr.bf16.gmra.mrb[0].mxu0 %v11985
      %v12120 = vpop.f32.mrb[0].mxu0
      %v12121 = vadd.f32 0.0, %v12120
      %v12122 = vpop.f32.mrb[0].mxu0
      %v12123 = vpop.f32.mrb[0].mxu0
      %v12124 = vadd.f32 0.0, %v12123
      %v12125 = vpop.f32.mrb[0].mxu0
      %12126 = vmatprep.mubr.bf16.mxu0 0
      %12127 = vmatmul.mubr.bf16.gmra.mrb[0].mxu0 %v11987
      %v12128 = vpop.f32.mrb[0].mxu0
      %v12129 = vadd.f32 0.0, %v12128
      %v12130 = vpop.f32.mrb[0].mxu0
      %v12131 = vpop.f32.mrb[0].mxu0
      %v12132 = vadd.f32 0.0, %v12131
      %v12133 = vpop.f32.mrb[0].mxu0
      %12134 = vmatprep.mubr.bf16.mxu0 0
      %12135 = vmatmul.mubr.bf16.gmra.mrb[0].mxu0 %v11989
      %v12136 = vpop.f32.mrb[0].mxu0
      %v12137 = vadd.f32 0.0, %v12136
      %v12138 = vpop.f32.mrb[0].mxu0
      %v12139 = vpop.f32.mrb[0].mxu0
      %v12140 = vadd.f32 0.0, %v12139
      %v12141 = vpop.f32.mrb[0].mxu0
      %12142 = vmatprep.mubr.bf16.mxu0 0
      %12143 = vmatmul.mubr.bf16.gmra.mrb[0].mxu0 %v11991
      %v12144 = vpop.f32.mrb[0].mxu0
      %v12145 = vadd.f32 0.0, %v12144
      %v12146 = vpop.f32.mrb[0].mxu0
      %v12147 = vpop.f32.mrb[0].mxu0
      %v12148 = vadd.f32 0.0, %v12147
      %v12149 = vpop.f32.mrb[0].mxu0
      %12150 = vmatprep.mubr.bf16.mxu0 0
      %12151 = vmatmul.mubr.bf16.gmra.mrb[0].mxu0 %v11993
      %v12152 = vpop.f32.mrb[0].mxu0
      %v12153 = vadd.f32 0.0, %v12152
      %v12154 = vpop.f32.mrb[0].mxu0
      %v12155 = vpop.f32.mrb[0].mxu0
      %v12156 = vadd.f32 0.0, %v12155
      %v12157 = vpop.f32.mrb[0].mxu0
      %12158 = vdwg.mxu0
      %v12159 = vadd.f32 %v11045, %v12033
      %v12160 = vadd.f32 %v11046, %v12036
      %v12161 = vadd.f32 %v11047, %v12041
      %v12162 = vadd.f32 %v11048, %v12044
      %v12163 = vadd.f32 %v11049, %v12049
      %v12164 = vadd.f32 %v11050, %v12052
      %v12165 = vadd.f32 %v11051, %v12057
      %v12166 = vadd.f32 %v11052, %v12060
      %v12167 = vadd.f32 %v11053, %v12065
      %v12168 = vadd.f32 %v11054, %v12068
      %v12169 = vadd.f32 %v11055, %v12073
      %v12170 = vadd.f32 %v11056, %v12076
      %v12171 = vadd.f32 %v11057, %v12081
      %v12172 = vadd.f32 %v11058, %v12084
      %v12173 = vadd.f32 %v11059, %v12089
      %v12174 = vadd.f32 %v11060, %v12092
      %v12175 = vadd.f32 %v11061, %v12097
      %v12176 = vadd.f32 %v11062, %v12100
      %v12177 = vadd.f32 %v11063, %v12105
      %v12178 = vadd.f32 %v11064, %v12108
      %v12179 = vadd.f32 %v11065, %v12113
      %v12180 = vadd.f32 %v11066, %v12116
      %v12181 = vadd.f32 %v11067, %v12121
      %v12182 = vadd.f32 %v11068, %v12124
      %v12183 = vadd.f32 %v11069, %v12129
      %v12184 = vadd.f32 %v11070, %v12132
      %v12185 = vadd.f32 %v11071, %v12137
      %v12186 = vadd.f32 %v11072, %v12140
      %v12187 = vadd.f32 %v11073, %v12145
      %v12188 = vadd.f32 %v11074, %v12148
      %v12189 = vadd.f32 %v11075, %v12153
      %v12190 = vadd.f32 %v11076, %v12156
      %s12191 = scalar_lea.vmem %s219, 48
      %v12192 = vld [vmem:[%s12191 + $0x2] sm:$0xff]
      %v12193 = vld [vmem:[%s12191 + $0xa] sm:$0xff]
      %v12194 = vld [vmem:[%s12191 + $0x1a] sm:$0xff]
      %v12195 = vld [vmem:[%s12191 + $0x22] sm:$0xff]
      %v12196 = vld [vmem:[%s12191 + $0x32] sm:$0xff]
      %v12197 = vld [vmem:[%s12191 + $0x3a] sm:$0xff]
      %v12198 = vld [vmem:[%s12191 + $0x4a] sm:$0xff]
      %v12199 = vld [vmem:[%s12191 + $0x52] sm:$0xff]
      %v12200 = vld [vmem:[%s12191 + $0x62] sm:$0xff]
      %v12201 = vld [vmem:[%s12191 + $0x6a] sm:$0xff]
      %v12202 = vld [vmem:[%s12191 + $0x7a] sm:$0xff]
      %v12203 = vld [vmem:[%s12191 + $0x82] sm:$0xff]
      %v12204 = vld [vmem:[%s12191 + $0x92] sm:$0xff]
      %v12205 = vld [vmem:[%s12191 + $0x9a] sm:$0xff]
      %v12206 = vld [vmem:[%s12191 + $0xaa] sm:$0xff]
      %v12207 = vld [vmem:[%s12191 + $0xb2] sm:$0xff]
      %v12208 = vld [vmem:[%s12191 + $0xc2] sm:$0xff]
      %v12209 = vld [vmem:[%s12191 + $0xca] sm:$0xff]
      %v12210 = vld [vmem:[%s12191 + $0xda] sm:$0xff]
      %v12211 = vld [vmem:[%s12191 + $0xe2] sm:$0xff]
      %v12212 = vld [vmem:[%s12191 + $0xf2] sm:$0xff]
      %v12213 = vld [vmem:[%s12191 + $0xfa] sm:$0xff]
      %v12214 = vld [vmem:[%s12191 + $0x10a] sm:$0xff]
      %v12215 = vld [vmem:[%s12191 + $0x112] sm:$0xff]
      %v12216 = vld [vmem:[%s12191 + $0x122] sm:$0xff]
      %v12217 = vld [vmem:[%s12191 + $0x12a] sm:$0xff]
      %v12218 = vld [vmem:[%s12191 + $0x13a] sm:$0xff]
      %v12219 = vld [vmem:[%s12191 + $0x142] sm:$0xff]
      %v12220 = vld [vmem:[%s12191 + $0x152] sm:$0xff]
      %v12221 = vld [vmem:[%s12191 + $0x15a] sm:$0xff]
      %v12222 = vld [vmem:[%s12191 + $0x16a] sm:$0xff]
      %v12223 = vld [vmem:[%s12191 + $0x172] sm:$0xff]
      %v12224 = vadd.f32 %v12192, %v12159
      %v12225 = vadd.f32 %v12193, %v12160
      %v12226 = vadd.f32 %v12194, %v12161
      %v12227 = vadd.f32 %v12195, %v12162
      %v12228 = vadd.f32 %v12196, %v12163
      %v12229 = vadd.f32 %v12197, %v12164
      %v12230 = vadd.f32 %v12198, %v12165
      %v12231 = vadd.f32 %v12199, %v12166
      %v12232 = vadd.f32 %v12200, %v12167
      %v12233 = vadd.f32 %v12201, %v12168
      %v12234 = vadd.f32 %v12202, %v12169
      %v12235 = vadd.f32 %v12203, %v12170
      %v12236 = vadd.f32 %v12204, %v12171
      %v12237 = vadd.f32 %v12205, %v12172
      %v12238 = vadd.f32 %v12206, %v12173
      %v12239 = vadd.f32 %v12207, %v12174
      %v12240 = vadd.f32 %v12208, %v12175
      %v12241 = vadd.f32 %v12209, %v12176
      %v12242 = vadd.f32 %v12210, %v12177
      %v12243 = vadd.f32 %v12211, %v12178
      %v12244 = vadd.f32 %v12212, %v12179
      %v12245 = vadd.f32 %v12213, %v12180
      %v12246 = vadd.f32 %v12214, %v12181
      %v12247 = vadd.f32 %v12215, %v12182
      %v12248 = vadd.f32 %v12216, %v12183
      %v12249 = vadd.f32 %v12217, %v12184
      %v12250 = vadd.f32 %v12218, %v12185
      %v12251 = vadd.f32 %v12219, %v12186
      %v12252 = vadd.f32 %v12220, %v12187
      %v12253 = vadd.f32 %v12221, %v12188
      %v12254 = vadd.f32 %v12222, %v12189
      %v12255 = vadd.f32 %v12223, %v12190
      %12256 = vst.msk [vmem:[%s224] sm:$0xff] %vm1470, %v12224
      %12257 = vst.msk [vmem:[%s224 + $0x8] sm:$0xff] %vm1470, %v12225
      %12258 = vst.msk [vmem:[%s224 + $0x10] sm:$0xff] %vm1470, %v12226
      %12259 = vst.msk [vmem:[%s224 + $0x18] sm:$0xff] %vm1470, %v12227
      %12260 = vst.msk [vmem:[%s224 + $0x20] sm:$0xff] %vm1470, %v12228
      %12261 = vst.msk [vmem:[%s224 + $0x28] sm:$0xff] %vm1470, %v12229
      %12262 = vst.msk [vmem:[%s224 + $0x30] sm:$0xff] %vm1470, %v12230
      %12263 = vst.msk [vmem:[%s224 + $0x38] sm:$0xff] %vm1470, %v12231
      %12264 = vst.msk [vmem:[%s224 + $0x40] sm:$0xff] %vm1470, %v12232
      %12265 = vst.msk [vmem:[%s224 + $0x48] sm:$0xff] %vm1470, %v12233
      %12266 = vst.msk [vmem:[%s224 + $0x50] sm:$0xff] %vm1470, %v12234
      %12267 = vst.msk [vmem:[%s224 + $0x58] sm:$0xff] %vm1470, %v12235
      %12268 = vst.msk [vmem:[%s224 + $0x60] sm:$0xff] %vm1470, %v12236
      %12269 = vst.msk [vmem:[%s224 + $0x68] sm:$0xff] %vm1470, %v12237
      %12270 = vst.msk [vmem:[%s224 + $0x70] sm:$0xff] %vm1470, %v12238
      %12271 = vst.msk [vmem:[%s224 + $0x78] sm:$0xff] %vm1470, %v12239
      %12272 = vst.msk [vmem:[%s224 + $0x80] sm:$0xff] %vm1470, %v12240
      %12273 = vst.msk [vmem:[%s224 + $0x88] sm:$0xff] %vm1470, %v12241
      %12274 = vst.msk [vmem:[%s224 + $0x90] sm:$0xff] %vm1470, %v12242
      %12275 = vst.msk [vmem:[%s224 + $0x98] sm:$0xff] %vm1470, %v12243
      %12276 = vst.msk [vmem:[%s224 + $0xa0] sm:$0xff] %vm1470, %v12244
      %12277 = vst.msk [vmem:[%s224 + $0xa8] sm:$0xff] %vm1470, %v12245
      %12278 = vst.msk [vmem:[%s224 + $0xb0] sm:$0xff] %vm1470, %v12246
      %12279 = vst.msk [vmem:[%s224 + $0xb8] sm:$0xff] %vm1470, %v12247
      %12280 = vst.msk [vmem:[%s224 + $0xc0] sm:$0xff] %vm1470, %v12248
      %12281 = vst.msk [vmem:[%s224 + $0xc8] sm:$0xff] %vm1470, %v12249
      %12282 = vst.msk [vmem:[%s224 + $0xd0] sm:$0xff] %vm1470, %v12250
      %12283 = vst.msk [vmem:[%s224 + $0xd8] sm:$0xff] %vm1470, %v12251
      %12284 = vst.msk [vmem:[%s224 + $0xe0] sm:$0xff] %vm1470, %v12252
      %12285 = vst.msk [vmem:[%s224 + $0xe8] sm:$0xff] %vm1470, %v12253
      %12286 = vst.msk [vmem:[%s224 + $0xf0] sm:$0xff] %vm1470, %v12254
      %12287 = vst.msk [vmem:[%s224 + $0xf8] sm:$0xff] %vm1470, %v12255
      %p12288 = scmp.lt.s32.totalorder %s16, 1
      %s12289 = scalar_select %p12288, %s16, 1
      %s12290 = smul.addr %s12289, 32
      %s12291 = smul.addr %s12290, 8
      %s12292 = scalar_lea.vmem %s5, %s12291
      // Predicated region
      $region41: #{tpu_custom_call.1} parent=39 // pred_check
        %p12293 = pneg %p144
      $region42: #{tpu_custom_call.1} parent=39 // pred_check_branch
        %12295 = sbr.rel (%p12293) target = $region44
      $region43: #{tpu_custom_call.1} parent=39 // pred_region
        _
      $region44: #{tpu_custom_call.1} parent=39 // pred_fallthru
        _
    $region40: #{tpu_custom_call.1} parent=5 // pred_fallthru
      _
    %p12296 = scmp.le.s32.totalorder 2, %s11
    // Predicated region
    $region45: #{tpu_custom_call.1} parent=5 // pred_check
      %p12297 = pneg %p12296
    $region46: #{tpu_custom_call.1} parent=5 // pred_check_branch
      %12299 = sbr.rel (%p12297) target = $region48
    $region47: #{tpu_custom_call.1} parent=5 // pred_region
      %s12300 = ssub.s32 %s11, 2
      // Predicated region
      $region49: #{tpu_custom_call.1} parent=47 // pred_check
        %p12301 = pneg %p150
      $region50: #{tpu_custom_call.1} parent=47 // pred_check_branch
        %12303 = sbr.rel (%p12301) target = $region52
      $region51: #{tpu_custom_call.1} parent=47 // pred_region
        %p12304 = scmp.lt.s32.totalorder %s17, 1
        %s12305 = scalar_select %p12304, %s17, 1
        %s12306 = smul.addr %s12305, 32
        %s12307 = smul.addr %s12306, 8
        %s12308 = scalar_lea.vmem %s5, %s12307
      $region52: #{tpu_custom_call.1} parent=47 // pred_fallthru
        _
    $region48: #{tpu_custom_call.1} parent=5 // pred_fallthru
      _
  $region6: #{tpu_custom_call.1} parent=0 // loop_footer
    %s15 = sadd.s32 1, %s11
  $region7: #{tpu_custom_call.1} parent=0 // loop_footer_branch
    %10 = sbr.rel target = $region3
  $region8: #{tpu_custom_call.1} parent=0 // loop_exit
    _

</llo_original>
